<compile_context>
chip_gen: v7x
topology: tpu7x:2x2x1
jax: 0.10.0
libtpu: 0.0.40
codegen_flags: <defaults>
</compile_context>

<pallas_src>
import math
from dataclasses import dataclass

import numpy as np
import jax
import jax.numpy as jnp
from jax import lax
from jax.experimental import pallas as pl
from jax.experimental.pallas import tpu as pltpu


# ----------------------------- hyper parameters -----------------------------
@dataclass(frozen=True)
class HParams:
    batch_size: int = 2
    max_len: int = 8
    pretraining_insize: int = 4            # conv input channels
    encoded_features_out_size: int = 8     # conv output channels
    in_height: int = 16
    in_width: int = 16
    standard_linear_nodes: int = 32
    target_context_vectors_size: int = 16
    mhsa_num_heads: int = 4
    conformer_ff1_linear1_nodes: int = 64
    n_conformers: int = 2
    conformer_depthwise_conv_kernel: int = 7
    dropout: float = 0.0
    decoder_nodes: int = 32
    pretraining_decoder_bidirectional: bool = False
    pretraining_decoder_layers: int = 1
    mask_probability: float = 0.5
    mask_value: float = 0.0
    simplified_pretraining: bool = True
    temperature_tau: float = 1.0


def _vmem():
    return pl.BlockSpec(memory_space=pltpu.MemorySpace.VMEM)


# ------------------------------ stem conv kernel ------------------------------
def _conv_mm_kernel(p_ref, w_ref, b_ref, o_ref):
    o_ref[...] = jnp.maximum(
        jnp.dot(p_ref[...], w_ref[...], preferred_element_type=jnp.float32)
        + b_ref[...], 0.0)


def conv_matmul_relu(patches, w, b):
    M = patches.shape[0]
    N = w.shape[1]
    return pl.pallas_call(
        _conv_mm_kernel,
        out_shape=jax.ShapeDtypeStruct((M, N), jnp.float32),
        in_specs=[_vmem()] * 3,
        out_specs=_vmem(),
    )(patches, w, b)


# ------------------------------ fused mega kernel -----------------------------
_LAYER_PARAM_NAMES = (
    "ffn1_ln_g", "ffn1_ln_b", "ffn1_w1", "ffn1_b1", "ffn1_w2", "ffn1_b2",
    "attn_ln_g", "attn_ln_b", "attn_in_w", "attn_in_b", "attn_out_w", "attn_out_b",
    "conv_ln_g", "conv_ln_b", "conv_pw1_w", "conv_pw1_b",
    "conv_dw_w", "conv_dw_b", "conv_bn_g", "conv_bn_b", "conv_pw2_w", "conv_pw2_b",
    "ffn2_ln_g", "ffn2_ln_b", "ffn2_w1", "ffn2_b1", "ffn2_w2", "ffn2_b2",
    "final_ln_g", "final_ln_b",
)

_DW_BASE = 8   # tile-aligned row offset of the real data inside the depthwise pad buffer


def _ln(x, gamma, beta, eps=1e-5):
    mu = jnp.mean(x, axis=-1, keepdims=True)
    var = jnp.mean((x - mu) ** 2, axis=-1, keepdims=True)
    return (x - mu) * lax.rsqrt(var + eps) * gamma + beta


def _silu(x):
    return x * jax.nn.sigmoid(x)


def _make_mega_kernel(hp: HParams, names, n_groups):
    B, T, D = hp.batch_size, hp.max_len, hp.standard_linear_nodes
    Hh = hp.mhsa_num_heads
    Dh = D // Hh
    K = hp.conformer_depthwise_conv_kernel
    pad = (K - 1) // 2
    Hd = hp.decoder_nodes
    O2 = hp.encoded_features_out_size
    scale = 1.0 / math.sqrt(Dh)
    n_in = len(names)
    f32 = jnp.float32

    def kernel(*refs):
        g = dict(zip(names, refs[:n_in]))
        ctx_ref = refs[n_in]
        q_ref = refs[n_in + 1]
        enc_asm, x2_asm, attn_asm, dw_asm, dwpad = refs[n_in + 2:]

        # zero-padded window for the depthwise conv (pad rows stay zero for all uses)
        dwpad[...] = jnp.zeros((_DW_BASE + T + _DW_BASE, D), f32)

        # --- conv2 of the ConvSubSampling: im2col matmul + ReLU ---
        h2 = jnp.maximum(
            jnp.dot(g["patches2"][...], g["conv2_w"][...],
                    preferred_element_type=f32) + g["conv2_b"][...], 0.0)

        # --- flatten(1): scatter the (B*groups, O2) rows into a lane-dense (B, enc) slab ---
        for b in range(B):
            for grp in range(n_groups):
                row = b * n_groups + grp
                enc_asm[b:b + 1, grp * O2:(grp + 1) * O2] = h2[row:row + 1, :]
        enc = enc_asm[...]

        # --- quantization linear (target context vectors), lane-dense (B, T*tcv) output ---
        q_ref[...] = (jnp.dot(enc, g["quant_w"][...], preferred_element_type=f32)
                      + g["quant_b"][...])
        # TODO(synk): gumbel_softmax branch (simplified_pretraining=False) not implemented.

        # --- masking fused with the fc projection: masked_fill(x, x >= p, value) ---
        masked = jnp.where(enc >= hp.mask_probability, hp.mask_value, enc)
        f = jnp.dot(masked, g["fc_w"][...], preferred_element_type=f32) + g["fc_b"][...]
        # view(B, T, D) -> batch-major (B*T, D) slab, assembled in VMEM
        for b in range(B):
            for t in range(T):
                r = b * T + t
                x2_asm[r:r + 1, :] = f[b:b + 1, t * D:(t + 1) * D]
        x = x2_asm[...]

        # --- conformer layers (torchaudio ConformerLayer semantics, dropout == 0) ---
        for li in range(hp.n_conformers):
            p = lambda n, _li=li: g[f"L{_li}_{n}"][...]

            # FFN1 (half-step residual)
            y = _ln(x, p("ffn1_ln_g"), p("ffn1_ln_b"))
            y = _silu(jnp.dot(y, p("ffn1_w1"), preferred_element_type=f32) + p("ffn1_b1"))
            y = jnp.dot(y, p("ffn1_w2"), preferred_element_type=f32) + p("ffn1_b2")
            x = x + 0.5 * y

            # MHSA: qkv projection, per-(batch, head) attention, output projection
            y = _ln(x, p("attn_ln_g"), p("attn_ln_b"))
            qkv = jnp.dot(y, p("attn_in_w"), preferred_element_type=f32) + p("attn_in_b")
            for b in range(B):
                r0, r1 = b * T, (b + 1) * T
                bias_b = g["attn_bias"][b:b + 1, :]          # (1, T) key-padding bias
                for hd in range(Hh):
                    qh = qkv[r0:r1, hd * Dh:(hd + 1) * Dh] * scale
                    kh = qkv[r0:r1, D + hd * Dh:D + (hd + 1) * Dh]
                    vh = qkv[r0:r1, 2 * D + hd * Dh:2 * D + (hd + 1) * Dh]
                    s = jnp.einsum("td,sd->ts", qh, kh,
                                   preferred_element_type=f32) + bias_b
                    s = s - jnp.max(s, axis=-1, keepdims=True)
                    e = jnp.exp(s)
                    pr = e * pl.reciprocal(jnp.sum(e, axis=-1, keepdims=True),
                                           approx=True)
                    attn_asm[r0:r1, hd * Dh:(hd + 1) * Dh] = jnp.dot(
                        pr, vh, preferred_element_type=f32)
            a = attn_asm[...]
            x = x + jnp.dot(a, p("attn_out_w"),
                            preferred_element_type=f32) + p("attn_out_b")

            # Convolution module: pointwise+GLU -> depthwise conv -> BN -> SiLU -> pointwise
            y = _ln(x, p("conv_ln_g"), p("conv_ln_b"))
            y = jnp.dot(y, p("conv_pw1_w"), preferred_element_type=f32) + p("conv_pw1_b")
            y = y[:, :D] * jax.nn.sigmoid(y[:, D:])          # GLU
            dw_w = p("conv_dw_w")
            dw_b = p("conv_dw_b")
            for b in range(B):
                dwpad[_DW_BASE:_DW_BASE + T, :] = y[b * T:(b + 1) * T, :]
                buf = dwpad[...]
                acc = jnp.zeros((T, D), f32)
                for k in range(K):
                    off = _DW_BASE - pad + k
                    acc = acc + buf[off:off + T, :] * dw_w[k:k + 1, :]
                dw_asm[b * T:(b + 1) * T, :] = acc + dw_b
            y = dw_asm[...]
            # BatchNorm1d (training-mode batch statistics) + SiLU
            mu = jnp.mean(y, axis=0, keepdims=True)
            var = jnp.mean((y - mu) ** 2, axis=0, keepdims=True)
            y = (y - mu) * lax.rsqrt(var + 1e-5) * p("conv_bn_g") + p("conv_bn_b")
            y = _silu(y)
            y = jnp.dot(y, p("conv_pw2_w"), preferred_element_type=f32) + p("conv_pw2_b")
            x = x + y

            # FFN2 (half-step residual) + final layer norm
            y = _ln(x, p("ffn2_ln_g"), p("ffn2_ln_b"))
            y = _silu(jnp.dot(y, p("ffn2_w1"), preferred_element_type=f32) + p("ffn2_b1"))
            y = jnp.dot(y, p("ffn2_w2"), preferred_element_type=f32) + p("ffn2_b2")
            x = x + 0.5 * y
            x = _ln(x, p("final_ln_g"), p("final_ln_b"))

        # --- LSTM decoder (nn.LSTM default batch_first=False => dim0 = B is "seq") ---
        # Input projection hoisted out of the recurrence; the B-step recurrence is unrolled.
        gates_in = (jnp.dot(x, g["lstm_wih"][...], preferred_element_type=f32)
                    + g["lstm_b"][...])
        h_st = jnp.zeros((T, Hd), f32)
        c_st = jnp.zeros((T, Hd), f32)
        for step in range(B):                          # seq length == batch_size
            gates = gates_in[step * T:(step + 1) * T, :] + jnp.dot(
                h_st, g["lstm_whh"][...], preferred_element_type=f32)
            i_g = jax.nn.sigmoid(gates[:, 0:Hd])
            f_g = jax.nn.sigmoid(gates[:, Hd:2 * Hd])
            c_g = jnp.tanh(gates[:, 2 * Hd:3 * Hd])
            o_g = jax.nn.sigmoid(gates[:, 3 * Hd:4 * Hd])
            c_st = f_g * c_st + i_g * c_g
            h_st = o_g * jnp.tanh(c_st)
            ctx_ref[step] = h_st
        # TODO(synk): bidirectional / multi-layer decoder variants not implemented
        # (hp uses 1 unidirectional layer).

    return kernel


def _mega_forward(params, hp: HParams, patches2, attn_bias, n_groups):
    B, T, D = hp.batch_size, hp.max_len, hp.standard_linear_nodes
    Hd = hp.decoder_nodes
    enc_dim = params["quant_w"].shape[0]
    q_dim = params["quant_w"].shape[1]

    items = [
        ("patches2", patches2),
        ("conv2_w", params["conv2_wf"]),
        ("conv2_b", params["conv2_b"]),
        ("quant_w", params["quant_w"]),
        ("quant_b", params["quant_b"]),
        ("fc_w", params["fc_w"]),
        ("fc_b", params["fc_b"]),
        ("attn_bias", attn_bias),
    ]
    for li, lp in enumerate(params["conformer_layers"]):
        for n in _LAYER_PARAM_NAMES:
            items.append((f"L{li}_{n}", lp[n]))
    items += [
        ("lstm_wih", params["lstm_wih"]),
        ("lstm_whh", params["lstm_whh"]),
        ("lstm_b", params["lstm_b"]),
    ]
    names = tuple(n for n, _ in items)
    arrays = [a for _, a in items]

    kernel = _make_mega_kernel(hp, names, n_groups)
    ctx, q = pl.pallas_call(
        kernel,
        out_shape=(jax.ShapeDtypeStruct((B, T, Hd), jnp.float32),
                   jax.ShapeDtypeStruct((B, q_dim), jnp.float32)),
        in_specs=[_vmem()] * len(arrays),
        out_specs=(_vmem(), _vmem()),
        scratch_shapes=[
            pltpu.VMEM((B, enc_dim), jnp.float32),                 # flatten(1) assembly
            pltpu.VMEM((B * T, D), jnp.float32),                   # fc -> (B*T, D) slab
            pltpu.VMEM((B * T, D), jnp.float32),                   # attention head assembly
            pltpu.VMEM((B * T, D), jnp.float32),                   # depthwise conv output
            pltpu.VMEM((_DW_BASE + T + _DW_BASE, D), jnp.float32),  # zero-padded dw window
        ],
    )(*arrays)
    return ctx, q


# ------------------------------ parameter init -------------------------------
class KeyGen:
    def __init__(self, key):
        self.key = key

    def __call__(self):
        self.key, sub = jax.random.split(self.key)
        return sub


def _dense(key, din, dout, scl=0.05):
    kw, kb = jax.random.split(key)
    w = scl * jax.random.normal(kw, (din, dout), jnp.float32)
    b = scl * jax.random.normal(kb, (1, dout), jnp.float32)
    return w, b


def _init_conformer_layer(kg, D, ffn_dim, K):
    ones = jnp.ones((1, D), jnp.float32)
    zeros = jnp.zeros((1, D), jnp.float32)
    p = {}
    p["ffn1_ln_g"], p["ffn1_ln_b"] = ones, zeros
    p["ffn1_w1"], p["ffn1_b1"] = _dense(kg(), D, ffn_dim)
    p["ffn1_w2"], p["ffn1_b2"] = _dense(kg(), ffn_dim, D)
    p["attn_ln_g"], p["attn_ln_b"] = ones, zeros
    p["attn_in_w"], p["attn_in_b"] = _dense(kg(), D, 3 * D)
    p["attn_out_w"], p["attn_out_b"] = _dense(kg(), D, D)
    p["conv_ln_g"], p["conv_ln_b"] = ones, zeros
    p["conv_pw1_w"], p["conv_pw1_b"] = _dense(kg(), D, 2 * D)
    p["conv_dw_w"] = 0.05 * jax.random.normal(kg(), (K, D), jnp.float32)
    p["conv_dw_b"] = zeros
    p["conv_bn_g"], p["conv_bn_b"] = ones, zeros
    p["conv_pw2_w"], p["conv_pw2_b"] = _dense(kg(), D, D)
    p["ffn2_ln_g"], p["ffn2_ln_b"] = ones, zeros
    p["ffn2_w1"], p["ffn2_b1"] = _dense(kg(), D, ffn_dim)
    p["ffn2_w2"], p["ffn2_b2"] = _dense(kg(), ffn_dim, D)
    p["final_ln_g"], p["final_ln_b"] = ones, zeros
    return p


def init_params(key, hp: HParams):
    kg = KeyGen(key)
    C_in, C_out = hp.pretraining_insize, hp.encoded_features_out_size
    D, T = hp.standard_linear_nodes, hp.max_len

    def conv_weight(k, cout, cin):
        # torch OIHW layout -> (kh*kw*cin, cout) matching the im2col column order.
        w = 0.1 * jax.random.normal(k, (cout, cin, 3, 3), jnp.float32)
        return jnp.transpose(w, (2, 3, 1, 0)).reshape(9 * cin, cout)

    params = {}
    # TODO(synk): ConvSubSampling's exact architecture is not in the provided snippet;
    # a standard 2x Conv2d(k=3, s=2, p=1)+ReLU subsampler is assumed.
    params["conv1_wf"] = conv_weight(kg(), C_out, C_in)
    params["conv1_b"] = jnp.zeros((1, C_out), jnp.float32)
    params["conv2_wf"] = conv_weight(kg(), C_out, C_out)
    params["conv2_b"] = jnp.zeros((1, C_out), jnp.float32)

    ho = (hp.in_height + 2 - 3) // 2 + 1
    ho = (ho + 2 - 3) // 2 + 1
    wo = (hp.in_width + 2 - 3) // 2 + 1
    wo = (wo + 2 - 3) // 2 + 1
    out_size = C_out * ho * wo

    # Row permutation mapping torch's NCHW flatten(1) feature order onto the kernel's
    # spatial-major / channel-minor enc layout (exact semantics preserved for weights
    # given in the PyTorch convention; purely cosmetic for random init).
    perm = np.array([o * ho * wo + i * wo + j
                     for i in range(ho) for j in range(wo) for o in range(C_out)])

    fc_w, params["fc_b"] = _dense(kg(), out_size, D * T)
    params["fc_w"] = fc_w[perm, :]
    q_w, params["quant_b"] = _dense(kg(), out_size, hp.target_context_vectors_size * T)
    params["quant_w"] = q_w[perm, :]

    params["conformer_layers"] = [
        _init_conformer_layer(kg, D, hp.conformer_ff1_linear1_nodes,
                              hp.conformer_depthwise_conv_kernel)
        for _ in range(hp.n_conformers)
    ]

    Hd = hp.decoder_nodes
    params["lstm_wih"] = 0.05 * jax.random.normal(kg(), (D, 4 * Hd), jnp.float32)
    params["lstm_whh"] = 0.05 * jax.random.normal(kg(), (Hd, 4 * Hd), jnp.float32)
    params["lstm_b"] = jnp.zeros((1, 4 * Hd), jnp.float32)   # b_ih + b_hh combined
    return params


# --------------------------------- forward -----------------------------------
def _im2col(x_nhwc, kh, kw, stride, pad):
    B, H, W, C = x_nhwc.shape
    Ho = (H + 2 * pad - kh) // stride + 1
    Wo = (W + 2 * pad - kw) // stride + 1
    xp = jnp.pad(x_nhwc, ((0, 0), (pad, pad), (pad, pad), (0, 0)))
    cols = [xp[:, i:i + stride * Ho:stride, j:j + stride * Wo:stride, :]
            for i in range(kh) for j in range(kw)]
    patches = jnp.concatenate(cols, axis=-1)
    return patches.reshape(B * Ho * Wo, kh * kw * C), Ho, Wo


def pretraining_forward(params, hp: HParams, x, input_lens):
    B, T = hp.batch_size, hp.max_len

    # --- ConvSubSampling (Pallas stem kernel; im2col extraction is cheap XLA glue) ---
    x_nhwc = jnp.transpose(x, (0, 2, 3, 1))
    p1, ho1, wo1 = _im2col(x_nhwc, 3, 3, 2, 1)
    h1 = conv_matmul_relu(p1, params["conv1_wf"], params["conv1_b"])
    h1 = h1.reshape(B, ho1, wo1, -1)
    p2, ho2, wo2 = _im2col(h1, 3, 3, 2, 1)

    # --- attention key-padding bias from input_lens (True = pad -> -1e9) ---
    # TODO(synk): torch.masked_select / data-dependent truncation by input_lens needs
    # static shapes in JAX; we assume all input_lens > 0 with max == max_len and feed
    # the lengths to the conformer attention as a key-padding mask (as torchaudio does).
    key_pad = jnp.arange(T)[None, :] >= input_lens[:, None]
    attn_bias = jnp.where(key_pad, -1e9, 0.0).astype(jnp.float32)

    # --- fused: conv2 + quantization + masking + fc + conformers + LSTM decoder ---
    ctx, q = _mega_forward(params, hp, p2, attn_bias, ho2 * wo2)
    target_context_vectors = q.reshape(B, T, q.shape[1] // T)
    return ctx, target_context_vectors


# ----------------------------------- main -------------------------------------
if __name__ == "__main__":
    hp = HParams()
    root = jax.random.PRNGKey(0)
    k_params, k_x = jax.random.split(root)
    params = init_params(k_params, hp)

    x = jax.random.normal(
        k_x, (hp.batch_size, hp.pretraining_insize, hp.in_height, hp.in_width),
        jnp.float32)
    input_lens = jnp.full((hp.batch_size,), hp.max_len, dtype=jnp.int32)

    fwd = jax.jit(pretraining_forward, static_argnums=1)
    ctx, tcv = fwd(params, hp, x, input_lens)
    jax.block_until_ready((ctx, tcv))

    assert ctx.shape == (hp.batch_size, hp.max_len, hp.decoder_nodes)
    assert tcv.shape == (hp.batch_size, hp.max_len, hp.target_context_vectors_size)
    assert bool(jnp.isfinite(ctx).all()) and bool(jnp.isfinite(tcv).all())
    print("KERNEL_OK")
</pallas_src>

<mosaic_0001>
module attributes {stable_mosaic.version = 11 : i64} {
  func.func @_conv_mm_kernel(%arg0: memref<128x36xf32, #tpu.memory_space<vmem>>, %arg1: memref<36x8xf32, #tpu.memory_space<vmem>>, %arg2: memref<1x8xf32, #tpu.memory_space<vmem>>, %arg3: memref<128x8xf32, #tpu.memory_space<vmem>>) attributes {dimension_semantics = [], scalar_prefetch = 0 : i64, scratch_operands = 0 : i64, tpu.core_type = #tpu.core_type<tc>} {
    %c0 = arith.constant 0 : index
    %c0_0 = arith.constant 0 : index
    %0 = vector.load %arg0[%c0, %c0_0] : memref<128x36xf32, #tpu.memory_space<vmem>>, vector<128x36xf32>
    %c0_1 = arith.constant 0 : index
    %c0_2 = arith.constant 0 : index
    %1 = vector.load %arg1[%c0_1, %c0_2] : memref<36x8xf32, #tpu.memory_space<vmem>>, vector<36x8xf32>
    %cst = arith.constant dense<0.000000e+00> : vector<128x8xf32>
    %2 = tpu.matmul %0, %1, %cst {dimension_numbers = #tpu.dot_dimension_numbers<[1], [0], [0], [1], [0, 0, 1, 1], [], []>} : vector<128x36xf32>, vector<36x8xf32>, vector<128x8xf32> -> vector<128x8xf32>
    %c0_3 = arith.constant 0 : index
    %c0_4 = arith.constant 0 : index
    %3 = vector.load %arg2[%c0_3, %c0_4] : memref<1x8xf32, #tpu.memory_space<vmem>>, vector<1x8xf32>
    %4 = vector.broadcast %3 : vector<1x8xf32> to vector<128x8xf32>
    %5 = arith.addf %2, %4 : vector<128x8xf32>
    %cst_5 = arith.constant 0.000000e+00 : f32
    %6 = vector.broadcast %cst_5 : f32 to vector<128x8xf32>
    %7 = arith.maximumf %5, %6 : vector<128x8xf32>
    %c0_6 = arith.constant 0 : index
    %c0_7 = arith.constant 0 : index
    %8 = vector.load %arg3[%c0_6, %c0_7] : memref<128x8xf32, #tpu.memory_space<vmem>>, vector<128x8xf32>
    tpu.vector_store %arg3[%c0_6, %c0_7], %7 {strides = array<i32>} : memref<128x8xf32, #tpu.memory_space<vmem>>, vector<128x8xf32>,
    return
  }
}

module attributes {stable_mosaic.version = 11 : i64} {
  func.func @kernel(%arg0: memref<32x72xf32, #tpu.memory_space<vmem>>, %arg1: memref<72x8xf32, #tpu.memory_space<vmem>>, %arg2: memref<1x8xf32, #tpu.memory_space<vmem>>, %arg3: memref<128x128xf32, #tpu.memory_space<vmem>>, %arg4: memref<1x128xf32, #tpu.memory_space<vmem>>, %arg5: memref<128x256xf32, #tpu.memory_space<vmem>>, %arg6: memref<1x256xf32, #tpu.memory_space<vmem>>, %arg7: memref<2x8xf32, #tpu.memory_space<vmem>>, %arg8: memref<1x32xf32, #tpu.memory_space<vmem>>, %arg9: memref<1x32xf32, #tpu.memory_space<vmem>>, %arg10: memref<32x64xf32, #tpu.memory_space<vmem>>, %arg11: memref<1x64xf32, #tpu.memory_space<vmem>>, %arg12: memref<64x32xf32, #tpu.memory_space<vmem>>, %arg13: memref<1x32xf32, #tpu.memory_space<vmem>>, %arg14: memref<1x32xf32, #tpu.memory_space<vmem>>, %arg15: memref<1x32xf32, #tpu.memory_space<vmem>>, %arg16: memref<32x96xf32, #tpu.memory_space<vmem>>, %arg17: memref<1x96xf32, #tpu.memory_space<vmem>>, %arg18: memref<32x32xf32, #tpu.memory_space<vmem>>, %arg19: memref<1x32xf32, #tpu.memory_space<vmem>>, %arg20: memref<1x32xf32, #tpu.memory_space<vmem>>, %arg21: memref<1x32xf32, #tpu.memory_space<vmem>>, %arg22: memref<32x64xf32, #tpu.memory_space<vmem>>, %arg23: memref<1x64xf32, #tpu.memory_space<vmem>>, %arg24: memref<7x32xf32, #tpu.memory_space<vmem>>, %arg25: memref<1x32xf32, #tpu.memory_space<vmem>>, %arg26: memref<1x32xf32, #tpu.memory_space<vmem>>, %arg27: memref<1x32xf32, #tpu.memory_space<vmem>>, %arg28: memref<32x32xf32, #tpu.memory_space<vmem>>, %arg29: memref<1x32xf32, #tpu.memory_space<vmem>>, %arg30: memref<1x32xf32, #tpu.memory_space<vmem>>, %arg31: memref<1x32xf32, #tpu.memory_space<vmem>>, %arg32: memref<32x64xf32, #tpu.memory_space<vmem>>, %arg33: memref<1x64xf32, #tpu.memory_space<vmem>>, %arg34: memref<64x32xf32, #tpu.memory_space<vmem>>, %arg35: memref<1x32xf32, #tpu.memory_space<vmem>>, %arg36: memref<1x32xf32, #tpu.memory_space<vmem>>, %arg37: memref<1x32xf32, #tpu.memory_space<vmem>>, %arg38: memref<1x32xf32, #tpu.memory_space<vmem>>, %arg39: memref<1x32xf32, #tpu.memory_space<vmem>>, %arg40: memref<32x64xf32, #tpu.memory_space<vmem>>, %arg41: memref<1x64xf32, #tpu.memory_space<vmem>>, %arg42: memref<64x32xf32, #tpu.memory_space<vmem>>, %arg43: memref<1x32xf32, #tpu.memory_space<vmem>>, %arg44: memref<1x32xf32, #tpu.memory_space<vmem>>, %arg45: memref<1x32xf32, #tpu.memory_space<vmem>>, %arg46: memref<32x96xf32, #tpu.memory_space<vmem>>, %arg47: memref<1x96xf32, #tpu.memory_space<vmem>>, %arg48: memref<32x32xf32, #tpu.memory_space<vmem>>, %arg49: memref<1x32xf32, #tpu.memory_space<vmem>>, %arg50: memref<1x32xf32, #tpu.memory_space<vmem>>, %arg51: memref<1x32xf32, #tpu.memory_space<vmem>>, %arg52: memref<32x64xf32, #tpu.memory_space<vmem>>, %arg53: memref<1x64xf32, #tpu.memory_space<vmem>>, %arg54: memref<7x32xf32, #tpu.memory_space<vmem>>, %arg55: memref<1x32xf32, #tpu.memory_space<vmem>>, %arg56: memref<1x32xf32, #tpu.memory_space<vmem>>, %arg57: memref<1x32xf32, #tpu.memory_space<vmem>>, %arg58: memref<32x32xf32, #tpu.memory_space<vmem>>, %arg59: memref<1x32xf32, #tpu.memory_space<vmem>>, %arg60: memref<1x32xf32, #tpu.memory_space<vmem>>, %arg61: memref<1x32xf32, #tpu.memory_space<vmem>>, %arg62: memref<32x64xf32, #tpu.memory_space<vmem>>, %arg63: memref<1x64xf32, #tpu.memory_space<vmem>>, %arg64: memref<64x32xf32, #tpu.memory_space<vmem>>, %arg65: memref<1x32xf32, #tpu.memory_space<vmem>>, %arg66: memref<1x32xf32, #tpu.memory_space<vmem>>, %arg67: memref<1x32xf32, #tpu.memory_space<vmem>>, %arg68: memref<32x128xf32, #tpu.memory_space<vmem>>, %arg69: memref<32x128xf32, #tpu.memory_space<vmem>>, %arg70: memref<1x128xf32, #tpu.memory_space<vmem>>, %arg71: memref<2x8x32xf32, #tpu.memory_space<vmem>>, %arg72: memref<2x128xf32, #tpu.memory_space<vmem>>, %arg73: memref<2x128xf32, #tpu.memory_space<vmem>>, %arg74: memref<16x32xf32, #tpu.memory_space<vmem>>, %arg75: memref<16x32xf32, #tpu.memory_space<vmem>>, %arg76: memref<16x32xf32, #tpu.memory_space<vmem>>, %arg77: memref<24x32xf32, #tpu.memory_space<vmem>>) attributes {dimension_semantics = [], scalar_prefetch = 0 : i64, scratch_operands = 5 : i64, tpu.core_type = #tpu.core_type<tc>} {
    %cst = arith.constant 0.000000e+00 : f32
    %0 = vector.broadcast %cst : f32 to vector<24x32xf32>
    %c0 = arith.constant 0 : index
    %c0_0 = arith.constant 0 : index
    %1 = vector.load %arg77[%c0, %c0_0] : memref<24x32xf32, #tpu.memory_space<vmem>>, vector<24x32xf32>
    tpu.vector_store %arg77[%c0, %c0_0], %0 {strides = array<i32>} : memref<24x32xf32, #tpu.memory_space<vmem>>, vector<24x32xf32>,
    %c0_1 = arith.constant 0 : index
    %c0_2 = arith.constant 0 : index
    %2 = vector.load %arg0[%c0_1, %c0_2] : memref<32x72xf32, #tpu.memory_space<vmem>>, vector<32x72xf32>
    %c0_3 = arith.constant 0 : index
    %c0_4 = arith.constant 0 : index
    %3 = vector.load %arg1[%c0_3, %c0_4] : memref<72x8xf32, #tpu.memory_space<vmem>>, vector<72x8xf32>
    %cst_5 = arith.constant dense<0.000000e+00> : vector<32x8xf32>
    %4 = tpu.matmul %2, %3, %cst_5 {dimension_numbers = #tpu.dot_dimension_numbers<[1], [0], [0], [1], [0, 0, 1, 1], [], []>} : vector<32x72xf32>, vector<72x8xf32>, vector<32x8xf32> -> vector<32x8xf32>
    %c0_6 = arith.constant 0 : index
    %c0_7 = arith.constant 0 : index
    %5 = vector.load %arg2[%c0_6, %c0_7] : memref<1x8xf32, #tpu.memory_space<vmem>>, vector<1x8xf32>
    %6 = vector.broadcast %5 : vector<1x8xf32> to vector<32x8xf32>
    %7 = arith.addf %4, %6 : vector<32x8xf32>
    %cst_8 = arith.constant 0.000000e+00 : f32
    %8 = vector.broadcast %cst_8 : f32 to vector<32x8xf32>
    %9 = arith.maximumf %7, %8 : vector<32x8xf32>
    %10 = vector.extract_strided_slice %9 {offsets = [0, 0], sizes = [1, 8], strides = [1, 1]} : vector<32x8xf32> to vector<1x8xf32>
    %c0_9 = arith.constant 0 : index
    %c0_10 = arith.constant 0 : index
    %11 = vector.load %arg73[%c0_9, %c0_10] : memref<2x128xf32, #tpu.memory_space<vmem>>, vector<1x8xf32>
    tpu.vector_store %arg73[%c0_9, %c0_10], %10 {strides = array<i32>} : memref<2x128xf32, #tpu.memory_space<vmem>>, vector<1x8xf32>,
    %12 = vector.extract_strided_slice %9 {offsets = [1, 0], sizes = [1, 8], strides = [1, 1]} : vector<32x8xf32> to vector<1x8xf32>
    %c0_11 = arith.constant 0 : index
    %c8 = arith.constant 8 : index
    %13 = vector.load %arg73[%c0_11, %c8] : memref<2x128xf32, #tpu.memory_space<vmem>>, vector<1x8xf32>
    tpu.vector_store %arg73[%c0_11, %c8], %12 {strides = array<i32>} : memref<2x128xf32, #tpu.memory_space<vmem>>, vector<1x8xf32>,
    %14 = vector.extract_strided_slice %9 {offsets = [2, 0], sizes = [1, 8], strides = [1, 1]} : vector<32x8xf32> to vector<1x8xf32>
    %c0_12 = arith.constant 0 : index
    %c16 = arith.constant 16 : index
    %15 = vector.load %arg73[%c0_12, %c16] : memref<2x128xf32, #tpu.memory_space<vmem>>, vector<1x8xf32>
    tpu.vector_store %arg73[%c0_12, %c16], %14 {strides = array<i32>} : memref<2x128xf32, #tpu.memory_space<vmem>>, vector<1x8xf32>,
    %16 = vector.extract_strided_slice %9 {offsets = [3, 0], sizes = [1, 8], strides = [1, 1]} : vector<32x8xf32> to vector<1x8xf32>
    %c0_13 = arith.constant 0 : index
    %c24 = arith.constant 24 : index
    %17 = vector.load %arg73[%c0_13, %c24] : memref<2x128xf32, #tpu.memory_space<vmem>>, vector<1x8xf32>
    tpu.vector_store %arg73[%c0_13, %c24], %16 {strides = array<i32>} : memref<2x128xf32, #tpu.memory_space<vmem>>, vector<1x8xf32>,
    %18 = vector.extract_strided_slice %9 {offsets = [4, 0], sizes = [1, 8], strides = [1, 1]} : vector<32x8xf32> to vector<1x8xf32>
    %c0_14 = arith.constant 0 : index
    %c32 = arith.constant 32 : index
    %19 = vector.load %arg73[%c0_14, %c32] : memref<2x128xf32, #tpu.memory_space<vmem>>, vector<1x8xf32>
    tpu.vector_store %arg73[%c0_14, %c32], %18 {strides = array<i32>} : memref<2x128xf32, #tpu.memory_space<vmem>>, vector<1x8xf32>,
    %20 = vector.extract_strided_slice %9 {offsets = [5, 0], sizes = [1, 8], strides = [1, 1]} : vector<32x8xf32> to vector<1x8xf32>
    %c0_15 = arith.constant 0 : index
    %c40 = arith.constant 40 : index
    %21 = vector.load %arg73[%c0_15, %c40] : memref<2x128xf32, #tpu.memory_space<vmem>>, vector<1x8xf32>
    tpu.vector_store %arg73[%c0_15, %c40], %20 {strides = array<i32>} : memref<2x128xf32, #tpu.memory_space<vmem>>, vector<1x8xf32>,
    %22 = vector.extract_strided_slice %9 {offsets = [6, 0], sizes = [1, 8], strides = [1, 1]} : vector<32x8xf32> to vector<1x8xf32>
    %c0_16 = arith.constant 0 : index
    %c48 = arith.constant 48 : index
    %23 = vector.load %arg73[%c0_16, %c48] : memref<2x128xf32, #tpu.memory_space<vmem>>, vector<1x8xf32>
    tpu.vector_store %arg73[%c0_16, %c48], %22 {strides = array<i32>} : memref<2x128xf32, #tpu.memory_space<vmem>>, vector<1x8xf32>,
    %24 = vector.extract_strided_slice %9 {offsets = [7, 0], sizes = [1, 8], strides = [1, 1]} : vector<32x8xf32> to vector<1x8xf32>
    %c0_17 = arith.constant 0 : index
    %c56 = arith.constant 56 : index
    %25 = vector.load %arg73[%c0_17, %c56] : memref<2x128xf32, #tpu.memory_space<vmem>>, vector<1x8xf32>
    tpu.vector_store %arg73[%c0_17, %c56], %24 {strides = array<i32>} : memref<2x128xf32, #tpu.memory_space<vmem>>, vector<1x8xf32>,
    %26 = vector.extract_strided_slice %9 {offsets = [8, 0], sizes = [1, 8], strides = [1, 1]} : vector<32x8xf32> to vector<1x8xf32>
    %c0_18 = arith.constant 0 : index
    %c64 = arith.constant 64 : index
    %27 = vector.load %arg73[%c0_18, %c64] : memref<2x128xf32, #tpu.memory_space<vmem>>, vector<1x8xf32>
    tpu.vector_store %arg73[%c0_18, %c64], %26 {strides = array<i32>} : memref<2x128xf32, #tpu.memory_space<vmem>>, vector<1x8xf32>,
    %28 = vector.extract_strided_slice %9 {offsets = [9, 0], sizes = [1, 8], strides = [1, 1]} : vector<32x8xf32> to vector<1x8xf32>
    %c0_19 = arith.constant 0 : index
    %c72 = arith.constant 72 : index
    %29 = vector.load %arg73[%c0_19, %c72] : memref<2x128xf32, #tpu.memory_space<vmem>>, vector<1x8xf32>
    tpu.vector_store %arg73[%c0_19, %c72], %28 {strides = array<i32>} : memref<2x128xf32, #tpu.memory_space<vmem>>, vector<1x8xf32>,
    %30 = vector.extract_strided_slice %9 {offsets = [10, 0], sizes = [1, 8], strides = [1, 1]} : vector<32x8xf32> to vector<1x8xf32>
    %c0_20 = arith.constant 0 : index
    %c80 = arith.constant 80 : index
    %31 = vector.load %arg73[%c0_20, %c80] : memref<2x128xf32, #tpu.memory_space<vmem>>, vector<1x8xf32>
    tpu.vector_store %arg73[%c0_20, %c80], %30 {strides = array<i32>} : memref<2x128xf32, #tpu.memory_space<vmem>>, vector<1x8xf32>,
    %32 = vector.extract_strided_slice %9 {offsets = [11, 0], sizes = [1, 8], strides = [1, 1]} : vector<32x8xf32> to vector<1x8xf32>
    %c0_21 = arith.constant 0 : index
    %c88 = arith.constant 88 : index
    %33 = vector.load %arg73[%c0_21, %c88] : memref<2x128xf32, #tpu.memory_space<vmem>>, vector<1x8xf32>
    tpu.vector_store %arg73[%c0_21, %c88], %32 {strides = array<i32>} : memref<2x128xf32, #tpu.memory_space<vmem>>, vector<1x8xf32>,
    %34 = vector.extract_strided_slice %9 {offsets = [12, 0], sizes = [1, 8], strides = [1, 1]} : vector<32x8xf32> to vector<1x8xf32>
    %c0_22 = arith.constant 0 : index
    %c96 = arith.constant 96 : index
    %35 = vector.load %arg73[%c0_22, %c96] : memref<2x128xf32, #tpu.memory_space<vmem>>, vector<1x8xf32>
    tpu.vector_store %arg73[%c0_22, %c96], %34 {strides = array<i32>} : memref<2x128xf32, #tpu.memory_space<vmem>>, vector<1x8xf32>,
    %36 = vector.extract_strided_slice %9 {offsets = [13, 0], sizes = [1, 8], strides = [1, 1]} : vector<32x8xf32> to vector<1x8xf32>
    %c0_23 = arith.constant 0 : index
    %c104 = arith.constant 104 : index
    %37 = vector.load %arg73[%c0_23, %c104] : memref<2x128xf32, #tpu.memory_space<vmem>>, vector<1x8xf32>
    tpu.vector_store %arg73[%c0_23, %c104], %36 {strides = array<i32>} : memref<2x128xf32, #tpu.memory_space<vmem>>, vector<1x8xf32>,
    %38 = vector.extract_strided_slice %9 {offsets = [14, 0], sizes = [1, 8], strides = [1, 1]} : vector<32x8xf32> to vector<1x8xf32>
    %c0_24 = arith.constant 0 : index
    %c112 = arith.constant 112 : index
    %39 = vector.load %arg73[%c0_24, %c112] : memref<2x128xf32, #tpu.memory_space<vmem>>, vector<1x8xf32>
    tpu.vector_store %arg73[%c0_24, %c112], %38 {strides = array<i32>} : memref<2x128xf32, #tpu.memory_space<vmem>>, vector<1x8xf32>,
    %40 = vector.extract_strided_slice %9 {offsets = [15, 0], sizes = [1, 8], strides = [1, 1]} : vector<32x8xf32> to vector<1x8xf32>
    %c0_25 = arith.constant 0 : index
    %c120 = arith.constant 120 : index
    %41 = vector.load %arg73[%c0_25, %c120] : memref<2x128xf32, #tpu.memory_space<vmem>>, vector<1x8xf32>
    tpu.vector_store %arg73[%c0_25, %c120], %40 {strides = array<i32>} : memref<2x128xf32, #tpu.memory_space<vmem>>, vector<1x8xf32>,
    %42 = vector.extract_strided_slice %9 {offsets = [16, 0], sizes = [1, 8], strides = [1, 1]} : vector<32x8xf32> to vector<1x8xf32>
    %c1 = arith.constant 1 : index
    %c0_26 = arith.constant 0 : index
    %43 = vector.load %arg73[%c1, %c0_26] : memref<2x128xf32, #tpu.memory_space<vmem>>, vector<1x8xf32>
    tpu.vector_store %arg73[%c1, %c0_26], %42 {strides = array<i32>} : memref<2x128xf32, #tpu.memory_space<vmem>>, vector<1x8xf32>,
    %44 = vector.extract_strided_slice %9 {offsets = [17, 0], sizes = [1, 8], strides = [1, 1]} : vector<32x8xf32> to vector<1x8xf32>
    %c1_27 = arith.constant 1 : index
    %c8_28 = arith.constant 8 : index
    %45 = vector.load %arg73[%c1_27, %c8_28] : memref<2x128xf32, #tpu.memory_space<vmem>>, vector<1x8xf32>
    tpu.vector_store %arg73[%c1_27, %c8_28], %44 {strides = array<i32>} : memref<2x128xf32, #tpu.memory_space<vmem>>, vector<1x8xf32>,
    %46 = vector.extract_strided_slice %9 {offsets = [18, 0], sizes = [1, 8], strides = [1, 1]} : vector<32x8xf32> to vector<1x8xf32>
    %c1_29 = arith.constant 1 : index
    %c16_30 = arith.constant 16 : index
    %47 = vector.load %arg73[%c1_29, %c16_30] : memref<2x128xf32, #tpu.memory_space<vmem>>, vector<1x8xf32>
    tpu.vector_store %arg73[%c1_29, %c16_30], %46 {strides = array<i32>} : memref<2x128xf32, #tpu.memory_space<vmem>>, vector<1x8xf32>,
    %48 = vector.extract_strided_slice %9 {offsets = [19, 0], sizes = [1, 8], strides = [1, 1]} : vector<32x8xf32> to vector<1x8xf32>
    %c1_31 = arith.constant 1 : index
    %c24_32 = arith.constant 24 : index
    %49 = vector.load %arg73[%c1_31, %c24_32] : memref<2x128xf32, #tpu.memory_space<vmem>>, vector<1x8xf32>
    tpu.vector_store %arg73[%c1_31, %c24_32], %48 {strides = array<i32>} : memref<2x128xf32, #tpu.memory_space<vmem>>, vector<1x8xf32>,
    %50 = vector.extract_strided_slice %9 {offsets = [20, 0], sizes = [1, 8], strides = [1, 1]} : vector<32x8xf32> to vector<1x8xf32>
    %c1_33 = arith.constant 1 : index
    %c32_34 = arith.constant 32 : index
    %51 = vector.load %arg73[%c1_33, %c32_34] : memref<2x128xf32, #tpu.memory_space<vmem>>, vector<1x8xf32>
    tpu.vector_store %arg73[%c1_33, %c32_34], %50 {strides = array<i32>} : memref<2x128xf32, #tpu.memory_space<vmem>>, vector<1x8xf32>,
    %52 = vector.extract_strided_slice %9 {offsets = [21, 0], sizes = [1, 8], strides = [1, 1]} : vector<32x8xf32> to vector<1x8xf32>
    %c1_35 = arith.constant 1 : index
    %c40_36 = arith.constant 40 : index
    %53 = vector.load %arg73[%c1_35, %c40_36] : memref<2x128xf32, #tpu.memory_space<vmem>>, vector<1x8xf32>
    tpu.vector_store %arg73[%c1_35, %c40_36], %52 {strides = array<i32>} : memref<2x128xf32, #tpu.memory_space<vmem>>, vector<1x8xf32>,
    %54 = vector.extract_strided_slice %9 {offsets = [22, 0], sizes = [1, 8], strides = [1, 1]} : vector<32x8xf32> to vector<1x8xf32>
    %c1_37 = arith.constant 1 : index
    %c48_38 = arith.constant 48 : index
    %55 = vector.load %arg73[%c1_37, %c48_38] : memref<2x128xf32, #tpu.memory_space<vmem>>, vector<1x8xf32>
    tpu.vector_store %arg73[%c1_37, %c48_38], %54 {strides = array<i32>} : memref<2x128xf32, #tpu.memory_space<vmem>>, vector<1x8xf32>,
    %56 = vector.extract_strided_slice %9 {offsets = [23, 0], sizes = [1, 8], strides = [1, 1]} : vector<32x8xf32> to vector<1x8xf32>
    %c1_39 = arith.constant 1 : index
    %c56_40 = arith.constant 56 : index
    %57 = vector.load %arg73[%c1_39, %c56_40] : memref<2x128xf32, #tpu.memory_space<vmem>>, vector<1x8xf32>
    tpu.vector_store %arg73[%c1_39, %c56_40], %56 {strides = array<i32>} : memref<2x128xf32, #tpu.memory_space<vmem>>, vector<1x8xf32>,
    %58 = vector.extract_strided_slice %9 {offsets = [24, 0], sizes = [1, 8], strides = [1, 1]} : vector<32x8xf32> to vector<1x8xf32>
    %c1_41 = arith.constant 1 : index
    %c64_42 = arith.constant 64 : index
    %59 = vector.load %arg73[%c1_41, %c64_42] : memref<2x128xf32, #tpu.memory_space<vmem>>, vector<1x8xf32>
    tpu.vector_store %arg73[%c1_41, %c64_42], %58 {strides = array<i32>} : memref<2x128xf32, #tpu.memory_space<vmem>>, vector<1x8xf32>,
    %60 = vector.extract_strided_slice %9 {offsets = [25, 0], sizes = [1, 8], strides = [1, 1]} : vector<32x8xf32> to vector<1x8xf32>
    %c1_43 = arith.constant 1 : index
    %c72_44 = arith.constant 72 : index
    %61 = vector.load %arg73[%c1_43, %c72_44] : memref<2x128xf32, #tpu.memory_space<vmem>>, vector<1x8xf32>
    tpu.vector_store %arg73[%c1_43, %c72_44], %60 {strides = array<i32>} : memref<2x128xf32, #tpu.memory_space<vmem>>, vector<1x8xf32>,
    %62 = vector.extract_strided_slice %9 {offsets = [26, 0], sizes = [1, 8], strides = [1, 1]} : vector<32x8xf32> to vector<1x8xf32>
    %c1_45 = arith.constant 1 : index
    %c80_46 = arith.constant 80 : index
    %63 = vector.load %arg73[%c1_45, %c80_46] : memref<2x128xf32, #tpu.memory_space<vmem>>, vector<1x8xf32>
    tpu.vector_store %arg73[%c1_45, %c80_46], %62 {strides = array<i32>} : memref<2x128xf32, #tpu.memory_space<vmem>>, vector<1x8xf32>,
    %64 = vector.extract_strided_slice %9 {offsets = [27, 0], sizes = [1, 8], strides = [1, 1]} : vector<32x8xf32> to vector<1x8xf32>
    %c1_47 = arith.constant 1 : index
    %c88_48 = arith.constant 88 : index
    %65 = vector.load %arg73[%c1_47, %c88_48] : memref<2x128xf32, #tpu.memory_space<vmem>>, vector<1x8xf32>
    tpu.vector_store %arg73[%c1_47, %c88_48], %64 {strides = array<i32>} : memref<2x128xf32, #tpu.memory_space<vmem>>, vector<1x8xf32>,
    %66 = vector.extract_strided_slice %9 {offsets = [28, 0], sizes = [1, 8], strides = [1, 1]} : vector<32x8xf32> to vector<1x8xf32>
    %c1_49 = arith.constant 1 : index
    %c96_50 = arith.constant 96 : index
    %67 = vector.load %arg73[%c1_49, %c96_50] : memref<2x128xf32, #tpu.memory_space<vmem>>, vector<1x8xf32>
    tpu.vector_store %arg73[%c1_49, %c96_50], %66 {strides = array<i32>} : memref<2x128xf32, #tpu.memory_space<vmem>>, vector<1x8xf32>,
    %68 = vector.extract_strided_slice %9 {offsets = [29, 0], sizes = [1, 8], strides = [1, 1]} : vector<32x8xf32> to vector<1x8xf32>
    %c1_51 = arith.constant 1 : index
    %c104_52 = arith.constant 104 : index
    %69 = vector.load %arg73[%c1_51, %c104_52] : memref<2x128xf32, #tpu.memory_space<vmem>>, vector<1x8xf32>
    tpu.vector_store %arg73[%c1_51, %c104_52], %68 {strides = array<i32>} : memref<2x128xf32, #tpu.memory_space<vmem>>, vector<1x8xf32>,
    %70 = vector.extract_strided_slice %9 {offsets = [30, 0], sizes = [1, 8], strides = [1, 1]} : vector<32x8xf32> to vector<1x8xf32>
    %c1_53 = arith.constant 1 : index
    %c112_54 = arith.constant 112 : index
    %71 = vector.load %arg73[%c1_53, %c112_54] : memref<2x128xf32, #tpu.memory_space<vmem>>, vector<1x8xf32>
    tpu.vector_store %arg73[%c1_53, %c112_54], %70 {strides = array<i32>} : memref<2x128xf32, #tpu.memory_space<vmem>>, vector<1x8xf32>,
    %72 = vector.extract_strided_slice %9 {offsets = [31, 0], sizes = [1, 8], strides = [1, 1]} : vector<32x8xf32> to vector<1x8xf32>
    %c1_55 = arith.constant 1 : index
    %c120_56 = arith.constant 120 : index
    %73 = vector.load %arg73[%c1_55, %c120_56] : memref<2x128xf32, #tpu.memory_space<vmem>>, vector<1x8xf32>
    tpu.vector_store %arg73[%c1_55, %c120_56], %72 {strides = array<i32>} : memref<2x128xf32, #tpu.memory_space<vmem>>, vector<1x8xf32>,
    %c0_57 = arith.constant 0 : index
    %c0_58 = arith.constant 0 : index
    %74 = vector.load %arg73[%c0_57, %c0_58] : memref<2x128xf32, #tpu.memory_space<vmem>>, vector<2x128xf32>
    %c0_59 = arith.constant 0 : index
    %c0_60 = arith.constant 0 : index
    %75 = vector.load %arg3[%c0_59, %c0_60] : memref<128x128xf32, #tpu.memory_space<vmem>>, vector<128x128xf32>
    %cst_61 = arith.constant dense<0.000000e+00> : vector<2x128xf32>
    %76 = tpu.matmul %74, %75, %cst_61 {dimension_numbers = #tpu.dot_dimension_numbers<[1], [0], [0], [1], [0, 0, 1, 1], [], []>} : vector<2x128xf32>, vector<128x128xf32>, vector<2x128xf32> -> vector<2x128xf32>
    %c0_62 = arith.constant 0 : index
    %c0_63 = arith.constant 0 : index
    %77 = vector.load %arg4[%c0_62, %c0_63] : memref<1x128xf32, #tpu.memory_space<vmem>>, vector<1x128xf32>
    %78 = vector.broadcast %77 : vector<1x128xf32> to vector<2x128xf32>
    %79 = arith.addf %76, %78 : vector<2x128xf32>
    %c0_64 = arith.constant 0 : index
    %c0_65 = arith.constant 0 : index
    %80 = vector.load %arg72[%c0_64, %c0_65] : memref<2x128xf32, #tpu.memory_space<vmem>>, vector<2x128xf32>
    tpu.vector_store %arg72[%c0_64, %c0_65], %79 {strides = array<i32>} : memref<2x128xf32, #tpu.memory_space<vmem>>, vector<2x128xf32>,
    %cst_66 = arith.constant 5.000000e-01 : f32
    %81 = vector.broadcast %cst_66 : f32 to vector<2x128xf32>
    %82 = arith.cmpf oge, %74, %81 : vector<2x128xf32>
    %cst_67 = arith.constant 0.000000e+00 : f32
    %83 = vector.broadcast %cst_67 : f32 to vector<2x128xf32>
    %84 = arith.select %82, %83, %74 : vector<2x128xi1>, vector<2x128xf32>
    %c0_68 = arith.constant 0 : index
    %c0_69 = arith.constant 0 : index
    %85 = vector.load %arg5[%c0_68, %c0_69] : memref<128x256xf32, #tpu.memory_space<vmem>>, vector<128x256xf32>
    %cst_70 = arith.constant dense<0.000000e+00> : vector<2x256xf32>
    %86 = tpu.matmul %84, %85, %cst_70 {dimension_numbers = #tpu.dot_dimension_numbers<[1], [0], [0], [1], [0, 0, 1, 1], [], []>} : vector<2x128xf32>, vector<128x256xf32>, vector<2x256xf32> -> vector<2x256xf32>
    %c0_71 = arith.constant 0 : index
    %c0_72 = arith.constant 0 : index
    %87 = vector.load %arg6[%c0_71, %c0_72] : memref<1x256xf32, #tpu.memory_space<vmem>>, vector<1x256xf32>
    %88 = vector.broadcast %87 : vector<1x256xf32> to vector<2x256xf32>
    %89 = arith.addf %86, %88 : vector<2x256xf32>
    %90 = vector.extract_strided_slice %89 {offsets = [0, 0], sizes = [1, 32], strides = [1, 1]} : vector<2x256xf32> to vector<1x32xf32>
    %c0_73 = arith.constant 0 : index
    %c0_74 = arith.constant 0 : index
    %91 = vector.load %arg74[%c0_73, %c0_74] : memref<16x32xf32, #tpu.memory_space<vmem>>, vector<1x32xf32>
    tpu.vector_store %arg74[%c0_73, %c0_74], %90 {strides = array<i32>} : memref<16x32xf32, #tpu.memory_space<vmem>>, vector<1x32xf32>,
    %92 = vector.extract_strided_slice %89 {offsets = [0, 32], sizes = [1, 32], strides = [1, 1]} : vector<2x256xf32> to vector<1x32xf32>
    %c1_75 = arith.constant 1 : index
    %c0_76 = arith.constant 0 : index
    %93 = vector.load %arg74[%c1_75, %c0_76] : memref<16x32xf32, #tpu.memory_space<vmem>>, vector<1x32xf32>
    tpu.vector_store %arg74[%c1_75, %c0_76], %92 {strides = array<i32>} : memref<16x32xf32, #tpu.memory_space<vmem>>, vector<1x32xf32>,
    %94 = vector.extract_strided_slice %89 {offsets = [0, 64], sizes = [1, 32], strides = [1, 1]} : vector<2x256xf32> to vector<1x32xf32>
    %c2 = arith.constant 2 : index
    %c0_77 = arith.constant 0 : index
    %95 = vector.load %arg74[%c2, %c0_77] : memref<16x32xf32, #tpu.memory_space<vmem>>, vector<1x32xf32>
    tpu.vector_store %arg74[%c2, %c0_77], %94 {strides = array<i32>} : memref<16x32xf32, #tpu.memory_space<vmem>>, vector<1x32xf32>,
    %96 = vector.extract_strided_slice %89 {offsets = [0, 96], sizes = [1, 32], strides = [1, 1]} : vector<2x256xf32> to vector<1x32xf32>
    %c3 = arith.constant 3 : index
    %c0_78 = arith.constant 0 : index
    %97 = vector.load %arg74[%c3, %c0_78] : memref<16x32xf32, #tpu.memory_space<vmem>>, vector<1x32xf32>
    tpu.vector_store %arg74[%c3, %c0_78], %96 {strides = array<i32>} : memref<16x32xf32, #tpu.memory_space<vmem>>, vector<1x32xf32>,
    %98 = vector.extract_strided_slice %89 {offsets = [0, 128], sizes = [1, 32], strides = [1, 1]} : vector<2x256xf32> to vector<1x32xf32>
    %c4 = arith.constant 4 : index
    %c0_79 = arith.constant 0 : index
    %99 = vector.load %arg74[%c4, %c0_79] : memref<16x32xf32, #tpu.memory_space<vmem>>, vector<1x32xf32>
    tpu.vector_store %arg74[%c4, %c0_79], %98 {strides = array<i32>} : memref<16x32xf32, #tpu.memory_space<vmem>>, vector<1x32xf32>,
    %100 = vector.extract_strided_slice %89 {offsets = [0, 160], sizes = [1, 32], strides = [1, 1]} : vector<2x256xf32> to vector<1x32xf32>
    %c5 = arith.constant 5 : index
    %c0_80 = arith.constant 0 : index
    %101 = vector.load %arg74[%c5, %c0_80] : memref<16x32xf32, #tpu.memory_space<vmem>>, vector<1x32xf32>
    tpu.vector_store %arg74[%c5, %c0_80], %100 {strides = array<i32>} : memref<16x32xf32, #tpu.memory_space<vmem>>, vector<1x32xf32>,
    %102 = vector.extract_strided_slice %89 {offsets = [0, 192], sizes = [1, 32], strides = [1, 1]} : vector<2x256xf32> to vector<1x32xf32>
    %c6 = arith.constant 6 : index
    %c0_81 = arith.constant 0 : index
    %103 = vector.load %arg74[%c6, %c0_81] : memref<16x32xf32, #tpu.memory_space<vmem>>, vector<1x32xf32>
    tpu.vector_store %arg74[%c6, %c0_81], %102 {strides = array<i32>} : memref<16x32xf32, #tpu.memory_space<vmem>>, vector<1x32xf32>,
    %104 = vector.extract_strided_slice %89 {offsets = [0, 224], sizes = [1, 32], strides = [1, 1]} : vector<2x256xf32> to vector<1x32xf32>
    %c7 = arith.constant 7 : index
    %c0_82 = arith.constant 0 : index
    %105 = vector.load %arg74[%c7, %c0_82] : memref<16x32xf32, #tpu.memory_space<vmem>>, vector<1x32xf32>
    tpu.vector_store %arg74[%c7, %c0_82], %104 {strides = array<i32>} : memref<16x32xf32, #tpu.memory_space<vmem>>, vector<1x32xf32>,
    %106 = vector.extract_strided_slice %89 {offsets = [1, 0], sizes = [1, 32], strides = [1, 1]} : vector<2x256xf32> to vector<1x32xf32>
    %c8_83 = arith.constant 8 : index
    %c0_84 = arith.constant 0 : index
    %107 = vector.load %arg74[%c8_83, %c0_84] : memref<16x32xf32, #tpu.memory_space<vmem>>, vector<1x32xf32>
    tpu.vector_store %arg74[%c8_83, %c0_84], %106 {strides = array<i32>} : memref<16x32xf32, #tpu.memory_space<vmem>>, vector<1x32xf32>,
    %108 = vector.extract_strided_slice %89 {offsets = [1, 32], sizes = [1, 32], strides = [1, 1]} : vector<2x256xf32> to vector<1x32xf32>
    %c9 = arith.constant 9 : index
    %c0_85 = arith.constant 0 : index
    %109 = vector.load %arg74[%c9, %c0_85] : memref<16x32xf32, #tpu.memory_space<vmem>>, vector<1x32xf32>
    tpu.vector_store %arg74[%c9, %c0_85], %108 {strides = array<i32>} : memref<16x32xf32, #tpu.memory_space<vmem>>, vector<1x32xf32>,
    %110 = vector.extract_strided_slice %89 {offsets = [1, 64], sizes = [1, 32], strides = [1, 1]} : vector<2x256xf32> to vector<1x32xf32>
    %c10 = arith.constant 10 : index
    %c0_86 = arith.constant 0 : index
    %111 = vector.load %arg74[%c10, %c0_86] : memref<16x32xf32, #tpu.memory_space<vmem>>, vector<1x32xf32>
    tpu.vector_store %arg74[%c10, %c0_86], %110 {strides = array<i32>} : memref<16x32xf32, #tpu.memory_space<vmem>>, vector<1x32xf32>,
    %112 = vector.extract_strided_slice %89 {offsets = [1, 96], sizes = [1, 32], strides = [1, 1]} : vector<2x256xf32> to vector<1x32xf32>
    %c11 = arith.constant 11 : index
    %c0_87 = arith.constant 0 : index
    %113 = vector.load %arg74[%c11, %c0_87] : memref<16x32xf32, #tpu.memory_space<vmem>>, vector<1x32xf32>
    tpu.vector_store %arg74[%c11, %c0_87], %112 {strides = array<i32>} : memref<16x32xf32, #tpu.memory_space<vmem>>, vector<1x32xf32>,
    %114 = vector.extract_strided_slice %89 {offsets = [1, 128], sizes = [1, 32], strides = [1, 1]} : vector<2x256xf32> to vector<1x32xf32>
    %c12 = arith.constant 12 : index
    %c0_88 = arith.constant 0 : index
    %115 = vector.load %arg74[%c12, %c0_88] : memref<16x32xf32, #tpu.memory_space<vmem>>, vector<1x32xf32>
    tpu.vector_store %arg74[%c12, %c0_88], %114 {strides = array<i32>} : memref<16x32xf32, #tpu.memory_space<vmem>>, vector<1x32xf32>,
    %116 = vector.extract_strided_slice %89 {offsets = [1, 160], sizes = [1, 32], strides = [1, 1]} : vector<2x256xf32> to vector<1x32xf32>
    %c13 = arith.constant 13 : index
    %c0_89 = arith.constant 0 : index
    %117 = vector.load %arg74[%c13, %c0_89] : memref<16x32xf32, #tpu.memory_space<vmem>>, vector<1x32xf32>
    tpu.vector_store %arg74[%c13, %c0_89], %116 {strides = array<i32>} : memref<16x32xf32, #tpu.memory_space<vmem>>, vector<1x32xf32>,
    %118 = vector.extract_strided_slice %89 {offsets = [1, 192], sizes = [1, 32], strides = [1, 1]} : vector<2x256xf32> to vector<1x32xf32>
    %c14 = arith.constant 14 : index
    %c0_90 = arith.constant 0 : index
    %119 = vector.load %arg74[%c14, %c0_90] : memref<16x32xf32, #tpu.memory_space<vmem>>, vector<1x32xf32>
    tpu.vector_store %arg74[%c14, %c0_90], %118 {strides = array<i32>} : memref<16x32xf32, #tpu.memory_space<vmem>>, vector<1x32xf32>,
    %120 = vector.extract_strided_slice %89 {offsets = [1, 224], sizes = [1, 32], strides = [1, 1]} : vector<2x256xf32> to vector<1x32xf32>
    %c15 = arith.constant 15 : index
    %c0_91 = arith.constant 0 : index
    %121 = vector.load %arg74[%c15, %c0_91] : memref<16x32xf32, #tpu.memory_space<vmem>>, vector<1x32xf32>
    tpu.vector_store %arg74[%c15, %c0_91], %120 {strides = array<i32>} : memref<16x32xf32, #tpu.memory_space<vmem>>, vector<1x32xf32>,
    %c0_92 = arith.constant 0 : index
    %c0_93 = arith.constant 0 : index
    %122 = vector.load %arg74[%c0_92, %c0_93] : memref<16x32xf32, #tpu.memory_space<vmem>>, vector<16x32xf32>
    %c0_94 = arith.constant 0 : index
    %c0_95 = arith.constant 0 : index
    %123 = vector.load %arg8[%c0_94, %c0_95] : memref<1x32xf32, #tpu.memory_space<vmem>>, vector<1x32xf32>
    %c0_96 = arith.constant 0 : index
    %c0_97 = arith.constant 0 : index
    %124 = vector.load %arg9[%c0_96, %c0_97] : memref<1x32xf32, #tpu.memory_space<vmem>>, vector<1x32xf32>
    %cst_98 = arith.constant dense<0.000000e+00> : vector<16xf32>
    %125 = vector.multi_reduction <add>, %122, %cst_98 [1] : vector<16x32xf32> to vector<16xf32>
    %126 = vector.shape_cast %125 : vector<16xf32> to vector<16x1xf32>
    %cst_99 = arith.constant 3.200000e+01 : f32
    %127 = vector.broadcast %cst_99 : f32 to vector<16x1xf32>
    %128 = arith.divf %126, %127 : vector<16x1xf32>
    %129 = vector.broadcast %128 : vector<16x1xf32> to vector<16x32xf32>
    %130 = arith.subf %122, %129 : vector<16x32xf32>
    %131 = arith.mulf %130, %130 : vector<16x32xf32>
    %cst_100 = arith.constant dense<0.000000e+00> : vector<16xf32>
    %132 = vector.multi_reduction <add>, %131, %cst_100 [1] : vector<16x32xf32> to vector<16xf32>
    %133 = vector.shape_cast %132 : vector<16xf32> to vector<16x1xf32>
    %cst_101 = arith.constant 3.200000e+01 : f32
    %134 = vector.broadcast %cst_101 : f32 to vector<16x1xf32>
    %135 = arith.divf %133, %134 : vector<16x1xf32>
    %136 = vector.broadcast %128 : vector<16x1xf32> to vector<16x32xf32>
    %137 = arith.subf %122, %136 : vector<16x32xf32>
    %cst_102 = arith.constant 9.99999974E-6 : f32
    %138 = vector.broadcast %cst_102 : f32 to vector<16x1xf32>
    %139 = arith.addf %135, %138 : vector<16x1xf32>
    %140 = math.rsqrt %139 : vector<16x1xf32>
    %141 = vector.broadcast %140 : vector<16x1xf32> to vector<16x32xf32>
    %142 = arith.mulf %137, %141 : vector<16x32xf32>
    %143 = vector.broadcast %123 : vector<1x32xf32> to vector<16x32xf32>
    %144 = arith.mulf %142, %143 : vector<16x32xf32>
    %145 = vector.broadcast %124 : vector<1x32xf32> to vector<16x32xf32>
    %146 = arith.addf %144, %145 : vector<16x32xf32>
    %c0_103 = arith.constant 0 : index
    %c0_104 = arith.constant 0 : index
    %147 = vector.load %arg10[%c0_103, %c0_104] : memref<32x64xf32, #tpu.memory_space<vmem>>, vector<32x64xf32>
    %cst_105 = arith.constant dense<0.000000e+00> : vector<16x64xf32>
    %148 = tpu.matmul %146, %147, %cst_105 {dimension_numbers = #tpu.dot_dimension_numbers<[1], [0], [0], [1], [0, 0, 1, 1], [], []>} : vector<16x32xf32>, vector<32x64xf32>, vector<16x64xf32> -> vector<16x64xf32>
    %c0_106 = arith.constant 0 : index
    %c0_107 = arith.constant 0 : index
    %149 = vector.load %arg11[%c0_106, %c0_107] : memref<1x64xf32, #tpu.memory_space<vmem>>, vector<1x64xf32>
    %150 = vector.broadcast %149 : vector<1x64xf32> to vector<16x64xf32>
    %151 = arith.addf %148, %150 : vector<16x64xf32>
    %152 = arith.negf %151 : vector<16x64xf32>
    %153 = math.exp %152 : vector<16x64xf32>
    %cst_108 = arith.constant 1.000000e+00 : f32
    %154 = vector.broadcast %cst_108 : f32 to vector<16x64xf32>
    %155 = arith.addf %154, %153 : vector<16x64xf32>
    %156 = arith.divf %154, %155 : vector<16x64xf32>
    %157 = arith.mulf %151, %156 : vector<16x64xf32>
    %c0_109 = arith.constant 0 : index
    %c0_110 = arith.constant 0 : index
    %158 = vector.load %arg12[%c0_109, %c0_110] : memref<64x32xf32, #tpu.memory_space<vmem>>, vector<64x32xf32>
    %cst_111 = arith.constant dense<0.000000e+00> : vector<16x32xf32>
    %159 = tpu.matmul %157, %158, %cst_111 {dimension_numbers = #tpu.dot_dimension_numbers<[1], [0], [0], [1], [0, 0, 1, 1], [], []>} : vector<16x64xf32>, vector<64x32xf32>, vector<16x32xf32> -> vector<16x32xf32>
    %c0_112 = arith.constant 0 : index
    %c0_113 = arith.constant 0 : index
    %160 = vector.load %arg13[%c0_112, %c0_113] : memref<1x32xf32, #tpu.memory_space<vmem>>, vector<1x32xf32>
    %161 = vector.broadcast %160 : vector<1x32xf32> to vector<16x32xf32>
    %162 = arith.addf %159, %161 : vector<16x32xf32>
    %cst_114 = arith.constant 5.000000e-01 : f32
    %163 = vector.broadcast %cst_114 : f32 to vector<16x32xf32>
    %164 = arith.mulf %163, %162 : vector<16x32xf32>
    %165 = arith.addf %122, %164 : vector<16x32xf32>
    %c0_115 = arith.constant 0 : index
    %c0_116 = arith.constant 0 : index
    %166 = vector.load %arg14[%c0_115, %c0_116] : memref<1x32xf32, #tpu.memory_space<vmem>>, vector<1x32xf32>
    %c0_117 = arith.constant 0 : index
    %c0_118 = arith.constant 0 : index
    %167 = vector.load %arg15[%c0_117, %c0_118] : memref<1x32xf32, #tpu.memory_space<vmem>>, vector<1x32xf32>
    %cst_119 = arith.constant dense<0.000000e+00> : vector<16xf32>
    %168 = vector.multi_reduction <add>, %165, %cst_119 [1] : vector<16x32xf32> to vector<16xf32>
    %169 = vector.shape_cast %168 : vector<16xf32> to vector<16x1xf32>
    %cst_120 = arith.constant 3.200000e+01 : f32
    %170 = vector.broadcast %cst_120 : f32 to vector<16x1xf32>
    %171 = arith.divf %169, %170 : vector<16x1xf32>
    %172 = vector.broadcast %171 : vector<16x1xf32> to vector<16x32xf32>
    %173 = arith.subf %165, %172 : vector<16x32xf32>
    %174 = arith.mulf %173, %173 : vector<16x32xf32>
    %cst_121 = arith.constant dense<0.000000e+00> : vector<16xf32>
    %175 = vector.multi_reduction <add>, %174, %cst_121 [1] : vector<16x32xf32> to vector<16xf32>
    %176 = vector.shape_cast %175 : vector<16xf32> to vector<16x1xf32>
    %cst_122 = arith.constant 3.200000e+01 : f32
    %177 = vector.broadcast %cst_122 : f32 to vector<16x1xf32>
    %178 = arith.divf %176, %177 : vector<16x1xf32>
    %179 = vector.broadcast %171 : vector<16x1xf32> to vector<16x32xf32>
    %180 = arith.subf %165, %179 : vector<16x32xf32>
    %cst_123 = arith.constant 9.99999974E-6 : f32
    %181 = vector.broadcast %cst_123 : f32 to vector<16x1xf32>
    %182 = arith.addf %178, %181 : vector<16x1xf32>
    %183 = math.rsqrt %182 : vector<16x1xf32>
    %184 = vector.broadcast %183 : vector<16x1xf32> to vector<16x32xf32>
    %185 = arith.mulf %180, %184 : vector<16x32xf32>
    %186 = vector.broadcast %166 : vector<1x32xf32> to vector<16x32xf32>
    %187 = arith.mulf %185, %186 : vector<16x32xf32>
    %188 = vector.broadcast %167 : vector<1x32xf32> to vector<16x32xf32>
    %189 = arith.addf %187, %188 : vector<16x32xf32>
    %c0_124 = arith.constant 0 : index
    %c0_125 = arith.constant 0 : index
    %190 = vector.load %arg16[%c0_124, %c0_125] : memref<32x96xf32, #tpu.memory_space<vmem>>, vector<32x96xf32>
    %cst_126 = arith.constant dense<0.000000e+00> : vector<16x96xf32>
    %191 = tpu.matmul %189, %190, %cst_126 {dimension_numbers = #tpu.dot_dimension_numbers<[1], [0], [0], [1], [0, 0, 1, 1], [], []>} : vector<16x32xf32>, vector<32x96xf32>, vector<16x96xf32> -> vector<16x96xf32>
    %c0_127 = arith.constant 0 : index
    %c0_128 = arith.constant 0 : index
    %192 = vector.load %arg17[%c0_127, %c0_128] : memref<1x96xf32, #tpu.memory_space<vmem>>, vector<1x96xf32>
    %193 = vector.broadcast %192 : vector<1x96xf32> to vector<16x96xf32>
    %194 = arith.addf %191, %193 : vector<16x96xf32>
    %c0_129 = arith.constant 0 : index
    %c0_130 = arith.constant 0 : index
    %195 = vector.load %arg7[%c0_129, %c0_130] : memref<2x8xf32, #tpu.memory_space<vmem>>, vector<1x8xf32>
    %196 = vector.extract_strided_slice %194 {offsets = [0, 0], sizes = [8, 8], strides = [1, 1]} : vector<16x96xf32> to vector<8x8xf32>
    %cst_131 = arith.constant 0.353553385 : f32
    %197 = vector.broadcast %cst_131 : f32 to vector<8x8xf32>
    %198 = arith.mulf %196, %197 : vector<8x8xf32>
    %199 = vector.extract_strided_slice %194 {offsets = [0, 32], sizes = [8, 8], strides = [1, 1]} : vector<16x96xf32> to vector<8x8xf32>
    %200 = vector.extract_strided_slice %194 {offsets = [0, 64], sizes = [8, 8], strides = [1, 1]} : vector<16x96xf32> to vector<8x8xf32>
    "tpu.trace_start"() <{level = 10 : i32, message = "td,sd->ts"}> : () -> ()
    %cst_132 = arith.constant dense<0.000000e+00> : vector<8x8xf32>
    %201 = tpu.matmul %198, %199, %cst_132 {dimension_numbers = #tpu.dot_dimension_numbers<[1], [1], [0], [0], [0, 0, 1, 0], [], []>} : vector<8x8xf32>, vector<8x8xf32>, vector<8x8xf32> -> vector<8x8xf32>
    "tpu.trace_stop"() : () -> ()
    %202 = vector.broadcast %195 : vector<1x8xf32> to vector<8x8xf32>
    %203 = arith.addf %201, %202 : vector<8x8xf32>
    %cst_133 = arith.constant dense<0xFF800000> : vector<8xf32>
    %204 = vector.multi_reduction <maximumf>, %203, %cst_133 [1] : vector<8x8xf32> to vector<8xf32>
    %205 = vector.shape_cast %204 : vector<8xf32> to vector<8x1xf32>
    %206 = vector.broadcast %205 : vector<8x1xf32> to vector<8x8xf32>
    %207 = arith.subf %203, %206 : vector<8x8xf32>
    %208 = math.exp %207 : vector<8x8xf32>
    %cst_134 = arith.constant dense<0.000000e+00> : vector<8xf32>
    %209 = vector.multi_reduction <add>, %208, %cst_134 [1] : vector<8x8xf32> to vector<8xf32>
    %210 = vector.shape_cast %209 : vector<8xf32> to vector<8x1xf32>
    %211 = tpu.reciprocal %210 {approx = true} : vector<8x1xf32> -> vector<8x1xf32>
    %212 = vector.broadcast %211 : vector<8x1xf32> to vector<8x8xf32>
    %213 = arith.mulf %208, %212 : vector<8x8xf32>
    %cst_135 = arith.constant dense<0.000000e+00> : vector<8x8xf32>
    %214 = tpu.matmul %213, %200, %cst_135 {dimension_numbers = #tpu.dot_dimension_numbers<[1], [0], [0], [1], [0, 0, 1, 1], [], []>} : vector<8x8xf32>, vector<8x8xf32>, vector<8x8xf32> -> vector<8x8xf32>
    %c0_136 = arith.constant 0 : index
    %c0_137 = arith.constant 0 : index
    %215 = vector.load %arg75[%c0_136, %c0_137] : memref<16x32xf32, #tpu.memory_space<vmem>>, vector<8x8xf32>
    tpu.vector_store %arg75[%c0_136, %c0_137], %214 {strides = array<i32>} : memref<16x32xf32, #tpu.memory_space<vmem>>, vector<8x8xf32>,
    %216 = vector.extract_strided_slice %194 {offsets = [0, 8], sizes = [8, 8], strides = [1, 1]} : vector<16x96xf32> to vector<8x8xf32>
    %cst_138 = arith.constant 0.353553385 : f32
    %217 = vector.broadcast %cst_138 : f32 to vector<8x8xf32>
    %218 = arith.mulf %216, %217 : vector<8x8xf32>
    %219 = vector.extract_strided_slice %194 {offsets = [0, 40], sizes = [8, 8], strides = [1, 1]} : vector<16x96xf32> to vector<8x8xf32>
    %220 = vector.extract_strided_slice %194 {offsets = [0, 72], sizes = [8, 8], strides = [1, 1]} : vector<16x96xf32> to vector<8x8xf32>
    "tpu.trace_start"() <{level = 10 : i32, message = "td,sd->ts"}> : () -> ()
    %cst_139 = arith.constant dense<0.000000e+00> : vector<8x8xf32>
    %221 = tpu.matmul %218, %219, %cst_139 {dimension_numbers = #tpu.dot_dimension_numbers<[1], [1], [0], [0], [0, 0, 1, 0], [], []>} : vector<8x8xf32>, vector<8x8xf32>, vector<8x8xf32> -> vector<8x8xf32>
    "tpu.trace_stop"() : () -> ()
    %222 = vector.broadcast %195 : vector<1x8xf32> to vector<8x8xf32>
    %223 = arith.addf %221, %222 : vector<8x8xf32>
    %cst_140 = arith.constant dense<0xFF800000> : vector<8xf32>
    %224 = vector.multi_reduction <maximumf>, %223, %cst_140 [1] : vector<8x8xf32> to vector<8xf32>
    %225 = vector.shape_cast %224 : vector<8xf32> to vector<8x1xf32>
    %226 = vector.broadcast %225 : vector<8x1xf32> to vector<8x8xf32>
    %227 = arith.subf %223, %226 : vector<8x8xf32>
    %228 = math.exp %227 : vector<8x8xf32>
    %cst_141 = arith.constant dense<0.000000e+00> : vector<8xf32>
    %229 = vector.multi_reduction <add>, %228, %cst_141 [1] : vector<8x8xf32> to vector<8xf32>
    %230 = vector.shape_cast %229 : vector<8xf32> to vector<8x1xf32>
    %231 = tpu.reciprocal %230 {approx = true} : vector<8x1xf32> -> vector<8x1xf32>
    %232 = vector.broadcast %231 : vector<8x1xf32> to vector<8x8xf32>
    %233 = arith.mulf %228, %232 : vector<8x8xf32>
    %cst_142 = arith.constant dense<0.000000e+00> : vector<8x8xf32>
    %234 = tpu.matmul %233, %220, %cst_142 {dimension_numbers = #tpu.dot_dimension_numbers<[1], [0], [0], [1], [0, 0, 1, 1], [], []>} : vector<8x8xf32>, vector<8x8xf32>, vector<8x8xf32> -> vector<8x8xf32>
    %c0_143 = arith.constant 0 : index
    %c8_144 = arith.constant 8 : index
    %235 = vector.load %arg75[%c0_143, %c8_144] : memref<16x32xf32, #tpu.memory_space<vmem>>, vector<8x8xf32>
    tpu.vector_store %arg75[%c0_143, %c8_144], %234 {strides = array<i32>} : memref<16x32xf32, #tpu.memory_space<vmem>>, vector<8x8xf32>,
    %236 = vector.extract_strided_slice %194 {offsets = [0, 16], sizes = [8, 8], strides = [1, 1]} : vector<16x96xf32> to vector<8x8xf32>
    %cst_145 = arith.constant 0.353553385 : f32
    %237 = vector.broadcast %cst_145 : f32 to vector<8x8xf32>
    %238 = arith.mulf %236, %237 : vector<8x8xf32>
    %239 = vector.extract_strided_slice %194 {offsets = [0, 48], sizes = [8, 8], strides = [1, 1]} : vector<16x96xf32> to vector<8x8xf32>
    %240 = vector.extract_strided_slice %194 {offsets = [0, 80], sizes = [8, 8], strides = [1, 1]} : vector<16x96xf32> to vector<8x8xf32>
    "tpu.trace_start"() <{level = 10 : i32, message = "td,sd->ts"}> : () -> ()
    %cst_146 = arith.constant dense<0.000000e+00> : vector<8x8xf32>
    %241 = tpu.matmul %238, %239, %cst_146 {dimension_numbers = #tpu.dot_dimension_numbers<[1], [1], [0], [0], [0, 0, 1, 0], [], []>} : vector<8x8xf32>, vector<8x8xf32>, vector<8x8xf32> -> vector<8x8xf32>
    "tpu.trace_stop"() : () -> ()
    %242 = vector.broadcast %195 : vector<1x8xf32> to vector<8x8xf32>
    %243 = arith.addf %241, %242 : vector<8x8xf32>
    %cst_147 = arith.constant dense<0xFF800000> : vector<8xf32>
    %244 = vector.multi_reduction <maximumf>, %243, %cst_147 [1] : vector<8x8xf32> to vector<8xf32>
    %245 = vector.shape_cast %244 : vector<8xf32> to vector<8x1xf32>
    %246 = vector.broadcast %245 : vector<8x1xf32> to vector<8x8xf32>
    %247 = arith.subf %243, %246 : vector<8x8xf32>
    %248 = math.exp %247 : vector<8x8xf32>
    %cst_148 = arith.constant dense<0.000000e+00> : vector<8xf32>
    %249 = vector.multi_reduction <add>, %248, %cst_148 [1] : vector<8x8xf32> to vector<8xf32>
    %250 = vector.shape_cast %249 : vector<8xf32> to vector<8x1xf32>
    %251 = tpu.reciprocal %250 {approx = true} : vector<8x1xf32> -> vector<8x1xf32>
    %252 = vector.broadcast %251 : vector<8x1xf32> to vector<8x8xf32>
    %253 = arith.mulf %248, %252 : vector<8x8xf32>
    %cst_149 = arith.constant dense<0.000000e+00> : vector<8x8xf32>
    %254 = tpu.matmul %253, %240, %cst_149 {dimension_numbers = #tpu.dot_dimension_numbers<[1], [0], [0], [1], [0, 0, 1, 1], [], []>} : vector<8x8xf32>, vector<8x8xf32>, vector<8x8xf32> -> vector<8x8xf32>
    %c0_150 = arith.constant 0 : index
    %c16_151 = arith.constant 16 : index
    %255 = vector.load %arg75[%c0_150, %c16_151] : memref<16x32xf32, #tpu.memory_space<vmem>>, vector<8x8xf32>
    tpu.vector_store %arg75[%c0_150, %c16_151], %254 {strides = array<i32>} : memref<16x32xf32, #tpu.memory_space<vmem>>, vector<8x8xf32>,
    %256 = vector.extract_strided_slice %194 {offsets = [0, 24], sizes = [8, 8], strides = [1, 1]} : vector<16x96xf32> to vector<8x8xf32>
    %cst_152 = arith.constant 0.353553385 : f32
    %257 = vector.broadcast %cst_152 : f32 to vector<8x8xf32>
    %258 = arith.mulf %256, %257 : vector<8x8xf32>
    %259 = vector.extract_strided_slice %194 {offsets = [0, 56], sizes = [8, 8], strides = [1, 1]} : vector<16x96xf32> to vector<8x8xf32>
    %260 = vector.extract_strided_slice %194 {offsets = [0, 88], sizes = [8, 8], strides = [1, 1]} : vector<16x96xf32> to vector<8x8xf32>
    "tpu.trace_start"() <{level = 10 : i32, message = "td,sd->ts"}> : () -> ()
    %cst_153 = arith.constant dense<0.000000e+00> : vector<8x8xf32>
    %261 = tpu.matmul %258, %259, %cst_153 {dimension_numbers = #tpu.dot_dimension_numbers<[1], [1], [0], [0], [0, 0, 1, 0], [], []>} : vector<8x8xf32>, vector<8x8xf32>, vector<8x8xf32> -> vector<8x8xf32>
    "tpu.trace_stop"() : () -> ()
    %262 = vector.broadcast %195 : vector<1x8xf32> to vector<8x8xf32>
    %263 = arith.addf %261, %262 : vector<8x8xf32>
    %cst_154 = arith.constant dense<0xFF800000> : vector<8xf32>
    %264 = vector.multi_reduction <maximumf>, %263, %cst_154 [1] : vector<8x8xf32> to vector<8xf32>
    %265 = vector.shape_cast %264 : vector<8xf32> to vector<8x1xf32>
    %266 = vector.broadcast %265 : vector<8x1xf32> to vector<8x8xf32>
    %267 = arith.subf %263, %266 : vector<8x8xf32>
    %268 = math.exp %267 : vector<8x8xf32>
    %cst_155 = arith.constant dense<0.000000e+00> : vector<8xf32>
    %269 = vector.multi_reduction <add>, %268, %cst_155 [1] : vector<8x8xf32> to vector<8xf32>
    %270 = vector.shape_cast %269 : vector<8xf32> to vector<8x1xf32>
    %271 = tpu.reciprocal %270 {approx = true} : vector<8x1xf32> -> vector<8x1xf32>
    %272 = vector.broadcast %271 : vector<8x1xf32> to vector<8x8xf32>
    %273 = arith.mulf %268, %272 : vector<8x8xf32>
    %cst_156 = arith.constant dense<0.000000e+00> : vector<8x8xf32>
    %274 = tpu.matmul %273, %260, %cst_156 {dimension_numbers = #tpu.dot_dimension_numbers<[1], [0], [0], [1], [0, 0, 1, 1], [], []>} : vector<8x8xf32>, vector<8x8xf32>, vector<8x8xf32> -> vector<8x8xf32>
    %c0_157 = arith.constant 0 : index
    %c24_158 = arith.constant 24 : index
    %275 = vector.load %arg75[%c0_157, %c24_158] : memref<16x32xf32, #tpu.memory_space<vmem>>, vector<8x8xf32>
    tpu.vector_store %arg75[%c0_157, %c24_158], %274 {strides = array<i32>} : memref<16x32xf32, #tpu.memory_space<vmem>>, vector<8x8xf32>,
    %c1_159 = arith.constant 1 : index
    %c0_160 = arith.constant 0 : index
    %276 = vector.load %arg7[%c1_159, %c0_160] : memref<2x8xf32, #tpu.memory_space<vmem>>, vector<1x8xf32>
    %277 = vector.extract_strided_slice %194 {offsets = [8, 0], sizes = [8, 8], strides = [1, 1]} : vector<16x96xf32> to vector<8x8xf32>
    %cst_161 = arith.constant 0.353553385 : f32
    %278 = vector.broadcast %cst_161 : f32 to vector<8x8xf32>
    %279 = arith.mulf %277, %278 : vector<8x8xf32>
    %280 = vector.extract_strided_slice %194 {offsets = [8, 32], sizes = [8, 8], strides = [1, 1]} : vector<16x96xf32> to vector<8x8xf32>
    %281 = vector.extract_strided_slice %194 {offsets = [8, 64], sizes = [8, 8], strides = [1, 1]} : vector<16x96xf32> to vector<8x8xf32>
    "tpu.trace_start"() <{level = 10 : i32, message = "td,sd->ts"}> : () -> ()
    %cst_162 = arith.constant dense<0.000000e+00> : vector<8x8xf32>
    %282 = tpu.matmul %279, %280, %cst_162 {dimension_numbers = #tpu.dot_dimension_numbers<[1], [1], [0], [0], [0, 0, 1, 0], [], []>} : vector<8x8xf32>, vector<8x8xf32>, vector<8x8xf32> -> vector<8x8xf32>
    "tpu.trace_stop"() : () -> ()
    %283 = vector.broadcast %276 : vector<1x8xf32> to vector<8x8xf32>
    %284 = arith.addf %282, %283 : vector<8x8xf32>
    %cst_163 = arith.constant dense<0xFF800000> : vector<8xf32>
    %285 = vector.multi_reduction <maximumf>, %284, %cst_163 [1] : vector<8x8xf32> to vector<8xf32>
    %286 = vector.shape_cast %285 : vector<8xf32> to vector<8x1xf32>
    %287 = vector.broadcast %286 : vector<8x1xf32> to vector<8x8xf32>
    %288 = arith.subf %284, %287 : vector<8x8xf32>
    %289 = math.exp %288 : vector<8x8xf32>
    %cst_164 = arith.constant dense<0.000000e+00> : vector<8xf32>
    %290 = vector.multi_reduction <add>, %289, %cst_164 [1] : vector<8x8xf32> to vector<8xf32>
    %291 = vector.shape_cast %290 : vector<8xf32> to vector<8x1xf32>
    %292 = tpu.reciprocal %291 {approx = true} : vector<8x1xf32> -> vector<8x1xf32>
    %293 = vector.broadcast %292 : vector<8x1xf32> to vector<8x8xf32>
    %294 = arith.mulf %289, %293 : vector<8x8xf32>
    %cst_165 = arith.constant dense<0.000000e+00> : vector<8x8xf32>
    %295 = tpu.matmul %294, %281, %cst_165 {dimension_numbers = #tpu.dot_dimension_numbers<[1], [0], [0], [1], [0, 0, 1, 1], [], []>} : vector<8x8xf32>, vector<8x8xf32>, vector<8x8xf32> -> vector<8x8xf32>
    %c8_166 = arith.constant 8 : index
    %c0_167 = arith.constant 0 : index
    %296 = vector.load %arg75[%c8_166, %c0_167] : memref<16x32xf32, #tpu.memory_space<vmem>>, vector<8x8xf32>
    tpu.vector_store %arg75[%c8_166, %c0_167], %295 {strides = array<i32>} : memref<16x32xf32, #tpu.memory_space<vmem>>, vector<8x8xf32>,
    %297 = vector.extract_strided_slice %194 {offsets = [8, 8], sizes = [8, 8], strides = [1, 1]} : vector<16x96xf32> to vector<8x8xf32>
    %cst_168 = arith.constant 0.353553385 : f32
    %298 = vector.broadcast %cst_168 : f32 to vector<8x8xf32>
    %299 = arith.mulf %297, %298 : vector<8x8xf32>
    %300 = vector.extract_strided_slice %194 {offsets = [8, 40], sizes = [8, 8], strides = [1, 1]} : vector<16x96xf32> to vector<8x8xf32>
    %301 = vector.extract_strided_slice %194 {offsets = [8, 72], sizes = [8, 8], strides = [1, 1]} : vector<16x96xf32> to vector<8x8xf32>
    "tpu.trace_start"() <{level = 10 : i32, message = "td,sd->ts"}> : () -> ()
    %cst_169 = arith.constant dense<0.000000e+00> : vector<8x8xf32>
    %302 = tpu.matmul %299, %300, %cst_169 {dimension_numbers = #tpu.dot_dimension_numbers<[1], [1], [0], [0], [0, 0, 1, 0], [], []>} : vector<8x8xf32>, vector<8x8xf32>, vector<8x8xf32> -> vector<8x8xf32>
    "tpu.trace_stop"() : () -> ()
    %303 = vector.broadcast %276 : vector<1x8xf32> to vector<8x8xf32>
    %304 = arith.addf %302, %303 : vector<8x8xf32>
    %cst_170 = arith.constant dense<0xFF800000> : vector<8xf32>
    %305 = vector.multi_reduction <maximumf>, %304, %cst_170 [1] : vector<8x8xf32> to vector<8xf32>
    %306 = vector.shape_cast %305 : vector<8xf32> to vector<8x1xf32>
    %307 = vector.broadcast %306 : vector<8x1xf32> to vector<8x8xf32>
    %308 = arith.subf %304, %307 : vector<8x8xf32>
    %309 = math.exp %308 : vector<8x8xf32>
    %cst_171 = arith.constant dense<0.000000e+00> : vector<8xf32>
    %310 = vector.multi_reduction <add>, %309, %cst_171 [1] : vector<8x8xf32> to vector<8xf32>
    %311 = vector.shape_cast %310 : vector<8xf32> to vector<8x1xf32>
    %312 = tpu.reciprocal %311 {approx = true} : vector<8x1xf32> -> vector<8x1xf32>
    %313 = vector.broadcast %312 : vector<8x1xf32> to vector<8x8xf32>
    %314 = arith.mulf %309, %313 : vector<8x8xf32>
    %cst_172 = arith.constant dense<0.000000e+00> : vector<8x8xf32>
    %315 = tpu.matmul %314, %301, %cst_172 {dimension_numbers = #tpu.dot_dimension_numbers<[1], [0], [0], [1], [0, 0, 1, 1], [], []>} : vector<8x8xf32>, vector<8x8xf32>, vector<8x8xf32> -> vector<8x8xf32>
    %c8_173 = arith.constant 8 : index
    %c8_174 = arith.constant 8 : index
    %316 = vector.load %arg75[%c8_173, %c8_174] : memref<16x32xf32, #tpu.memory_space<vmem>>, vector<8x8xf32>
    tpu.vector_store %arg75[%c8_173, %c8_174], %315 {strides = array<i32>} : memref<16x32xf32, #tpu.memory_space<vmem>>, vector<8x8xf32>,
    %317 = vector.extract_strided_slice %194 {offsets = [8, 16], sizes = [8, 8], strides = [1, 1]} : vector<16x96xf32> to vector<8x8xf32>
    %cst_175 = arith.constant 0.353553385 : f32
    %318 = vector.broadcast %cst_175 : f32 to vector<8x8xf32>
    %319 = arith.mulf %317, %318 : vector<8x8xf32>
    %320 = vector.extract_strided_slice %194 {offsets = [8, 48], sizes = [8, 8], strides = [1, 1]} : vector<16x96xf32> to vector<8x8xf32>
    %321 = vector.extract_strided_slice %194 {offsets = [8, 80], sizes = [8, 8], strides = [1, 1]} : vector<16x96xf32> to vector<8x8xf32>
    "tpu.trace_start"() <{level = 10 : i32, message = "td,sd->ts"}> : () -> ()
    %cst_176 = arith.constant dense<0.000000e+00> : vector<8x8xf32>
    %322 = tpu.matmul %319, %320, %cst_176 {dimension_numbers = #tpu.dot_dimension_numbers<[1], [1], [0], [0], [0, 0, 1, 0], [], []>} : vector<8x8xf32>, vector<8x8xf32>, vector<8x8xf32> -> vector<8x8xf32>
    "tpu.trace_stop"() : () -> ()
    %323 = vector.broadcast %276 : vector<1x8xf32> to vector<8x8xf32>
    %324 = arith.addf %322, %323 : vector<8x8xf32>
    %cst_177 = arith.constant dense<0xFF800000> : vector<8xf32>
    %325 = vector.multi_reduction <maximumf>, %324, %cst_177 [1] : vector<8x8xf32> to vector<8xf32>
    %326 = vector.shape_cast %325 : vector<8xf32> to vector<8x1xf32>
    %327 = vector.broadcast %326 : vector<8x1xf32> to vector<8x8xf32>
    %328 = arith.subf %324, %327 : vector<8x8xf32>
    %329 = math.exp %328 : vector<8x8xf32>
    %cst_178 = arith.constant dense<0.000000e+00> : vector<8xf32>
    %330 = vector.multi_reduction <add>, %329, %cst_178 [1] : vector<8x8xf32> to vector<8xf32>
    %331 = vector.shape_cast %330 : vector<8xf32> to vector<8x1xf32>
    %332 = tpu.reciprocal %331 {approx = true} : vector<8x1xf32> -> vector<8x1xf32>
    %333 = vector.broadcast %332 : vector<8x1xf32> to vector<8x8xf32>
    %334 = arith.mulf %329, %333 : vector<8x8xf32>
    %cst_179 = arith.constant dense<0.000000e+00> : vector<8x8xf32>
    %335 = tpu.matmul %334, %321, %cst_179 {dimension_numbers = #tpu.dot_dimension_numbers<[1], [0], [0], [1], [0, 0, 1, 1], [], []>} : vector<8x8xf32>, vector<8x8xf32>, vector<8x8xf32> -> vector<8x8xf32>
    %c8_180 = arith.constant 8 : index
    %c16_181 = arith.constant 16 : index
    %336 = vector.load %arg75[%c8_180, %c16_181] : memref<16x32xf32, #tpu.memory_space<vmem>>, vector<8x8xf32>
    tpu.vector_store %arg75[%c8_180, %c16_181], %335 {strides = array<i32>} : memref<16x32xf32, #tpu.memory_space<vmem>>, vector<8x8xf32>,
    %337 = vector.extract_strided_slice %194 {offsets = [8, 24], sizes = [8, 8], strides = [1, 1]} : vector<16x96xf32> to vector<8x8xf32>
    %cst_182 = arith.constant 0.353553385 : f32
    %338 = vector.broadcast %cst_182 : f32 to vector<8x8xf32>
    %339 = arith.mulf %337, %338 : vector<8x8xf32>
    %340 = vector.extract_strided_slice %194 {offsets = [8, 56], sizes = [8, 8], strides = [1, 1]} : vector<16x96xf32> to vector<8x8xf32>
    %341 = vector.extract_strided_slice %194 {offsets = [8, 88], sizes = [8, 8], strides = [1, 1]} : vector<16x96xf32> to vector<8x8xf32>
    "tpu.trace_start"() <{level = 10 : i32, message = "td,sd->ts"}> : () -> ()
    %cst_183 = arith.constant dense<0.000000e+00> : vector<8x8xf32>
    %342 = tpu.matmul %339, %340, %cst_183 {dimension_numbers = #tpu.dot_dimension_numbers<[1], [1], [0], [0], [0, 0, 1, 0], [], []>} : vector<8x8xf32>, vector<8x8xf32>, vector<8x8xf32> -> vector<8x8xf32>
    "tpu.trace_stop"() : () -> ()
    %343 = vector.broadcast %276 : vector<1x8xf32> to vector<8x8xf32>
    %344 = arith.addf %342, %343 : vector<8x8xf32>
    %cst_184 = arith.constant dense<0xFF800000> : vector<8xf32>
    %345 = vector.multi_reduction <maximumf>, %344, %cst_184 [1] : vector<8x8xf32> to vector<8xf32>
    %346 = vector.shape_cast %345 : vector<8xf32> to vector<8x1xf32>
    %347 = vector.broadcast %346 : vector<8x1xf32> to vector<8x8xf32>
    %348 = arith.subf %344, %347 : vector<8x8xf32>
    %349 = math.exp %348 : vector<8x8xf32>
    %cst_185 = arith.constant dense<0.000000e+00> : vector<8xf32>
    %350 = vector.multi_reduction <add>, %349, %cst_185 [1] : vector<8x8xf32> to vector<8xf32>
    %351 = vector.shape_cast %350 : vector<8xf32> to vector<8x1xf32>
    %352 = tpu.reciprocal %351 {approx = true} : vector<8x1xf32> -> vector<8x1xf32>
    %353 = vector.broadcast %352 : vector<8x1xf32> to vector<8x8xf32>
    %354 = arith.mulf %349, %353 : vector<8x8xf32>
    %cst_186 = arith.constant dense<0.000000e+00> : vector<8x8xf32>
    %355 = tpu.matmul %354, %341, %cst_186 {dimension_numbers = #tpu.dot_dimension_numbers<[1], [0], [0], [1], [0, 0, 1, 1], [], []>} : vector<8x8xf32>, vector<8x8xf32>, vector<8x8xf32> -> vector<8x8xf32>
    %c8_187 = arith.constant 8 : index
    %c24_188 = arith.constant 24 : index
    %356 = vector.load %arg75[%c8_187, %c24_188] : memref<16x32xf32, #tpu.memory_space<vmem>>, vector<8x8xf32>
    tpu.vector_store %arg75[%c8_187, %c24_188], %355 {strides = array<i32>} : memref<16x32xf32, #tpu.memory_space<vmem>>, vector<8x8xf32>,
    %c0_189 = arith.constant 0 : index
    %c0_190 = arith.constant 0 : index
    %357 = vector.load %arg75[%c0_189, %c0_190] : memref<16x32xf32, #tpu.memory_space<vmem>>, vector<16x32xf32>
    %c0_191 = arith.constant 0 : index
    %c0_192 = arith.constant 0 : index
    %358 = vector.load %arg18[%c0_191, %c0_192] : memref<32x32xf32, #tpu.memory_space<vmem>>, vector<32x32xf32>
    %cst_193 = arith.constant dense<0.000000e+00> : vector<16x32xf32>
    %359 = tpu.matmul %357, %358, %cst_193 {dimension_numbers = #tpu.dot_dimension_numbers<[1], [0], [0], [1], [0, 0, 1, 1], [], []>} : vector<16x32xf32>, vector<32x32xf32>, vector<16x32xf32> -> vector<16x32xf32>
    %360 = arith.addf %165, %359 : vector<16x32xf32>
    %c0_194 = arith.constant 0 : index
    %c0_195 = arith.constant 0 : index
    %361 = vector.load %arg19[%c0_194, %c0_195] : memref<1x32xf32, #tpu.memory_space<vmem>>, vector<1x32xf32>
    %362 = vector.broadcast %361 : vector<1x32xf32> to vector<16x32xf32>
    %363 = arith.addf %360, %362 : vector<16x32xf32>
    %c0_196 = arith.constant 0 : index
    %c0_197 = arith.constant 0 : index
    %364 = vector.load %arg20[%c0_196, %c0_197] : memref<1x32xf32, #tpu.memory_space<vmem>>, vector<1x32xf32>
    %c0_198 = arith.constant 0 : index
    %c0_199 = arith.constant 0 : index
    %365 = vector.load %arg21[%c0_198, %c0_199] : memref<1x32xf32, #tpu.memory_space<vmem>>, vector<1x32xf32>
    %cst_200 = arith.constant dense<0.000000e+00> : vector<16xf32>
    %366 = vector.multi_reduction <add>, %363, %cst_200 [1] : vector<16x32xf32> to vector<16xf32>
    %367 = vector.shape_cast %366 : vector<16xf32> to vector<16x1xf32>
    %cst_201 = arith.constant 3.200000e+01 : f32
    %368 = vector.broadcast %cst_201 : f32 to vector<16x1xf32>
    %369 = arith.divf %367, %368 : vector<16x1xf32>
    %370 = vector.broadcast %369 : vector<16x1xf32> to vector<16x32xf32>
    %371 = arith.subf %363, %370 : vector<16x32xf32>
    %372 = arith.mulf %371, %371 : vector<16x32xf32>
    %cst_202 = arith.constant dense<0.000000e+00> : vector<16xf32>
    %373 = vector.multi_reduction <add>, %372, %cst_202 [1] : vector<16x32xf32> to vector<16xf32>
    %374 = vector.shape_cast %373 : vector<16xf32> to vector<16x1xf32>
    %cst_203 = arith.constant 3.200000e+01 : f32
    %375 = vector.broadcast %cst_203 : f32 to vector<16x1xf32>
    %376 = arith.divf %374, %375 : vector<16x1xf32>
    %377 = vector.broadcast %369 : vector<16x1xf32> to vector<16x32xf32>
    %378 = arith.subf %363, %377 : vector<16x32xf32>
    %cst_204 = arith.constant 9.99999974E-6 : f32
    %379 = vector.broadcast %cst_204 : f32 to vector<16x1xf32>
    %380 = arith.addf %376, %379 : vector<16x1xf32>
    %381 = math.rsqrt %380 : vector<16x1xf32>
    %382 = vector.broadcast %381 : vector<16x1xf32> to vector<16x32xf32>
    %383 = arith.mulf %378, %382 : vector<16x32xf32>
    %384 = vector.broadcast %364 : vector<1x32xf32> to vector<16x32xf32>
    %385 = arith.mulf %383, %384 : vector<16x32xf32>
    %386 = vector.broadcast %365 : vector<1x32xf32> to vector<16x32xf32>
    %387 = arith.addf %385, %386 : vector<16x32xf32>
    %c0_205 = arith.constant 0 : index
    %c0_206 = arith.constant 0 : index
    %388 = vector.load %arg22[%c0_205, %c0_206] : memref<32x64xf32, #tpu.memory_space<vmem>>, vector<32x64xf32>
    %cst_207 = arith.constant dense<0.000000e+00> : vector<16x64xf32>
    %389 = tpu.matmul %387, %388, %cst_207 {dimension_numbers = #tpu.dot_dimension_numbers<[1], [0], [0], [1], [0, 0, 1, 1], [], []>} : vector<16x32xf32>, vector<32x64xf32>, vector<16x64xf32> -> vector<16x64xf32>
    %c0_208 = arith.constant 0 : index
    %c0_209 = arith.constant 0 : index
    %390 = vector.load %arg23[%c0_208, %c0_209] : memref<1x64xf32, #tpu.memory_space<vmem>>, vector<1x64xf32>
    %391 = vector.broadcast %390 : vector<1x64xf32> to vector<16x64xf32>
    %392 = arith.addf %389, %391 : vector<16x64xf32>
    %393 = vector.extract_strided_slice %392 {offsets = [0, 0], sizes = [16, 32], strides = [1, 1]} : vector<16x64xf32> to vector<16x32xf32>
    %394 = vector.extract_strided_slice %392 {offsets = [0, 32], sizes = [16, 32], strides = [1, 1]} : vector<16x64xf32> to vector<16x32xf32>
    %395 = arith.negf %394 : vector<16x32xf32>
    %396 = math.exp %395 : vector<16x32xf32>
    %cst_210 = arith.constant 1.000000e+00 : f32
    %397 = vector.broadcast %cst_210 : f32 to vector<16x32xf32>
    %398 = arith.addf %397, %396 : vector<16x32xf32>
    %399 = arith.divf %397, %398 : vector<16x32xf32>
    %400 = arith.mulf %393, %399 : vector<16x32xf32>
    %c0_211 = arith.constant 0 : index
    %c0_212 = arith.constant 0 : index
    %401 = vector.load %arg24[%c0_211, %c0_212] : memref<7x32xf32, #tpu.memory_space<vmem>>, vector<7x32xf32>
    %c0_213 = arith.constant 0 : index
    %c0_214 = arith.constant 0 : index
    %402 = vector.load %arg25[%c0_213, %c0_214] : memref<1x32xf32, #tpu.memory_space<vmem>>, vector<1x32xf32>
    %403 = vector.extract_strided_slice %400 {offsets = [0, 0], sizes = [8, 32], strides = [1, 1]} : vector<16x32xf32> to vector<8x32xf32>
    %c8_215 = arith.constant 8 : index
    %c0_216 = arith.constant 0 : index
    %404 = vector.load %arg77[%c8_215, %c0_216] : memref<24x32xf32, #tpu.memory_space<vmem>>, vector<8x32xf32>
    tpu.vector_store %arg77[%c8_215, %c0_216], %403 {strides = array<i32>} : memref<24x32xf32, #tpu.memory_space<vmem>>, vector<8x32xf32>,
    %c0_217 = arith.constant 0 : index
    %c0_218 = arith.constant 0 : index
    %405 = vector.load %arg77[%c0_217, %c0_218] : memref<24x32xf32, #tpu.memory_space<vmem>>, vector<24x32xf32>
    %cst_219 = arith.constant 0.000000e+00 : f32
    %406 = vector.broadcast %cst_219 : f32 to vector<8x32xf32>
    %407 = vector.extract_strided_slice %405 {offsets = [5, 0], sizes = [8, 32], strides = [1, 1]} : vector<24x32xf32> to vector<8x32xf32>
    %408 = vector.extract_strided_slice %401 {offsets = [0, 0], sizes = [1, 32], strides = [1, 1]} : vector<7x32xf32> to vector<1x32xf32>
    %409 = vector.broadcast %408 : vector<1x32xf32> to vector<8x32xf32>
    %410 = arith.mulf %407, %409 : vector<8x32xf32>
    %411 = arith.addf %406, %410 : vector<8x32xf32>
    %412 = vector.extract_strided_slice %405 {offsets = [6, 0], sizes = [8, 32], strides = [1, 1]} : vector<24x32xf32> to vector<8x32xf32>
    %413 = vector.extract_strided_slice %401 {offsets = [1, 0], sizes = [1, 32], strides = [1, 1]} : vector<7x32xf32> to vector<1x32xf32>
    %414 = vector.broadcast %413 : vector<1x32xf32> to vector<8x32xf32>
    %415 = arith.mulf %412, %414 : vector<8x32xf32>
    %416 = arith.addf %411, %415 : vector<8x32xf32>
    %417 = vector.extract_strided_slice %405 {offsets = [7, 0], sizes = [8, 32], strides = [1, 1]} : vector<24x32xf32> to vector<8x32xf32>
    %418 = vector.extract_strided_slice %401 {offsets = [2, 0], sizes = [1, 32], strides = [1, 1]} : vector<7x32xf32> to vector<1x32xf32>
    %419 = vector.broadcast %418 : vector<1x32xf32> to vector<8x32xf32>
    %420 = arith.mulf %417, %419 : vector<8x32xf32>
    %421 = arith.addf %416, %420 : vector<8x32xf32>
    %422 = vector.extract_strided_slice %405 {offsets = [8, 0], sizes = [8, 32], strides = [1, 1]} : vector<24x32xf32> to vector<8x32xf32>
    %423 = vector.extract_strided_slice %401 {offsets = [3, 0], sizes = [1, 32], strides = [1, 1]} : vector<7x32xf32> to vector<1x32xf32>
    %424 = vector.broadcast %423 : vector<1x32xf32> to vector<8x32xf32>
    %425 = arith.mulf %422, %424 : vector<8x32xf32>
    %426 = arith.addf %421, %425 : vector<8x32xf32>
    %427 = vector.extract_strided_slice %405 {offsets = [9, 0], sizes = [8, 32], strides = [1, 1]} : vector<24x32xf32> to vector<8x32xf32>
    %428 = vector.extract_strided_slice %401 {offsets = [4, 0], sizes = [1, 32], strides = [1, 1]} : vector<7x32xf32> to vector<1x32xf32>
    %429 = vector.broadcast %428 : vector<1x32xf32> to vector<8x32xf32>
    %430 = arith.mulf %427, %429 : vector<8x32xf32>
    %431 = arith.addf %426, %430 : vector<8x32xf32>
    %432 = vector.extract_strided_slice %405 {offsets = [10, 0], sizes = [8, 32], strides = [1, 1]} : vector<24x32xf32> to vector<8x32xf32>
    %433 = vector.extract_strided_slice %401 {offsets = [5, 0], sizes = [1, 32], strides = [1, 1]} : vector<7x32xf32> to vector<1x32xf32>
    %434 = vector.broadcast %433 : vector<1x32xf32> to vector<8x32xf32>
    %435 = arith.mulf %432, %434 : vector<8x32xf32>
    %436 = arith.addf %431, %435 : vector<8x32xf32>
    %437 = vector.extract_strided_slice %405 {offsets = [11, 0], sizes = [8, 32], strides = [1, 1]} : vector<24x32xf32> to vector<8x32xf32>
    %438 = vector.extract_strided_slice %401 {offsets = [6, 0], sizes = [1, 32], strides = [1, 1]} : vector<7x32xf32> to vector<1x32xf32>
    %439 = vector.broadcast %438 : vector<1x32xf32> to vector<8x32xf32>
    %440 = arith.mulf %437, %439 : vector<8x32xf32>
    %441 = arith.addf %436, %440 : vector<8x32xf32>
    %442 = vector.broadcast %402 : vector<1x32xf32> to vector<8x32xf32>
    %443 = arith.addf %441, %442 : vector<8x32xf32>
    %c0_220 = arith.constant 0 : index
    %c0_221 = arith.constant 0 : index
    %444 = vector.load %arg76[%c0_220, %c0_221] : memref<16x32xf32, #tpu.memory_space<vmem>>, vector<8x32xf32>
    tpu.vector_store %arg76[%c0_220, %c0_221], %443 {strides = array<i32>} : memref<16x32xf32, #tpu.memory_space<vmem>>, vector<8x32xf32>,
    %445 = vector.extract_strided_slice %400 {offsets = [8, 0], sizes = [8, 32], strides = [1, 1]} : vector<16x32xf32> to vector<8x32xf32>
    %c8_222 = arith.constant 8 : index
    %c0_223 = arith.constant 0 : index
    %446 = vector.load %arg77[%c8_222, %c0_223] : memref<24x32xf32, #tpu.memory_space<vmem>>, vector<8x32xf32>
    tpu.vector_store %arg77[%c8_222, %c0_223], %445 {strides = array<i32>} : memref<24x32xf32, #tpu.memory_space<vmem>>, vector<8x32xf32>,
    %c0_224 = arith.constant 0 : index
    %c0_225 = arith.constant 0 : index
    %447 = vector.load %arg77[%c0_224, %c0_225] : memref<24x32xf32, #tpu.memory_space<vmem>>, vector<24x32xf32>
    %cst_226 = arith.constant 0.000000e+00 : f32
    %448 = vector.broadcast %cst_226 : f32 to vector<8x32xf32>
    %449 = vector.extract_strided_slice %447 {offsets = [5, 0], sizes = [8, 32], strides = [1, 1]} : vector<24x32xf32> to vector<8x32xf32>
    %450 = vector.extract_strided_slice %401 {offsets = [0, 0], sizes = [1, 32], strides = [1, 1]} : vector<7x32xf32> to vector<1x32xf32>
    %451 = vector.broadcast %450 : vector<1x32xf32> to vector<8x32xf32>
    %452 = arith.mulf %449, %451 : vector<8x32xf32>
    %453 = arith.addf %448, %452 : vector<8x32xf32>
    %454 = vector.extract_strided_slice %447 {offsets = [6, 0], sizes = [8, 32], strides = [1, 1]} : vector<24x32xf32> to vector<8x32xf32>
    %455 = vector.extract_strided_slice %401 {offsets = [1, 0], sizes = [1, 32], strides = [1, 1]} : vector<7x32xf32> to vector<1x32xf32>
    %456 = vector.broadcast %455 : vector<1x32xf32> to vector<8x32xf32>
    %457 = arith.mulf %454, %456 : vector<8x32xf32>
    %458 = arith.addf %453, %457 : vector<8x32xf32>
    %459 = vector.extract_strided_slice %447 {offsets = [7, 0], sizes = [8, 32], strides = [1, 1]} : vector<24x32xf32> to vector<8x32xf32>
    %460 = vector.extract_strided_slice %401 {offsets = [2, 0], sizes = [1, 32], strides = [1, 1]} : vector<7x32xf32> to vector<1x32xf32>
    %461 = vector.broadcast %460 : vector<1x32xf32> to vector<8x32xf32>
    %462 = arith.mulf %459, %461 : vector<8x32xf32>
    %463 = arith.addf %458, %462 : vector<8x32xf32>
    %464 = vector.extract_strided_slice %447 {offsets = [8, 0], sizes = [8, 32], strides = [1, 1]} : vector<24x32xf32> to vector<8x32xf32>
    %465 = vector.extract_strided_slice %401 {offsets = [3, 0], sizes = [1, 32], strides = [1, 1]} : vector<7x32xf32> to vector<1x32xf32>
    %466 = vector.broadcast %465 : vector<1x32xf32> to vector<8x32xf32>
    %467 = arith.mulf %464, %466 : vector<8x32xf32>
    %468 = arith.addf %463, %467 : vector<8x32xf32>
    %469 = vector.extract_strided_slice %447 {offsets = [9, 0], sizes = [8, 32], strides = [1, 1]} : vector<24x32xf32> to vector<8x32xf32>
    %470 = vector.extract_strided_slice %401 {offsets = [4, 0], sizes = [1, 32], strides = [1, 1]} : vector<7x32xf32> to vector<1x32xf32>
    %471 = vector.broadcast %470 : vector<1x32xf32> to vector<8x32xf32>
    %472 = arith.mulf %469, %471 : vector<8x32xf32>
    %473 = arith.addf %468, %472 : vector<8x32xf32>
    %474 = vector.extract_strided_slice %447 {offsets = [10, 0], sizes = [8, 32], strides = [1, 1]} : vector<24x32xf32> to vector<8x32xf32>
    %475 = vector.extract_strided_slice %401 {offsets = [5, 0], sizes = [1, 32], strides = [1, 1]} : vector<7x32xf32> to vector<1x32xf32>
    %476 = vector.broadcast %475 : vector<1x32xf32> to vector<8x32xf32>
    %477 = arith.mulf %474, %476 : vector<8x32xf32>
    %478 = arith.addf %473, %477 : vector<8x32xf32>
    %479 = vector.extract_strided_slice %447 {offsets = [11, 0], sizes = [8, 32], strides = [1, 1]} : vector<24x32xf32> to vector<8x32xf32>
    %480 = vector.extract_strided_slice %401 {offsets = [6, 0], sizes = [1, 32], strides = [1, 1]} : vector<7x32xf32> to vector<1x32xf32>
    %481 = vector.broadcast %480 : vector<1x32xf32> to vector<8x32xf32>
    %482 = arith.mulf %479, %481 : vector<8x32xf32>
    %483 = arith.addf %478, %482 : vector<8x32xf32>
    %484 = vector.broadcast %402 : vector<1x32xf32> to vector<8x32xf32>
    %485 = arith.addf %483, %484 : vector<8x32xf32>
    %c8_227 = arith.constant 8 : index
    %c0_228 = arith.constant 0 : index
    %486 = vector.load %arg76[%c8_227, %c0_228] : memref<16x32xf32, #tpu.memory_space<vmem>>, vector<8x32xf32>
    tpu.vector_store %arg76[%c8_227, %c0_228], %485 {strides = array<i32>} : memref<16x32xf32, #tpu.memory_space<vmem>>, vector<8x32xf32>,
    %c0_229 = arith.constant 0 : index
    %c0_230 = arith.constant 0 : index
    %487 = vector.load %arg76[%c0_229, %c0_230] : memref<16x32xf32, #tpu.memory_space<vmem>>, vector<16x32xf32>
    %cst_231 = arith.constant dense<0.000000e+00> : vector<32xf32>
    %488 = vector.multi_reduction <add>, %487, %cst_231 [0] : vector<16x32xf32> to vector<32xf32>
    %489 = vector.shape_cast %488 : vector<32xf32> to vector<1x32xf32>
    %cst_232 = arith.constant 1.600000e+01 : f32
    %490 = vector.broadcast %cst_232 : f32 to vector<1x32xf32>
    %491 = arith.divf %489, %490 : vector<1x32xf32>
    %492 = vector.broadcast %491 : vector<1x32xf32> to vector<16x32xf32>
    %493 = arith.subf %487, %492 : vector<16x32xf32>
    %494 = arith.mulf %493, %493 : vector<16x32xf32>
    %cst_233 = arith.constant dense<0.000000e+00> : vector<32xf32>
    %495 = vector.multi_reduction <add>, %494, %cst_233 [0] : vector<16x32xf32> to vector<32xf32>
    %496 = vector.shape_cast %495 : vector<32xf32> to vector<1x32xf32>
    %cst_234 = arith.constant 1.600000e+01 : f32
    %497 = vector.broadcast %cst_234 : f32 to vector<1x32xf32>
    %498 = arith.divf %496, %497 : vector<1x32xf32>
    %499 = vector.broadcast %491 : vector<1x32xf32> to vector<16x32xf32>
    %500 = arith.subf %487, %499 : vector<16x32xf32>
    %cst_235 = arith.constant 9.99999974E-6 : f32
    %501 = vector.broadcast %cst_235 : f32 to vector<1x32xf32>
    %502 = arith.addf %498, %501 : vector<1x32xf32>
    %503 = math.rsqrt %502 : vector<1x32xf32>
    %504 = vector.broadcast %503 : vector<1x32xf32> to vector<16x32xf32>
    %505 = arith.mulf %500, %504 : vector<16x32xf32>
    %c0_236 = arith.constant 0 : index
    %c0_237 = arith.constant 0 : index
    %506 = vector.load %arg26[%c0_236, %c0_237] : memref<1x32xf32, #tpu.memory_space<vmem>>, vector<1x32xf32>
    %507 = vector.broadcast %506 : vector<1x32xf32> to vector<16x32xf32>
    %508 = arith.mulf %505, %507 : vector<16x32xf32>
    %c0_238 = arith.constant 0 : index
    %c0_239 = arith.constant 0 : index
    %509 = vector.load %arg27[%c0_238, %c0_239] : memref<1x32xf32, #tpu.memory_space<vmem>>, vector<1x32xf32>
    %510 = vector.broadcast %509 : vector<1x32xf32> to vector<16x32xf32>
    %511 = arith.addf %508, %510 : vector<16x32xf32>
    %512 = arith.negf %511 : vector<16x32xf32>
    %513 = math.exp %512 : vector<16x32xf32>
    %cst_240 = arith.constant 1.000000e+00 : f32
    %514 = vector.broadcast %cst_240 : f32 to vector<16x32xf32>
    %515 = arith.addf %514, %513 : vector<16x32xf32>
    %516 = arith.divf %514, %515 : vector<16x32xf32>
    %517 = arith.mulf %511, %516 : vector<16x32xf32>
    %c0_241 = arith.constant 0 : index
    %c0_242 = arith.constant 0 : index
    %518 = vector.load %arg28[%c0_241, %c0_242] : memref<32x32xf32, #tpu.memory_space<vmem>>, vector<32x32xf32>
    %cst_243 = arith.constant dense<0.000000e+00> : vector<16x32xf32>
    %519 = tpu.matmul %517, %518, %cst_243 {dimension_numbers = #tpu.dot_dimension_numbers<[1], [0], [0], [1], [0, 0, 1, 1], [], []>} : vector<16x32xf32>, vector<32x32xf32>, vector<16x32xf32> -> vector<16x32xf32>
    %c0_244 = arith.constant 0 : index
    %c0_245 = arith.constant 0 : index
    %520 = vector.load %arg29[%c0_244, %c0_245] : memref<1x32xf32, #tpu.memory_space<vmem>>, vector<1x32xf32>
    %521 = vector.broadcast %520 : vector<1x32xf32> to vector<16x32xf32>
    %522 = arith.addf %519, %521 : vector<16x32xf32>
    %523 = arith.addf %363, %522 : vector<16x32xf32>
    %c0_246 = arith.constant 0 : index
    %c0_247 = arith.constant 0 : index
    %524 = vector.load %arg30[%c0_246, %c0_247] : memref<1x32xf32, #tpu.memory_space<vmem>>, vector<1x32xf32>
    %c0_248 = arith.constant 0 : index
    %c0_249 = arith.constant 0 : index
    %525 = vector.load %arg31[%c0_248, %c0_249] : memref<1x32xf32, #tpu.memory_space<vmem>>, vector<1x32xf32>
    %cst_250 = arith.constant dense<0.000000e+00> : vector<16xf32>
    %526 = vector.multi_reduction <add>, %523, %cst_250 [1] : vector<16x32xf32> to vector<16xf32>
    %527 = vector.shape_cast %526 : vector<16xf32> to vector<16x1xf32>
    %cst_251 = arith.constant 3.200000e+01 : f32
    %528 = vector.broadcast %cst_251 : f32 to vector<16x1xf32>
    %529 = arith.divf %527, %528 : vector<16x1xf32>
    %530 = vector.broadcast %529 : vector<16x1xf32> to vector<16x32xf32>
    %531 = arith.subf %523, %530 : vector<16x32xf32>
    %532 = arith.mulf %531, %531 : vector<16x32xf32>
    %cst_252 = arith.constant dense<0.000000e+00> : vector<16xf32>
    %533 = vector.multi_reduction <add>, %532, %cst_252 [1] : vector<16x32xf32> to vector<16xf32>
    %534 = vector.shape_cast %533 : vector<16xf32> to vector<16x1xf32>
    %cst_253 = arith.constant 3.200000e+01 : f32
    %535 = vector.broadcast %cst_253 : f32 to vector<16x1xf32>
    %536 = arith.divf %534, %535 : vector<16x1xf32>
    %537 = vector.broadcast %529 : vector<16x1xf32> to vector<16x32xf32>
    %538 = arith.subf %523, %537 : vector<16x32xf32>
    %cst_254 = arith.constant 9.99999974E-6 : f32
    %539 = vector.broadcast %cst_254 : f32 to vector<16x1xf32>
    %540 = arith.addf %536, %539 : vector<16x1xf32>
    %541 = math.rsqrt %540 : vector<16x1xf32>
    %542 = vector.broadcast %541 : vector<16x1xf32> to vector<16x32xf32>
    %543 = arith.mulf %538, %542 : vector<16x32xf32>
    %544 = vector.broadcast %524 : vector<1x32xf32> to vector<16x32xf32>
    %545 = arith.mulf %543, %544 : vector<16x32xf32>
    %546 = vector.broadcast %525 : vector<1x32xf32> to vector<16x32xf32>
    %547 = arith.addf %545, %546 : vector<16x32xf32>
    %c0_255 = arith.constant 0 : index
    %c0_256 = arith.constant 0 : index
    %548 = vector.load %arg32[%c0_255, %c0_256] : memref<32x64xf32, #tpu.memory_space<vmem>>, vector<32x64xf32>
    %cst_257 = arith.constant dense<0.000000e+00> : vector<16x64xf32>
    %549 = tpu.matmul %547, %548, %cst_257 {dimension_numbers = #tpu.dot_dimension_numbers<[1], [0], [0], [1], [0, 0, 1, 1], [], []>} : vector<16x32xf32>, vector<32x64xf32>, vector<16x64xf32> -> vector<16x64xf32>
    %c0_258 = arith.constant 0 : index
    %c0_259 = arith.constant 0 : index
    %550 = vector.load %arg33[%c0_258, %c0_259] : memref<1x64xf32, #tpu.memory_space<vmem>>, vector<1x64xf32>
    %551 = vector.broadcast %550 : vector<1x64xf32> to vector<16x64xf32>
    %552 = arith.addf %549, %551 : vector<16x64xf32>
    %553 = arith.negf %552 : vector<16x64xf32>
    %554 = math.exp %553 : vector<16x64xf32>
    %cst_260 = arith.constant 1.000000e+00 : f32
    %555 = vector.broadcast %cst_260 : f32 to vector<16x64xf32>
    %556 = arith.addf %555, %554 : vector<16x64xf32>
    %557 = arith.divf %555, %556 : vector<16x64xf32>
    %558 = arith.mulf %552, %557 : vector<16x64xf32>
    %c0_261 = arith.constant 0 : index
    %c0_262 = arith.constant 0 : index
    %559 = vector.load %arg34[%c0_261, %c0_262] : memref<64x32xf32, #tpu.memory_space<vmem>>, vector<64x32xf32>
    %cst_263 = arith.constant dense<0.000000e+00> : vector<16x32xf32>
    %560 = tpu.matmul %558, %559, %cst_263 {dimension_numbers = #tpu.dot_dimension_numbers<[1], [0], [0], [1], [0, 0, 1, 1], [], []>} : vector<16x64xf32>, vector<64x32xf32>, vector<16x32xf32> -> vector<16x32xf32>
    %c0_264 = arith.constant 0 : index
    %c0_265 = arith.constant 0 : index
    %561 = vector.load %arg35[%c0_264, %c0_265] : memref<1x32xf32, #tpu.memory_space<vmem>>, vector<1x32xf32>
    %562 = vector.broadcast %561 : vector<1x32xf32> to vector<16x32xf32>
    %563 = arith.addf %560, %562 : vector<16x32xf32>
    %cst_266 = arith.constant 5.000000e-01 : f32
    %564 = vector.broadcast %cst_266 : f32 to vector<16x32xf32>
    %565 = arith.mulf %564, %563 : vector<16x32xf32>
    %566 = arith.addf %523, %565 : vector<16x32xf32>
    %c0_267 = arith.constant 0 : index
    %c0_268 = arith.constant 0 : index
    %567 = vector.load %arg36[%c0_267, %c0_268] : memref<1x32xf32, #tpu.memory_space<vmem>>, vector<1x32xf32>
    %c0_269 = arith.constant 0 : index
    %c0_270 = arith.constant 0 : index
    %568 = vector.load %arg37[%c0_269, %c0_270] : memref<1x32xf32, #tpu.memory_space<vmem>>, vector<1x32xf32>
    %cst_271 = arith.constant dense<0.000000e+00> : vector<16xf32>
    %569 = vector.multi_reduction <add>, %566, %cst_271 [1] : vector<16x32xf32> to vector<16xf32>
    %570 = vector.shape_cast %569 : vector<16xf32> to vector<16x1xf32>
    %cst_272 = arith.constant 3.200000e+01 : f32
    %571 = vector.broadcast %cst_272 : f32 to vector<16x1xf32>
    %572 = arith.divf %570, %571 : vector<16x1xf32>
    %573 = vector.broadcast %572 : vector<16x1xf32> to vector<16x32xf32>
    %574 = arith.subf %566, %573 : vector<16x32xf32>
    %575 = arith.mulf %574, %574 : vector<16x32xf32>
    %cst_273 = arith.constant dense<0.000000e+00> : vector<16xf32>
    %576 = vector.multi_reduction <add>, %575, %cst_273 [1] : vector<16x32xf32> to vector<16xf32>
    %577 = vector.shape_cast %576 : vector<16xf32> to vector<16x1xf32>
    %cst_274 = arith.constant 3.200000e+01 : f32
    %578 = vector.broadcast %cst_274 : f32 to vector<16x1xf32>
    %579 = arith.divf %577, %578 : vector<16x1xf32>
    %580 = vector.broadcast %572 : vector<16x1xf32> to vector<16x32xf32>
    %581 = arith.subf %566, %580 : vector<16x32xf32>
    %cst_275 = arith.constant 9.99999974E-6 : f32
    %582 = vector.broadcast %cst_275 : f32 to vector<16x1xf32>
    %583 = arith.addf %579, %582 : vector<16x1xf32>
    %584 = math.rsqrt %583 : vector<16x1xf32>
    %585 = vector.broadcast %584 : vector<16x1xf32> to vector<16x32xf32>
    %586 = arith.mulf %581, %585 : vector<16x32xf32>
    %587 = vector.broadcast %567 : vector<1x32xf32> to vector<16x32xf32>
    %588 = arith.mulf %586, %587 : vector<16x32xf32>
    %589 = vector.broadcast %568 : vector<1x32xf32> to vector<16x32xf32>
    %590 = arith.addf %588, %589 : vector<16x32xf32>
    %c0_276 = arith.constant 0 : index
    %c0_277 = arith.constant 0 : index
    %591 = vector.load %arg38[%c0_276, %c0_277] : memref<1x32xf32, #tpu.memory_space<vmem>>, vector<1x32xf32>
    %c0_278 = arith.constant 0 : index
    %c0_279 = arith.constant 0 : index
    %592 = vector.load %arg39[%c0_278, %c0_279] : memref<1x32xf32, #tpu.memory_space<vmem>>, vector<1x32xf32>
    %cst_280 = arith.constant dense<0.000000e+00> : vector<16xf32>
    %593 = vector.multi_reduction <add>, %590, %cst_280 [1] : vector<16x32xf32> to vector<16xf32>
    %594 = vector.shape_cast %593 : vector<16xf32> to vector<16x1xf32>
    %cst_281 = arith.constant 3.200000e+01 : f32
    %595 = vector.broadcast %cst_281 : f32 to vector<16x1xf32>
    %596 = arith.divf %594, %595 : vector<16x1xf32>
    %597 = vector.broadcast %596 : vector<16x1xf32> to vector<16x32xf32>
    %598 = arith.subf %590, %597 : vector<16x32xf32>
    %599 = arith.mulf %598, %598 : vector<16x32xf32>
    %cst_282 = arith.constant dense<0.000000e+00> : vector<16xf32>
    %600 = vector.multi_reduction <add>, %599, %cst_282 [1] : vector<16x32xf32> to vector<16xf32>
    %601 = vector.shape_cast %600 : vector<16xf32> to vector<16x1xf32>
    %cst_283 = arith.constant 3.200000e+01 : f32
    %602 = vector.broadcast %cst_283 : f32 to vector<16x1xf32>
    %603 = arith.divf %601, %602 : vector<16x1xf32>
    %604 = vector.broadcast %596 : vector<16x1xf32> to vector<16x32xf32>
    %605 = arith.subf %590, %604 : vector<16x32xf32>
    %cst_284 = arith.constant 9.99999974E-6 : f32
    %606 = vector.broadcast %cst_284 : f32 to vector<16x1xf32>
    %607 = arith.addf %603, %606 : vector<16x1xf32>
    %608 = math.rsqrt %607 : vector<16x1xf32>
    %609 = vector.broadcast %608 : vector<16x1xf32> to vector<16x32xf32>
    %610 = arith.mulf %605, %609 : vector<16x32xf32>
    %611 = vector.broadcast %591 : vector<1x32xf32> to vector<16x32xf32>
    %612 = arith.mulf %610, %611 : vector<16x32xf32>
    %613 = vector.broadcast %592 : vector<1x32xf32> to vector<16x32xf32>
    %614 = arith.addf %612, %613 : vector<16x32xf32>
    %c0_285 = arith.constant 0 : index
    %c0_286 = arith.constant 0 : index
    %615 = vector.load %arg40[%c0_285, %c0_286] : memref<32x64xf32, #tpu.memory_space<vmem>>, vector<32x64xf32>
    %cst_287 = arith.constant dense<0.000000e+00> : vector<16x64xf32>
    %616 = tpu.matmul %614, %615, %cst_287 {dimension_numbers = #tpu.dot_dimension_numbers<[1], [0], [0], [1], [0, 0, 1, 1], [], []>} : vector<16x32xf32>, vector<32x64xf32>, vector<16x64xf32> -> vector<16x64xf32>
    %c0_288 = arith.constant 0 : index
    %c0_289 = arith.constant 0 : index
    %617 = vector.load %arg41[%c0_288, %c0_289] : memref<1x64xf32, #tpu.memory_space<vmem>>, vector<1x64xf32>
    %618 = vector.broadcast %617 : vector<1x64xf32> to vector<16x64xf32>
    %619 = arith.addf %616, %618 : vector<16x64xf32>
    %620 = arith.negf %619 : vector<16x64xf32>
    %621 = math.exp %620 : vector<16x64xf32>
    %cst_290 = arith.constant 1.000000e+00 : f32
    %622 = vector.broadcast %cst_290 : f32 to vector<16x64xf32>
    %623 = arith.addf %622, %621 : vector<16x64xf32>
    %624 = arith.divf %622, %623 : vector<16x64xf32>
    %625 = arith.mulf %619, %624 : vector<16x64xf32>
    %c0_291 = arith.constant 0 : index
    %c0_292 = arith.constant 0 : index
    %626 = vector.load %arg42[%c0_291, %c0_292] : memref<64x32xf32, #tpu.memory_space<vmem>>, vector<64x32xf32>
    %cst_293 = arith.constant dense<0.000000e+00> : vector<16x32xf32>
    %627 = tpu.matmul %625, %626, %cst_293 {dimension_numbers = #tpu.dot_dimension_numbers<[1], [0], [0], [1], [0, 0, 1, 1], [], []>} : vector<16x64xf32>, vector<64x32xf32>, vector<16x32xf32> -> vector<16x32xf32>
    %c0_294 = arith.constant 0 : index
    %c0_295 = arith.constant 0 : index
    %628 = vector.load %arg43[%c0_294, %c0_295] : memref<1x32xf32, #tpu.memory_space<vmem>>, vector<1x32xf32>
    %629 = vector.broadcast %628 : vector<1x32xf32> to vector<16x32xf32>
    %630 = arith.addf %627, %629 : vector<16x32xf32>
    %cst_296 = arith.constant 5.000000e-01 : f32
    %631 = vector.broadcast %cst_296 : f32 to vector<16x32xf32>
    %632 = arith.mulf %631, %630 : vector<16x32xf32>
    %633 = arith.addf %590, %632 : vector<16x32xf32>
    %c0_297 = arith.constant 0 : index
    %c0_298 = arith.constant 0 : index
    %634 = vector.load %arg44[%c0_297, %c0_298] : memref<1x32xf32, #tpu.memory_space<vmem>>, vector<1x32xf32>
    %c0_299 = arith.constant 0 : index
    %c0_300 = arith.constant 0 : index
    %635 = vector.load %arg45[%c0_299, %c0_300] : memref<1x32xf32, #tpu.memory_space<vmem>>, vector<1x32xf32>
    %cst_301 = arith.constant dense<0.000000e+00> : vector<16xf32>
    %636 = vector.multi_reduction <add>, %633, %cst_301 [1] : vector<16x32xf32> to vector<16xf32>
    %637 = vector.shape_cast %636 : vector<16xf32> to vector<16x1xf32>
    %cst_302 = arith.constant 3.200000e+01 : f32
    %638 = vector.broadcast %cst_302 : f32 to vector<16x1xf32>
    %639 = arith.divf %637, %638 : vector<16x1xf32>
    %640 = vector.broadcast %639 : vector<16x1xf32> to vector<16x32xf32>
    %641 = arith.subf %633, %640 : vector<16x32xf32>
    %642 = arith.mulf %641, %641 : vector<16x32xf32>
    %cst_303 = arith.constant dense<0.000000e+00> : vector<16xf32>
    %643 = vector.multi_reduction <add>, %642, %cst_303 [1] : vector<16x32xf32> to vector<16xf32>
    %644 = vector.shape_cast %643 : vector<16xf32> to vector<16x1xf32>
    %cst_304 = arith.constant 3.200000e+01 : f32
    %645 = vector.broadcast %cst_304 : f32 to vector<16x1xf32>
    %646 = arith.divf %644, %645 : vector<16x1xf32>
    %647 = vector.broadcast %639 : vector<16x1xf32> to vector<16x32xf32>
    %648 = arith.subf %633, %647 : vector<16x32xf32>
    %cst_305 = arith.constant 9.99999974E-6 : f32
    %649 = vector.broadcast %cst_305 : f32 to vector<16x1xf32>
    %650 = arith.addf %646, %649 : vector<16x1xf32>
    %651 = math.rsqrt %650 : vector<16x1xf32>
    %652 = vector.broadcast %651 : vector<16x1xf32> to vector<16x32xf32>
    %653 = arith.mulf %648, %652 : vector<16x32xf32>
    %654 = vector.broadcast %634 : vector<1x32xf32> to vector<16x32xf32>
    %655 = arith.mulf %653, %654 : vector<16x32xf32>
    %656 = vector.broadcast %635 : vector<1x32xf32> to vector<16x32xf32>
    %657 = arith.addf %655, %656 : vector<16x32xf32>
    %c0_306 = arith.constant 0 : index
    %c0_307 = arith.constant 0 : index
    %658 = vector.load %arg46[%c0_306, %c0_307] : memref<32x96xf32, #tpu.memory_space<vmem>>, vector<32x96xf32>
    %cst_308 = arith.constant dense<0.000000e+00> : vector<16x96xf32>
    %659 = tpu.matmul %657, %658, %cst_308 {dimension_numbers = #tpu.dot_dimension_numbers<[1], [0], [0], [1], [0, 0, 1, 1], [], []>} : vector<16x32xf32>, vector<32x96xf32>, vector<16x96xf32> -> vector<16x96xf32>
    %c0_309 = arith.constant 0 : index
    %c0_310 = arith.constant 0 : index
    %660 = vector.load %arg47[%c0_309, %c0_310] : memref<1x96xf32, #tpu.memory_space<vmem>>, vector<1x96xf32>
    %661 = vector.broadcast %660 : vector<1x96xf32> to vector<16x96xf32>
    %662 = arith.addf %659, %661 : vector<16x96xf32>
    %c0_311 = arith.constant 0 : index
    %c0_312 = arith.constant 0 : index
    %663 = vector.load %arg7[%c0_311, %c0_312] : memref<2x8xf32, #tpu.memory_space<vmem>>, vector<1x8xf32>
    %664 = vector.extract_strided_slice %662 {offsets = [0, 0], sizes = [8, 8], strides = [1, 1]} : vector<16x96xf32> to vector<8x8xf32>
    %cst_313 = arith.constant 0.353553385 : f32
    %665 = vector.broadcast %cst_313 : f32 to vector<8x8xf32>
    %666 = arith.mulf %664, %665 : vector<8x8xf32>
    %667 = vector.extract_strided_slice %662 {offsets = [0, 32], sizes = [8, 8], strides = [1, 1]} : vector<16x96xf32> to vector<8x8xf32>
    %668 = vector.extract_strided_slice %662 {offsets = [0, 64], sizes = [8, 8], strides = [1, 1]} : vector<16x96xf32> to vector<8x8xf32>
    "tpu.trace_start"() <{level = 10 : i32, message = "td,sd->ts"}> : () -> ()
    %cst_314 = arith.constant dense<0.000000e+00> : vector<8x8xf32>
    %669 = tpu.matmul %666, %667, %cst_314 {dimension_numbers = #tpu.dot_dimension_numbers<[1], [1], [0], [0], [0, 0, 1, 0], [], []>} : vector<8x8xf32>, vector<8x8xf32>, vector<8x8xf32> -> vector<8x8xf32>
    "tpu.trace_stop"() : () -> ()
    %670 = vector.broadcast %663 : vector<1x8xf32> to vector<8x8xf32>
    %671 = arith.addf %669, %670 : vector<8x8xf32>
    %cst_315 = arith.constant dense<0xFF800000> : vector<8xf32>
    %672 = vector.multi_reduction <maximumf>, %671, %cst_315 [1] : vector<8x8xf32> to vector<8xf32>
    %673 = vector.shape_cast %672 : vector<8xf32> to vector<8x1xf32>
    %674 = vector.broadcast %673 : vector<8x1xf32> to vector<8x8xf32>
    %675 = arith.subf %671, %674 : vector<8x8xf32>
    %676 = math.exp %675 : vector<8x8xf32>
    %cst_316 = arith.constant dense<0.000000e+00> : vector<8xf32>
    %677 = vector.multi_reduction <add>, %676, %cst_316 [1] : vector<8x8xf32> to vector<8xf32>
    %678 = vector.shape_cast %677 : vector<8xf32> to vector<8x1xf32>
    %679 = tpu.reciprocal %678 {approx = true} : vector<8x1xf32> -> vector<8x1xf32>
    %680 = vector.broadcast %679 : vector<8x1xf32> to vector<8x8xf32>
    %681 = arith.mulf %676, %680 : vector<8x8xf32>
    %cst_317 = arith.constant dense<0.000000e+00> : vector<8x8xf32>
    %682 = tpu.matmul %681, %668, %cst_317 {dimension_numbers = #tpu.dot_dimension_numbers<[1], [0], [0], [1], [0, 0, 1, 1], [], []>} : vector<8x8xf32>, vector<8x8xf32>, vector<8x8xf32> -> vector<8x8xf32>
    %c0_318 = arith.constant 0 : index
    %c0_319 = arith.constant 0 : index
    %683 = vector.load %arg75[%c0_318, %c0_319] : memref<16x32xf32, #tpu.memory_space<vmem>>, vector<8x8xf32>
    tpu.vector_store %arg75[%c0_318, %c0_319], %682 {strides = array<i32>} : memref<16x32xf32, #tpu.memory_space<vmem>>, vector<8x8xf32>,
    %684 = vector.extract_strided_slice %662 {offsets = [0, 8], sizes = [8, 8], strides = [1, 1]} : vector<16x96xf32> to vector<8x8xf32>
    %cst_320 = arith.constant 0.353553385 : f32
    %685 = vector.broadcast %cst_320 : f32 to vector<8x8xf32>
    %686 = arith.mulf %684, %685 : vector<8x8xf32>
    %687 = vector.extract_strided_slice %662 {offsets = [0, 40], sizes = [8, 8], strides = [1, 1]} : vector<16x96xf32> to vector<8x8xf32>
    %688 = vector.extract_strided_slice %662 {offsets = [0, 72], sizes = [8, 8], strides = [1, 1]} : vector<16x96xf32> to vector<8x8xf32>
    "tpu.trace_start"() <{level = 10 : i32, message = "td,sd->ts"}> : () -> ()
    %cst_321 = arith.constant dense<0.000000e+00> : vector<8x8xf32>
    %689 = tpu.matmul %686, %687, %cst_321 {dimension_numbers = #tpu.dot_dimension_numbers<[1], [1], [0], [0], [0, 0, 1, 0], [], []>} : vector<8x8xf32>, vector<8x8xf32>, vector<8x8xf32> -> vector<8x8xf32>
    "tpu.trace_stop"() : () -> ()
    %690 = vector.broadcast %663 : vector<1x8xf32> to vector<8x8xf32>
    %691 = arith.addf %689, %690 : vector<8x8xf32>
    %cst_322 = arith.constant dense<0xFF800000> : vector<8xf32>
    %692 = vector.multi_reduction <maximumf>, %691, %cst_322 [1] : vector<8x8xf32> to vector<8xf32>
    %693 = vector.shape_cast %692 : vector<8xf32> to vector<8x1xf32>
    %694 = vector.broadcast %693 : vector<8x1xf32> to vector<8x8xf32>
    %695 = arith.subf %691, %694 : vector<8x8xf32>
    %696 = math.exp %695 : vector<8x8xf32>
    %cst_323 = arith.constant dense<0.000000e+00> : vector<8xf32>
    %697 = vector.multi_reduction <add>, %696, %cst_323 [1] : vector<8x8xf32> to vector<8xf32>
    %698 = vector.shape_cast %697 : vector<8xf32> to vector<8x1xf32>
    %699 = tpu.reciprocal %698 {approx = true} : vector<8x1xf32> -> vector<8x1xf32>
    %700 = vector.broadcast %699 : vector<8x1xf32> to vector<8x8xf32>
    %701 = arith.mulf %696, %700 : vector<8x8xf32>
    %cst_324 = arith.constant dense<0.000000e+00> : vector<8x8xf32>
    %702 = tpu.matmul %701, %688, %cst_324 {dimension_numbers = #tpu.dot_dimension_numbers<[1], [0], [0], [1], [0, 0, 1, 1], [], []>} : vector<8x8xf32>, vector<8x8xf32>, vector<8x8xf32> -> vector<8x8xf32>
    %c0_325 = arith.constant 0 : index
    %c8_326 = arith.constant 8 : index
    %703 = vector.load %arg75[%c0_325, %c8_326] : memref<16x32xf32, #tpu.memory_space<vmem>>, vector<8x8xf32>
    tpu.vector_store %arg75[%c0_325, %c8_326], %702 {strides = array<i32>} : memref<16x32xf32, #tpu.memory_space<vmem>>, vector<8x8xf32>,
    %704 = vector.extract_strided_slice %662 {offsets = [0, 16], sizes = [8, 8], strides = [1, 1]} : vector<16x96xf32> to vector<8x8xf32>
    %cst_327 = arith.constant 0.353553385 : f32
    %705 = vector.broadcast %cst_327 : f32 to vector<8x8xf32>
    %706 = arith.mulf %704, %705 : vector<8x8xf32>
    %707 = vector.extract_strided_slice %662 {offsets = [0, 48], sizes = [8, 8], strides = [1, 1]} : vector<16x96xf32> to vector<8x8xf32>
    %708 = vector.extract_strided_slice %662 {offsets = [0, 80], sizes = [8, 8], strides = [1, 1]} : vector<16x96xf32> to vector<8x8xf32>
    "tpu.trace_start"() <{level = 10 : i32, message = "td,sd->ts"}> : () -> ()
    %cst_328 = arith.constant dense<0.000000e+00> : vector<8x8xf32>
    %709 = tpu.matmul %706, %707, %cst_328 {dimension_numbers = #tpu.dot_dimension_numbers<[1], [1], [0], [0], [0, 0, 1, 0], [], []>} : vector<8x8xf32>, vector<8x8xf32>, vector<8x8xf32> -> vector<8x8xf32>
    "tpu.trace_stop"() : () -> ()
    %710 = vector.broadcast %663 : vector<1x8xf32> to vector<8x8xf32>
    %711 = arith.addf %709, %710 : vector<8x8xf32>
    %cst_329 = arith.constant dense<0xFF800000> : vector<8xf32>
    %712 = vector.multi_reduction <maximumf>, %711, %cst_329 [1] : vector<8x8xf32> to vector<8xf32>
    %713 = vector.shape_cast %712 : vector<8xf32> to vector<8x1xf32>
    %714 = vector.broadcast %713 : vector<8x1xf32> to vector<8x8xf32>
    %715 = arith.subf %711, %714 : vector<8x8xf32>
    %716 = math.exp %715 : vector<8x8xf32>
    %cst_330 = arith.constant dense<0.000000e+00> : vector<8xf32>
    %717 = vector.multi_reduction <add>, %716, %cst_330 [1] : vector<8x8xf32> to vector<8xf32>
    %718 = vector.shape_cast %717 : vector<8xf32> to vector<8x1xf32>
    %719 = tpu.reciprocal %718 {approx = true} : vector<8x1xf32> -> vector<8x1xf32>
    %720 = vector.broadcast %719 : vector<8x1xf32> to vector<8x8xf32>
    %721 = arith.mulf %716, %720 : vector<8x8xf32>
    %cst_331 = arith.constant dense<0.000000e+00> : vector<8x8xf32>
    %722 = tpu.matmul %721, %708, %cst_331 {dimension_numbers = #tpu.dot_dimension_numbers<[1], [0], [0], [1], [0, 0, 1, 1], [], []>} : vector<8x8xf32>, vector<8x8xf32>, vector<8x8xf32> -> vector<8x8xf32>
    %c0_332 = arith.constant 0 : index
    %c16_333 = arith.constant 16 : index
    %723 = vector.load %arg75[%c0_332, %c16_333] : memref<16x32xf32, #tpu.memory_space<vmem>>, vector<8x8xf32>
    tpu.vector_store %arg75[%c0_332, %c16_333], %722 {strides = array<i32>} : memref<16x32xf32, #tpu.memory_space<vmem>>, vector<8x8xf32>,
    %724 = vector.extract_strided_slice %662 {offsets = [0, 24], sizes = [8, 8], strides = [1, 1]} : vector<16x96xf32> to vector<8x8xf32>
    %cst_334 = arith.constant 0.353553385 : f32
    %725 = vector.broadcast %cst_334 : f32 to vector<8x8xf32>
    %726 = arith.mulf %724, %725 : vector<8x8xf32>
    %727 = vector.extract_strided_slice %662 {offsets = [0, 56], sizes = [8, 8], strides = [1, 1]} : vector<16x96xf32> to vector<8x8xf32>
    %728 = vector.extract_strided_slice %662 {offsets = [0, 88], sizes = [8, 8], strides = [1, 1]} : vector<16x96xf32> to vector<8x8xf32>
    "tpu.trace_start"() <{level = 10 : i32, message = "td,sd->ts"}> : () -> ()
    %cst_335 = arith.constant dense<0.000000e+00> : vector<8x8xf32>
    %729 = tpu.matmul %726, %727, %cst_335 {dimension_numbers = #tpu.dot_dimension_numbers<[1], [1], [0], [0], [0, 0, 1, 0], [], []>} : vector<8x8xf32>, vector<8x8xf32>, vector<8x8xf32> -> vector<8x8xf32>
    "tpu.trace_stop"() : () -> ()
    %730 = vector.broadcast %663 : vector<1x8xf32> to vector<8x8xf32>
    %731 = arith.addf %729, %730 : vector<8x8xf32>
    %cst_336 = arith.constant dense<0xFF800000> : vector<8xf32>
    %732 = vector.multi_reduction <maximumf>, %731, %cst_336 [1] : vector<8x8xf32> to vector<8xf32>
    %733 = vector.shape_cast %732 : vector<8xf32> to vector<8x1xf32>
    %734 = vector.broadcast %733 : vector<8x1xf32> to vector<8x8xf32>
    %735 = arith.subf %731, %734 : vector<8x8xf32>
    %736 = math.exp %735 : vector<8x8xf32>
    %cst_337 = arith.constant dense<0.000000e+00> : vector<8xf32>
    %737 = vector.multi_reduction <add>, %736, %cst_337 [1] : vector<8x8xf32> to vector<8xf32>
    %738 = vector.shape_cast %737 : vector<8xf32> to vector<8x1xf32>
    %739 = tpu.reciprocal %738 {approx = true} : vector<8x1xf32> -> vector<8x1xf32>
    %740 = vector.broadcast %739 : vector<8x1xf32> to vector<8x8xf32>
    %741 = arith.mulf %736, %740 : vector<8x8xf32>
    %cst_338 = arith.constant dense<0.000000e+00> : vector<8x8xf32>
    %742 = tpu.matmul %741, %728, %cst_338 {dimension_numbers = #tpu.dot_dimension_numbers<[1], [0], [0], [1], [0, 0, 1, 1], [], []>} : vector<8x8xf32>, vector<8x8xf32>, vector<8x8xf32> -> vector<8x8xf32>
    %c0_339 = arith.constant 0 : index
    %c24_340 = arith.constant 24 : index
    %743 = vector.load %arg75[%c0_339, %c24_340] : memref<16x32xf32, #tpu.memory_space<vmem>>, vector<8x8xf32>
    tpu.vector_store %arg75[%c0_339, %c24_340], %742 {strides = array<i32>} : memref<16x32xf32, #tpu.memory_space<vmem>>, vector<8x8xf32>,
    %c1_341 = arith.constant 1 : index
    %c0_342 = arith.constant 0 : index
    %744 = vector.load %arg7[%c1_341, %c0_342] : memref<2x8xf32, #tpu.memory_space<vmem>>, vector<1x8xf32>
    %745 = vector.extract_strided_slice %662 {offsets = [8, 0], sizes = [8, 8], strides = [1, 1]} : vector<16x96xf32> to vector<8x8xf32>
    %cst_343 = arith.constant 0.353553385 : f32
    %746 = vector.broadcast %cst_343 : f32 to vector<8x8xf32>
    %747 = arith.mulf %745, %746 : vector<8x8xf32>
    %748 = vector.extract_strided_slice %662 {offsets = [8, 32], sizes = [8, 8], strides = [1, 1]} : vector<16x96xf32> to vector<8x8xf32>
    %749 = vector.extract_strided_slice %662 {offsets = [8, 64], sizes = [8, 8], strides = [1, 1]} : vector<16x96xf32> to vector<8x8xf32>
    "tpu.trace_start"() <{level = 10 : i32, message = "td,sd->ts"}> : () -> ()
    %cst_344 = arith.constant dense<0.000000e+00> : vector<8x8xf32>
    %750 = tpu.matmul %747, %748, %cst_344 {dimension_numbers = #tpu.dot_dimension_numbers<[1], [1], [0], [0], [0, 0, 1, 0], [], []>} : vector<8x8xf32>, vector<8x8xf32>, vector<8x8xf32> -> vector<8x8xf32>
    "tpu.trace_stop"() : () -> ()
    %751 = vector.broadcast %744 : vector<1x8xf32> to vector<8x8xf32>
    %752 = arith.addf %750, %751 : vector<8x8xf32>
    %cst_345 = arith.constant dense<0xFF800000> : vector<8xf32>
    %753 = vector.multi_reduction <maximumf>, %752, %cst_345 [1] : vector<8x8xf32> to vector<8xf32>
    %754 = vector.shape_cast %753 : vector<8xf32> to vector<8x1xf32>
    %755 = vector.broadcast %754 : vector<8x1xf32> to vector<8x8xf32>
    %756 = arith.subf %752, %755 : vector<8x8xf32>
    %757 = math.exp %756 : vector<8x8xf32>
    %cst_346 = arith.constant dense<0.000000e+00> : vector<8xf32>
    %758 = vector.multi_reduction <add>, %757, %cst_346 [1] : vector<8x8xf32> to vector<8xf32>
    %759 = vector.shape_cast %758 : vector<8xf32> to vector<8x1xf32>
    %760 = tpu.reciprocal %759 {approx = true} : vector<8x1xf32> -> vector<8x1xf32>
    %761 = vector.broadcast %760 : vector<8x1xf32> to vector<8x8xf32>
    %762 = arith.mulf %757, %761 : vector<8x8xf32>
    %cst_347 = arith.constant dense<0.000000e+00> : vector<8x8xf32>
    %763 = tpu.matmul %762, %749, %cst_347 {dimension_numbers = #tpu.dot_dimension_numbers<[1], [0], [0], [1], [0, 0, 1, 1], [], []>} : vector<8x8xf32>, vector<8x8xf32>, vector<8x8xf32> -> vector<8x8xf32>
    %c8_348 = arith.constant 8 : index
    %c0_349 = arith.constant 0 : index
    %764 = vector.load %arg75[%c8_348, %c0_349] : memref<16x32xf32, #tpu.memory_space<vmem>>, vector<8x8xf32>
    tpu.vector_store %arg75[%c8_348, %c0_349], %763 {strides = array<i32>} : memref<16x32xf32, #tpu.memory_space<vmem>>, vector<8x8xf32>,
    %765 = vector.extract_strided_slice %662 {offsets = [8, 8], sizes = [8, 8], strides = [1, 1]} : vector<16x96xf32> to vector<8x8xf32>
    %cst_350 = arith.constant 0.353553385 : f32
    %766 = vector.broadcast %cst_350 : f32 to vector<8x8xf32>
    %767 = arith.mulf %765, %766 : vector<8x8xf32>
    %768 = vector.extract_strided_slice %662 {offsets = [8, 40], sizes = [8, 8], strides = [1, 1]} : vector<16x96xf32> to vector<8x8xf32>
    %769 = vector.extract_strided_slice %662 {offsets = [8, 72], sizes = [8, 8], strides = [1, 1]} : vector<16x96xf32> to vector<8x8xf32>
    "tpu.trace_start"() <{level = 10 : i32, message = "td,sd->ts"}> : () -> ()
    %cst_351 = arith.constant dense<0.000000e+00> : vector<8x8xf32>
    %770 = tpu.matmul %767, %768, %cst_351 {dimension_numbers = #tpu.dot_dimension_numbers<[1], [1], [0], [0], [0, 0, 1, 0], [], []>} : vector<8x8xf32>, vector<8x8xf32>, vector<8x8xf32> -> vector<8x8xf32>
    "tpu.trace_stop"() : () -> ()
    %771 = vector.broadcast %744 : vector<1x8xf32> to vector<8x8xf32>
    %772 = arith.addf %770, %771 : vector<8x8xf32>
    %cst_352 = arith.constant dense<0xFF800000> : vector<8xf32>
    %773 = vector.multi_reduction <maximumf>, %772, %cst_352 [1] : vector<8x8xf32> to vector<8xf32>
    %774 = vector.shape_cast %773 : vector<8xf32> to vector<8x1xf32>
    %775 = vector.broadcast %774 : vector<8x1xf32> to vector<8x8xf32>
    %776 = arith.subf %772, %775 : vector<8x8xf32>
    %777 = math.exp %776 : vector<8x8xf32>
    %cst_353 = arith.constant dense<0.000000e+00> : vector<8xf32>
    %778 = vector.multi_reduction <add>, %777, %cst_353 [1] : vector<8x8xf32> to vector<8xf32>
    %779 = vector.shape_cast %778 : vector<8xf32> to vector<8x1xf32>
    %780 = tpu.reciprocal %779 {approx = true} : vector<8x1xf32> -> vector<8x1xf32>
    %781 = vector.broadcast %780 : vector<8x1xf32> to vector<8x8xf32>
    %782 = arith.mulf %777, %781 : vector<8x8xf32>
    %cst_354 = arith.constant dense<0.000000e+00> : vector<8x8xf32>
    %783 = tpu.matmul %782, %769, %cst_354 {dimension_numbers = #tpu.dot_dimension_numbers<[1], [0], [0], [1], [0, 0, 1, 1], [], []>} : vector<8x8xf32>, vector<8x8xf32>, vector<8x8xf32> -> vector<8x8xf32>
    %c8_355 = arith.constant 8 : index
    %c8_356 = arith.constant 8 : index
    %784 = vector.load %arg75[%c8_355, %c8_356] : memref<16x32xf32, #tpu.memory_space<vmem>>, vector<8x8xf32>
    tpu.vector_store %arg75[%c8_355, %c8_356], %783 {strides = array<i32>} : memref<16x32xf32, #tpu.memory_space<vmem>>, vector<8x8xf32>,
    %785 = vector.extract_strided_slice %662 {offsets = [8, 16], sizes = [8, 8], strides = [1, 1]} : vector<16x96xf32> to vector<8x8xf32>
    %cst_357 = arith.constant 0.353553385 : f32
    %786 = vector.broadcast %cst_357 : f32 to vector<8x8xf32>
    %787 = arith.mulf %785, %786 : vector<8x8xf32>
    %788 = vector.extract_strided_slice %662 {offsets = [8, 48], sizes = [8, 8], strides = [1, 1]} : vector<16x96xf32> to vector<8x8xf32>
    %789 = vector.extract_strided_slice %662 {offsets = [8, 80], sizes = [8, 8], strides = [1, 1]} : vector<16x96xf32> to vector<8x8xf32>
    "tpu.trace_start"() <{level = 10 : i32, message = "td,sd->ts"}> : () -> ()
    %cst_358 = arith.constant dense<0.000000e+00> : vector<8x8xf32>
    %790 = tpu.matmul %787, %788, %cst_358 {dimension_numbers = #tpu.dot_dimension_numbers<[1], [1], [0], [0], [0, 0, 1, 0], [], []>} : vector<8x8xf32>, vector<8x8xf32>, vector<8x8xf32> -> vector<8x8xf32>
    "tpu.trace_stop"() : () -> ()
    %791 = vector.broadcast %744 : vector<1x8xf32> to vector<8x8xf32>
    %792 = arith.addf %790, %791 : vector<8x8xf32>
    %cst_359 = arith.constant dense<0xFF800000> : vector<8xf32>
    %793 = vector.multi_reduction <maximumf>, %792, %cst_359 [1] : vector<8x8xf32> to vector<8xf32>
    %794 = vector.shape_cast %793 : vector<8xf32> to vector<8x1xf32>
    %795 = vector.broadcast %794 : vector<8x1xf32> to vector<8x8xf32>
    %796 = arith.subf %792, %795 : vector<8x8xf32>
    %797 = math.exp %796 : vector<8x8xf32>
    %cst_360 = arith.constant dense<0.000000e+00> : vector<8xf32>
    %798 = vector.multi_reduction <add>, %797, %cst_360 [1] : vector<8x8xf32> to vector<8xf32>
    %799 = vector.shape_cast %798 : vector<8xf32> to vector<8x1xf32>
    %800 = tpu.reciprocal %799 {approx = true} : vector<8x1xf32> -> vector<8x1xf32>
    %801 = vector.broadcast %800 : vector<8x1xf32> to vector<8x8xf32>
    %802 = arith.mulf %797, %801 : vector<8x8xf32>
    %cst_361 = arith.constant dense<0.000000e+00> : vector<8x8xf32>
    %803 = tpu.matmul %802, %789, %cst_361 {dimension_numbers = #tpu.dot_dimension_numbers<[1], [0], [0], [1], [0, 0, 1, 1], [], []>} : vector<8x8xf32>, vector<8x8xf32>, vector<8x8xf32> -> vector<8x8xf32>
    %c8_362 = arith.constant 8 : index
    %c16_363 = arith.constant 16 : index
    %804 = vector.load %arg75[%c8_362, %c16_363] : memref<16x32xf32, #tpu.memory_space<vmem>>, vector<8x8xf32>
    tpu.vector_store %arg75[%c8_362, %c16_363], %803 {strides = array<i32>} : memref<16x32xf32, #tpu.memory_space<vmem>>, vector<8x8xf32>,
    %805 = vector.extract_strided_slice %662 {offsets = [8, 24], sizes = [8, 8], strides = [1, 1]} : vector<16x96xf32> to vector<8x8xf32>
    %cst_364 = arith.constant 0.353553385 : f32
    %806 = vector.broadcast %cst_364 : f32 to vector<8x8xf32>
    %807 = arith.mulf %805, %806 : vector<8x8xf32>
    %808 = vector.extract_strided_slice %662 {offsets = [8, 56], sizes = [8, 8], strides = [1, 1]} : vector<16x96xf32> to vector<8x8xf32>
    %809 = vector.extract_strided_slice %662 {offsets = [8, 88], sizes = [8, 8], strides = [1, 1]} : vector<16x96xf32> to vector<8x8xf32>
    "tpu.trace_start"() <{level = 10 : i32, message = "td,sd->ts"}> : () -> ()
    %cst_365 = arith.constant dense<0.000000e+00> : vector<8x8xf32>
    %810 = tpu.matmul %807, %808, %cst_365 {dimension_numbers = #tpu.dot_dimension_numbers<[1], [1], [0], [0], [0, 0, 1, 0], [], []>} : vector<8x8xf32>, vector<8x8xf32>, vector<8x8xf32> -> vector<8x8xf32>
    "tpu.trace_stop"() : () -> ()
    %811 = vector.broadcast %744 : vector<1x8xf32> to vector<8x8xf32>
    %812 = arith.addf %810, %811 : vector<8x8xf32>
    %cst_366 = arith.constant dense<0xFF800000> : vector<8xf32>
    %813 = vector.multi_reduction <maximumf>, %812, %cst_366 [1] : vector<8x8xf32> to vector<8xf32>
    %814 = vector.shape_cast %813 : vector<8xf32> to vector<8x1xf32>
    %815 = vector.broadcast %814 : vector<8x1xf32> to vector<8x8xf32>
    %816 = arith.subf %812, %815 : vector<8x8xf32>
    %817 = math.exp %816 : vector<8x8xf32>
    %cst_367 = arith.constant dense<0.000000e+00> : vector<8xf32>
    %818 = vector.multi_reduction <add>, %817, %cst_367 [1] : vector<8x8xf32> to vector<8xf32>
    %819 = vector.shape_cast %818 : vector<8xf32> to vector<8x1xf32>
    %820 = tpu.reciprocal %819 {approx = true} : vector<8x1xf32> -> vector<8x1xf32>
    %821 = vector.broadcast %820 : vector<8x1xf32> to vector<8x8xf32>
    %822 = arith.mulf %817, %821 : vector<8x8xf32>
    %cst_368 = arith.constant dense<0.000000e+00> : vector<8x8xf32>
    %823 = tpu.matmul %822, %809, %cst_368 {dimension_numbers = #tpu.dot_dimension_numbers<[1], [0], [0], [1], [0, 0, 1, 1], [], []>} : vector<8x8xf32>, vector<8x8xf32>, vector<8x8xf32> -> vector<8x8xf32>
    %c8_369 = arith.constant 8 : index
    %c24_370 = arith.constant 24 : index
    %824 = vector.load %arg75[%c8_369, %c24_370] : memref<16x32xf32, #tpu.memory_space<vmem>>, vector<8x8xf32>
    tpu.vector_store %arg75[%c8_369, %c24_370], %823 {strides = array<i32>} : memref<16x32xf32, #tpu.memory_space<vmem>>, vector<8x8xf32>,
    %c0_371 = arith.constant 0 : index
    %c0_372 = arith.constant 0 : index
    %825 = vector.load %arg75[%c0_371, %c0_372] : memref<16x32xf32, #tpu.memory_space<vmem>>, vector<16x32xf32>
    %c0_373 = arith.constant 0 : index
    %c0_374 = arith.constant 0 : index
    %826 = vector.load %arg48[%c0_373, %c0_374] : memref<32x32xf32, #tpu.memory_space<vmem>>, vector<32x32xf32>
    %cst_375 = arith.constant dense<0.000000e+00> : vector<16x32xf32>
    %827 = tpu.matmul %825, %826, %cst_375 {dimension_numbers = #tpu.dot_dimension_numbers<[1], [0], [0], [1], [0, 0, 1, 1], [], []>} : vector<16x32xf32>, vector<32x32xf32>, vector<16x32xf32> -> vector<16x32xf32>
    %828 = arith.addf %633, %827 : vector<16x32xf32>
    %c0_376 = arith.constant 0 : index
    %c0_377 = arith.constant 0 : index
    %829 = vector.load %arg49[%c0_376, %c0_377] : memref<1x32xf32, #tpu.memory_space<vmem>>, vector<1x32xf32>
    %830 = vector.broadcast %829 : vector<1x32xf32> to vector<16x32xf32>
    %831 = arith.addf %828, %830 : vector<16x32xf32>
    %c0_378 = arith.constant 0 : index
    %c0_379 = arith.constant 0 : index
    %832 = vector.load %arg50[%c0_378, %c0_379] : memref<1x32xf32, #tpu.memory_space<vmem>>, vector<1x32xf32>
    %c0_380 = arith.constant 0 : index
    %c0_381 = arith.constant 0 : index
    %833 = vector.load %arg51[%c0_380, %c0_381] : memref<1x32xf32, #tpu.memory_space<vmem>>, vector<1x32xf32>
    %cst_382 = arith.constant dense<0.000000e+00> : vector<16xf32>
    %834 = vector.multi_reduction <add>, %831, %cst_382 [1] : vector<16x32xf32> to vector<16xf32>
    %835 = vector.shape_cast %834 : vector<16xf32> to vector<16x1xf32>
    %cst_383 = arith.constant 3.200000e+01 : f32
    %836 = vector.broadcast %cst_383 : f32 to vector<16x1xf32>
    %837 = arith.divf %835, %836 : vector<16x1xf32>
    %838 = vector.broadcast %837 : vector<16x1xf32> to vector<16x32xf32>
    %839 = arith.subf %831, %838 : vector<16x32xf32>
    %840 = arith.mulf %839, %839 : vector<16x32xf32>
    %cst_384 = arith.constant dense<0.000000e+00> : vector<16xf32>
    %841 = vector.multi_reduction <add>, %840, %cst_384 [1] : vector<16x32xf32> to vector<16xf32>
    %842 = vector.shape_cast %841 : vector<16xf32> to vector<16x1xf32>
    %cst_385 = arith.constant 3.200000e+01 : f32
    %843 = vector.broadcast %cst_385 : f32 to vector<16x1xf32>
    %844 = arith.divf %842, %843 : vector<16x1xf32>
    %845 = vector.broadcast %837 : vector<16x1xf32> to vector<16x32xf32>
    %846 = arith.subf %831, %845 : vector<16x32xf32>
    %cst_386 = arith.constant 9.99999974E-6 : f32
    %847 = vector.broadcast %cst_386 : f32 to vector<16x1xf32>
    %848 = arith.addf %844, %847 : vector<16x1xf32>
    %849 = math.rsqrt %848 : vector<16x1xf32>
    %850 = vector.broadcast %849 : vector<16x1xf32> to vector<16x32xf32>
    %851 = arith.mulf %846, %850 : vector<16x32xf32>
    %852 = vector.broadcast %832 : vector<1x32xf32> to vector<16x32xf32>
    %853 = arith.mulf %851, %852 : vector<16x32xf32>
    %854 = vector.broadcast %833 : vector<1x32xf32> to vector<16x32xf32>
    %855 = arith.addf %853, %854 : vector<16x32xf32>
    %c0_387 = arith.constant 0 : index
    %c0_388 = arith.constant 0 : index
    %856 = vector.load %arg52[%c0_387, %c0_388] : memref<32x64xf32, #tpu.memory_space<vmem>>, vector<32x64xf32>
    %cst_389 = arith.constant dense<0.000000e+00> : vector<16x64xf32>
    %857 = tpu.matmul %855, %856, %cst_389 {dimension_numbers = #tpu.dot_dimension_numbers<[1], [0], [0], [1], [0, 0, 1, 1], [], []>} : vector<16x32xf32>, vector<32x64xf32>, vector<16x64xf32> -> vector<16x64xf32>
    %c0_390 = arith.constant 0 : index
    %c0_391 = arith.constant 0 : index
    %858 = vector.load %arg53[%c0_390, %c0_391] : memref<1x64xf32, #tpu.memory_space<vmem>>, vector<1x64xf32>
    %859 = vector.broadcast %858 : vector<1x64xf32> to vector<16x64xf32>
    %860 = arith.addf %857, %859 : vector<16x64xf32>
    %861 = vector.extract_strided_slice %860 {offsets = [0, 0], sizes = [16, 32], strides = [1, 1]} : vector<16x64xf32> to vector<16x32xf32>
    %862 = vector.extract_strided_slice %860 {offsets = [0, 32], sizes = [16, 32], strides = [1, 1]} : vector<16x64xf32> to vector<16x32xf32>
    %863 = arith.negf %862 : vector<16x32xf32>
    %864 = math.exp %863 : vector<16x32xf32>
    %cst_392 = arith.constant 1.000000e+00 : f32
    %865 = vector.broadcast %cst_392 : f32 to vector<16x32xf32>
    %866 = arith.addf %865, %864 : vector<16x32xf32>
    %867 = arith.divf %865, %866 : vector<16x32xf32>
    %868 = arith.mulf %861, %867 : vector<16x32xf32>
    %c0_393 = arith.constant 0 : index
    %c0_394 = arith.constant 0 : index
    %869 = vector.load %arg54[%c0_393, %c0_394] : memref<7x32xf32, #tpu.memory_space<vmem>>, vector<7x32xf32>
    %c0_395 = arith.constant 0 : index
    %c0_396 = arith.constant 0 : index
    %870 = vector.load %arg55[%c0_395, %c0_396] : memref<1x32xf32, #tpu.memory_space<vmem>>, vector<1x32xf32>
    %871 = vector.extract_strided_slice %868 {offsets = [0, 0], sizes = [8, 32], strides = [1, 1]} : vector<16x32xf32> to vector<8x32xf32>
    %c8_397 = arith.constant 8 : index
    %c0_398 = arith.constant 0 : index
    %872 = vector.load %arg77[%c8_397, %c0_398] : memref<24x32xf32, #tpu.memory_space<vmem>>, vector<8x32xf32>
    tpu.vector_store %arg77[%c8_397, %c0_398], %871 {strides = array<i32>} : memref<24x32xf32, #tpu.memory_space<vmem>>, vector<8x32xf32>,
    %c0_399 = arith.constant 0 : index
    %c0_400 = arith.constant 0 : index
    %873 = vector.load %arg77[%c0_399, %c0_400] : memref<24x32xf32, #tpu.memory_space<vmem>>, vector<24x32xf32>
    %cst_401 = arith.constant 0.000000e+00 : f32
    %874 = vector.broadcast %cst_401 : f32 to vector<8x32xf32>
    %875 = vector.extract_strided_slice %873 {offsets = [5, 0], sizes = [8, 32], strides = [1, 1]} : vector<24x32xf32> to vector<8x32xf32>
    %876 = vector.extract_strided_slice %869 {offsets = [0, 0], sizes = [1, 32], strides = [1, 1]} : vector<7x32xf32> to vector<1x32xf32>
    %877 = vector.broadcast %876 : vector<1x32xf32> to vector<8x32xf32>
    %878 = arith.mulf %875, %877 : vector<8x32xf32>
    %879 = arith.addf %874, %878 : vector<8x32xf32>
    %880 = vector.extract_strided_slice %873 {offsets = [6, 0], sizes = [8, 32], strides = [1, 1]} : vector<24x32xf32> to vector<8x32xf32>
    %881 = vector.extract_strided_slice %869 {offsets = [1, 0], sizes = [1, 32], strides = [1, 1]} : vector<7x32xf32> to vector<1x32xf32>
    %882 = vector.broadcast %881 : vector<1x32xf32> to vector<8x32xf32>
    %883 = arith.mulf %880, %882 : vector<8x32xf32>
    %884 = arith.addf %879, %883 : vector<8x32xf32>
    %885 = vector.extract_strided_slice %873 {offsets = [7, 0], sizes = [8, 32], strides = [1, 1]} : vector<24x32xf32> to vector<8x32xf32>
    %886 = vector.extract_strided_slice %869 {offsets = [2, 0], sizes = [1, 32], strides = [1, 1]} : vector<7x32xf32> to vector<1x32xf32>
    %887 = vector.broadcast %886 : vector<1x32xf32> to vector<8x32xf32>
    %888 = arith.mulf %885, %887 : vector<8x32xf32>
    %889 = arith.addf %884, %888 : vector<8x32xf32>
    %890 = vector.extract_strided_slice %873 {offsets = [8, 0], sizes = [8, 32], strides = [1, 1]} : vector<24x32xf32> to vector<8x32xf32>
    %891 = vector.extract_strided_slice %869 {offsets = [3, 0], sizes = [1, 32], strides = [1, 1]} : vector<7x32xf32> to vector<1x32xf32>
    %892 = vector.broadcast %891 : vector<1x32xf32> to vector<8x32xf32>
    %893 = arith.mulf %890, %892 : vector<8x32xf32>
    %894 = arith.addf %889, %893 : vector<8x32xf32>
    %895 = vector.extract_strided_slice %873 {offsets = [9, 0], sizes = [8, 32], strides = [1, 1]} : vector<24x32xf32> to vector<8x32xf32>
    %896 = vector.extract_strided_slice %869 {offsets = [4, 0], sizes = [1, 32], strides = [1, 1]} : vector<7x32xf32> to vector<1x32xf32>
    %897 = vector.broadcast %896 : vector<1x32xf32> to vector<8x32xf32>
    %898 = arith.mulf %895, %897 : vector<8x32xf32>
    %899 = arith.addf %894, %898 : vector<8x32xf32>
    %900 = vector.extract_strided_slice %873 {offsets = [10, 0], sizes = [8, 32], strides = [1, 1]} : vector<24x32xf32> to vector<8x32xf32>
    %901 = vector.extract_strided_slice %869 {offsets = [5, 0], sizes = [1, 32], strides = [1, 1]} : vector<7x32xf32> to vector<1x32xf32>
    %902 = vector.broadcast %901 : vector<1x32xf32> to vector<8x32xf32>
    %903 = arith.mulf %900, %902 : vector<8x32xf32>
    %904 = arith.addf %899, %903 : vector<8x32xf32>
    %905 = vector.extract_strided_slice %873 {offsets = [11, 0], sizes = [8, 32], strides = [1, 1]} : vector<24x32xf32> to vector<8x32xf32>
    %906 = vector.extract_strided_slice %869 {offsets = [6, 0], sizes = [1, 32], strides = [1, 1]} : vector<7x32xf32> to vector<1x32xf32>
    %907 = vector.broadcast %906 : vector<1x32xf32> to vector<8x32xf32>
    %908 = arith.mulf %905, %907 : vector<8x32xf32>
    %909 = arith.addf %904, %908 : vector<8x32xf32>
    %910 = vector.broadcast %870 : vector<1x32xf32> to vector<8x32xf32>
    %911 = arith.addf %909, %910 : vector<8x32xf32>
    %c0_402 = arith.constant 0 : index
    %c0_403 = arith.constant 0 : index
    %912 = vector.load %arg76[%c0_402, %c0_403] : memref<16x32xf32, #tpu.memory_space<vmem>>, vector<8x32xf32>
    tpu.vector_store %arg76[%c0_402, %c0_403], %911 {strides = array<i32>} : memref<16x32xf32, #tpu.memory_space<vmem>>, vector<8x32xf32>,
    %913 = vector.extract_strided_slice %868 {offsets = [8, 0], sizes = [8, 32], strides = [1, 1]} : vector<16x32xf32> to vector<8x32xf32>
    %c8_404 = arith.constant 8 : index
    %c0_405 = arith.constant 0 : index
    %914 = vector.load %arg77[%c8_404, %c0_405] : memref<24x32xf32, #tpu.memory_space<vmem>>, vector<8x32xf32>
    tpu.vector_store %arg77[%c8_404, %c0_405], %913 {strides = array<i32>} : memref<24x32xf32, #tpu.memory_space<vmem>>, vector<8x32xf32>,
    %c0_406 = arith.constant 0 : index
    %c0_407 = arith.constant 0 : index
    %915 = vector.load %arg77[%c0_406, %c0_407] : memref<24x32xf32, #tpu.memory_space<vmem>>, vector<24x32xf32>
    %cst_408 = arith.constant 0.000000e+00 : f32
    %916 = vector.broadcast %cst_408 : f32 to vector<8x32xf32>
    %917 = vector.extract_strided_slice %915 {offsets = [5, 0], sizes = [8, 32], strides = [1, 1]} : vector<24x32xf32> to vector<8x32xf32>
    %918 = vector.extract_strided_slice %869 {offsets = [0, 0], sizes = [1, 32], strides = [1, 1]} : vector<7x32xf32> to vector<1x32xf32>
    %919 = vector.broadcast %918 : vector<1x32xf32> to vector<8x32xf32>
    %920 = arith.mulf %917, %919 : vector<8x32xf32>
    %921 = arith.addf %916, %920 : vector<8x32xf32>
    %922 = vector.extract_strided_slice %915 {offsets = [6, 0], sizes = [8, 32], strides = [1, 1]} : vector<24x32xf32> to vector<8x32xf32>
    %923 = vector.extract_strided_slice %869 {offsets = [1, 0], sizes = [1, 32], strides = [1, 1]} : vector<7x32xf32> to vector<1x32xf32>
    %924 = vector.broadcast %923 : vector<1x32xf32> to vector<8x32xf32>
    %925 = arith.mulf %922, %924 : vector<8x32xf32>
    %926 = arith.addf %921, %925 : vector<8x32xf32>
    %927 = vector.extract_strided_slice %915 {offsets = [7, 0], sizes = [8, 32], strides = [1, 1]} : vector<24x32xf32> to vector<8x32xf32>
    %928 = vector.extract_strided_slice %869 {offsets = [2, 0], sizes = [1, 32], strides = [1, 1]} : vector<7x32xf32> to vector<1x32xf32>
    %929 = vector.broadcast %928 : vector<1x32xf32> to vector<8x32xf32>
    %930 = arith.mulf %927, %929 : vector<8x32xf32>
    %931 = arith.addf %926, %930 : vector<8x32xf32>
    %932 = vector.extract_strided_slice %915 {offsets = [8, 0], sizes = [8, 32], strides = [1, 1]} : vector<24x32xf32> to vector<8x32xf32>
    %933 = vector.extract_strided_slice %869 {offsets = [3, 0], sizes = [1, 32], strides = [1, 1]} : vector<7x32xf32> to vector<1x32xf32>
    %934 = vector.broadcast %933 : vector<1x32xf32> to vector<8x32xf32>
    %935 = arith.mulf %932, %934 : vector<8x32xf32>
    %936 = arith.addf %931, %935 : vector<8x32xf32>
    %937 = vector.extract_strided_slice %915 {offsets = [9, 0], sizes = [8, 32], strides = [1, 1]} : vector<24x32xf32> to vector<8x32xf32>
    %938 = vector.extract_strided_slice %869 {offsets = [4, 0], sizes = [1, 32], strides = [1, 1]} : vector<7x32xf32> to vector<1x32xf32>
    %939 = vector.broadcast %938 : vector<1x32xf32> to vector<8x32xf32>
    %940 = arith.mulf %937, %939 : vector<8x32xf32>
    %941 = arith.addf %936, %940 : vector<8x32xf32>
    %942 = vector.extract_strided_slice %915 {offsets = [10, 0], sizes = [8, 32], strides = [1, 1]} : vector<24x32xf32> to vector<8x32xf32>
    %943 = vector.extract_strided_slice %869 {offsets = [5, 0], sizes = [1, 32], strides = [1, 1]} : vector<7x32xf32> to vector<1x32xf32>
    %944 = vector.broadcast %943 : vector<1x32xf32> to vector<8x32xf32>
    %945 = arith.mulf %942, %944 : vector<8x32xf32>
    %946 = arith.addf %941, %945 : vector<8x32xf32>
    %947 = vector.extract_strided_slice %915 {offsets = [11, 0], sizes = [8, 32], strides = [1, 1]} : vector<24x32xf32> to vector<8x32xf32>
    %948 = vector.extract_strided_slice %869 {offsets = [6, 0], sizes = [1, 32], strides = [1, 1]} : vector<7x32xf32> to vector<1x32xf32>
    %949 = vector.broadcast %948 : vector<1x32xf32> to vector<8x32xf32>
    %950 = arith.mulf %947, %949 : vector<8x32xf32>
    %951 = arith.addf %946, %950 : vector<8x32xf32>
    %952 = vector.broadcast %870 : vector<1x32xf32> to vector<8x32xf32>
    %953 = arith.addf %951, %952 : vector<8x32xf32>
    %c8_409 = arith.constant 8 : index
    %c0_410 = arith.constant 0 : index
    %954 = vector.load %arg76[%c8_409, %c0_410] : memref<16x32xf32, #tpu.memory_space<vmem>>, vector<8x32xf32>
    tpu.vector_store %arg76[%c8_409, %c0_410], %953 {strides = array<i32>} : memref<16x32xf32, #tpu.memory_space<vmem>>, vector<8x32xf32>,
    %c0_411 = arith.constant 0 : index
    %c0_412 = arith.constant 0 : index
    %955 = vector.load %arg76[%c0_411, %c0_412] : memref<16x32xf32, #tpu.memory_space<vmem>>, vector<16x32xf32>
    %cst_413 = arith.constant dense<0.000000e+00> : vector<32xf32>
    %956 = vector.multi_reduction <add>, %955, %cst_413 [0] : vector<16x32xf32> to vector<32xf32>
    %957 = vector.shape_cast %956 : vector<32xf32> to vector<1x32xf32>
    %cst_414 = arith.constant 1.600000e+01 : f32
    %958 = vector.broadcast %cst_414 : f32 to vector<1x32xf32>
    %959 = arith.divf %957, %958 : vector<1x32xf32>
    %960 = vector.broadcast %959 : vector<1x32xf32> to vector<16x32xf32>
    %961 = arith.subf %955, %960 : vector<16x32xf32>
    %962 = arith.mulf %961, %961 : vector<16x32xf32>
    %cst_415 = arith.constant dense<0.000000e+00> : vector<32xf32>
    %963 = vector.multi_reduction <add>, %962, %cst_415 [0] : vector<16x32xf32> to vector<32xf32>
    %964 = vector.shape_cast %963 : vector<32xf32> to vector<1x32xf32>
    %cst_416 = arith.constant 1.600000e+01 : f32
    %965 = vector.broadcast %cst_416 : f32 to vector<1x32xf32>
    %966 = arith.divf %964, %965 : vector<1x32xf32>
    %967 = vector.broadcast %959 : vector<1x32xf32> to vector<16x32xf32>
    %968 = arith.subf %955, %967 : vector<16x32xf32>
    %cst_417 = arith.constant 9.99999974E-6 : f32
    %969 = vector.broadcast %cst_417 : f32 to vector<1x32xf32>
    %970 = arith.addf %966, %969 : vector<1x32xf32>
    %971 = math.rsqrt %970 : vector<1x32xf32>
    %972 = vector.broadcast %971 : vector<1x32xf32> to vector<16x32xf32>
    %973 = arith.mulf %968, %972 : vector<16x32xf32>
    %c0_418 = arith.constant 0 : index
    %c0_419 = arith.constant 0 : index
    %974 = vector.load %arg56[%c0_418, %c0_419] : memref<1x32xf32, #tpu.memory_space<vmem>>, vector<1x32xf32>
    %975 = vector.broadcast %974 : vector<1x32xf32> to vector<16x32xf32>
    %976 = arith.mulf %973, %975 : vector<16x32xf32>
    %c0_420 = arith.constant 0 : index
    %c0_421 = arith.constant 0 : index
    %977 = vector.load %arg57[%c0_420, %c0_421] : memref<1x32xf32, #tpu.memory_space<vmem>>, vector<1x32xf32>
    %978 = vector.broadcast %977 : vector<1x32xf32> to vector<16x32xf32>
    %979 = arith.addf %976, %978 : vector<16x32xf32>
    %980 = arith.negf %979 : vector<16x32xf32>
    %981 = math.exp %980 : vector<16x32xf32>
    %cst_422 = arith.constant 1.000000e+00 : f32
    %982 = vector.broadcast %cst_422 : f32 to vector<16x32xf32>
    %983 = arith.addf %982, %981 : vector<16x32xf32>
    %984 = arith.divf %982, %983 : vector<16x32xf32>
    %985 = arith.mulf %979, %984 : vector<16x32xf32>
    %c0_423 = arith.constant 0 : index
    %c0_424 = arith.constant 0 : index
    %986 = vector.load %arg58[%c0_423, %c0_424] : memref<32x32xf32, #tpu.memory_space<vmem>>, vector<32x32xf32>
    %cst_425 = arith.constant dense<0.000000e+00> : vector<16x32xf32>
    %987 = tpu.matmul %985, %986, %cst_425 {dimension_numbers = #tpu.dot_dimension_numbers<[1], [0], [0], [1], [0, 0, 1, 1], [], []>} : vector<16x32xf32>, vector<32x32xf32>, vector<16x32xf32> -> vector<16x32xf32>
    %c0_426 = arith.constant 0 : index
    %c0_427 = arith.constant 0 : index
    %988 = vector.load %arg59[%c0_426, %c0_427] : memref<1x32xf32, #tpu.memory_space<vmem>>, vector<1x32xf32>
    %989 = vector.broadcast %988 : vector<1x32xf32> to vector<16x32xf32>
    %990 = arith.addf %987, %989 : vector<16x32xf32>
    %991 = arith.addf %831, %990 : vector<16x32xf32>
    %c0_428 = arith.constant 0 : index
    %c0_429 = arith.constant 0 : index
    %992 = vector.load %arg60[%c0_428, %c0_429] : memref<1x32xf32, #tpu.memory_space<vmem>>, vector<1x32xf32>
    %c0_430 = arith.constant 0 : index
    %c0_431 = arith.constant 0 : index
    %993 = vector.load %arg61[%c0_430, %c0_431] : memref<1x32xf32, #tpu.memory_space<vmem>>, vector<1x32xf32>
    %cst_432 = arith.constant dense<0.000000e+00> : vector<16xf32>
    %994 = vector.multi_reduction <add>, %991, %cst_432 [1] : vector<16x32xf32> to vector<16xf32>
    %995 = vector.shape_cast %994 : vector<16xf32> to vector<16x1xf32>
    %cst_433 = arith.constant 3.200000e+01 : f32
    %996 = vector.broadcast %cst_433 : f32 to vector<16x1xf32>
    %997 = arith.divf %995, %996 : vector<16x1xf32>
    %998 = vector.broadcast %997 : vector<16x1xf32> to vector<16x32xf32>
    %999 = arith.subf %991, %998 : vector<16x32xf32>
    %1000 = arith.mulf %999, %999 : vector<16x32xf32>
    %cst_434 = arith.constant dense<0.000000e+00> : vector<16xf32>
    %1001 = vector.multi_reduction <add>, %1000, %cst_434 [1] : vector<16x32xf32> to vector<16xf32>
    %1002 = vector.shape_cast %1001 : vector<16xf32> to vector<16x1xf32>
    %cst_435 = arith.constant 3.200000e+01 : f32
    %1003 = vector.broadcast %cst_435 : f32 to vector<16x1xf32>
    %1004 = arith.divf %1002, %1003 : vector<16x1xf32>
    %1005 = vector.broadcast %997 : vector<16x1xf32> to vector<16x32xf32>
    %1006 = arith.subf %991, %1005 : vector<16x32xf32>
    %cst_436 = arith.constant 9.99999974E-6 : f32
    %1007 = vector.broadcast %cst_436 : f32 to vector<16x1xf32>
    %1008 = arith.addf %1004, %1007 : vector<16x1xf32>
    %1009 = math.rsqrt %1008 : vector<16x1xf32>
    %1010 = vector.broadcast %1009 : vector<16x1xf32> to vector<16x32xf32>
    %1011 = arith.mulf %1006, %1010 : vector<16x32xf32>
    %1012 = vector.broadcast %992 : vector<1x32xf32> to vector<16x32xf32>
    %1013 = arith.mulf %1011, %1012 : vector<16x32xf32>
    %1014 = vector.broadcast %993 : vector<1x32xf32> to vector<16x32xf32>
    %1015 = arith.addf %1013, %1014 : vector<16x32xf32>
    %c0_437 = arith.constant 0 : index
    %c0_438 = arith.constant 0 : index
    %1016 = vector.load %arg62[%c0_437, %c0_438] : memref<32x64xf32, #tpu.memory_space<vmem>>, vector<32x64xf32>
    %cst_439 = arith.constant dense<0.000000e+00> : vector<16x64xf32>
    %1017 = tpu.matmul %1015, %1016, %cst_439 {dimension_numbers = #tpu.dot_dimension_numbers<[1], [0], [0], [1], [0, 0, 1, 1], [], []>} : vector<16x32xf32>, vector<32x64xf32>, vector<16x64xf32> -> vector<16x64xf32>
    %c0_440 = arith.constant 0 : index
    %c0_441 = arith.constant 0 : index
    %1018 = vector.load %arg63[%c0_440, %c0_441] : memref<1x64xf32, #tpu.memory_space<vmem>>, vector<1x64xf32>
    %1019 = vector.broadcast %1018 : vector<1x64xf32> to vector<16x64xf32>
    %1020 = arith.addf %1017, %1019 : vector<16x64xf32>
    %1021 = arith.negf %1020 : vector<16x64xf32>
    %1022 = math.exp %1021 : vector<16x64xf32>
    %cst_442 = arith.constant 1.000000e+00 : f32
    %1023 = vector.broadcast %cst_442 : f32 to vector<16x64xf32>
    %1024 = arith.addf %1023, %1022 : vector<16x64xf32>
    %1025 = arith.divf %1023, %1024 : vector<16x64xf32>
    %1026 = arith.mulf %1020, %1025 : vector<16x64xf32>
    %c0_443 = arith.constant 0 : index
    %c0_444 = arith.constant 0 : index
    %1027 = vector.load %arg64[%c0_443, %c0_444] : memref<64x32xf32, #tpu.memory_space<vmem>>, vector<64x32xf32>
    %cst_445 = arith.constant dense<0.000000e+00> : vector<16x32xf32>
    %1028 = tpu.matmul %1026, %1027, %cst_445 {dimension_numbers = #tpu.dot_dimension_numbers<[1], [0], [0], [1], [0, 0, 1, 1], [], []>} : vector<16x64xf32>, vector<64x32xf32>, vector<16x32xf32> -> vector<16x32xf32>
    %c0_446 = arith.constant 0 : index
    %c0_447 = arith.constant 0 : index
    %1029 = vector.load %arg65[%c0_446, %c0_447] : memref<1x32xf32, #tpu.memory_space<vmem>>, vector<1x32xf32>
    %1030 = vector.broadcast %1029 : vector<1x32xf32> to vector<16x32xf32>
    %1031 = arith.addf %1028, %1030 : vector<16x32xf32>
    %cst_448 = arith.constant 5.000000e-01 : f32
    %1032 = vector.broadcast %cst_448 : f32 to vector<16x32xf32>
    %1033 = arith.mulf %1032, %1031 : vector<16x32xf32>
    %1034 = arith.addf %991, %1033 : vector<16x32xf32>
    %c0_449 = arith.constant 0 : index
    %c0_450 = arith.constant 0 : index
    %1035 = vector.load %arg66[%c0_449, %c0_450] : memref<1x32xf32, #tpu.memory_space<vmem>>, vector<1x32xf32>
    %c0_451 = arith.constant 0 : index
    %c0_452 = arith.constant 0 : index
    %1036 = vector.load %arg67[%c0_451, %c0_452] : memref<1x32xf32, #tpu.memory_space<vmem>>, vector<1x32xf32>
    %cst_453 = arith.constant dense<0.000000e+00> : vector<16xf32>
    %1037 = vector.multi_reduction <add>, %1034, %cst_453 [1] : vector<16x32xf32> to vector<16xf32>
    %1038 = vector.shape_cast %1037 : vector<16xf32> to vector<16x1xf32>
    %cst_454 = arith.constant 3.200000e+01 : f32
    %1039 = vector.broadcast %cst_454 : f32 to vector<16x1xf32>
    %1040 = arith.divf %1038, %1039 : vector<16x1xf32>
    %1041 = vector.broadcast %1040 : vector<16x1xf32> to vector<16x32xf32>
    %1042 = arith.subf %1034, %1041 : vector<16x32xf32>
    %1043 = arith.mulf %1042, %1042 : vector<16x32xf32>
    %cst_455 = arith.constant dense<0.000000e+00> : vector<16xf32>
    %1044 = vector.multi_reduction <add>, %1043, %cst_455 [1] : vector<16x32xf32> to vector<16xf32>
    %1045 = vector.shape_cast %1044 : vector<16xf32> to vector<16x1xf32>
    %cst_456 = arith.constant 3.200000e+01 : f32
    %1046 = vector.broadcast %cst_456 : f32 to vector<16x1xf32>
    %1047 = arith.divf %1045, %1046 : vector<16x1xf32>
    %1048 = vector.broadcast %1040 : vector<16x1xf32> to vector<16x32xf32>
    %1049 = arith.subf %1034, %1048 : vector<16x32xf32>
    %cst_457 = arith.constant 9.99999974E-6 : f32
    %1050 = vector.broadcast %cst_457 : f32 to vector<16x1xf32>
    %1051 = arith.addf %1047, %1050 : vector<16x1xf32>
    %1052 = math.rsqrt %1051 : vector<16x1xf32>
    %1053 = vector.broadcast %1052 : vector<16x1xf32> to vector<16x32xf32>
    %1054 = arith.mulf %1049, %1053 : vector<16x32xf32>
    %1055 = vector.broadcast %1035 : vector<1x32xf32> to vector<16x32xf32>
    %1056 = arith.mulf %1054, %1055 : vector<16x32xf32>
    %1057 = vector.broadcast %1036 : vector<1x32xf32> to vector<16x32xf32>
    %1058 = arith.addf %1056, %1057 : vector<16x32xf32>
    %c0_458 = arith.constant 0 : index
    %c0_459 = arith.constant 0 : index
    %1059 = vector.load %arg68[%c0_458, %c0_459] : memref<32x128xf32, #tpu.memory_space<vmem>>, vector<32x128xf32>
    %cst_460 = arith.constant dense<0.000000e+00> : vector<16x128xf32>
    %1060 = tpu.matmul %1058, %1059, %cst_460 {dimension_numbers = #tpu.dot_dimension_numbers<[1], [0], [0], [1], [0, 0, 1, 1], [], []>} : vector<16x32xf32>, vector<32x128xf32>, vector<16x128xf32> -> vector<16x128xf32>
    %c0_461 = arith.constant 0 : index
    %c0_462 = arith.constant 0 : index
    %1061 = vector.load %arg70[%c0_461, %c0_462] : memref<1x128xf32, #tpu.memory_space<vmem>>, vector<1x128xf32>
    %1062 = vector.broadcast %1061 : vector<1x128xf32> to vector<16x128xf32>
    %1063 = arith.addf %1060, %1062 : vector<16x128xf32>
    %cst_463 = arith.constant 0.000000e+00 : f32
    %1064 = vector.broadcast %cst_463 : f32 to vector<8x32xf32>
    %cst_464 = arith.constant 0.000000e+00 : f32
    %1065 = vector.broadcast %cst_464 : f32 to vector<8x32xf32>
    %1066 = vector.extract_strided_slice %1063 {offsets = [0, 0], sizes = [8, 128], strides = [1, 1]} : vector<16x128xf32> to vector<8x128xf32>
    %c0_465 = arith.constant 0 : index
    %c0_466 = arith.constant 0 : index
    %1067 = vector.load %arg69[%c0_465, %c0_466] : memref<32x128xf32, #tpu.memory_space<vmem>>, vector<32x128xf32>
    %cst_467 = arith.constant dense<0.000000e+00> : vector<8x128xf32>
    %1068 = tpu.matmul %1064, %1067, %cst_467 {dimension_numbers = #tpu.dot_dimension_numbers<[1], [0], [0], [1], [0, 0, 1, 1], [], []>} : vector<8x32xf32>, vector<32x128xf32>, vector<8x128xf32> -> vector<8x128xf32>
    %1069 = arith.addf %1066, %1068 : vector<8x128xf32>
    %1070 = vector.extract_strided_slice %1069 {offsets = [0, 0], sizes = [8, 32], strides = [1, 1]} : vector<8x128xf32> to vector<8x32xf32>
    %1071 = arith.negf %1070 : vector<8x32xf32>
    %1072 = math.exp %1071 : vector<8x32xf32>
    %cst_468 = arith.constant 1.000000e+00 : f32
    %1073 = vector.broadcast %cst_468 : f32 to vector<8x32xf32>
    %1074 = arith.addf %1073, %1072 : vector<8x32xf32>
    %1075 = arith.divf %1073, %1074 : vector<8x32xf32>
    %1076 = vector.extract_strided_slice %1069 {offsets = [0, 32], sizes = [8, 32], strides = [1, 1]} : vector<8x128xf32> to vector<8x32xf32>
    %1077 = arith.negf %1076 : vector<8x32xf32>
    %1078 = math.exp %1077 : vector<8x32xf32>
    %cst_469 = arith.constant 1.000000e+00 : f32
    %1079 = vector.broadcast %cst_469 : f32 to vector<8x32xf32>
    %1080 = arith.addf %1079, %1078 : vector<8x32xf32>
    %1081 = arith.divf %1079, %1080 : vector<8x32xf32>
    %1082 = vector.extract_strided_slice %1069 {offsets = [0, 64], sizes = [8, 32], strides = [1, 1]} : vector<8x128xf32> to vector<8x32xf32>
    %1083 = math.tanh %1082 : vector<8x32xf32>
    %1084 = vector.extract_strided_slice %1069 {offsets = [0, 96], sizes = [8, 32], strides = [1, 1]} : vector<8x128xf32> to vector<8x32xf32>
    %1085 = arith.negf %1084 : vector<8x32xf32>
    %1086 = math.exp %1085 : vector<8x32xf32>
    %cst_470 = arith.constant 1.000000e+00 : f32
    %1087 = vector.broadcast %cst_470 : f32 to vector<8x32xf32>
    %1088 = arith.addf %1087, %1086 : vector<8x32xf32>
    %1089 = arith.divf %1087, %1088 : vector<8x32xf32>
    %1090 = arith.mulf %1081, %1065 : vector<8x32xf32>
    %1091 = arith.mulf %1075, %1083 : vector<8x32xf32>
    %1092 = arith.addf %1090, %1091 : vector<8x32xf32>
    %1093 = math.tanh %1092 : vector<8x32xf32>
    %1094 = arith.mulf %1089, %1093 : vector<8x32xf32>
    %c0_471 = arith.constant 0 : index
    %c0_472 = arith.constant 0 : index
    %c0_473 = arith.constant 0 : index
    %1095 = vector.load %arg71[%c0_471, %c0_472, %c0_473] : memref<2x8x32xf32, #tpu.memory_space<vmem>>, vector<1x8x32xf32>
    %1096 = vector.shape_cast %1095 : vector<1x8x32xf32> to vector<8x32xf32>
    %1097 = vector.shape_cast %1094 : vector<8x32xf32> to vector<1x8x32xf32>
    tpu.vector_store %arg71[%c0_471, %c0_472, %c0_473], %1097 {strides = array<i32>} : memref<2x8x32xf32, #tpu.memory_space<vmem>>, vector<1x8x32xf32>,
    %1098 = vector.extract_strided_slice %1063 {offsets = [8, 0], sizes = [8, 128], strides = [1, 1]} : vector<16x128xf32> to vector<8x128xf32>
    %c0_474 = arith.constant 0 : index
    %c0_475 = arith.constant 0 : index
    %1099 = vector.load %arg69[%c0_474, %c0_475] : memref<32x128xf32, #tpu.memory_space<vmem>>, vector<32x128xf32>
    %cst_476 = arith.constant dense<0.000000e+00> : vector<8x128xf32>
    %1100 = tpu.matmul %1094, %1099, %cst_476 {dimension_numbers = #tpu.dot_dimension_numbers<[1], [0], [0], [1], [0, 0, 1, 1], [], []>} : vector<8x32xf32>, vector<32x128xf32>, vector<8x128xf32> -> vector<8x128xf32>
    %1101 = arith.addf %1098, %1100 : vector<8x128xf32>
    %1102 = vector.extract_strided_slice %1101 {offsets = [0, 0], sizes = [8, 32], strides = [1, 1]} : vector<8x128xf32> to vector<8x32xf32>
    %1103 = arith.negf %1102 : vector<8x32xf32>
    %1104 = math.exp %1103 : vector<8x32xf32>
    %cst_477 = arith.constant 1.000000e+00 : f32
    %1105 = vector.broadcast %cst_477 : f32 to vector<8x32xf32>
    %1106 = arith.addf %1105, %1104 : vector<8x32xf32>
    %1107 = arith.divf %1105, %1106 : vector<8x32xf32>
    %1108 = vector.extract_strided_slice %1101 {offsets = [0, 32], sizes = [8, 32], strides = [1, 1]} : vector<8x128xf32> to vector<8x32xf32>
    %1109 = arith.negf %1108 : vector<8x32xf32>
    %1110 = math.exp %1109 : vector<8x32xf32>
    %cst_478 = arith.constant 1.000000e+00 : f32
    %1111 = vector.broadcast %cst_478 : f32 to vector<8x32xf32>
    %1112 = arith.addf %1111, %1110 : vector<8x32xf32>
    %1113 = arith.divf %1111, %1112 : vector<8x32xf32>
    %1114 = vector.extract_strided_slice %1101 {offsets = [0, 64], sizes = [8, 32], strides = [1, 1]} : vector<8x128xf32> to vector<8x32xf32>
    %1115 = math.tanh %1114 : vector<8x32xf32>
    %1116 = vector.extract_strided_slice %1101 {offsets = [0, 96], sizes = [8, 32], strides = [1, 1]} : vector<8x128xf32> to vector<8x32xf32>
    %1117 = arith.negf %1116 : vector<8x32xf32>
    %1118 = math.exp %1117 : vector<8x32xf32>
    %cst_479 = arith.constant 1.000000e+00 : f32
    %1119 = vector.broadcast %cst_479 : f32 to vector<8x32xf32>
    %1120 = arith.addf %1119, %1118 : vector<8x32xf32>
    %1121 = arith.divf %1119, %1120 : vector<8x32xf32>
    %1122 = arith.mulf %1113, %1092 : vector<8x32xf32>
    %1123 = arith.mulf %1107, %1115 : vector<8x32xf32>
    %1124 = arith.addf %1122, %1123 : vector<8x32xf32>
    %1125 = math.tanh %1124 : vector<8x32xf32>
    %1126 = arith.mulf %1121, %1125 : vector<8x32xf32>
    %c1_480 = arith.constant 1 : index
    %c0_481 = arith.constant 0 : index
    %c0_482 = arith.constant 0 : index
    %1127 = vector.load %arg71[%c1_480, %c0_481, %c0_482] : memref<2x8x32xf32, #tpu.memory_space<vmem>>, vector<1x8x32xf32>
    %1128 = vector.shape_cast %1127 : vector<1x8x32xf32> to vector<8x32xf32>
    %1129 = vector.shape_cast %1126 : vector<8x32xf32> to vector<1x8x32xf32>
    tpu.vector_store %arg71[%c1_480, %c0_481, %c0_482], %1129 {strides = array<i32>} : memref<2x8x32xf32, #tpu.memory_space<vmem>>, vector<1x8x32xf32>,
    return
  }
}

</mosaic_0001>

<llo_original>
// kernel: pretraining_forward.2
$region0: #{pretraining_forward.2}
  #allocation0 [shape = 'u32[]', space=smem, size = 0x4, offset = 0x4, fixed_abs, tag = 'smem constant byte address 0x4 - core index']
  #allocation1 [shape = 'u32[144,128]{1,0:T(1,128)}', space=vmem, size = 0x12000, scoped, tag = 'internal scratch']
  %s0 = inlined_call_operand.vmem [shape: f32[128,36], index: 0, kind: input, shape index: {}]
  %s1 = inlined_call_operand.vmem [shape: f32[36,8], index: 1, kind: input, shape index: {}]
  %s2 = inlined_call_operand.vmem [shape: f32[1,8], index: 2, kind: input, shape index: {}]
  %s3 = inlined_call_operand.vmem [shape: f32[128,8], index: 3, kind: output, shape index: {}]
  %s4 = sld [smem:[#allocation0]]
  $region22: #{pretraining_forward.2} parent=0
    _
  %s6 = ssub.s32 1, %s4
  %s7 = scalar_select 0, %s6, %s4
  // Predicated region
  $region2: #{pretraining_forward.2} parent=0 // pred_check
    _
  $region3: #{pretraining_forward.2} parent=0 // pred_check_branch
    %9 = sbr.rel (0) target = $region5
  $region4: #{pretraining_forward.2} parent=0 // pred_region
    _
  $region5: #{pretraining_forward.2} parent=0 // pred_fallthru
    _
  // Predicated region
  $region6: #{pretraining_forward.2} parent=0 // pred_check
    _
  $region7: #{pretraining_forward.2} parent=0 // pred_check_branch
    %11 = sbr.rel (0) target = $region9
  $region8: #{pretraining_forward.2} parent=0 // pred_region
    _
  $region9: #{pretraining_forward.2} parent=0 // pred_fallthru
    _
  // Predicated region
  $region10: #{pretraining_forward.2} parent=0 // pred_check
    _
  $region11: #{pretraining_forward.2} parent=0 // pred_check_branch
    %13 = sbr.rel (0) target = $region13
  $region12: #{pretraining_forward.2} parent=0 // pred_region
    _
  $region13: #{pretraining_forward.2} parent=0 // pred_fallthru
    _
  %v14 = vld [vmem:[%s0] sm:$0xff]
  %v15 = vld [vmem:[%s0 + $0x8] sm:$0xff]
  %v16 = vld [vmem:[%s0 + $0x10] sm:$0xff]
  %v17 = vld [vmem:[%s0 + $0x18] sm:$0xff]
  %v18 = vld [vmem:[%s0 + $0x20] sm:$0xff]
  %v19 = vld [vmem:[%s0 + $0x28] sm:$0xff]
  %v20 = vld [vmem:[%s0 + $0x30] sm:$0xff]
  %v21 = vld [vmem:[%s0 + $0x38] sm:$0xff]
  %v22 = vld [vmem:[%s0 + $0x40] sm:$0xff]
  %v23 = vld [vmem:[%s0 + $0x48] sm:$0xff]
  %v24 = vld [vmem:[%s0 + $0x50] sm:$0xff]
  %v25 = vld [vmem:[%s0 + $0x58] sm:$0xff]
  %v26 = vld [vmem:[%s0 + $0x60] sm:$0xff]
  %v27 = vld [vmem:[%s0 + $0x68] sm:$0xff]
  %v28 = vld [vmem:[%s0 + $0x70] sm:$0xff]
  %v29 = vld [vmem:[%s0 + $0x78] sm:$0xff]
  %v30 = vld [vmem:[%s1] sm:$0xff]
  %v31 = vld [vmem:[%s1 + $0x8] sm:$0xff]
  %v32 = vld [vmem:[%s1 + $0x10] sm:$0xff]
  %v33 = vld [vmem:[%s1 + $0x18] sm:$0xff]
  %v34 = vld [vmem:[%s1 + $0x20] sm:$0xf]
  %v35 = vld [vmem:[%s2] sm:$0x1]
  %v37 = vlaneseq
  %v38 = vshrl.u32 %v37, 7
  %v39 = vsub.s32 0, %v38
  %v40 = vrot.slane %v35, %v39
  %vm42 = vcmask 293888
  %v44 = vsel %vm42, %v14, 0
  %v47 = vsel %vm42, %v15, 0
  %v50 = vsel %vm42, %v16, 0
  %v53 = vsel %vm42, %v17, 0
  %v56 = vsel %vm42, %v18, 0
  %v59 = vsel %vm42, %v19, 0
  %v62 = vsel %vm42, %v20, 0
  %v65 = vsel %vm42, %v21, 0
  %v68 = vsel %vm42, %v22, 0
  %v71 = vsel %vm42, %v23, 0
  %v74 = vsel %vm42, %v24, 0
  %v77 = vsel %vm42, %v25, 0
  %v80 = vsel %vm42, %v26, 0
  %v83 = vsel %vm42, %v27, 0
  %v86 = vsel %vm42, %v28, 0
  %v89 = vsel %vm42, %v29, 0
  %vm91 = vcmask 1043456
  %v93 = vsel %vm91, %v34, 0
  %95 = vmatprep.subr.mxu0 0.0
  %96 = vmatpush1.msra.mxu0 %v30
  %97 = vmatprep.subr.mxu0 0.0
  %98 = vmatpush1.msra.mxu0 %v31
  %99 = vmatprep.subr.mxu0 0.0
  %100 = vmatpush1.msra.mxu0 %v32
  %101 = vmatprep.subr.mxu0 0.0
  %102 = vmatpush1.msra.mxu0 %v33
  %103 = vmatprep.subr.mxu0 0.0
  %104 = vmatpush1.msra.mxu0 %v93
  %105 = vmatprep.subr.mxu0 0.0
  %106 = vmatpush1.msra.mxu0 0.0
  %107 = vmatprep.subr.mxu0 0.0
  %108 = vmatpush1.msra.mxu0 0.0
  %109 = vmatprep.subr.mxu0 0.0
  %110 = vmatpush1.msra.mxu0 0.0
  %111 = vmatprep.subr.mxu0 0.0
  %112 = vmatpush1.msra.mxu0 0.0
  %113 = vmatprep.subr.mxu0 0.0
  %114 = vmatpush1.msra.mxu0 0.0
  %115 = vmatprep.subr.mxu0 0.0
  %116 = vmatpush1.msra.mxu0 0.0
  %117 = vmatprep.subr.mxu0 0.0
  %118 = vmatpush1.msra.mxu0 0.0
  %119 = vmatprep.subr.mxu0 0.0
  %120 = vmatpush1.msra.mxu0 0.0
  %121 = vmatprep.subr.mxu0 0.0
  %122 = vmatpush1.msra.mxu0 0.0
  %123 = vmatprep.subr.mxu0 0.0
  %124 = vmatpush1.msra.mxu0 0.0
  %125 = vmatprep.subr.mxu0 0.0
  %126 = vmatpush1.msra.mxu0 0.0
  %127 = vmatprep.subr.mxu0 0.0
  %128 = vmatpush1.msra.mxu0 0.0
  %129 = vmatprep.subr.mxu0 0.0
  %130 = vmatpush1.msra.mxu0 0.0
  %131 = vmatprep.subr.mxu0 0.0
  %132 = vmatpush1.msra.mxu0 0.0
  %133 = vmatprep.subr.mxu0 0.0
  %134 = vmatpush1.msra.mxu0 0.0
  %135 = vmatprep.subr.mxu0 0.0
  %136 = vmatpush1.msra.mxu0 0.0
  %137 = vmatprep.subr.mxu0 0.0
  %138 = vmatpush1.msra.mxu0 0.0
  %139 = vmatprep.subr.mxu0 0.0
  %140 = vmatpush1.msra.mxu0 0.0
  %141 = vmatprep.subr.mxu0 0.0
  %142 = vmatpush1.msra.mxu0 0.0
  %143 = vmatprep.subr.mxu0 0.0
  %144 = vmatpush1.msra.mxu0 0.0
  %145 = vmatprep.subr.mxu0 0.0
  %146 = vmatpush1.msra.mxu0 0.0
  %147 = vmatprep.subr.mxu0 0.0
  %148 = vmatpush1.msra.mxu0 0.0
  %149 = vmatprep.subr.mxu0 0.0
  %150 = vmatpush1.msra.mxu0 0.0
  %151 = vmatprep.subr.mxu0 0.0
  %152 = vmatpush1.msra.mxu0 0.0
  %153 = vmatprep.subr.mxu0 0.0
  %154 = vmatpush1.msra.mxu0 0.0
  %155 = vmatprep.subr.mxu0 0.0
  %156 = vmatpush1.msra.mxu0 0.0
  %157 = vmatprep.subr.mxu0 0.0
  %158 = vmatpush1.msra.mxu0 0.0
  %159 = vmatprep.mubr.f32.mxu0 0.0
  %160 = vmatmul.mubr.f32.gmra.mrb[0].mxu0 %v44
  %v161 = vpop.f32.mrb[0].mxu0
  %v162 = vadd.f32 %v40, %v161
  %v163 = vpop.f32.mrb[0].mxu0
  %164 = vmatprep.mubr.f32.mxu0 0.0
  %165 = vmatmul.mubr.f32.gmra.mrb[0].mxu0 %v47
  %v166 = vpop.f32.mrb[0].mxu0
  %v167 = vadd.f32 %v40, %v166
  %v168 = vpop.f32.mrb[0].mxu0
  %169 = vmatprep.mubr.f32.mxu0 0.0
  %170 = vmatmul.mubr.f32.gmra.mrb[0].mxu0 %v50
  %v171 = vpop.f32.mrb[0].mxu0
  %v172 = vadd.f32 %v40, %v171
  %v173 = vpop.f32.mrb[0].mxu0
  %174 = vmatprep.mubr.f32.mxu0 0.0
  %175 = vmatmul.mubr.f32.gmra.mrb[0].mxu0 %v53
  %v176 = vpop.f32.mrb[0].mxu0
  %v177 = vadd.f32 %v40, %v176
  %v178 = vpop.f32.mrb[0].mxu0
  %179 = vmatprep.mubr.f32.mxu0 0.0
  %180 = vmatmul.mubr.f32.gmra.mrb[0].mxu0 %v56
  %v181 = vpop.f32.mrb[0].mxu0
  %v182 = vadd.f32 %v40, %v181
  %v183 = vpop.f32.mrb[0].mxu0
  %184 = vmatprep.mubr.f32.mxu0 0.0
  %185 = vmatmul.mubr.f32.gmra.mrb[0].mxu0 %v59
  %v186 = vpop.f32.mrb[0].mxu0
  %v187 = vadd.f32 %v40, %v186
  %v188 = vpop.f32.mrb[0].mxu0
  %189 = vmatprep.mubr.f32.mxu0 0.0
  %190 = vmatmul.mubr.f32.gmra.mrb[0].mxu0 %v62
  %v191 = vpop.f32.mrb[0].mxu0
  %v192 = vadd.f32 %v40, %v191
  %v193 = vpop.f32.mrb[0].mxu0
  %194 = vmatprep.mubr.f32.mxu0 0.0
  %195 = vmatmul.mubr.f32.gmra.mrb[0].mxu0 %v65
  %v196 = vpop.f32.mrb[0].mxu0
  %v197 = vadd.f32 %v40, %v196
  %v198 = vpop.f32.mrb[0].mxu0
  %199 = vmatprep.mubr.f32.mxu0 0.0
  %200 = vmatmul.mubr.f32.gmra.mrb[0].mxu0 %v68
  %v201 = vpop.f32.mrb[0].mxu0
  %v202 = vadd.f32 %v40, %v201
  %v203 = vpop.f32.mrb[0].mxu0
  %204 = vmatprep.mubr.f32.mxu0 0.0
  %205 = vmatmul.mubr.f32.gmra.mrb[0].mxu0 %v71
  %v206 = vpop.f32.mrb[0].mxu0
  %v207 = vadd.f32 %v40, %v206
  %v208 = vpop.f32.mrb[0].mxu0
  %209 = vmatprep.mubr.f32.mxu0 0.0
  %210 = vmatmul.mubr.f32.gmra.mrb[0].mxu0 %v74
  %v211 = vpop.f32.mrb[0].mxu0
  %v212 = vadd.f32 %v40, %v211
  %v213 = vpop.f32.mrb[0].mxu0
  %214 = vmatprep.mubr.f32.mxu0 0.0
  %215 = vmatmul.mubr.f32.gmra.mrb[0].mxu0 %v77
  %v216 = vpop.f32.mrb[0].mxu0
  %v217 = vadd.f32 %v40, %v216
  %v218 = vpop.f32.mrb[0].mxu0
  %219 = vmatprep.mubr.f32.mxu0 0.0
  %220 = vmatmul.mubr.f32.gmra.mrb[0].mxu0 %v80
  %v221 = vpop.f32.mrb[0].mxu0
  %v222 = vadd.f32 %v40, %v221
  %v223 = vpop.f32.mrb[0].mxu0
  %224 = vmatprep.mubr.f32.mxu0 0.0
  %225 = vmatmul.mubr.f32.gmra.mrb[0].mxu0 %v83
  %v226 = vpop.f32.mrb[0].mxu0
  %v227 = vadd.f32 %v40, %v226
  %v228 = vpop.f32.mrb[0].mxu0
  %229 = vmatprep.mubr.f32.mxu0 0.0
  %230 = vmatmul.mubr.f32.gmra.mrb[0].mxu0 %v86
  %v231 = vpop.f32.mrb[0].mxu0
  %v232 = vadd.f32 %v40, %v231
  %v233 = vpop.f32.mrb[0].mxu0
  %234 = vmatprep.mubr.f32.mxu0 0.0
  %235 = vmatmul.mubr.f32.gmra.mrb[0].mxu0 %v89
  %v236 = vpop.f32.mrb[0].mxu0
  %v237 = vadd.f32 %v40, %v236
  %v238 = vpop.f32.mrb[0].mxu0
  %239 = vdwg.mxu0
  %v240 = vmax.f32 %v162, 0.0
  %v241 = vmax.f32 %v167, 0.0
  %v242 = vmax.f32 %v172, 0.0
  %v243 = vmax.f32 %v177, 0.0
  %v244 = vmax.f32 %v182, 0.0
  %v245 = vmax.f32 %v187, 0.0
  %v246 = vmax.f32 %v192, 0.0
  %v247 = vmax.f32 %v197, 0.0
  %v248 = vmax.f32 %v202, 0.0
  %v249 = vmax.f32 %v207, 0.0
  %v250 = vmax.f32 %v212, 0.0
  %v251 = vmax.f32 %v217, 0.0
  %v252 = vmax.f32 %v222, 0.0
  %v253 = vmax.f32 %v227, 0.0
  %v254 = vmax.f32 %v232, 0.0
  %v255 = vmax.f32 %v237, 0.0
  %vm256 = vcmask 64512
  %257 = vst.msk [vmem:[%s3] sm:$0xff] %vm256, %v240
  %258 = vst.msk [vmem:[%s3 + $0x8] sm:$0xff] %vm256, %v241
  %259 = vst.msk [vmem:[%s3 + $0x10] sm:$0xff] %vm256, %v242
  %260 = vst.msk [vmem:[%s3 + $0x18] sm:$0xff] %vm256, %v243
  %261 = vst.msk [vmem:[%s3 + $0x20] sm:$0xff] %vm256, %v244
  %262 = vst.msk [vmem:[%s3 + $0x28] sm:$0xff] %vm256, %v245
  %263 = vst.msk [vmem:[%s3 + $0x30] sm:$0xff] %vm256, %v246
  %264 = vst.msk [vmem:[%s3 + $0x38] sm:$0xff] %vm256, %v247
  %265 = vst.msk [vmem:[%s3 + $0x40] sm:$0xff] %vm256, %v248
  %266 = vst.msk [vmem:[%s3 + $0x48] sm:$0xff] %vm256, %v249
  %267 = vst.msk [vmem:[%s3 + $0x50] sm:$0xff] %vm256, %v250
  %268 = vst.msk [vmem:[%s3 + $0x58] sm:$0xff] %vm256, %v251
  %269 = vst.msk [vmem:[%s3 + $0x60] sm:$0xff] %vm256, %v252
  %270 = vst.msk [vmem:[%s3 + $0x68] sm:$0xff] %vm256, %v253
  %271 = vst.msk [vmem:[%s3 + $0x70] sm:$0xff] %vm256, %v254
  %272 = vst.msk [vmem:[%s3 + $0x78] sm:$0xff] %vm256, %v255
  // Predicated region
  $region14: #{pretraining_forward.2} parent=0 // pred_check
    _
  $region15: #{pretraining_forward.2} parent=0 // pred_check_branch
    %274 = sbr.rel (0) target = $region17
  $region16: #{pretraining_forward.2} parent=0 // pred_region
    _
  $region17: #{pretraining_forward.2} parent=0 // pred_fallthru
    _
  // Predicated region
  $region18: #{pretraining_forward.2} parent=0 // pred_check
    _
  $region19: #{pretraining_forward.2} parent=0 // pred_check_branch
    %276 = sbr.rel (0) target = $region21
  $region20: #{pretraining_forward.2} parent=0 // pred_region
    _
  $region21: #{pretraining_forward.2} parent=0 // pred_fallthru
    _

// kernel: pretraining_forward.3
$region0: #{pretraining_forward.3}
  #allocation0 [shape = 'u32[]', space=smem, size = 0x4, offset = 0x4, fixed_abs, tag = 'smem constant byte address 0x4 - core index']
  #allocation1 [shape = 'u32[144,128]{1,0:T(1,128)}', space=vmem, size = 0x12000, scoped, tag = 'internal scratch']
  #allocation2 [shape = 'f32[2,128]{1,0:T(2,128)}', space=vmem, size = 0x400, scoped, tag = 'scratch operand']
  #allocation3 [shape = 'f32[16,32]{1,0:T(8,128)}', space=vmem, size = 0x2000, scoped, tag = 'scratch operand']
  #allocation4 [shape = 'f32[16,32]{1,0:T(8,128)}', space=vmem, size = 0x2000, scoped, tag = 'scratch operand']
  #allocation5 [shape = 'f32[16,32]{1,0:T(8,128)}', space=vmem, size = 0x2000, scoped, tag = 'scratch operand']
  #allocation6 [shape = 'f32[24,32]{1,0:T(8,128)}', space=vmem, size = 0x3000, scoped, tag = 'scratch operand']
  %s0 = inlined_call_operand.smem [shape: u32[73], index: -1, kind: input, shape index: {}]
  %s1 = sld [smem:[%s0]]
  %s2 = scalar_lea.smem %s0, 1
  %s3 = sld [smem:[%s2]]
  %s4 = scalar_lea.smem %s0, 2
  %s5 = sld [smem:[%s4]]
  %s6 = scalar_lea.smem %s0, 3
  %s7 = sld [smem:[%s6]]
  %s8 = scalar_lea.smem %s0, 4
  %s9 = sld [smem:[%s8]]
  %s10 = scalar_lea.smem %s0, 5
  %s11 = sld [smem:[%s10]]
  %s12 = scalar_lea.smem %s0, 6
  %s13 = sld [smem:[%s12]]
  %s14 = scalar_lea.smem %s0, 7
  %s15 = sld [smem:[%s14]]
  %s16 = scalar_lea.smem %s0, 8
  %s17 = sld [smem:[%s16]]
  %s18 = scalar_lea.smem %s0, 9
  %s19 = sld [smem:[%s18]]
  %s20 = scalar_lea.smem %s0, 10
  %s21 = sld [smem:[%s20]]
  %s22 = scalar_lea.smem %s0, 11
  %s23 = sld [smem:[%s22]]
  %s24 = scalar_lea.smem %s0, 12
  %s25 = sld [smem:[%s24]]
  %s26 = scalar_lea.smem %s0, 13
  %s27 = sld [smem:[%s26]]
  %s28 = scalar_lea.smem %s0, 14
  %s29 = sld [smem:[%s28]]
  %s30 = scalar_lea.smem %s0, 15
  %s31 = sld [smem:[%s30]]
  %s32 = scalar_lea.smem %s0, 16
  %s33 = sld [smem:[%s32]]
  %s34 = scalar_lea.smem %s0, 17
  %s35 = sld [smem:[%s34]]
  %s36 = scalar_lea.smem %s0, 18
  %s37 = sld [smem:[%s36]]
  %s38 = scalar_lea.smem %s0, 19
  %s39 = sld [smem:[%s38]]
  %s40 = scalar_lea.smem %s0, 20
  %s41 = sld [smem:[%s40]]
  %s42 = scalar_lea.smem %s0, 21
  %s43 = sld [smem:[%s42]]
  %s44 = scalar_lea.smem %s0, 22
  %s45 = sld [smem:[%s44]]
  %s46 = scalar_lea.smem %s0, 23
  %s47 = sld [smem:[%s46]]
  %s48 = scalar_lea.smem %s0, 24
  %s49 = sld [smem:[%s48]]
  %s50 = scalar_lea.smem %s0, 25
  %s51 = sld [smem:[%s50]]
  %s52 = scalar_lea.smem %s0, 26
  %s53 = sld [smem:[%s52]]
  %s54 = scalar_lea.smem %s0, 27
  %s55 = sld [smem:[%s54]]
  %s56 = scalar_lea.smem %s0, 28
  %s57 = sld [smem:[%s56]]
  %s58 = scalar_lea.smem %s0, 29
  %s59 = sld [smem:[%s58]]
  %s60 = scalar_lea.smem %s0, 30
  %s61 = sld [smem:[%s60]]
  %s62 = scalar_lea.smem %s0, 31
  %s63 = sld [smem:[%s62]]
  %s64 = scalar_lea.smem %s0, 32
  %s65 = sld [smem:[%s64]]
  %s66 = scalar_lea.smem %s0, 33
  %s67 = sld [smem:[%s66]]
  %s68 = scalar_lea.smem %s0, 34
  %s69 = sld [smem:[%s68]]
  %s70 = scalar_lea.smem %s0, 35
  %s71 = sld [smem:[%s70]]
  %s72 = scalar_lea.smem %s0, 36
  %s73 = sld [smem:[%s72]]
  %s74 = scalar_lea.smem %s0, 37
  %s75 = sld [smem:[%s74]]
  %s76 = scalar_lea.smem %s0, 38
  %s77 = sld [smem:[%s76]]
  %s78 = scalar_lea.smem %s0, 39
  %s79 = sld [smem:[%s78]]
  %s80 = scalar_lea.smem %s0, 40
  %s81 = sld [smem:[%s80]]
  %s82 = scalar_lea.smem %s0, 41
  %s83 = sld [smem:[%s82]]
  %s84 = scalar_lea.smem %s0, 42
  %s85 = sld [smem:[%s84]]
  %s86 = scalar_lea.smem %s0, 43
  %s87 = sld [smem:[%s86]]
  %s88 = scalar_lea.smem %s0, 44
  %s89 = sld [smem:[%s88]]
  %s90 = scalar_lea.smem %s0, 45
  %s91 = sld [smem:[%s90]]
  %s92 = scalar_lea.smem %s0, 46
  %s93 = sld [smem:[%s92]]
  %s94 = scalar_lea.smem %s0, 47
  %s95 = sld [smem:[%s94]]
  %s96 = scalar_lea.smem %s0, 48
  %s97 = sld [smem:[%s96]]
  %s98 = scalar_lea.smem %s0, 49
  %s99 = sld [smem:[%s98]]
  %s100 = scalar_lea.smem %s0, 50
  %s101 = sld [smem:[%s100]]
  %s102 = scalar_lea.smem %s0, 51
  %s103 = sld [smem:[%s102]]
  %s104 = scalar_lea.smem %s0, 52
  %s105 = sld [smem:[%s104]]
  %s106 = scalar_lea.smem %s0, 53
  %s107 = sld [smem:[%s106]]
  %s108 = scalar_lea.smem %s0, 54
  %s109 = sld [smem:[%s108]]
  %s110 = scalar_lea.smem %s0, 55
  %s111 = sld [smem:[%s110]]
  %s112 = scalar_lea.smem %s0, 56
  %s113 = sld [smem:[%s112]]
  %s114 = scalar_lea.smem %s0, 57
  %s115 = sld [smem:[%s114]]
  %s116 = scalar_lea.smem %s0, 58
  %s117 = sld [smem:[%s116]]
  %s118 = scalar_lea.smem %s0, 59
  %s119 = sld [smem:[%s118]]
  %s120 = scalar_lea.smem %s0, 60
  %s121 = sld [smem:[%s120]]
  %s122 = scalar_lea.smem %s0, 61
  %s123 = sld [smem:[%s122]]
  %s124 = scalar_lea.smem %s0, 62
  %s125 = sld [smem:[%s124]]
  %s126 = scalar_lea.smem %s0, 63
  %s127 = sld [smem:[%s126]]
  %s128 = scalar_lea.smem %s0, 64
  %s129 = sld [smem:[%s128]]
  %s130 = scalar_lea.smem %s0, 65
  %s131 = sld [smem:[%s130]]
  %s132 = scalar_lea.smem %s0, 66
  %s133 = sld [smem:[%s132]]
  %s134 = scalar_lea.smem %s0, 67
  %s135 = sld [smem:[%s134]]
  %s136 = scalar_lea.smem %s0, 68
  %s137 = sld [smem:[%s136]]
  %s138 = scalar_lea.smem %s0, 69
  %s139 = sld [smem:[%s138]]
  %s140 = scalar_lea.smem %s0, 70
  %s141 = sld [smem:[%s140]]
  %s142 = scalar_lea.smem %s0, 71
  %s143 = sld [smem:[%s142]]
  %s144 = scalar_lea.smem %s0, 72
  %s145 = sld [smem:[%s144]]
  %146 = xla_tuple %s143, %s145
  %s147 = sld [smem:[#allocation0]]
  $region418: #{pretraining_forward.3} parent=0
    _
  %s149 = ssub.s32 1, %s147
  %s150 = scalar_select 0, %s149, %s147
  $region1: #{pretraining_forward.3} parent=0
    #allocation7 [shape = 'u8[512]{0}', space=vmem, size = 0x400, scoped, tag = 'input window, operand 29, single buffered']
    #allocation8 [shape = 's32[1]{0}', space=sflag, size = 0x4, scoped, tag = 'scoped memory for pretraining_forward.3']
    #allocation9 [shape = 's32[1]{0}', space=sflag, size = 0x4, scoped, tag = 'scoped memory for pretraining_forward.3']
    #allocation10 [shape = 'u8[512]{0}', space=vmem, size = 0x400, scoped, tag = 'input window, operand 30, single buffered']
    #allocation11 [shape = 's32[1]{0}', space=sflag, size = 0x4, scoped, tag = 'scoped memory for pretraining_forward.3']
    #allocation12 [shape = 'u8[512]{0}', space=vmem, size = 0x400, scoped, tag = 'input window, operand 31, single buffered']
    #allocation13 [shape = 'u8[512]{0}', space=vmem, size = 0x400, scoped, tag = 'input window, operand 33, single buffered']
    #allocation14 [shape = 's32[1]{0}', space=sflag, size = 0x4, scoped, tag = 'scoped memory for pretraining_forward.3']
    #allocation15 [shape = 'u8[512]{0}', space=vmem, size = 0x400, scoped, tag = 'input window, operand 35, single buffered']
    #allocation16 [shape = 'u8[512]{0}', space=vmem, size = 0x400, scoped, tag = 'input window, operand 36, single buffered']
    #allocation17 [shape = 's32[1]{0}', space=sflag, size = 0x4, scoped, tag = 'scoped memory for pretraining_forward.3']
    #allocation18 [shape = 'u8[512]{0}', space=vmem, size = 0x400, scoped, tag = 'input window, operand 37, single buffered']
    #allocation19 [shape = 'u8[512]{0}', space=vmem, size = 0x400, scoped, tag = 'input window, operand 38, single buffered']
    #allocation20 [shape = 's32[1]{0}', space=sflag, size = 0x4, scoped, tag = 'scoped memory for pretraining_forward.3']
    #allocation21 [shape = 'u8[512]{0}', space=vmem, size = 0x400, scoped, tag = 'input window, operand 39, single buffered']
    #allocation22 [shape = 'u8[512]{0}', space=vmem, size = 0x400, scoped, tag = 'input window, operand 41, single buffered']
    #allocation23 [shape = 's32[1]{0}', space=sflag, size = 0x4, scoped, tag = 'scoped memory for pretraining_forward.3']
    #allocation24 [shape = 'u8[512]{0}', space=vmem, size = 0x400, scoped, tag = 'input window, operand 43, single buffered']
    #allocation25 [shape = 'u8[512]{0}', space=vmem, size = 0x400, scoped, tag = 'input window, operand 44, single buffered']
    #allocation26 [shape = 's32[1]{0}', space=sflag, size = 0x4, scoped, tag = 'scoped memory for pretraining_forward.3']
    #allocation27 [shape = 'u8[512]{0}', space=vmem, size = 0x400, scoped, tag = 'input window, operand 45, single buffered']
    #allocation28 [shape = 'u8[512]{0}', space=vmem, size = 0x400, scoped, tag = 'input window, operand 47, single buffered']
    #allocation29 [shape = 's32[1]{0}', space=sflag, size = 0x4, scoped, tag = 'scoped memory for pretraining_forward.3']
    #allocation30 [shape = 'u8[512]{0}', space=vmem, size = 0x400, scoped, tag = 'input window, operand 49, single buffered']
    #allocation31 [shape = 'u8[512]{0}', space=vmem, size = 0x400, scoped, tag = 'input window, operand 50, single buffered']
    #allocation32 [shape = 's32[1]{0}', space=sflag, size = 0x4, scoped, tag = 'scoped memory for pretraining_forward.3']
    #allocation33 [shape = 'u8[512]{0}', space=vmem, size = 0x400, scoped, tag = 'input window, operand 51, single buffered']
    #allocation34 [shape = 'u8[512]{0}', space=vmem, size = 0x400, scoped, tag = 'input window, operand 53, single buffered']
    #allocation35 [shape = 's32[1]{0}', space=sflag, size = 0x4, scoped, tag = 'scoped memory for pretraining_forward.3']
    #allocation36 [shape = 'u8[512]{0}', space=vmem, size = 0x400, scoped, tag = 'input window, operand 55, single buffered']
    #allocation37 [shape = 'u8[512]{0}', space=vmem, size = 0x400, scoped, tag = 'input window, operand 56, single buffered']
    #allocation38 [shape = 's32[1]{0}', space=sflag, size = 0x4, scoped, tag = 'scoped memory for pretraining_forward.3']
    #allocation39 [shape = 'u8[512]{0}', space=vmem, size = 0x400, scoped, tag = 'input window, operand 57, single buffered']
    #allocation40 [shape = 'u8[512]{0}', space=vmem, size = 0x400, scoped, tag = 'input window, operand 59, single buffered']
    #allocation41 [shape = 's32[1]{0}', space=sflag, size = 0x4, scoped, tag = 'scoped memory for pretraining_forward.3']
    #allocation42 [shape = 'u8[512]{0}', space=vmem, size = 0x400, scoped, tag = 'input window, operand 60, single buffered']
    #allocation43 [shape = 'u8[512]{0}', space=vmem, size = 0x400, scoped, tag = 'input window, operand 61, single buffered']
    #allocation44 [shape = 's32[1]{0}', space=sflag, size = 0x4, scoped, tag = 'scoped memory for pretraining_forward.3']
    #allocation45 [shape = 'u8[512]{0}', space=vmem, size = 0x400, scoped, tag = 'input window, operand 63, single buffered']
    #allocation46 [shape = 'u8[512]{0}', space=vmem, size = 0x400, scoped, tag = 'input window, operand 65, single buffered']
    #allocation47 [shape = 's32[1]{0}', space=sflag, size = 0x4, scoped, tag = 'scoped memory for pretraining_forward.3']
    #allocation48 [shape = 'u8[512]{0}', space=vmem, size = 0x400, scoped, tag = 'input window, operand 66, single buffered']
    #allocation49 [shape = 'u8[512]{0}', space=vmem, size = 0x400, scoped, tag = 'input window, operand 67, single buffered']
    #allocation50 [shape = 's32[1]{0}', space=sflag, size = 0x4, scoped, tag = 'scoped memory for pretraining_forward.3']
    #allocation51 [shape = 'u8[512]{0}', space=vmem, size = 0x400, scoped, tag = 'input window, operand 70, single buffered']
    #allocation52 [shape = 'u8[8192]{0}', space=vmem, size = 0x2000, scoped, tag = 'output window, operand 0, single buffered']
    %151 = vsyncpa [#allocation8], 0
    %152 = vsyncpa [#allocation11], 0
    %153 = vsyncpa [#allocation14], 0
    %154 = vsyncpa [#allocation17], 0
    %155 = vsyncpa [#allocation20], 0
    %156 = vsyncpa [#allocation23], 0
    %157 = vsyncpa [#allocation26], 0
    %158 = vsyncpa [#allocation29], 0
    %159 = vsyncpa [#allocation32], 0
    %160 = vsyncpa [#allocation35], 0
    %161 = vsyncpa [#allocation38], 0
    %162 = vsyncpa [#allocation41], 0
    %163 = vsyncpa [#allocation44], 0
    %164 = vsyncpa [#allocation47], 0
    %165 = vsyncpa [#allocation50], 0
    %166 = vsyncpa [#allocation9], 0
    // Predicated region
    $region2: #{pretraining_forward.3} parent=1 // pred_check
      _
    $region3: #{pretraining_forward.3} parent=1 // pred_check_branch
      %168 = sbr.rel (0) target = $region5
    $region4: #{pretraining_forward.3} parent=1 // pred_region
      _
    $region5: #{pretraining_forward.3} parent=1 // pred_fallthru
      _
    // Predicated region
    $region6: #{pretraining_forward.3} parent=1 // pred_check
      _
    $region7: #{pretraining_forward.3} parent=1 // pred_check_branch
      %170 = sbr.rel (0) target = $region9
    $region8: #{pretraining_forward.3} parent=1 // pred_region
      _
    $region9: #{pretraining_forward.3} parent=1 // pred_fallthru
      _
    // Predicated region
    $region10: #{pretraining_forward.3} parent=1 // pred_check
      _
    $region11: #{pretraining_forward.3} parent=1 // pred_check_branch
      %172 = sbr.rel (0) target = $region13
    $region12: #{pretraining_forward.3} parent=1 // pred_region
      _
    $region13: #{pretraining_forward.3} parent=1 // pred_fallthru
      _
    // Predicated region
    $region14: #{pretraining_forward.3} parent=1 // pred_check
      _
    $region15: #{pretraining_forward.3} parent=1 // pred_check_branch
      %174 = sbr.rel (0) target = $region17
    $region16: #{pretraining_forward.3} parent=1 // pred_region
      _
    $region17: #{pretraining_forward.3} parent=1 // pred_fallthru
      _
    // Predicated region
    $region18: #{pretraining_forward.3} parent=1 // pred_check
      _
    $region19: #{pretraining_forward.3} parent=1 // pred_check_branch
      %176 = sbr.rel (0) target = $region21
    $region20: #{pretraining_forward.3} parent=1 // pred_region
      _
    $region21: #{pretraining_forward.3} parent=1 // pred_fallthru
      _
    // Predicated region
    $region22: #{pretraining_forward.3} parent=1 // pred_check
      _
    $region23: #{pretraining_forward.3} parent=1 // pred_check_branch
      %178 = sbr.rel (0) target = $region25
    $region24: #{pretraining_forward.3} parent=1 // pred_region
      _
    $region25: #{pretraining_forward.3} parent=1 // pred_fallthru
      _
    // Predicated region
    $region26: #{pretraining_forward.3} parent=1 // pred_check
      _
    $region27: #{pretraining_forward.3} parent=1 // pred_check_branch
      %180 = sbr.rel (0) target = $region29
    $region28: #{pretraining_forward.3} parent=1 // pred_region
      _
    $region29: #{pretraining_forward.3} parent=1 // pred_fallthru
      _
    // Predicated region
    $region30: #{pretraining_forward.3} parent=1 // pred_check
      _
    $region31: #{pretraining_forward.3} parent=1 // pred_check_branch
      %182 = sbr.rel (0) target = $region33
    $region32: #{pretraining_forward.3} parent=1 // pred_region
      _
    $region33: #{pretraining_forward.3} parent=1 // pred_fallthru
      _
    // Predicated region
    $region34: #{pretraining_forward.3} parent=1 // pred_check
      _
    $region35: #{pretraining_forward.3} parent=1 // pred_check_branch
      %184 = sbr.rel (0) target = $region37
    $region36: #{pretraining_forward.3} parent=1 // pred_region
      _
    $region37: #{pretraining_forward.3} parent=1 // pred_fallthru
      _
    // Predicated region
    $region38: #{pretraining_forward.3} parent=1 // pred_check
      _
    $region39: #{pretraining_forward.3} parent=1 // pred_check_branch
      %186 = sbr.rel (0) target = $region41
    $region40: #{pretraining_forward.3} parent=1 // pred_region
      _
    $region41: #{pretraining_forward.3} parent=1 // pred_fallthru
      _
    // Predicated region
    $region42: #{pretraining_forward.3} parent=1 // pred_check
      _
    $region43: #{pretraining_forward.3} parent=1 // pred_check_branch
      %188 = sbr.rel (0) target = $region45
    $region44: #{pretraining_forward.3} parent=1 // pred_region
      _
    $region45: #{pretraining_forward.3} parent=1 // pred_fallthru
      _
    // Predicated region
    $region46: #{pretraining_forward.3} parent=1 // pred_check
      _
    $region47: #{pretraining_forward.3} parent=1 // pred_check_branch
      %190 = sbr.rel (0) target = $region49
    $region48: #{pretraining_forward.3} parent=1 // pred_region
      _
    $region49: #{pretraining_forward.3} parent=1 // pred_fallthru
      _
    // Predicated region
    $region50: #{pretraining_forward.3} parent=1 // pred_check
      _
    $region51: #{pretraining_forward.3} parent=1 // pred_check_branch
      %192 = sbr.rel (0) target = $region53
    $region52: #{pretraining_forward.3} parent=1 // pred_region
      _
    $region53: #{pretraining_forward.3} parent=1 // pred_fallthru
      _
    // Predicated region
    $region54: #{pretraining_forward.3} parent=1 // pred_check
      _
    $region55: #{pretraining_forward.3} parent=1 // pred_check_branch
      %194 = sbr.rel (0) target = $region57
    $region56: #{pretraining_forward.3} parent=1 // pred_region
      _
    $region57: #{pretraining_forward.3} parent=1 // pred_fallthru
      _
    // Predicated region
    $region58: #{pretraining_forward.3} parent=1 // pred_check
      _
    $region59: #{pretraining_forward.3} parent=1 // pred_check_branch
      %196 = sbr.rel (0) target = $region61
    $region60: #{pretraining_forward.3} parent=1 // pred_region
      _
    $region61: #{pretraining_forward.3} parent=1 // pred_fallthru
      _
    // Predicated region
    $region62: #{pretraining_forward.3} parent=1 // pred_check
      _
    $region63: #{pretraining_forward.3} parent=1 // pred_check_branch
      %198 = sbr.rel (0) target = $region65
    $region64: #{pretraining_forward.3} parent=1 // pred_region
      _
    $region65: #{pretraining_forward.3} parent=1 // pred_fallthru
      _
    // Predicated region
    $region66: #{pretraining_forward.3} parent=1 // pred_check
      _
    $region67: #{pretraining_forward.3} parent=1 // pred_check_branch
      %200 = sbr.rel (0) target = $region69
    $region68: #{pretraining_forward.3} parent=1 // pred_region
      _
    $region69: #{pretraining_forward.3} parent=1 // pred_fallthru
      _
    // Predicated region
    $region70: #{pretraining_forward.3} parent=1 // pred_check
      _
    $region71: #{pretraining_forward.3} parent=1 // pred_check_branch
      %202 = sbr.rel (0) target = $region73
    $region72: #{pretraining_forward.3} parent=1 // pred_region
      _
    $region73: #{pretraining_forward.3} parent=1 // pred_fallthru
      _
    // Predicated region
    $region74: #{pretraining_forward.3} parent=1 // pred_check
      _
    $region75: #{pretraining_forward.3} parent=1 // pred_check_branch
      %204 = sbr.rel (0) target = $region77
    $region76: #{pretraining_forward.3} parent=1 // pred_region
      _
    $region77: #{pretraining_forward.3} parent=1 // pred_fallthru
      _
    // Predicated region
    $region78: #{pretraining_forward.3} parent=1 // pred_check
      _
    $region79: #{pretraining_forward.3} parent=1 // pred_check_branch
      %206 = sbr.rel (0) target = $region81
    $region80: #{pretraining_forward.3} parent=1 // pred_region
      _
    $region81: #{pretraining_forward.3} parent=1 // pred_fallthru
      _
    // Predicated region
    $region82: #{pretraining_forward.3} parent=1 // pred_check
      _
    $region83: #{pretraining_forward.3} parent=1 // pred_check_branch
      %208 = sbr.rel (0) target = $region85
    $region84: #{pretraining_forward.3} parent=1 // pred_region
      _
    $region85: #{pretraining_forward.3} parent=1 // pred_fallthru
      _
    // Predicated region
    $region86: #{pretraining_forward.3} parent=1 // pred_check
      _
    $region87: #{pretraining_forward.3} parent=1 // pred_check_branch
      %210 = sbr.rel (0) target = $region89
    $region88: #{pretraining_forward.3} parent=1 // pred_region
      _
    $region89: #{pretraining_forward.3} parent=1 // pred_fallthru
      _
    // Predicated region
    $region90: #{pretraining_forward.3} parent=1 // pred_check
      _
    $region91: #{pretraining_forward.3} parent=1 // pred_check_branch
      %212 = sbr.rel (0) target = $region93
    $region92: #{pretraining_forward.3} parent=1 // pred_region
      _
    $region93: #{pretraining_forward.3} parent=1 // pred_fallthru
      _
    // Predicated region
    $region94: #{pretraining_forward.3} parent=1 // pred_check
      _
    $region95: #{pretraining_forward.3} parent=1 // pred_check_branch
      %214 = sbr.rel (0) target = $region97
    $region96: #{pretraining_forward.3} parent=1 // pred_region
      _
    $region97: #{pretraining_forward.3} parent=1 // pred_fallthru
      _
    // Predicated region
    $region98: #{pretraining_forward.3} parent=1 // pred_check
      _
    $region99: #{pretraining_forward.3} parent=1 // pred_check_branch
      %216 = sbr.rel (0) target = $region101
    $region100: #{pretraining_forward.3} parent=1 // pred_region
      _
    $region101: #{pretraining_forward.3} parent=1 // pred_fallthru
      _
    // Predicated region
    $region102: #{pretraining_forward.3} parent=1 // pred_check
      _
    $region103: #{pretraining_forward.3} parent=1 // pred_check_branch
      %218 = sbr.rel (0) target = $region105
    $region104: #{pretraining_forward.3} parent=1 // pred_region
      _
    $region105: #{pretraining_forward.3} parent=1 // pred_fallthru
      _
    // Predicated region
    $region106: #{pretraining_forward.3} parent=1 // pred_check
      _
    $region107: #{pretraining_forward.3} parent=1 // pred_check_branch
      %220 = sbr.rel (0) target = $region109
    $region108: #{pretraining_forward.3} parent=1 // pred_region
      _
    $region109: #{pretraining_forward.3} parent=1 // pred_fallthru
      _
    // Predicated region
    $region110: #{pretraining_forward.3} parent=1 // pred_check
      _
    $region111: #{pretraining_forward.3} parent=1 // pred_check_branch
      %222 = sbr.rel (0) target = $region113
    $region112: #{pretraining_forward.3} parent=1 // pred_region
      _
    $region113: #{pretraining_forward.3} parent=1 // pred_fallthru
      _
    // Predicated region
    $region114: #{pretraining_forward.3} parent=1 // pred_check
      _
    $region115: #{pretraining_forward.3} parent=1 // pred_check_branch
      %224 = sbr.rel (0) target = $region117
    $region116: #{pretraining_forward.3} parent=1 // pred_region
      _
    $region117: #{pretraining_forward.3} parent=1 // pred_fallthru
      _
    // Predicated region
    $region118: #{pretraining_forward.3} parent=1 // pred_check
      _
    $region119: #{pretraining_forward.3} parent=1 // pred_check_branch
      %226 = sbr.rel (0) target = $region121
    $region120: #{pretraining_forward.3} parent=1 // pred_region
      %s228 = ssub.s32 16, 16
      %229 = vsyncadd [#allocation8], %s228
      %s231 = sshll.u32 [#allocation7], 4
      %s232 = int_to_ptr.vmem [resolvable:$true] %s231
      %234 = dma.hbm_to_vmem [thread:$0]  %s59, 16, %s232, [#allocation8]
    $region121: #{pretraining_forward.3} parent=1 // pred_fallthru
      _
    // Predicated region
    $region122: #{pretraining_forward.3} parent=1 // pred_check
      _
    $region123: #{pretraining_forward.3} parent=1 // pred_check_branch
      %236 = sbr.rel (0) target = $region125
    $region124: #{pretraining_forward.3} parent=1 // pred_region
      %s238 = ssub.s32 16, 16
      %239 = vsyncadd [#allocation11], %s238
      %s241 = sshll.u32 [#allocation10], 4
      %s242 = int_to_ptr.vmem [resolvable:$true] %s241
      %244 = dma.hbm_to_vmem [thread:$0]  %s61, 16, %s242, [#allocation11]
    $region125: #{pretraining_forward.3} parent=1 // pred_fallthru
      _
    // Predicated region
    $region126: #{pretraining_forward.3} parent=1 // pred_check
      _
    $region127: #{pretraining_forward.3} parent=1 // pred_check_branch
      %246 = sbr.rel (0) target = $region129
    $region128: #{pretraining_forward.3} parent=1 // pred_region
      %s248 = ssub.s32 16, 16
      %249 = vsyncadd [#allocation11], %s248
      %s251 = sshll.u32 [#allocation12], 4
      %s252 = int_to_ptr.vmem [resolvable:$true] %s251
      %254 = dma.hbm_to_vmem [thread:$0]  %s63, 16, %s252, [#allocation11]
    $region129: #{pretraining_forward.3} parent=1 // pred_fallthru
      _
    // Predicated region
    $region130: #{pretraining_forward.3} parent=1 // pred_check
      _
    $region131: #{pretraining_forward.3} parent=1 // pred_check_branch
      %256 = sbr.rel (0) target = $region133
    $region132: #{pretraining_forward.3} parent=1 // pred_region
      _
    $region133: #{pretraining_forward.3} parent=1 // pred_fallthru
      _
    // Predicated region
    $region134: #{pretraining_forward.3} parent=1 // pred_check
      _
    $region135: #{pretraining_forward.3} parent=1 // pred_check_branch
      %258 = sbr.rel (0) target = $region137
    $region136: #{pretraining_forward.3} parent=1 // pred_region
      %s260 = ssub.s32 16, 16
      %261 = vsyncadd [#allocation14], %s260
      %s263 = sshll.u32 [#allocation13], 4
      %s264 = int_to_ptr.vmem [resolvable:$true] %s263
      %266 = dma.hbm_to_vmem [thread:$0]  %s67, 16, %s264, [#allocation14]
    $region137: #{pretraining_forward.3} parent=1 // pred_fallthru
      _
    // Predicated region
    $region138: #{pretraining_forward.3} parent=1 // pred_check
      _
    $region139: #{pretraining_forward.3} parent=1 // pred_check_branch
      %268 = sbr.rel (0) target = $region141
    $region140: #{pretraining_forward.3} parent=1 // pred_region
      _
    $region141: #{pretraining_forward.3} parent=1 // pred_fallthru
      _
    // Predicated region
    $region142: #{pretraining_forward.3} parent=1 // pred_check
      _
    $region143: #{pretraining_forward.3} parent=1 // pred_check_branch
      %270 = sbr.rel (0) target = $region145
    $region144: #{pretraining_forward.3} parent=1 // pred_region
      %s272 = ssub.s32 16, 16
      %273 = vsyncadd [#allocation14], %s272
      %s275 = sshll.u32 [#allocation15], 4
      %s276 = int_to_ptr.vmem [resolvable:$true] %s275
      %278 = dma.hbm_to_vmem [thread:$0]  %s71, 16, %s276, [#allocation14]
    $region145: #{pretraining_forward.3} parent=1 // pred_fallthru
      _
    // Predicated region
    $region146: #{pretraining_forward.3} parent=1 // pred_check
      _
    $region147: #{pretraining_forward.3} parent=1 // pred_check_branch
      %280 = sbr.rel (0) target = $region149
    $region148: #{pretraining_forward.3} parent=1 // pred_region
      %s282 = ssub.s32 16, 16
      %283 = vsyncadd [#allocation17], %s282
      %s285 = sshll.u32 [#allocation16], 4
      %s286 = int_to_ptr.vmem [resolvable:$true] %s285
      %288 = dma.hbm_to_vmem [thread:$0]  %s73, 16, %s286, [#allocation17]
    $region149: #{pretraining_forward.3} parent=1 // pred_fallthru
      _
    // Predicated region
    $region150: #{pretraining_forward.3} parent=1 // pred_check
      _
    $region151: #{pretraining_forward.3} parent=1 // pred_check_branch
      %290 = sbr.rel (0) target = $region153
    $region152: #{pretraining_forward.3} parent=1 // pred_region
      %s292 = ssub.s32 16, 16
      %293 = vsyncadd [#allocation17], %s292
      %s295 = sshll.u32 [#allocation18], 4
      %s296 = int_to_ptr.vmem [resolvable:$true] %s295
      %298 = dma.hbm_to_vmem [thread:$0]  %s75, 16, %s296, [#allocation17]
    $region153: #{pretraining_forward.3} parent=1 // pred_fallthru
      _
    // Predicated region
    $region154: #{pretraining_forward.3} parent=1 // pred_check
      _
    $region155: #{pretraining_forward.3} parent=1 // pred_check_branch
      %300 = sbr.rel (0) target = $region157
    $region156: #{pretraining_forward.3} parent=1 // pred_region
      %s302 = ssub.s32 16, 16
      %303 = vsyncadd [#allocation20], %s302
      %s305 = sshll.u32 [#allocation19], 4
      %s306 = int_to_ptr.vmem [resolvable:$true] %s305
      %308 = dma.hbm_to_vmem [thread:$0]  %s77, 16, %s306, [#allocation20]
    $region157: #{pretraining_forward.3} parent=1 // pred_fallthru
      _
    // Predicated region
    $region158: #{pretraining_forward.3} parent=1 // pred_check
      _
    $region159: #{pretraining_forward.3} parent=1 // pred_check_branch
      %310 = sbr.rel (0) target = $region161
    $region160: #{pretraining_forward.3} parent=1 // pred_region
      %s312 = ssub.s32 16, 16
      %313 = vsyncadd [#allocation20], %s312
      %s315 = sshll.u32 [#allocation21], 4
      %s316 = int_to_ptr.vmem [resolvable:$true] %s315
      %318 = dma.hbm_to_vmem [thread:$0]  %s79, 16, %s316, [#allocation20]
    $region161: #{pretraining_forward.3} parent=1 // pred_fallthru
      _
    // Predicated region
    $region162: #{pretraining_forward.3} parent=1 // pred_check
      _
    $region163: #{pretraining_forward.3} parent=1 // pred_check_branch
      %320 = sbr.rel (0) target = $region165
    $region164: #{pretraining_forward.3} parent=1 // pred_region
      _
    $region165: #{pretraining_forward.3} parent=1 // pred_fallthru
      _
    // Predicated region
    $region166: #{pretraining_forward.3} parent=1 // pred_check
      _
    $region167: #{pretraining_forward.3} parent=1 // pred_check_branch
      %322 = sbr.rel (0) target = $region169
    $region168: #{pretraining_forward.3} parent=1 // pred_region
      %s324 = ssub.s32 16, 16
      %325 = vsyncadd [#allocation23], %s324
      %s327 = sshll.u32 [#allocation22], 4
      %s328 = int_to_ptr.vmem [resolvable:$true] %s327
      %330 = dma.hbm_to_vmem [thread:$0]  %s83, 16, %s328, [#allocation23]
    $region169: #{pretraining_forward.3} parent=1 // pred_fallthru
      _
    // Predicated region
    $region170: #{pretraining_forward.3} parent=1 // pred_check
      _
    $region171: #{pretraining_forward.3} parent=1 // pred_check_branch
      %332 = sbr.rel (0) target = $region173
    $region172: #{pretraining_forward.3} parent=1 // pred_region
      _
    $region173: #{pretraining_forward.3} parent=1 // pred_fallthru
      _
    // Predicated region
    $region174: #{pretraining_forward.3} parent=1 // pred_check
      _
    $region175: #{pretraining_forward.3} parent=1 // pred_check_branch
      %334 = sbr.rel (0) target = $region177
    $region176: #{pretraining_forward.3} parent=1 // pred_region
      %s336 = ssub.s32 16, 16
      %337 = vsyncadd [#allocation23], %s336
      %s339 = sshll.u32 [#allocation24], 4
      %s340 = int_to_ptr.vmem [resolvable:$true] %s339
      %342 = dma.hbm_to_vmem [thread:$0]  %s87, 16, %s340, [#allocation23]
    $region177: #{pretraining_forward.3} parent=1 // pred_fallthru
      _
    // Predicated region
    $region178: #{pretraining_forward.3} parent=1 // pred_check
      _
    $region179: #{pretraining_forward.3} parent=1 // pred_check_branch
      %344 = sbr.rel (0) target = $region181
    $region180: #{pretraining_forward.3} parent=1 // pred_region
      %s346 = ssub.s32 16, 16
      %347 = vsyncadd [#allocation26], %s346
      %s349 = sshll.u32 [#allocation25], 4
      %s350 = int_to_ptr.vmem [resolvable:$true] %s349
      %352 = dma.hbm_to_vmem [thread:$0]  %s89, 16, %s350, [#allocation26]
    $region181: #{pretraining_forward.3} parent=1 // pred_fallthru
      _
    // Predicated region
    $region182: #{pretraining_forward.3} parent=1 // pred_check
      _
    $region183: #{pretraining_forward.3} parent=1 // pred_check_branch
      %354 = sbr.rel (0) target = $region185
    $region184: #{pretraining_forward.3} parent=1 // pred_region
      %s356 = ssub.s32 16, 16
      %357 = vsyncadd [#allocation26], %s356
      %s359 = sshll.u32 [#allocation27], 4
      %s360 = int_to_ptr.vmem [resolvable:$true] %s359
      %362 = dma.hbm_to_vmem [thread:$0]  %s91, 16, %s360, [#allocation26]
    $region185: #{pretraining_forward.3} parent=1 // pred_fallthru
      _
    // Predicated region
    $region186: #{pretraining_forward.3} parent=1 // pred_check
      _
    $region187: #{pretraining_forward.3} parent=1 // pred_check_branch
      %364 = sbr.rel (0) target = $region189
    $region188: #{pretraining_forward.3} parent=1 // pred_region
      _
    $region189: #{pretraining_forward.3} parent=1 // pred_fallthru
      _
    // Predicated region
    $region190: #{pretraining_forward.3} parent=1 // pred_check
      _
    $region191: #{pretraining_forward.3} parent=1 // pred_check_branch
      %366 = sbr.rel (0) target = $region193
    $region192: #{pretraining_forward.3} parent=1 // pred_region
      %s368 = ssub.s32 16, 16
      %369 = vsyncadd [#allocation29], %s368
      %s371 = sshll.u32 [#allocation28], 4
      %s372 = int_to_ptr.vmem [resolvable:$true] %s371
      %374 = dma.hbm_to_vmem [thread:$0]  %s95, 16, %s372, [#allocation29]
    $region193: #{pretraining_forward.3} parent=1 // pred_fallthru
      _
    // Predicated region
    $region194: #{pretraining_forward.3} parent=1 // pred_check
      _
    $region195: #{pretraining_forward.3} parent=1 // pred_check_branch
      %376 = sbr.rel (0) target = $region197
    $region196: #{pretraining_forward.3} parent=1 // pred_region
      _
    $region197: #{pretraining_forward.3} parent=1 // pred_fallthru
      _
    // Predicated region
    $region198: #{pretraining_forward.3} parent=1 // pred_check
      _
    $region199: #{pretraining_forward.3} parent=1 // pred_check_branch
      %378 = sbr.rel (0) target = $region201
    $region200: #{pretraining_forward.3} parent=1 // pred_region
      %s380 = ssub.s32 16, 16
      %381 = vsyncadd [#allocation29], %s380
      %s383 = sshll.u32 [#allocation30], 4
      %s384 = int_to_ptr.vmem [resolvable:$true] %s383
      %386 = dma.hbm_to_vmem [thread:$0]  %s99, 16, %s384, [#allocation29]
    $region201: #{pretraining_forward.3} parent=1 // pred_fallthru
      _
    // Predicated region
    $region202: #{pretraining_forward.3} parent=1 // pred_check
      _
    $region203: #{pretraining_forward.3} parent=1 // pred_check_branch
      %388 = sbr.rel (0) target = $region205
    $region204: #{pretraining_forward.3} parent=1 // pred_region
      %s390 = ssub.s32 16, 16
      %391 = vsyncadd [#allocation32], %s390
      %s393 = sshll.u32 [#allocation31], 4
      %s394 = int_to_ptr.vmem [resolvable:$true] %s393
      %396 = dma.hbm_to_vmem [thread:$0]  %s101, 16, %s394, [#allocation32]
    $region205: #{pretraining_forward.3} parent=1 // pred_fallthru
      _
    // Predicated region
    $region206: #{pretraining_forward.3} parent=1 // pred_check
      _
    $region207: #{pretraining_forward.3} parent=1 // pred_check_branch
      %398 = sbr.rel (0) target = $region209
    $region208: #{pretraining_forward.3} parent=1 // pred_region
      %s400 = ssub.s32 16, 16
      %401 = vsyncadd [#allocation32], %s400
      %s403 = sshll.u32 [#allocation33], 4
      %s404 = int_to_ptr.vmem [resolvable:$true] %s403
      %406 = dma.hbm_to_vmem [thread:$0]  %s103, 16, %s404, [#allocation32]
    $region209: #{pretraining_forward.3} parent=1 // pred_fallthru
      _
    // Predicated region
    $region210: #{pretraining_forward.3} parent=1 // pred_check
      _
    $region211: #{pretraining_forward.3} parent=1 // pred_check_branch
      %408 = sbr.rel (0) target = $region213
    $region212: #{pretraining_forward.3} parent=1 // pred_region
      _
    $region213: #{pretraining_forward.3} parent=1 // pred_fallthru
      _
    // Predicated region
    $region214: #{pretraining_forward.3} parent=1 // pred_check
      _
    $region215: #{pretraining_forward.3} parent=1 // pred_check_branch
      %410 = sbr.rel (0) target = $region217
    $region216: #{pretraining_forward.3} parent=1 // pred_region
      %s412 = ssub.s32 16, 16
      %413 = vsyncadd [#allocation35], %s412
      %s415 = sshll.u32 [#allocation34], 4
      %s416 = int_to_ptr.vmem [resolvable:$true] %s415
      %418 = dma.hbm_to_vmem [thread:$0]  %s107, 16, %s416, [#allocation35]
    $region217: #{pretraining_forward.3} parent=1 // pred_fallthru
      _
    // Predicated region
    $region218: #{pretraining_forward.3} parent=1 // pred_check
      _
    $region219: #{pretraining_forward.3} parent=1 // pred_check_branch
      %420 = sbr.rel (0) target = $region221
    $region220: #{pretraining_forward.3} parent=1 // pred_region
      _
    $region221: #{pretraining_forward.3} parent=1 // pred_fallthru
      _
    // Predicated region
    $region222: #{pretraining_forward.3} parent=1 // pred_check
      _
    $region223: #{pretraining_forward.3} parent=1 // pred_check_branch
      %422 = sbr.rel (0) target = $region225
    $region224: #{pretraining_forward.3} parent=1 // pred_region
      %s424 = ssub.s32 16, 16
      %425 = vsyncadd [#allocation35], %s424
      %s427 = sshll.u32 [#allocation36], 4
      %s428 = int_to_ptr.vmem [resolvable:$true] %s427
      %430 = dma.hbm_to_vmem [thread:$0]  %s111, 16, %s428, [#allocation35]
    $region225: #{pretraining_forward.3} parent=1 // pred_fallthru
      _
    // Predicated region
    $region226: #{pretraining_forward.3} parent=1 // pred_check
      _
    $region227: #{pretraining_forward.3} parent=1 // pred_check_branch
      %432 = sbr.rel (0) target = $region229
    $region228: #{pretraining_forward.3} parent=1 // pred_region
      %s434 = ssub.s32 16, 16
      %435 = vsyncadd [#allocation38], %s434
      %s437 = sshll.u32 [#allocation37], 4
      %s438 = int_to_ptr.vmem [resolvable:$true] %s437
      %440 = dma.hbm_to_vmem [thread:$0]  %s113, 16, %s438, [#allocation38]
    $region229: #{pretraining_forward.3} parent=1 // pred_fallthru
      _
    // Predicated region
    $region230: #{pretraining_forward.3} parent=1 // pred_check
      _
    $region231: #{pretraining_forward.3} parent=1 // pred_check_branch
      %442 = sbr.rel (0) target = $region233
    $region232: #{pretraining_forward.3} parent=1 // pred_region
      %s444 = ssub.s32 16, 16
      %445 = vsyncadd [#allocation38], %s444
      %s447 = sshll.u32 [#allocation39], 4
      %s448 = int_to_ptr.vmem [resolvable:$true] %s447
      %450 = dma.hbm_to_vmem [thread:$0]  %s115, 16, %s448, [#allocation38]
    $region233: #{pretraining_forward.3} parent=1 // pred_fallthru
      _
    // Predicated region
    $region234: #{pretraining_forward.3} parent=1 // pred_check
      _
    $region235: #{pretraining_forward.3} parent=1 // pred_check_branch
      %452 = sbr.rel (0) target = $region237
    $region236: #{pretraining_forward.3} parent=1 // pred_region
      _
    $region237: #{pretraining_forward.3} parent=1 // pred_fallthru
      _
    // Predicated region
    $region238: #{pretraining_forward.3} parent=1 // pred_check
      _
    $region239: #{pretraining_forward.3} parent=1 // pred_check_branch
      %454 = sbr.rel (0) target = $region241
    $region240: #{pretraining_forward.3} parent=1 // pred_region
      %s456 = ssub.s32 16, 16
      %457 = vsyncadd [#allocation41], %s456
      %s459 = sshll.u32 [#allocation40], 4
      %s460 = int_to_ptr.vmem [resolvable:$true] %s459
      %462 = dma.hbm_to_vmem [thread:$0]  %s119, 16, %s460, [#allocation41]
    $region241: #{pretraining_forward.3} parent=1 // pred_fallthru
      _
    // Predicated region
    $region242: #{pretraining_forward.3} parent=1 // pred_check
      _
    $region243: #{pretraining_forward.3} parent=1 // pred_check_branch
      %464 = sbr.rel (0) target = $region245
    $region244: #{pretraining_forward.3} parent=1 // pred_region
      %s466 = ssub.s32 16, 16
      %467 = vsyncadd [#allocation41], %s466
      %s469 = sshll.u32 [#allocation42], 4
      %s470 = int_to_ptr.vmem [resolvable:$true] %s469
      %472 = dma.hbm_to_vmem [thread:$0]  %s121, 16, %s470, [#allocation41]
    $region245: #{pretraining_forward.3} parent=1 // pred_fallthru
      _
    // Predicated region
    $region246: #{pretraining_forward.3} parent=1 // pred_check
      _
    $region247: #{pretraining_forward.3} parent=1 // pred_check_branch
      %474 = sbr.rel (0) target = $region249
    $region248: #{pretraining_forward.3} parent=1 // pred_region
      %s476 = ssub.s32 16, 16
      %477 = vsyncadd [#allocation44], %s476
      %s479 = sshll.u32 [#allocation43], 4
      %s480 = int_to_ptr.vmem [resolvable:$true] %s479
      %482 = dma.hbm_to_vmem [thread:$0]  %s123, 16, %s480, [#allocation44]
    $region249: #{pretraining_forward.3} parent=1 // pred_fallthru
      _
    // Predicated region
    $region250: #{pretraining_forward.3} parent=1 // pred_check
      _
    $region251: #{pretraining_forward.3} parent=1 // pred_check_branch
      %484 = sbr.rel (0) target = $region253
    $region252: #{pretraining_forward.3} parent=1 // pred_region
      _
    $region253: #{pretraining_forward.3} parent=1 // pred_fallthru
      _
    // Predicated region
    $region254: #{pretraining_forward.3} parent=1 // pred_check
      _
    $region255: #{pretraining_forward.3} parent=1 // pred_check_branch
      %486 = sbr.rel (0) target = $region257
    $region256: #{pretraining_forward.3} parent=1 // pred_region
      %s488 = ssub.s32 16, 16
      %489 = vsyncadd [#allocation44], %s488
      %s491 = sshll.u32 [#allocation45], 4
      %s492 = int_to_ptr.vmem [resolvable:$true] %s491
      %494 = dma.hbm_to_vmem [thread:$0]  %s127, 16, %s492, [#allocation44]
    $region257: #{pretraining_forward.3} parent=1 // pred_fallthru
      _
    // Predicated region
    $region258: #{pretraining_forward.3} parent=1 // pred_check
      _
    $region259: #{pretraining_forward.3} parent=1 // pred_check_branch
      %496 = sbr.rel (0) target = $region261
    $region260: #{pretraining_forward.3} parent=1 // pred_region
      _
    $region261: #{pretraining_forward.3} parent=1 // pred_fallthru
      _
    // Predicated region
    $region262: #{pretraining_forward.3} parent=1 // pred_check
      _
    $region263: #{pretraining_forward.3} parent=1 // pred_check_branch
      %498 = sbr.rel (0) target = $region265
    $region264: #{pretraining_forward.3} parent=1 // pred_region
      %s500 = ssub.s32 16, 16
      %501 = vsyncadd [#allocation47], %s500
      %s503 = sshll.u32 [#allocation46], 4
      %s504 = int_to_ptr.vmem [resolvable:$true] %s503
      %506 = dma.hbm_to_vmem [thread:$0]  %s131, 16, %s504, [#allocation47]
    $region265: #{pretraining_forward.3} parent=1 // pred_fallthru
      _
    // Predicated region
    $region266: #{pretraining_forward.3} parent=1 // pred_check
      _
    $region267: #{pretraining_forward.3} parent=1 // pred_check_branch
      %508 = sbr.rel (0) target = $region269
    $region268: #{pretraining_forward.3} parent=1 // pred_region
      %s510 = ssub.s32 16, 16
      %511 = vsyncadd [#allocation47], %s510
      %s513 = sshll.u32 [#allocation48], 4
      %s514 = int_to_ptr.vmem [resolvable:$true] %s513
      %516 = dma.hbm_to_vmem [thread:$0]  %s133, 16, %s514, [#allocation47]
    $region269: #{pretraining_forward.3} parent=1 // pred_fallthru
      _
    // Predicated region
    $region270: #{pretraining_forward.3} parent=1 // pred_check
      _
    $region271: #{pretraining_forward.3} parent=1 // pred_check_branch
      %518 = sbr.rel (0) target = $region273
    $region272: #{pretraining_forward.3} parent=1 // pred_region
      %s520 = ssub.s32 16, 16
      %521 = vsyncadd [#allocation50], %s520
      %s523 = sshll.u32 [#allocation49], 4
      %s524 = int_to_ptr.vmem [resolvable:$true] %s523
      %526 = dma.hbm_to_vmem [thread:$0]  %s135, 16, %s524, [#allocation50]
    $region273: #{pretraining_forward.3} parent=1 // pred_fallthru
      _
    // Predicated region
    $region274: #{pretraining_forward.3} parent=1 // pred_check
      _
    $region275: #{pretraining_forward.3} parent=1 // pred_check_branch
      %528 = sbr.rel (0) target = $region277
    $region276: #{pretraining_forward.3} parent=1 // pred_region
      _
    $region277: #{pretraining_forward.3} parent=1 // pred_fallthru
      _
    // Predicated region
    $region278: #{pretraining_forward.3} parent=1 // pred_check
      _
    $region279: #{pretraining_forward.3} parent=1 // pred_check_branch
      %530 = sbr.rel (0) target = $region281
    $region280: #{pretraining_forward.3} parent=1 // pred_region
      _
    $region281: #{pretraining_forward.3} parent=1 // pred_fallthru
      _
    // Predicated region
    $region282: #{pretraining_forward.3} parent=1 // pred_check
      _
    $region283: #{pretraining_forward.3} parent=1 // pred_check_branch
      %532 = sbr.rel (0) target = $region285
    $region284: #{pretraining_forward.3} parent=1 // pred_region
      %s534 = ssub.s32 16, 16
      %535 = vsyncadd [#allocation50], %s534
      %s537 = sshll.u32 [#allocation51], 4
      %s538 = int_to_ptr.vmem [resolvable:$true] %s537
      %540 = dma.hbm_to_vmem [thread:$0]  %s141, 16, %s538, [#allocation50]
    $region285: #{pretraining_forward.3} parent=1 // pred_fallthru
      _
    // Predicated region
    $region286: #{pretraining_forward.3} parent=1 // pred_check
      _
    $region287: #{pretraining_forward.3} parent=1 // pred_check_branch
      %542 = sbr.rel (0) target = $region289
    $region288: #{pretraining_forward.3} parent=1 // pred_region
      %543 = dma.done [#allocation8], 16
    $region289: #{pretraining_forward.3} parent=1 // pred_fallthru
      _
    // Predicated region
    $region290: #{pretraining_forward.3} parent=1 // pred_check
      _
    $region291: #{pretraining_forward.3} parent=1 // pred_check_branch
      %545 = sbr.rel (0) target = $region293
    $region292: #{pretraining_forward.3} parent=1 // pred_region
      %546 = dma.done [#allocation11], 16
    $region293: #{pretraining_forward.3} parent=1 // pred_fallthru
      _
    // Predicated region
    $region294: #{pretraining_forward.3} parent=1 // pred_check
      _
    $region295: #{pretraining_forward.3} parent=1 // pred_check_branch
      %548 = sbr.rel (0) target = $region297
    $region296: #{pretraining_forward.3} parent=1 // pred_region
      %549 = dma.done [#allocation11], 16
    $region297: #{pretraining_forward.3} parent=1 // pred_fallthru
      _
    // Predicated region
    $region298: #{pretraining_forward.3} parent=1 // pred_check
      _
    $region299: #{pretraining_forward.3} parent=1 // pred_check_branch
      %551 = sbr.rel (0) target = $region301
    $region300: #{pretraining_forward.3} parent=1 // pred_region
      %552 = dma.done [#allocation14], 16
    $region301: #{pretraining_forward.3} parent=1 // pred_fallthru
      _
    // Predicated region
    $region302: #{pretraining_forward.3} parent=1 // pred_check
      _
    $region303: #{pretraining_forward.3} parent=1 // pred_check_branch
      %554 = sbr.rel (0) target = $region305
    $region304: #{pretraining_forward.3} parent=1 // pred_region
      %555 = dma.done [#allocation14], 16
    $region305: #{pretraining_forward.3} parent=1 // pred_fallthru
      _
    // Predicated region
    $region306: #{pretraining_forward.3} parent=1 // pred_check
      _
    $region307: #{pretraining_forward.3} parent=1 // pred_check_branch
      %557 = sbr.rel (0) target = $region309
    $region308: #{pretraining_forward.3} parent=1 // pred_region
      %558 = dma.done [#allocation17], 16
    $region309: #{pretraining_forward.3} parent=1 // pred_fallthru
      _
    // Predicated region
    $region310: #{pretraining_forward.3} parent=1 // pred_check
      _
    $region311: #{pretraining_forward.3} parent=1 // pred_check_branch
      %560 = sbr.rel (0) target = $region313
    $region312: #{pretraining_forward.3} parent=1 // pred_region
      %561 = dma.done [#allocation17], 16
    $region313: #{pretraining_forward.3} parent=1 // pred_fallthru
      _
    // Predicated region
    $region314: #{pretraining_forward.3} parent=1 // pred_check
      _
    $region315: #{pretraining_forward.3} parent=1 // pred_check_branch
      %563 = sbr.rel (0) target = $region317
    $region316: #{pretraining_forward.3} parent=1 // pred_region
      %564 = dma.done [#allocation20], 16
    $region317: #{pretraining_forward.3} parent=1 // pred_fallthru
      _
    // Predicated region
    $region318: #{pretraining_forward.3} parent=1 // pred_check
      _
    $region319: #{pretraining_forward.3} parent=1 // pred_check_branch
      %566 = sbr.rel (0) target = $region321
    $region320: #{pretraining_forward.3} parent=1 // pred_region
      %567 = dma.done [#allocation20], 16
    $region321: #{pretraining_forward.3} parent=1 // pred_fallthru
      _
    // Predicated region
    $region322: #{pretraining_forward.3} parent=1 // pred_check
      _
    $region323: #{pretraining_forward.3} parent=1 // pred_check_branch
      %569 = sbr.rel (0) target = $region325
    $region324: #{pretraining_forward.3} parent=1 // pred_region
      %570 = dma.done [#allocation23], 16
    $region325: #{pretraining_forward.3} parent=1 // pred_fallthru
      _
    // Predicated region
    $region326: #{pretraining_forward.3} parent=1 // pred_check
      _
    $region327: #{pretraining_forward.3} parent=1 // pred_check_branch
      %572 = sbr.rel (0) target = $region329
    $region328: #{pretraining_forward.3} parent=1 // pred_region
      %573 = dma.done [#allocation23], 16
    $region329: #{pretraining_forward.3} parent=1 // pred_fallthru
      _
    // Predicated region
    $region330: #{pretraining_forward.3} parent=1 // pred_check
      _
    $region331: #{pretraining_forward.3} parent=1 // pred_check_branch
      %575 = sbr.rel (0) target = $region333
    $region332: #{pretraining_forward.3} parent=1 // pred_region
      %576 = dma.done [#allocation26], 16
    $region333: #{pretraining_forward.3} parent=1 // pred_fallthru
      _
    // Predicated region
    $region334: #{pretraining_forward.3} parent=1 // pred_check
      _
    $region335: #{pretraining_forward.3} parent=1 // pred_check_branch
      %578 = sbr.rel (0) target = $region337
    $region336: #{pretraining_forward.3} parent=1 // pred_region
      %579 = dma.done [#allocation26], 16
    $region337: #{pretraining_forward.3} parent=1 // pred_fallthru
      _
    // Predicated region
    $region338: #{pretraining_forward.3} parent=1 // pred_check
      _
    $region339: #{pretraining_forward.3} parent=1 // pred_check_branch
      %581 = sbr.rel (0) target = $region341
    $region340: #{pretraining_forward.3} parent=1 // pred_region
      %582 = dma.done [#allocation29], 16
    $region341: #{pretraining_forward.3} parent=1 // pred_fallthru
      _
    // Predicated region
    $region342: #{pretraining_forward.3} parent=1 // pred_check
      _
    $region343: #{pretraining_forward.3} parent=1 // pred_check_branch
      %584 = sbr.rel (0) target = $region345
    $region344: #{pretraining_forward.3} parent=1 // pred_region
      %585 = dma.done [#allocation29], 16
    $region345: #{pretraining_forward.3} parent=1 // pred_fallthru
      _
    // Predicated region
    $region346: #{pretraining_forward.3} parent=1 // pred_check
      _
    $region347: #{pretraining_forward.3} parent=1 // pred_check_branch
      %587 = sbr.rel (0) target = $region349
    $region348: #{pretraining_forward.3} parent=1 // pred_region
      %588 = dma.done [#allocation32], 16
    $region349: #{pretraining_forward.3} parent=1 // pred_fallthru
      _
    // Predicated region
    $region350: #{pretraining_forward.3} parent=1 // pred_check
      _
    $region351: #{pretraining_forward.3} parent=1 // pred_check_branch
      %590 = sbr.rel (0) target = $region353
    $region352: #{pretraining_forward.3} parent=1 // pred_region
      %591 = dma.done [#allocation32], 16
    $region353: #{pretraining_forward.3} parent=1 // pred_fallthru
      _
    // Predicated region
    $region354: #{pretraining_forward.3} parent=1 // pred_check
      _
    $region355: #{pretraining_forward.3} parent=1 // pred_check_branch
      %593 = sbr.rel (0) target = $region357
    $region356: #{pretraining_forward.3} parent=1 // pred_region
      %594 = dma.done [#allocation35], 16
    $region357: #{pretraining_forward.3} parent=1 // pred_fallthru
      _
    // Predicated region
    $region358: #{pretraining_forward.3} parent=1 // pred_check
      _
    $region359: #{pretraining_forward.3} parent=1 // pred_check_branch
      %596 = sbr.rel (0) target = $region361
    $region360: #{pretraining_forward.3} parent=1 // pred_region
      %597 = dma.done [#allocation35], 16
    $region361: #{pretraining_forward.3} parent=1 // pred_fallthru
      _
    // Predicated region
    $region362: #{pretraining_forward.3} parent=1 // pred_check
      _
    $region363: #{pretraining_forward.3} parent=1 // pred_check_branch
      %599 = sbr.rel (0) target = $region365
    $region364: #{pretraining_forward.3} parent=1 // pred_region
      %600 = dma.done [#allocation38], 16
    $region365: #{pretraining_forward.3} parent=1 // pred_fallthru
      _
    // Predicated region
    $region366: #{pretraining_forward.3} parent=1 // pred_check
      _
    $region367: #{pretraining_forward.3} parent=1 // pred_check_branch
      %602 = sbr.rel (0) target = $region369
    $region368: #{pretraining_forward.3} parent=1 // pred_region
      %603 = dma.done [#allocation38], 16
    $region369: #{pretraining_forward.3} parent=1 // pred_fallthru
      _
    // Predicated region
    $region370: #{pretraining_forward.3} parent=1 // pred_check
      _
    $region371: #{pretraining_forward.3} parent=1 // pred_check_branch
      %605 = sbr.rel (0) target = $region373
    $region372: #{pretraining_forward.3} parent=1 // pred_region
      %606 = dma.done [#allocation41], 16
    $region373: #{pretraining_forward.3} parent=1 // pred_fallthru
      _
    // Predicated region
    $region374: #{pretraining_forward.3} parent=1 // pred_check
      _
    $region375: #{pretraining_forward.3} parent=1 // pred_check_branch
      %608 = sbr.rel (0) target = $region377
    $region376: #{pretraining_forward.3} parent=1 // pred_region
      %609 = dma.done [#allocation41], 16
    $region377: #{pretraining_forward.3} parent=1 // pred_fallthru
      _
    // Predicated region
    $region378: #{pretraining_forward.3} parent=1 // pred_check
      _
    $region379: #{pretraining_forward.3} parent=1 // pred_check_branch
      %611 = sbr.rel (0) target = $region381
    $region380: #{pretraining_forward.3} parent=1 // pred_region
      %612 = dma.done [#allocation44], 16
    $region381: #{pretraining_forward.3} parent=1 // pred_fallthru
      _
    // Predicated region
    $region382: #{pretraining_forward.3} parent=1 // pred_check
      _
    $region383: #{pretraining_forward.3} parent=1 // pred_check_branch
      %614 = sbr.rel (0) target = $region385
    $region384: #{pretraining_forward.3} parent=1 // pred_region
      %615 = dma.done [#allocation44], 16
    $region385: #{pretraining_forward.3} parent=1 // pred_fallthru
      _
    // Predicated region
    $region386: #{pretraining_forward.3} parent=1 // pred_check
      _
    $region387: #{pretraining_forward.3} parent=1 // pred_check_branch
      %617 = sbr.rel (0) target = $region389
    $region388: #{pretraining_forward.3} parent=1 // pred_region
      %618 = dma.done [#allocation47], 16
    $region389: #{pretraining_forward.3} parent=1 // pred_fallthru
      _
    // Predicated region
    $region390: #{pretraining_forward.3} parent=1 // pred_check
      _
    $region391: #{pretraining_forward.3} parent=1 // pred_check_branch
      %620 = sbr.rel (0) target = $region393
    $region392: #{pretraining_forward.3} parent=1 // pred_region
      %621 = dma.done [#allocation47], 16
    $region393: #{pretraining_forward.3} parent=1 // pred_fallthru
      _
    // Predicated region
    $region394: #{pretraining_forward.3} parent=1 // pred_check
      _
    $region395: #{pretraining_forward.3} parent=1 // pred_check_branch
      %623 = sbr.rel (0) target = $region397
    $region396: #{pretraining_forward.3} parent=1 // pred_region
      %624 = dma.done [#allocation50], 16
    $region397: #{pretraining_forward.3} parent=1 // pred_fallthru
      _
    // Predicated region
    $region398: #{pretraining_forward.3} parent=1 // pred_check
      _
    $region399: #{pretraining_forward.3} parent=1 // pred_check_branch
      %626 = sbr.rel (0) target = $region401
    $region400: #{pretraining_forward.3} parent=1 // pred_region
      %627 = dma.done [#allocation50], 16
    $region401: #{pretraining_forward.3} parent=1 // pred_fallthru
      _
    %vm628 = vcmask 261120
    %629 = vst.msk [vmem:[#allocation6] sm:$0xff] %vm628, 0.0
    %630 = vst.msk [vmem:[#allocation6 + $0x8] sm:$0xff] %vm628, 0.0
    %631 = vst.msk [vmem:[#allocation6 + $0x10] sm:$0xff] %vm628, 0.0
    %v632 = vld [vmem:[%s1] sm:$0xff]
    %v633 = vld [vmem:[%s1 + $0x8] sm:$0xff]
    %v634 = vld [vmem:[%s1 + $0x10] sm:$0xff]
    %v635 = vld [vmem:[%s1 + $0x18] sm:$0xff]
    %v636 = vld [vmem:[%s3] sm:$0xff]
    %v637 = vld [vmem:[%s3 + $0x8] sm:$0xff]
    %v638 = vld [vmem:[%s3 + $0x10] sm:$0xff]
    %v639 = vld [vmem:[%s3 + $0x18] sm:$0xff]
    %v640 = vld [vmem:[%s3 + $0x20] sm:$0xff]
    %v641 = vld [vmem:[%s3 + $0x28] sm:$0xff]
    %v642 = vld [vmem:[%s3 + $0x30] sm:$0xff]
    %v643 = vld [vmem:[%s3 + $0x38] sm:$0xff]
    %v644 = vld [vmem:[%s3 + $0x40] sm:$0xff]
    %v645 = vld [vmem:[%s5] sm:$0x1]
    %v647 = vlaneseq
    %v648 = vshrl.u32 %v647, 7
    %v649 = vsub.s32 0, %v648
    %v650 = vrot.slane %v645, %v649
    %vm652 = vcmask 588800
    %v654 = vsel %vm652, %v632, 0
    %v657 = vsel %vm652, %v633, 0
    %v660 = vsel %vm652, %v634, 0
    %v663 = vsel %vm652, %v635, 0
    %665 = vmatprep.subr.mxu0 0.0
    %666 = vmatpush1.msra.mxu0 %v636
    %667 = vmatprep.subr.mxu0 0.0
    %668 = vmatpush1.msra.mxu0 %v637
    %669 = vmatprep.subr.mxu0 0.0
    %670 = vmatpush1.msra.mxu0 %v638
    %671 = vmatprep.subr.mxu0 0.0
    %672 = vmatpush1.msra.mxu0 %v639
    %673 = vmatprep.subr.mxu0 0.0
    %674 = vmatpush1.msra.mxu0 %v640
    %675 = vmatprep.subr.mxu0 0.0
    %676 = vmatpush1.msra.mxu0 %v641
    %677 = vmatprep.subr.mxu0 0.0
    %678 = vmatpush1.msra.mxu0 %v642
    %679 = vmatprep.subr.mxu0 0.0
    %680 = vmatpush1.msra.mxu0 %v643
    %681 = vmatprep.subr.mxu0 0.0
    %682 = vmatpush1.msra.mxu0 %v644
    %683 = vmatprep.subr.mxu0 0.0
    %684 = vmatpush1.msra.mxu0 0.0
    %685 = vmatprep.subr.mxu0 0.0
    %686 = vmatpush1.msra.mxu0 0.0
    %687 = vmatprep.subr.mxu0 0.0
    %688 = vmatpush1.msra.mxu0 0.0
    %689 = vmatprep.subr.mxu0 0.0
    %690 = vmatpush1.msra.mxu0 0.0
    %691 = vmatprep.subr.mxu0 0.0
    %692 = vmatpush1.msra.mxu0 0.0
    %693 = vmatprep.subr.mxu0 0.0
    %694 = vmatpush1.msra.mxu0 0.0
    %695 = vmatprep.subr.mxu0 0.0
    %696 = vmatpush1.msra.mxu0 0.0
    %697 = vmatprep.subr.mxu0 0.0
    %698 = vmatpush1.msra.mxu0 0.0
    %699 = vmatprep.subr.mxu0 0.0
    %700 = vmatpush1.msra.mxu0 0.0
    %701 = vmatprep.subr.mxu0 0.0
    %702 = vmatpush1.msra.mxu0 0.0
    %703 = vmatprep.subr.mxu0 0.0
    %704 = vmatpush1.msra.mxu0 0.0
    %705 = vmatprep.subr.mxu0 0.0
    %706 = vmatpush1.msra.mxu0 0.0
    %707 = vmatprep.subr.mxu0 0.0
    %708 = vmatpush1.msra.mxu0 0.0
    %709 = vmatprep.subr.mxu0 0.0
    %710 = vmatpush1.msra.mxu0 0.0
    %711 = vmatprep.subr.mxu0 0.0
    %712 = vmatpush1.msra.mxu0 0.0
    %713 = vmatprep.subr.mxu0 0.0
    %714 = vmatpush1.msra.mxu0 0.0
    %715 = vmatprep.subr.mxu0 0.0
    %716 = vmatpush1.msra.mxu0 0.0
    %717 = vmatprep.subr.mxu0 0.0
    %718 = vmatpush1.msra.mxu0 0.0
    %719 = vmatprep.subr.mxu0 0.0
    %720 = vmatpush1.msra.mxu0 0.0
    %721 = vmatprep.subr.mxu0 0.0
    %722 = vmatpush1.msra.mxu0 0.0
    %723 = vmatprep.subr.mxu0 0.0
    %724 = vmatpush1.msra.mxu0 0.0
    %725 = vmatprep.subr.mxu0 0.0
    %726 = vmatpush1.msra.mxu0 0.0
    %727 = vmatprep.subr.mxu0 0.0
    %728 = vmatpush1.msra.mxu0 0.0
    %729 = vmatprep.mubr.f32.mxu0 0.0
    %730 = vmatmul.mubr.f32.gmra.mrb[0].mxu0 %v654
    %v731 = vpop.f32.mrb[0].mxu0
    %v732 = vadd.f32 %v650, %v731
    %v733 = vpop.f32.mrb[0].mxu0
    %734 = vmatprep.mubr.f32.mxu0 0.0
    %735 = vmatmul.mubr.f32.gmra.mrb[0].mxu0 %v657
    %v736 = vpop.f32.mrb[0].mxu0
    %v737 = vadd.f32 %v650, %v736
    %v738 = vpop.f32.mrb[0].mxu0
    %739 = vmatprep.mubr.f32.mxu0 0.0
    %740 = vmatmul.mubr.f32.gmra.mrb[0].mxu0 %v660
    %v741 = vpop.f32.mrb[0].mxu0
    %v742 = vadd.f32 %v650, %v741
    %v743 = vpop.f32.mrb[0].mxu0
    %744 = vmatprep.mubr.f32.mxu0 0.0
    %745 = vmatmul.mubr.f32.gmra.mrb[0].mxu0 %v663
    %v746 = vpop.f32.mrb[0].mxu0
    %v747 = vadd.f32 %v650, %v746
    %v748 = vpop.f32.mrb[0].mxu0
    %749 = vdwg.mxu0
    %v750 = vmax.f32 %v732, 0.0
    %v751 = vmax.f32 %v737, 0.0
    %v752 = vmax.f32 %v742, 0.0
    %v753 = vmax.f32 %v747, 0.0
    %vm754 = vcmask 57344
    %755 = vst.msk [vmem:[#allocation2] sm:$0x1] %vm754, %v750
    %757 = vrot.lane.b32.xlu0 %v750, 8
    %v758 = vpop.permute.xlu0 %757
    %vm760 = vcmask 123969
    %761 = vst.msk [vmem:[#allocation2 - $0x1] sm:$0x2] %vm760, %v758
    %762 = vrot.lane.b32.xlu0 %v750, 16
    %v763 = vpop.permute.xlu0 %762
    %vm765 = vcmask 190594
    %766 = vst.msk [vmem:[#allocation2 - $0x2] sm:$0x4] %vm765, %v763
    %767 = vrot.lane.b32.xlu0 %v750, 24
    %v768 = vpop.permute.xlu0 %767
    %vm770 = vcmask 257219
    %771 = vst.msk [vmem:[#allocation2 - $0x3] sm:$0x8] %vm770, %v768
    %772 = vrot.lane.b32.xlu0 %v750, 32
    %v773 = vpop.permute.xlu0 %772
    %vm775 = vcmask 323844
    %776 = vst.msk [vmem:[#allocation2 - $0x4] sm:$0x10] %vm775, %v773
    %777 = vrot.lane.b32.xlu0 %v750, 40
    %v778 = vpop.permute.xlu0 %777
    %vm780 = vcmask 390469
    %781 = vst.msk [vmem:[#allocation2 - $0x5] sm:$0x20] %vm780, %v778
    %782 = vrot.lane.b32.xlu0 %v750, 48
    %v783 = vpop.permute.xlu0 %782
    %vm785 = vcmask 457094
    %786 = vst.msk [vmem:[#allocation2 - $0x6] sm:$0x40] %vm785, %v783
    %787 = vrot.lane.b32.xlu0 %v750, 56
    %v788 = vpop.permute.xlu0 %787
    %vm790 = vcmask 523719
    %791 = vst.msk [vmem:[#allocation2 - $0x7] sm:$0x80] %vm790, %v788
    %793 = vrot.lane.b32.xlu0 %v751, 64
    %v794 = vpop.permute.xlu0 %793
    %vm796 = vcmask 582144
    %797 = vst.msk [vmem:[#allocation2] sm:$0x1] %vm796, %v794
    %798 = vrot.lane.b32.xlu0 %v751, 72
    %v799 = vpop.permute.xlu0 %798
    %vm801 = vcmask 648769
    %802 = vst.msk [vmem:[#allocation2 - $0x1] sm:$0x2] %vm801, %v799
    %803 = vrot.lane.b32.xlu0 %v751, 80
    %v804 = vpop.permute.xlu0 %803
    %vm806 = vcmask 715394
    %807 = vst.msk [vmem:[#allocation2 - $0x2] sm:$0x4] %vm806, %v804
    %808 = vrot.lane.b32.xlu0 %v751, 88
    %v809 = vpop.permute.xlu0 %808
    %vm811 = vcmask 782019
    %812 = vst.msk [vmem:[#allocation2 - $0x3] sm:$0x8] %vm811, %v809
    %813 = vrot.lane.b32.xlu0 %v751, 96
    %v814 = vpop.permute.xlu0 %813
    %vm816 = vcmask 848644
    %817 = vst.msk [vmem:[#allocation2 - $0x4] sm:$0x10] %vm816, %v814
    %818 = vrot.lane.b32.xlu0 %v751, 104
    %v819 = vpop.permute.xlu0 %818
    %vm821 = vcmask 915269
    %822 = vst.msk [vmem:[#allocation2 - $0x5] sm:$0x20] %vm821, %v819
    %823 = vrot.lane.b32.xlu0 %v751, 112
    %v824 = vpop.permute.xlu0 %823
    %vm826 = vcmask 981894
    %827 = vst.msk [vmem:[#allocation2 - $0x6] sm:$0x40] %vm826, %v824
    %828 = vrot.lane.b32.xlu0 %v751, 120
    %v829 = vpop.permute.xlu0 %828
    %vm831 = vcmask 1048519
    %832 = vst.msk [vmem:[#allocation2 - $0x7] sm:$0x80] %vm831, %v829
    %833 = vst.msk [vmem:[#allocation2 + $0x1] sm:$0x1] %vm754, %v752
    %835 = vrot.lane.b32.xlu0 %v752, 8
    %v836 = vpop.permute.xlu0 %835
    %838 = vst.msk [vmem:[#allocation2] sm:$0x2] %vm760, %v836
    %839 = vrot.lane.b32.xlu0 %v752, 16
    %v840 = vpop.permute.xlu0 %839
    %842 = vst.msk [vmem:[#allocation2 - $0x1] sm:$0x4] %vm765, %v840
    %843 = vrot.lane.b32.xlu0 %v752, 24
    %v844 = vpop.permute.xlu0 %843
    %846 = vst.msk [vmem:[#allocation2 - $0x2] sm:$0x8] %vm770, %v844
    %847 = vrot.lane.b32.xlu0 %v752, 32
    %v848 = vpop.permute.xlu0 %847
    %850 = vst.msk [vmem:[#allocation2 - $0x3] sm:$0x10] %vm775, %v848
    %851 = vrot.lane.b32.xlu0 %v752, 40
    %v852 = vpop.permute.xlu0 %851
    %854 = vst.msk [vmem:[#allocation2 - $0x4] sm:$0x20] %vm780, %v852
    %855 = vrot.lane.b32.xlu0 %v752, 48
    %v856 = vpop.permute.xlu0 %855
    %858 = vst.msk [vmem:[#allocation2 - $0x5] sm:$0x40] %vm785, %v856
    %859 = vrot.lane.b32.xlu0 %v752, 56
    %v860 = vpop.permute.xlu0 %859
    %862 = vst.msk [vmem:[#allocation2 - $0x6] sm:$0x80] %vm790, %v860
    %864 = vrot.lane.b32.xlu0 %v753, 64
    %v865 = vpop.permute.xlu0 %864
    %867 = vst.msk [vmem:[#allocation2 + $0x1] sm:$0x1] %vm796, %v865
    %868 = vrot.lane.b32.xlu0 %v753, 72
    %v869 = vpop.permute.xlu0 %868
    %871 = vst.msk [vmem:[#allocation2] sm:$0x2] %vm801, %v869
    %872 = vrot.lane.b32.xlu0 %v753, 80
    %v873 = vpop.permute.xlu0 %872
    %875 = vst.msk [vmem:[#allocation2 - $0x1] sm:$0x4] %vm806, %v873
    %876 = vrot.lane.b32.xlu0 %v753, 88
    %v877 = vpop.permute.xlu0 %876
    %879 = vst.msk [vmem:[#allocation2 - $0x2] sm:$0x8] %vm811, %v877
    %880 = vrot.lane.b32.xlu0 %v753, 96
    %v881 = vpop.permute.xlu0 %880
    %883 = vst.msk [vmem:[#allocation2 - $0x3] sm:$0x10] %vm816, %v881
    %884 = vrot.lane.b32.xlu0 %v753, 104
    %v885 = vpop.permute.xlu0 %884
    %887 = vst.msk [vmem:[#allocation2 - $0x4] sm:$0x20] %vm821, %v885
    %888 = vrot.lane.b32.xlu0 %v753, 112
    %v889 = vpop.permute.xlu0 %888
    %891 = vst.msk [vmem:[#allocation2 - $0x5] sm:$0x40] %vm826, %v889
    %892 = vrot.lane.b32.xlu0 %v753, 120
    %v893 = vpop.permute.xlu0 %892
    %895 = vst.msk [vmem:[#allocation2 - $0x6] sm:$0x80] %vm831, %v893
    %v896 = vld [vmem:[#allocation2] sm:$0x3]
    %v897 = vld [vmem:[%s7] sm:$0xff]
    %v898 = vld [vmem:[%s7 + $0x8] sm:$0xff]
    %v899 = vld [vmem:[%s7 + $0x10] sm:$0xff]
    %v900 = vld [vmem:[%s7 + $0x18] sm:$0xff]
    %v901 = vld [vmem:[%s7 + $0x20] sm:$0xff]
    %v902 = vld [vmem:[%s7 + $0x28] sm:$0xff]
    %v903 = vld [vmem:[%s7 + $0x30] sm:$0xff]
    %v904 = vld [vmem:[%s7 + $0x38] sm:$0xff]
    %v905 = vld [vmem:[%s7 + $0x40] sm:$0xff]
    %v906 = vld [vmem:[%s7 + $0x48] sm:$0xff]
    %v907 = vld [vmem:[%s7 + $0x50] sm:$0xff]
    %v908 = vld [vmem:[%s7 + $0x58] sm:$0xff]
    %v909 = vld [vmem:[%s7 + $0x60] sm:$0xff]
    %v910 = vld [vmem:[%s7 + $0x68] sm:$0xff]
    %v911 = vld [vmem:[%s7 + $0x70] sm:$0xff]
    %v912 = vld [vmem:[%s7 + $0x78] sm:$0xff]
    %v913 = vld [vmem:[%s9] sm:$0x1]
    %v915 = vlaneseq
    %v916 = vshrl.u32 %v915, 7
    %v917 = vsub.s32 0, %v916
    %v918 = vrot.slane %v913, %v917
    %920 = vmatprep.subr.mxu0 0.0
    %921 = vmatpush1.msra.mxu0 %v897
    %922 = vmatprep.subr.mxu0 0.0
    %923 = vmatpush1.msra.mxu0 %v898
    %924 = vmatprep.subr.mxu0 0.0
    %925 = vmatpush1.msra.mxu0 %v899
    %926 = vmatprep.subr.mxu0 0.0
    %927 = vmatpush1.msra.mxu0 %v900
    %928 = vmatprep.subr.mxu0 0.0
    %929 = vmatpush1.msra.mxu0 %v901
    %930 = vmatprep.subr.mxu0 0.0
    %931 = vmatpush1.msra.mxu0 %v902
    %932 = vmatprep.subr.mxu0 0.0
    %933 = vmatpush1.msra.mxu0 %v903
    %934 = vmatprep.subr.mxu0 0.0
    %935 = vmatpush1.msra.mxu0 %v904
    %936 = vmatprep.subr.mxu0 0.0
    %937 = vmatpush1.msra.mxu0 %v905
    %938 = vmatprep.subr.mxu0 0.0
    %939 = vmatpush1.msra.mxu0 %v906
    %940 = vmatprep.subr.mxu0 0.0
    %941 = vmatpush1.msra.mxu0 %v907
    %942 = vmatprep.subr.mxu0 0.0
    %943 = vmatpush1.msra.mxu0 %v908
    %944 = vmatprep.subr.mxu0 0.0
    %945 = vmatpush1.msra.mxu0 %v909
    %946 = vmatprep.subr.mxu0 0.0
    %947 = vmatpush1.msra.mxu0 %v910
    %948 = vmatprep.subr.mxu0 0.0
    %949 = vmatpush1.msra.mxu0 %v911
    %950 = vmatprep.subr.mxu0 0.0
    %951 = vmatpush1.msra.mxu0 %v912
    %952 = vmatprep.subr.mxu0 0.0
    %953 = vmatpush1.msra.mxu0 0.0
    %954 = vmatprep.subr.mxu0 0.0
    %955 = vmatpush1.msra.mxu0 0.0
    %956 = vmatprep.subr.mxu0 0.0
    %957 = vmatpush1.msra.mxu0 0.0
    %958 = vmatprep.subr.mxu0 0.0
    %959 = vmatpush1.msra.mxu0 0.0
    %960 = vmatprep.subr.mxu0 0.0
    %961 = vmatpush1.msra.mxu0 0.0
    %962 = vmatprep.subr.mxu0 0.0
    %963 = vmatpush1.msra.mxu0 0.0
    %964 = vmatprep.subr.mxu0 0.0
    %965 = vmatpush1.msra.mxu0 0.0
    %966 = vmatprep.subr.mxu0 0.0
    %967 = vmatpush1.msra.mxu0 0.0
    %968 = vmatprep.subr.mxu0 0.0
    %969 = vmatpush1.msra.mxu0 0.0
    %970 = vmatprep.subr.mxu0 0.0
    %971 = vmatpush1.msra.mxu0 0.0
    %972 = vmatprep.subr.mxu0 0.0
    %973 = vmatpush1.msra.mxu0 0.0
    %974 = vmatprep.subr.mxu0 0.0
    %975 = vmatpush1.msra.mxu0 0.0
    %976 = vmatprep.subr.mxu0 0.0
    %977 = vmatpush1.msra.mxu0 0.0
    %978 = vmatprep.subr.mxu0 0.0
    %979 = vmatpush1.msra.mxu0 0.0
    %980 = vmatprep.subr.mxu0 0.0
    %981 = vmatpush1.msra.mxu0 0.0
    %982 = vmatprep.subr.mxu0 0.0
    %983 = vmatpush1.msra.mxu0 0.0
    %984 = vmatprep.mubr.f32.mxu0 0.0
    %985 = vmatmul.mubr.f32.gmra.mrb[0].mxu0 %v896
    %v986 = vpop.f32.mrb[0].mxu0
    %v987 = vadd.f32 %v918, %v986
    %v988 = vpop.f32.mrb[0].mxu0
    %989 = vdwg.mxu0
    %990 = vst [vmem:[%s145] sm:$0x3] %v987
    %vm991 = vcmp.ge.f32.partialorder %v896, 0.5
    %v992 = vsel %vm991, 0.0, %v896
    %v993 = vld [vmem:[%s11] sm:$0xff]
    %v994 = vld [vmem:[%s11 + $0x8] sm:$0xff]
    %v995 = vld [vmem:[%s11 + $0x10] sm:$0xff]
    %v996 = vld [vmem:[%s11 + $0x18] sm:$0xff]
    %v997 = vld [vmem:[%s11 + $0x20] sm:$0xff]
    %v998 = vld [vmem:[%s11 + $0x28] sm:$0xff]
    %v999 = vld [vmem:[%s11 + $0x30] sm:$0xff]
    %v1000 = vld [vmem:[%s11 + $0x38] sm:$0xff]
    %v1001 = vld [vmem:[%s11 + $0x40] sm:$0xff]
    %v1002 = vld [vmem:[%s11 + $0x48] sm:$0xff]
    %v1003 = vld [vmem:[%s11 + $0x50] sm:$0xff]
    %v1004 = vld [vmem:[%s11 + $0x58] sm:$0xff]
    %v1005 = vld [vmem:[%s11 + $0x60] sm:$0xff]
    %v1006 = vld [vmem:[%s11 + $0x68] sm:$0xff]
    %v1007 = vld [vmem:[%s11 + $0x70] sm:$0xff]
    %v1008 = vld [vmem:[%s11 + $0x78] sm:$0xff]
    %v1009 = vld [vmem:[%s11 + $0x80] sm:$0xff]
    %v1010 = vld [vmem:[%s11 + $0x88] sm:$0xff]
    %v1011 = vld [vmem:[%s11 + $0x90] sm:$0xff]
    %v1012 = vld [vmem:[%s11 + $0x98] sm:$0xff]
    %v1013 = vld [vmem:[%s11 + $0xa0] sm:$0xff]
    %v1014 = vld [vmem:[%s11 + $0xa8] sm:$0xff]
    %v1015 = vld [vmem:[%s11 + $0xb0] sm:$0xff]
    %v1016 = vld [vmem:[%s11 + $0xb8] sm:$0xff]
    %v1017 = vld [vmem:[%s11 + $0xc0] sm:$0xff]
    %v1018 = vld [vmem:[%s11 + $0xc8] sm:$0xff]
    %v1019 = vld [vmem:[%s11 + $0xd0] sm:$0xff]
    %v1020 = vld [vmem:[%s11 + $0xd8] sm:$0xff]
    %v1021 = vld [vmem:[%s11 + $0xe0] sm:$0xff]
    %v1022 = vld [vmem:[%s11 + $0xe8] sm:$0xff]
    %v1023 = vld [vmem:[%s11 + $0xf0] sm:$0xff]
    %v1024 = vld [vmem:[%s11 + $0xf8] sm:$0xff]
    %v1025 = vld [vmem:[%s13] sm:$0x3]
    %v1027 = vlaneseq
    %v1028 = vshrl.u32 %v1027, 7
    %v1029 = vsub.s32 0, %v1028
    %v1030 = vrot.slane %v1025, %v1029
    %v1031 = vlaneseq
    %v1032 = vshrl.u32 %v1031, 7
    %v1033 = vsub.s32 1, %v1032
    %v1034 = vrot.slane %v1025, %v1033
    %1037 = vmatprep.subr.mxu0 %v994
    %1038 = vmatpush1.msra.mxu0 %v993
    %1039 = vmatprep.subr.mxu0 %v996
    %1040 = vmatpush1.msra.mxu0 %v995
    %1041 = vmatprep.subr.mxu0 %v998
    %1042 = vmatpush1.msra.mxu0 %v997
    %1043 = vmatprep.subr.mxu0 %v1000
    %1044 = vmatpush1.msra.mxu0 %v999
    %1045 = vmatprep.subr.mxu0 %v1002
    %1046 = vmatpush1.msra.mxu0 %v1001
    %1047 = vmatprep.subr.mxu0 %v1004
    %1048 = vmatpush1.msra.mxu0 %v1003
    %1049 = vmatprep.subr.mxu0 %v1006
    %1050 = vmatpush1.msra.mxu0 %v1005
    %1051 = vmatprep.subr.mxu0 %v1008
    %1052 = vmatpush1.msra.mxu0 %v1007
    %1053 = vmatprep.subr.mxu0 %v1010
    %1054 = vmatpush1.msra.mxu0 %v1009
    %1055 = vmatprep.subr.mxu0 %v1012
    %1056 = vmatpush1.msra.mxu0 %v1011
    %1057 = vmatprep.subr.mxu0 %v1014
    %1058 = vmatpush1.msra.mxu0 %v1013
    %1059 = vmatprep.subr.mxu0 %v1016
    %1060 = vmatpush1.msra.mxu0 %v1015
    %1061 = vmatprep.subr.mxu0 %v1018
    %1062 = vmatpush1.msra.mxu0 %v1017
    %1063 = vmatprep.subr.mxu0 %v1020
    %1064 = vmatpush1.msra.mxu0 %v1019
    %1065 = vmatprep.subr.mxu0 %v1022
    %1066 = vmatpush1.msra.mxu0 %v1021
    %1067 = vmatprep.subr.mxu0 %v1024
    %1068 = vmatpush1.msra.mxu0 %v1023
    %1069 = vmatprep.subr.mxu0 0.0
    %1070 = vmatpush1.msra.mxu0 0.0
    %1071 = vmatprep.subr.mxu0 0.0
    %1072 = vmatpush1.msra.mxu0 0.0
    %1073 = vmatprep.subr.mxu0 0.0
    %1074 = vmatpush1.msra.mxu0 0.0
    %1075 = vmatprep.subr.mxu0 0.0
    %1076 = vmatpush1.msra.mxu0 0.0
    %1077 = vmatprep.subr.mxu0 0.0
    %1078 = vmatpush1.msra.mxu0 0.0
    %1079 = vmatprep.subr.mxu0 0.0
    %1080 = vmatpush1.msra.mxu0 0.0
    %1081 = vmatprep.subr.mxu0 0.0
    %1082 = vmatpush1.msra.mxu0 0.0
    %1083 = vmatprep.subr.mxu0 0.0
    %1084 = vmatpush1.msra.mxu0 0.0
    %1085 = vmatprep.subr.mxu0 0.0
    %1086 = vmatpush1.msra.mxu0 0.0
    %1087 = vmatprep.subr.mxu0 0.0
    %1088 = vmatpush1.msra.mxu0 0.0
    %1089 = vmatprep.subr.mxu0 0.0
    %1090 = vmatpush1.msra.mxu0 0.0
    %1091 = vmatprep.subr.mxu0 0.0
    %1092 = vmatpush1.msra.mxu0 0.0
    %1093 = vmatprep.subr.mxu0 0.0
    %1094 = vmatpush1.msra.mxu0 0.0
    %1095 = vmatprep.subr.mxu0 0.0
    %1096 = vmatpush1.msra.mxu0 0.0
    %1097 = vmatprep.subr.mxu0 0.0
    %1098 = vmatpush1.msra.mxu0 0.0
    %1099 = vmatprep.subr.mxu0 0.0
    %1100 = vmatpush1.msra.mxu0 0.0
    %1101 = vmatprep.mubr.f32.mxu0 0.0
    %1102 = vmatmul.mubr.f32.gmra.mrb[0].mxu0 %v992
    %v1103 = vpop.f32.mrb[0].mxu0
    %v1104 = vadd.f32 %v1030, %v1103
    %v1105 = vpop.f32.mrb[0].mxu0
    %v1106 = vadd.f32 %v1034, %v1105
    %1107 = vdwg.mxu0
    %vm1108 = vcmask 253952
    %1109 = vst.msk [vmem:[#allocation3] sm:$0x1] %vm1108, %v1104
    %1111 = vrot.lane.b32.xlu0 %v1104, 96
    %v1112 = vpop.permute.xlu0 %1111
    %1114 = vst.msk [vmem:[#allocation3 + $0x1] sm:$0x1] %vm1108, %v1112
    %1115 = vrot.lane.b32.xlu0 %v1104, 64
    %v1116 = vpop.permute.xlu0 %1115
    %1118 = vst.msk [vmem:[#allocation3 + $0x2] sm:$0x1] %vm1108, %v1116
    %1119 = vrot.lane.b32.xlu0 %v1104, 32
    %v1120 = vpop.permute.xlu0 %1119
    %1122 = vst.msk [vmem:[#allocation3 + $0x3] sm:$0x1] %vm1108, %v1120
    %1123 = vst.msk [vmem:[#allocation3 + $0x4] sm:$0x1] %vm1108, %v1106
    %1125 = vrot.lane.b32.xlu0 %v1106, 96
    %v1126 = vpop.permute.xlu0 %1125
    %1128 = vst.msk [vmem:[#allocation3 + $0x5] sm:$0x1] %vm1108, %v1126
    %1129 = vrot.lane.b32.xlu0 %v1106, 64
    %v1130 = vpop.permute.xlu0 %1129
    %1132 = vst.msk [vmem:[#allocation3 + $0x6] sm:$0x1] %vm1108, %v1130
    %1133 = vrot.lane.b32.xlu0 %v1106, 32
    %v1134 = vpop.permute.xlu0 %1133
    %1136 = vst.msk [vmem:[#allocation3 + $0x7] sm:$0x1] %vm1108, %v1134
    %vm1137 = vcmask 254977
    %1138 = vst.msk [vmem:[#allocation3 + $0x7] sm:$0x2] %vm1137, %v1104
    %1139 = vst.msk [vmem:[#allocation3 + $0x8] sm:$0x2] %vm1137, %v1112
    %1140 = vst.msk [vmem:[#allocation3 + $0x9] sm:$0x2] %vm1137, %v1116
    %1141 = vst.msk [vmem:[#allocation3 + $0xa] sm:$0x2] %vm1137, %v1120
    %1142 = vst.msk [vmem:[#allocation3 + $0xb] sm:$0x2] %vm1137, %v1106
    %1143 = vst.msk [vmem:[#allocation3 + $0xc] sm:$0x2] %vm1137, %v1126
    %1144 = vst.msk [vmem:[#allocation3 + $0xd] sm:$0x2] %vm1137, %v1130
    %1145 = vst.msk [vmem:[#allocation3 + $0xe] sm:$0x2] %vm1137, %v1134
    %v1146 = vld [vmem:[#allocation3] sm:$0xff]
    %v1147 = vld [vmem:[#allocation3 + $0x8] sm:$0xff]
    %v1148 = vld [vmem:[%s17] sm:$0x1]
    %v1149 = vld [vmem:[%s19] sm:$0x1]
    %v1150 = vsel %vm628, %v1146, 0.0
    %1151 = vadd.xlane.f32.xlu0 %v1150
    %v1152 = vpop.xlane.xlu0 %1151
    %v1153 = vsel %vm628, %v1147, 0.0
    %1154 = vadd.xlane.f32.xlu0 %v1153
    %v1155 = vpop.xlane.xlu0 %1154
    %v1156 = vrcp.pop 32.0
    %v1157 = vmul.f32 %v1152, %v1156
    %v1158 = vmul.f32 %v1155, %v1156
    %v1159 = vsub.f32 %v1146, %v1157
    %v1160 = vsub.f32 %v1147, %v1158
    %v1161 = vmul.f32 %v1159, %v1159
    %v1162 = vmul.f32 %v1160, %v1160
    %v1163 = vsel %vm628, %v1161, 0.0
    %1164 = vadd.xlane.f32.xlu0 %v1163
    %v1165 = vpop.xlane.xlu0 %1164
    %v1166 = vsel %vm628, %v1162, 0.0
    %1167 = vadd.xlane.f32.xlu0 %v1166
    %v1168 = vpop.xlane.xlu0 %1167
    %v1169 = vmul.f32 %v1165, %v1156
    %v1170 = vmul.f32 %v1168, %v1156
    %v1171 = vadd.f32 %v1169, 1e-05
    %v1172 = vadd.f32 %v1170, 1e-05
    %v1173 = vrsqrt.pop %v1171
    %v1174 = vrsqrt.pop %v1172
    %v1175 = vmul.f32 %v1159, %v1173
    %v1176 = vmul.f32 %v1160, %v1174
    %v1178 = vlaneseq
    %v1179 = vshrl.u32 %v1178, 7
    %v1180 = vsub.s32 0, %v1179
    %v1181 = vrot.slane %v1148, %v1180
    %v1183 = vmul.f32 %v1175, %v1181
    %v1184 = vmul.f32 %v1176, %v1181
    %v1186 = vlaneseq
    %v1187 = vshrl.u32 %v1186, 7
    %v1188 = vsub.s32 0, %v1187
    %v1189 = vrot.slane %v1149, %v1188
    %v1191 = vadd.f32 %v1183, %v1189
    %v1192 = vadd.f32 %v1184, %v1189
    %v1193 = vld [vmem:[%s21] sm:$0xff]
    %v1194 = vld [vmem:[%s21 + $0x8] sm:$0xff]
    %v1195 = vld [vmem:[%s21 + $0x10] sm:$0xff]
    %v1196 = vld [vmem:[%s21 + $0x18] sm:$0xff]
    %v1197 = vld [vmem:[%s23] sm:$0x1]
    %v1199 = vlaneseq
    %v1200 = vshrl.u32 %v1199, 7
    %v1201 = vsub.s32 0, %v1200
    %v1202 = vrot.slane %v1197, %v1201
    %v1205 = vsel %vm628, %v1191, 0
    %v1208 = vsel %vm628, %v1192, 0
    %1210 = vmatprep.subr.mxu0 0.0
    %1211 = vmatpush1.msra.mxu0 %v1193
    %1212 = vmatprep.subr.mxu0 0.0
    %1213 = vmatpush1.msra.mxu0 %v1194
    %1214 = vmatprep.subr.mxu0 0.0
    %1215 = vmatpush1.msra.mxu0 %v1195
    %1216 = vmatprep.subr.mxu0 0.0
    %1217 = vmatpush1.msra.mxu0 %v1196
    %1218 = vmatprep.subr.mxu0 0.0
    %1219 = vmatpush1.msra.mxu0 0.0
    %1220 = vmatprep.subr.mxu0 0.0
    %1221 = vmatpush1.msra.mxu0 0.0
    %1222 = vmatprep.subr.mxu0 0.0
    %1223 = vmatpush1.msra.mxu0 0.0
    %1224 = vmatprep.subr.mxu0 0.0
    %1225 = vmatpush1.msra.mxu0 0.0
    %1226 = vmatprep.subr.mxu0 0.0
    %1227 = vmatpush1.msra.mxu0 0.0
    %1228 = vmatprep.subr.mxu0 0.0
    %1229 = vmatpush1.msra.mxu0 0.0
    %1230 = vmatprep.subr.mxu0 0.0
    %1231 = vmatpush1.msra.mxu0 0.0
    %1232 = vmatprep.subr.mxu0 0.0
    %1233 = vmatpush1.msra.mxu0 0.0
    %1234 = vmatprep.subr.mxu0 0.0
    %1235 = vmatpush1.msra.mxu0 0.0
    %1236 = vmatprep.subr.mxu0 0.0
    %1237 = vmatpush1.msra.mxu0 0.0
    %1238 = vmatprep.subr.mxu0 0.0
    %1239 = vmatpush1.msra.mxu0 0.0
    %1240 = vmatprep.subr.mxu0 0.0
    %1241 = vmatpush1.msra.mxu0 0.0
    %1242 = vmatprep.subr.mxu0 0.0
    %1243 = vmatpush1.msra.mxu0 0.0
    %1244 = vmatprep.subr.mxu0 0.0
    %1245 = vmatpush1.msra.mxu0 0.0
    %1246 = vmatprep.subr.mxu0 0.0
    %1247 = vmatpush1.msra.mxu0 0.0
    %1248 = vmatprep.subr.mxu0 0.0
    %1249 = vmatpush1.msra.mxu0 0.0
    %1250 = vmatprep.subr.mxu0 0.0
    %1251 = vmatpush1.msra.mxu0 0.0
    %1252 = vmatprep.subr.mxu0 0.0
    %1253 = vmatpush1.msra.mxu0 0.0
    %1254 = vmatprep.subr.mxu0 0.0
    %1255 = vmatpush1.msra.mxu0 0.0
    %1256 = vmatprep.subr.mxu0 0.0
    %1257 = vmatpush1.msra.mxu0 0.0
    %1258 = vmatprep.subr.mxu0 0.0
    %1259 = vmatpush1.msra.mxu0 0.0
    %1260 = vmatprep.subr.mxu0 0.0
    %1261 = vmatpush1.msra.mxu0 0.0
    %1262 = vmatprep.subr.mxu0 0.0
    %1263 = vmatpush1.msra.mxu0 0.0
    %1264 = vmatprep.subr.mxu0 0.0
    %1265 = vmatpush1.msra.mxu0 0.0
    %1266 = vmatprep.subr.mxu0 0.0
    %1267 = vmatpush1.msra.mxu0 0.0
    %1268 = vmatprep.subr.mxu0 0.0
    %1269 = vmatpush1.msra.mxu0 0.0
    %1270 = vmatprep.subr.mxu0 0.0
    %1271 = vmatpush1.msra.mxu0 0.0
    %1272 = vmatprep.subr.mxu0 0.0
    %1273 = vmatpush1.msra.mxu0 0.0
    %1274 = vmatprep.mubr.f32.mxu0 0.0
    %1275 = vmatmul.mubr.f32.gmra.mrb[0].mxu0 %v1205
    %v1276 = vpop.f32.mrb[0].mxu0
    %v1277 = vadd.f32 %v1202, %v1276
    %v1278 = vpop.f32.mrb[0].mxu0
    %1279 = vmatprep.mubr.f32.mxu0 0.0
    %1280 = vmatmul.mubr.f32.gmra.mrb[0].mxu0 %v1208
    %v1281 = vpop.f32.mrb[0].mxu0
    %v1282 = vadd.f32 %v1202, %v1281
    %v1283 = vpop.f32.mrb[0].mxu0
    %1284 = vdwg.mxu0
    %v1285 = vxor.u32 %v1277, 2147483648
    %v1286 = vxor.u32 %v1282, 2147483648
    %v1287 = vmul.f32 %v1285, 1.442695
    %v1288 = vpow.pop %v1287
    %v1289 = vmul.f32 %v1286, 1.442695
    %v1290 = vpow.pop %v1289
    %v1291 = vadd.f32 %v1288, 1.0
    %v1292 = vadd.f32 %v1290, 1.0
    %v1293 = vrcp.pop %v1291
    %v1294 = vmul.f32 1.0, %v1293
    %v1295 = vrcp.pop %v1292
    %v1296 = vmul.f32 1.0, %v1295
    %v1297 = vmul.f32 %v1277, %v1294
    %v1298 = vmul.f32 %v1282, %v1296
    %v1299 = vld [vmem:[%s25] sm:$0xff]
    %v1300 = vld [vmem:[%s25 + $0x8] sm:$0xff]
    %v1301 = vld [vmem:[%s25 + $0x10] sm:$0xff]
    %v1302 = vld [vmem:[%s25 + $0x18] sm:$0xff]
    %v1303 = vld [vmem:[%s25 + $0x20] sm:$0xff]
    %v1304 = vld [vmem:[%s25 + $0x28] sm:$0xff]
    %v1305 = vld [vmem:[%s25 + $0x30] sm:$0xff]
    %v1306 = vld [vmem:[%s25 + $0x38] sm:$0xff]
    %v1307 = vld [vmem:[%s27] sm:$0x1]
    %v1309 = vlaneseq
    %v1310 = vshrl.u32 %v1309, 7
    %v1311 = vsub.s32 0, %v1310
    %v1312 = vrot.slane %v1307, %v1311
    %vm1314 = vcmask 523264
    %v1316 = vsel %vm1314, %v1297, 0
    %v1319 = vsel %vm1314, %v1298, 0
    %1321 = vmatprep.subr.mxu0 0.0
    %1322 = vmatpush1.msra.mxu0 %v1299
    %1323 = vmatprep.subr.mxu0 0.0
    %1324 = vmatpush1.msra.mxu0 %v1300
    %1325 = vmatprep.subr.mxu0 0.0
    %1326 = vmatpush1.msra.mxu0 %v1301
    %1327 = vmatprep.subr.mxu0 0.0
    %1328 = vmatpush1.msra.mxu0 %v1302
    %1329 = vmatprep.subr.mxu0 0.0
    %1330 = vmatpush1.msra.mxu0 %v1303
    %1331 = vmatprep.subr.mxu0 0.0
    %1332 = vmatpush1.msra.mxu0 %v1304
    %1333 = vmatprep.subr.mxu0 0.0
    %1334 = vmatpush1.msra.mxu0 %v1305
    %1335 = vmatprep.subr.mxu0 0.0
    %1336 = vmatpush1.msra.mxu0 %v1306
    %1337 = vmatprep.subr.mxu0 0.0
    %1338 = vmatpush1.msra.mxu0 0.0
    %1339 = vmatprep.subr.mxu0 0.0
    %1340 = vmatpush1.msra.mxu0 0.0
    %1341 = vmatprep.subr.mxu0 0.0
    %1342 = vmatpush1.msra.mxu0 0.0
    %1343 = vmatprep.subr.mxu0 0.0
    %1344 = vmatpush1.msra.mxu0 0.0
    %1345 = vmatprep.subr.mxu0 0.0
    %1346 = vmatpush1.msra.mxu0 0.0
    %1347 = vmatprep.subr.mxu0 0.0
    %1348 = vmatpush1.msra.mxu0 0.0
    %1349 = vmatprep.subr.mxu0 0.0
    %1350 = vmatpush1.msra.mxu0 0.0
    %1351 = vmatprep.subr.mxu0 0.0
    %1352 = vmatpush1.msra.mxu0 0.0
    %1353 = vmatprep.subr.mxu0 0.0
    %1354 = vmatpush1.msra.mxu0 0.0
    %1355 = vmatprep.subr.mxu0 0.0
    %1356 = vmatpush1.msra.mxu0 0.0
    %1357 = vmatprep.subr.mxu0 0.0
    %1358 = vmatpush1.msra.mxu0 0.0
    %1359 = vmatprep.subr.mxu0 0.0
    %1360 = vmatpush1.msra.mxu0 0.0
    %1361 = vmatprep.subr.mxu0 0.0
    %1362 = vmatpush1.msra.mxu0 0.0
    %1363 = vmatprep.subr.mxu0 0.0
    %1364 = vmatpush1.msra.mxu0 0.0
    %1365 = vmatprep.subr.mxu0 0.0
    %1366 = vmatpush1.msra.mxu0 0.0
    %1367 = vmatprep.subr.mxu0 0.0
    %1368 = vmatpush1.msra.mxu0 0.0
    %1369 = vmatprep.subr.mxu0 0.0
    %1370 = vmatpush1.msra.mxu0 0.0
    %1371 = vmatprep.subr.mxu0 0.0
    %1372 = vmatpush1.msra.mxu0 0.0
    %1373 = vmatprep.subr.mxu0 0.0
    %1374 = vmatpush1.msra.mxu0 0.0
    %1375 = vmatprep.subr.mxu0 0.0
    %1376 = vmatpush1.msra.mxu0 0.0
    %1377 = vmatprep.subr.mxu0 0.0
    %1378 = vmatpush1.msra.mxu0 0.0
    %1379 = vmatprep.subr.mxu0 0.0
    %1380 = vmatpush1.msra.mxu0 0.0
    %1381 = vmatprep.subr.mxu0 0.0
    %1382 = vmatpush1.msra.mxu0 0.0
    %1383 = vmatprep.subr.mxu0 0.0
    %1384 = vmatpush1.msra.mxu0 0.0
    %1385 = vmatprep.mubr.f32.mxu0 0.0
    %1386 = vmatmul.mubr.f32.gmra.mrb[0].mxu0 %v1316
    %v1387 = vpop.f32.mrb[0].mxu0
    %v1388 = vadd.f32 %v1312, %v1387
    %v1389 = vpop.f32.mrb[0].mxu0
    %1390 = vmatprep.mubr.f32.mxu0 0.0
    %1391 = vmatmul.mubr.f32.gmra.mrb[0].mxu0 %v1319
    %v1392 = vpop.f32.mrb[0].mxu0
    %v1393 = vadd.f32 %v1312, %v1392
    %v1394 = vpop.f32.mrb[0].mxu0
    %1395 = vdwg.mxu0
    %v1396 = vmul.f32 %v1388, 0.5
    %v1397 = vmul.f32 %v1393, 0.5
    %v1398 = vadd.f32 %v1146, %v1396
    %v1399 = vadd.f32 %v1147, %v1397
    %v1400 = vld [vmem:[%s29] sm:$0x1]
    %v1401 = vld [vmem:[%s31] sm:$0x1]
    %v1402 = vsel %vm628, %v1398, 0.0
    %1403 = vadd.xlane.f32.xlu0 %v1402
    %v1404 = vpop.xlane.xlu0 %1403
    %v1405 = vsel %vm628, %v1399, 0.0
    %1406 = vadd.xlane.f32.xlu0 %v1405
    %v1407 = vpop.xlane.xlu0 %1406
    %v1408 = vmul.f32 %v1404, %v1156
    %v1409 = vmul.f32 %v1407, %v1156
    %v1410 = vsub.f32 %v1398, %v1408
    %v1411 = vsub.f32 %v1399, %v1409
    %v1412 = vmul.f32 %v1410, %v1410
    %v1413 = vmul.f32 %v1411, %v1411
    %v1414 = vsel %vm628, %v1412, 0.0
    %1415 = vadd.xlane.f32.xlu0 %v1414
    %v1416 = vpop.xlane.xlu0 %1415
    %v1417 = vsel %vm628, %v1413, 0.0
    %1418 = vadd.xlane.f32.xlu0 %v1417
    %v1419 = vpop.xlane.xlu0 %1418
    %v1420 = vmul.f32 %v1416, %v1156
    %v1421 = vmul.f32 %v1419, %v1156
    %v1422 = vadd.f32 %v1420, 1e-05
    %v1423 = vadd.f32 %v1421, 1e-05
    %v1424 = vrsqrt.pop %v1422
    %v1425 = vrsqrt.pop %v1423
    %v1426 = vmul.f32 %v1410, %v1424
    %v1427 = vmul.f32 %v1411, %v1425
    %v1429 = vlaneseq
    %v1430 = vshrl.u32 %v1429, 7
    %v1431 = vsub.s32 0, %v1430
    %v1432 = vrot.slane %v1400, %v1431
    %v1434 = vmul.f32 %v1426, %v1432
    %v1435 = vmul.f32 %v1427, %v1432
    %v1437 = vlaneseq
    %v1438 = vshrl.u32 %v1437, 7
    %v1439 = vsub.s32 0, %v1438
    %v1440 = vrot.slane %v1401, %v1439
    %v1442 = vadd.f32 %v1434, %v1440
    %v1443 = vadd.f32 %v1435, %v1440
    %v1444 = vld [vmem:[%s33] sm:$0xff]
    %v1445 = vld [vmem:[%s33 + $0x8] sm:$0xff]
    %v1446 = vld [vmem:[%s33 + $0x10] sm:$0xff]
    %v1447 = vld [vmem:[%s33 + $0x18] sm:$0xff]
    %v1448 = vld [vmem:[%s35] sm:$0x1]
    %v1450 = vlaneseq
    %v1451 = vshrl.u32 %v1450, 7
    %v1452 = vsub.s32 0, %v1451
    %v1453 = vrot.slane %v1448, %v1452
    %v1456 = vsel %vm628, %v1442, 0
    %v1459 = vsel %vm628, %v1443, 0
    %1461 = vmatprep.subr.mxu0 0.0
    %1462 = vmatpush1.msra.mxu0 %v1444
    %1463 = vmatprep.subr.mxu0 0.0
    %1464 = vmatpush1.msra.mxu0 %v1445
    %1465 = vmatprep.subr.mxu0 0.0
    %1466 = vmatpush1.msra.mxu0 %v1446
    %1467 = vmatprep.subr.mxu0 0.0
    %1468 = vmatpush1.msra.mxu0 %v1447
    %1469 = vmatprep.subr.mxu0 0.0
    %1470 = vmatpush1.msra.mxu0 0.0
    %1471 = vmatprep.subr.mxu0 0.0
    %1472 = vmatpush1.msra.mxu0 0.0
    %1473 = vmatprep.subr.mxu0 0.0
    %1474 = vmatpush1.msra.mxu0 0.0
    %1475 = vmatprep.subr.mxu0 0.0
    %1476 = vmatpush1.msra.mxu0 0.0
    %1477 = vmatprep.subr.mxu0 0.0
    %1478 = vmatpush1.msra.mxu0 0.0
    %1479 = vmatprep.subr.mxu0 0.0
    %1480 = vmatpush1.msra.mxu0 0.0
    %1481 = vmatprep.subr.mxu0 0.0
    %1482 = vmatpush1.msra.mxu0 0.0
    %1483 = vmatprep.subr.mxu0 0.0
    %1484 = vmatpush1.msra.mxu0 0.0
    %1485 = vmatprep.subr.mxu0 0.0
    %1486 = vmatpush1.msra.mxu0 0.0
    %1487 = vmatprep.subr.mxu0 0.0
    %1488 = vmatpush1.msra.mxu0 0.0
    %1489 = vmatprep.subr.mxu0 0.0
    %1490 = vmatpush1.msra.mxu0 0.0
    %1491 = vmatprep.subr.mxu0 0.0
    %1492 = vmatpush1.msra.mxu0 0.0
    %1493 = vmatprep.subr.mxu0 0.0
    %1494 = vmatpush1.msra.mxu0 0.0
    %1495 = vmatprep.subr.mxu0 0.0
    %1496 = vmatpush1.msra.mxu0 0.0
    %1497 = vmatprep.subr.mxu0 0.0
    %1498 = vmatpush1.msra.mxu0 0.0
    %1499 = vmatprep.subr.mxu0 0.0
    %1500 = vmatpush1.msra.mxu0 0.0
    %1501 = vmatprep.subr.mxu0 0.0
    %1502 = vmatpush1.msra.mxu0 0.0
    %1503 = vmatprep.subr.mxu0 0.0
    %1504 = vmatpush1.msra.mxu0 0.0
    %1505 = vmatprep.subr.mxu0 0.0
    %1506 = vmatpush1.msra.mxu0 0.0
    %1507 = vmatprep.subr.mxu0 0.0
    %1508 = vmatpush1.msra.mxu0 0.0
    %1509 = vmatprep.subr.mxu0 0.0
    %1510 = vmatpush1.msra.mxu0 0.0
    %1511 = vmatprep.subr.mxu0 0.0
    %1512 = vmatpush1.msra.mxu0 0.0
    %1513 = vmatprep.subr.mxu0 0.0
    %1514 = vmatpush1.msra.mxu0 0.0
    %1515 = vmatprep.subr.mxu0 0.0
    %1516 = vmatpush1.msra.mxu0 0.0
    %1517 = vmatprep.subr.mxu0 0.0
    %1518 = vmatpush1.msra.mxu0 0.0
    %1519 = vmatprep.subr.mxu0 0.0
    %1520 = vmatpush1.msra.mxu0 0.0
    %1521 = vmatprep.subr.mxu0 0.0
    %1522 = vmatpush1.msra.mxu0 0.0
    %1523 = vmatprep.subr.mxu0 0.0
    %1524 = vmatpush1.msra.mxu0 0.0
    %1525 = vmatprep.mubr.f32.mxu0 0.0
    %1526 = vmatmul.mubr.f32.gmra.mrb[0].mxu0 %v1456
    %v1527 = vpop.f32.mrb[0].mxu0
    %v1528 = vadd.f32 %v1453, %v1527
    %v1529 = vpop.f32.mrb[0].mxu0
    %1530 = vmatprep.mubr.f32.mxu0 0.0
    %1531 = vmatmul.mubr.f32.gmra.mrb[0].mxu0 %v1459
    %v1532 = vpop.f32.mrb[0].mxu0
    %v1533 = vadd.f32 %v1453, %v1532
    %v1534 = vpop.f32.mrb[0].mxu0
    %1535 = vdwg.mxu0
    %v1536 = vld [vmem:[%s15] sm:$0x1]
    %v1537 = vmul.f32 %v1528, 0.35355338
    %v1538 = vlaneseq
    %v1539 = vshrl.u32 %v1538, 7
    %v1540 = vsub.s32 0, %v1539
    %v1541 = vrot.slane %v1536, %v1540
    %1543 = vrot.lane.b32.xlu0 %v1528, 96
    %v1544 = vpop.permute.xlu0 %1543
    %vm1545 = vcmask 64512
    %v1547 = vsel %vm1545, %v1537, 0
    %v1549 = vsel %vm1545, %v1544, 0
    %1551 = vmatprep.subr.mxu0 0.0
    %1552 = vmatpush1.xpose.msra.mxu0 %v1549
    %1553 = vmatprep.subr.mxu0 0.0
    %1554 = vmatpush1.xpose.msra.mxu0 0.0
    %1555 = vmatprep.subr.mxu0 0.0
    %1556 = vmatpush1.xpose.msra.mxu0 0.0
    %1557 = vmatprep.subr.mxu0 0.0
    %1558 = vmatpush1.xpose.msra.mxu0 0.0
    %1559 = vmatprep.subr.mxu0 0.0
    %1560 = vmatpush1.xpose.msra.mxu0 0.0
    %1561 = vmatprep.subr.mxu0 0.0
    %1562 = vmatpush1.xpose.msra.mxu0 0.0
    %1563 = vmatprep.subr.mxu0 0.0
    %1564 = vmatpush1.xpose.msra.mxu0 0.0
    %1565 = vmatprep.subr.mxu0 0.0
    %1566 = vmatpush1.xpose.msra.mxu0 0.0
    %1567 = vmatprep.subr.mxu0 0.0
    %1568 = vmatpush1.xpose.msra.mxu0 0.0
    %1569 = vmatprep.subr.mxu0 0.0
    %1570 = vmatpush1.xpose.msra.mxu0 0.0
    %1571 = vmatprep.subr.mxu0 0.0
    %1572 = vmatpush1.xpose.msra.mxu0 0.0
    %1573 = vmatprep.subr.mxu0 0.0
    %1574 = vmatpush1.xpose.msra.mxu0 0.0
    %1575 = vmatprep.subr.mxu0 0.0
    %1576 = vmatpush1.xpose.msra.mxu0 0.0
    %1577 = vmatprep.subr.mxu0 0.0
    %1578 = vmatpush1.xpose.msra.mxu0 0.0
    %1579 = vmatprep.subr.mxu0 0.0
    %1580 = vmatpush1.xpose.msra.mxu0 0.0
    %1581 = vmatprep.subr.mxu0 0.0
    %1582 = vmatpush1.xpose.msra.mxu0 0.0
    %1583 = vmatprep.subr.mxu0 0.0
    %1584 = vmatpush1.xpose.msra.mxu0 0.0
    %1585 = vmatprep.subr.mxu0 0.0
    %1586 = vmatpush1.xpose.msra.mxu0 0.0
    %1587 = vmatprep.subr.mxu0 0.0
    %1588 = vmatpush1.xpose.msra.mxu0 0.0
    %1589 = vmatprep.subr.mxu0 0.0
    %1590 = vmatpush1.xpose.msra.mxu0 0.0
    %1591 = vmatprep.subr.mxu0 0.0
    %1592 = vmatpush1.xpose.msra.mxu0 0.0
    %1593 = vmatprep.subr.mxu0 0.0
    %1594 = vmatpush1.xpose.msra.mxu0 0.0
    %1595 = vmatprep.subr.mxu0 0.0
    %1596 = vmatpush1.xpose.msra.mxu0 0.0
    %1597 = vmatprep.subr.mxu0 0.0
    %1598 = vmatpush1.xpose.msra.mxu0 0.0
    %1599 = vmatprep.subr.mxu0 0.0
    %1600 = vmatpush1.xpose.msra.mxu0 0.0
    %1601 = vmatprep.subr.mxu0 0.0
    %1602 = vmatpush1.xpose.msra.mxu0 0.0
    %1603 = vmatprep.subr.mxu0 0.0
    %1604 = vmatpush1.xpose.msra.mxu0 0.0
    %1605 = vmatprep.subr.mxu0 0.0
    %1606 = vmatpush1.xpose.msra.mxu0 0.0
    %1607 = vmatprep.subr.mxu0 0.0
    %1608 = vmatpush1.xpose.msra.mxu0 0.0
    %1609 = vmatprep.subr.mxu0 0.0
    %1610 = vmatpush1.xpose.msra.mxu0 0.0
    %1611 = vmatprep.subr.mxu0 0.0
    %1612 = vmatpush1.xpose.msra.mxu0 0.0
    %1613 = vmatprep.subr.mxu0 0.0
    %1614 = vmatpush1.xpose.msra.mxu0 0.0
    %1615 = vmatprep.mubr.f32.mxu0 0.0
    %1616 = vmatmul.mubr.f32.gmra.mrb[0].mxu0 %v1547
    %v1617 = vpop.f32.mrb[0].mxu0
    %v1618 = vadd.f32 %v1541, %v1617
    %v1619 = vpop.f32.mrb[0].mxu0
    %1620 = vdwg.mxu0
    %v1621 = vsel %vm1545, %v1618, -inf
    %1622 = vmax.xlane.f32.xlu0 %v1621
    %v1623 = vpop.xlane.xlu0 %1622
    %v1624 = vsub.f32 %v1618, %v1623
    %v1625 = vmul.f32 %v1624, 1.442695
    %v1626 = vpow.pop %v1625
    %v1627 = vsel %vm1545, %v1626, 0.0
    %1628 = vadd.xlane.f32.xlu0 %v1627
    %v1629 = vpop.xlane.xlu0 %1628
    %v1630 = vrcp.pop %v1629
    %v1631 = vmul.f32 %v1626, %v1630
    %1632 = vrot.lane.b32.xlu0 %v1528, 64
    %v1633 = vpop.permute.xlu0 %1632
    %v1636 = vsel %vm1545, %v1631, 0
    %1638 = vmatprep.subr.mxu0 0.0
    %1639 = vmatpush1.msra.mxu0 %v1633
    %1640 = vmatprep.subr.mxu0 0.0
    %1641 = vmatpush1.msra.mxu0 0.0
    %1642 = vmatprep.subr.mxu0 0.0
    %1643 = vmatpush1.msra.mxu0 0.0
    %1644 = vmatprep.subr.mxu0 0.0
    %1645 = vmatpush1.msra.mxu0 0.0
    %1646 = vmatprep.subr.mxu0 0.0
    %1647 = vmatpush1.msra.mxu0 0.0
    %1648 = vmatprep.subr.mxu0 0.0
    %1649 = vmatpush1.msra.mxu0 0.0
    %1650 = vmatprep.subr.mxu0 0.0
    %1651 = vmatpush1.msra.mxu0 0.0
    %1652 = vmatprep.subr.mxu0 0.0
    %1653 = vmatpush1.msra.mxu0 0.0
    %1654 = vmatprep.subr.mxu0 0.0
    %1655 = vmatpush1.msra.mxu0 0.0
    %1656 = vmatprep.subr.mxu0 0.0
    %1657 = vmatpush1.msra.mxu0 0.0
    %1658 = vmatprep.subr.mxu0 0.0
    %1659 = vmatpush1.msra.mxu0 0.0
    %1660 = vmatprep.subr.mxu0 0.0
    %1661 = vmatpush1.msra.mxu0 0.0
    %1662 = vmatprep.subr.mxu0 0.0
    %1663 = vmatpush1.msra.mxu0 0.0
    %1664 = vmatprep.subr.mxu0 0.0
    %1665 = vmatpush1.msra.mxu0 0.0
    %1666 = vmatprep.subr.mxu0 0.0
    %1667 = vmatpush1.msra.mxu0 0.0
    %1668 = vmatprep.subr.mxu0 0.0
    %1669 = vmatpush1.msra.mxu0 0.0
    %1670 = vmatprep.subr.mxu0 0.0
    %1671 = vmatpush1.msra.mxu0 0.0
    %1672 = vmatprep.subr.mxu0 0.0
    %1673 = vmatpush1.msra.mxu0 0.0
    %1674 = vmatprep.subr.mxu0 0.0
    %1675 = vmatpush1.msra.mxu0 0.0
    %1676 = vmatprep.subr.mxu0 0.0
    %1677 = vmatpush1.msra.mxu0 0.0
    %1678 = vmatprep.subr.mxu0 0.0
    %1679 = vmatpush1.msra.mxu0 0.0
    %1680 = vmatprep.subr.mxu0 0.0
    %1681 = vmatpush1.msra.mxu0 0.0
    %1682 = vmatprep.subr.mxu0 0.0
    %1683 = vmatpush1.msra.mxu0 0.0
    %1684 = vmatprep.subr.mxu0 0.0
    %1685 = vmatpush1.msra.mxu0 0.0
    %1686 = vmatprep.subr.mxu0 0.0
    %1687 = vmatpush1.msra.mxu0 0.0
    %1688 = vmatprep.subr.mxu0 0.0
    %1689 = vmatpush1.msra.mxu0 0.0
    %1690 = vmatprep.subr.mxu0 0.0
    %1691 = vmatpush1.msra.mxu0 0.0
    %1692 = vmatprep.subr.mxu0 0.0
    %1693 = vmatpush1.msra.mxu0 0.0
    %1694 = vmatprep.subr.mxu0 0.0
    %1695 = vmatpush1.msra.mxu0 0.0
    %1696 = vmatprep.subr.mxu0 0.0
    %1697 = vmatpush1.msra.mxu0 0.0
    %1698 = vmatprep.subr.mxu0 0.0
    %1699 = vmatpush1.msra.mxu0 0.0
    %1700 = vmatprep.subr.mxu0 0.0
    %1701 = vmatpush1.msra.mxu0 0.0
    %1702 = vmatprep.mubr.f32.mxu0 0.0
    %1703 = vmatmul.mubr.f32.gmra.mrb[0].mxu0 %v1636
    %v1704 = vpop.f32.mrb[0].mxu0
    %v1705 = vadd.f32 0.0, %v1704
    %v1706 = vpop.f32.mrb[0].mxu0
    %1707 = vdwg.mxu0
    %1708 = vst.msk [vmem:[#allocation4] sm:$0xff] %vm1545, %v1705
    %1709 = vrot.lane.b32.xlu0 %v1537, 120
    %v1710 = vpop.permute.xlu0 %1709
    %1711 = vrot.lane.b32.xlu0 %v1528, 88
    %v1712 = vpop.permute.xlu0 %1711
    %v1713 = vsel %vm1545, %v1710, 0
    %v1715 = vsel %vm1545, %v1712, 0
    %1717 = vmatprep.subr.mxu0 0.0
    %1718 = vmatpush1.xpose.msra.mxu0 %v1715
    %1719 = vmatprep.subr.mxu0 0.0
    %1720 = vmatpush1.xpose.msra.mxu0 0.0
    %1721 = vmatprep.subr.mxu0 0.0
    %1722 = vmatpush1.xpose.msra.mxu0 0.0
    %1723 = vmatprep.subr.mxu0 0.0
    %1724 = vmatpush1.xpose.msra.mxu0 0.0
    %1725 = vmatprep.subr.mxu0 0.0
    %1726 = vmatpush1.xpose.msra.mxu0 0.0
    %1727 = vmatprep.subr.mxu0 0.0
    %1728 = vmatpush1.xpose.msra.mxu0 0.0
    %1729 = vmatprep.subr.mxu0 0.0
    %1730 = vmatpush1.xpose.msra.mxu0 0.0
    %1731 = vmatprep.subr.mxu0 0.0
    %1732 = vmatpush1.xpose.msra.mxu0 0.0
    %1733 = vmatprep.subr.mxu0 0.0
    %1734 = vmatpush1.xpose.msra.mxu0 0.0
    %1735 = vmatprep.subr.mxu0 0.0
    %1736 = vmatpush1.xpose.msra.mxu0 0.0
    %1737 = vmatprep.subr.mxu0 0.0
    %1738 = vmatpush1.xpose.msra.mxu0 0.0
    %1739 = vmatprep.subr.mxu0 0.0
    %1740 = vmatpush1.xpose.msra.mxu0 0.0
    %1741 = vmatprep.subr.mxu0 0.0
    %1742 = vmatpush1.xpose.msra.mxu0 0.0
    %1743 = vmatprep.subr.mxu0 0.0
    %1744 = vmatpush1.xpose.msra.mxu0 0.0
    %1745 = vmatprep.subr.mxu0 0.0
    %1746 = vmatpush1.xpose.msra.mxu0 0.0
    %1747 = vmatprep.subr.mxu0 0.0
    %1748 = vmatpush1.xpose.msra.mxu0 0.0
    %1749 = vmatprep.subr.mxu0 0.0
    %1750 = vmatpush1.xpose.msra.mxu0 0.0
    %1751 = vmatprep.subr.mxu0 0.0
    %1752 = vmatpush1.xpose.msra.mxu0 0.0
    %1753 = vmatprep.subr.mxu0 0.0
    %1754 = vmatpush1.xpose.msra.mxu0 0.0
    %1755 = vmatprep.subr.mxu0 0.0
    %1756 = vmatpush1.xpose.msra.mxu0 0.0
    %1757 = vmatprep.subr.mxu0 0.0
    %1758 = vmatpush1.xpose.msra.mxu0 0.0
    %1759 = vmatprep.subr.mxu0 0.0
    %1760 = vmatpush1.xpose.msra.mxu0 0.0
    %1761 = vmatprep.subr.mxu0 0.0
    %1762 = vmatpush1.xpose.msra.mxu0 0.0
    %1763 = vmatprep.subr.mxu0 0.0
    %1764 = vmatpush1.xpose.msra.mxu0 0.0
    %1765 = vmatprep.subr.mxu0 0.0
    %1766 = vmatpush1.xpose.msra.mxu0 0.0
    %1767 = vmatprep.subr.mxu0 0.0
    %1768 = vmatpush1.xpose.msra.mxu0 0.0
    %1769 = vmatprep.subr.mxu0 0.0
    %1770 = vmatpush1.xpose.msra.mxu0 0.0
    %1771 = vmatprep.subr.mxu0 0.0
    %1772 = vmatpush1.xpose.msra.mxu0 0.0
    %1773 = vmatprep.subr.mxu0 0.0
    %1774 = vmatpush1.xpose.msra.mxu0 0.0
    %1775 = vmatprep.subr.mxu0 0.0
    %1776 = vmatpush1.xpose.msra.mxu0 0.0
    %1777 = vmatprep.subr.mxu0 0.0
    %1778 = vmatpush1.xpose.msra.mxu0 0.0
    %1779 = vmatprep.subr.mxu0 0.0
    %1780 = vmatpush1.xpose.msra.mxu0 0.0
    %1781 = vmatprep.mubr.f32.mxu0 0.0
    %1782 = vmatmul.mubr.f32.gmra.mrb[0].mxu0 %v1713
    %v1783 = vpop.f32.mrb[0].mxu0
    %v1784 = vadd.f32 %v1541, %v1783
    %v1785 = vpop.f32.mrb[0].mxu0
    %1786 = vdwg.mxu0
    %v1787 = vsel %vm1545, %v1784, -inf
    %1788 = vmax.xlane.f32.xlu0 %v1787
    %v1789 = vpop.xlane.xlu0 %1788
    %v1790 = vsub.f32 %v1784, %v1789
    %v1791 = vmul.f32 %v1790, 1.442695
    %v1792 = vpow.pop %v1791
    %v1793 = vsel %vm1545, %v1792, 0.0
    %1794 = vadd.xlane.f32.xlu0 %v1793
    %v1795 = vpop.xlane.xlu0 %1794
    %v1796 = vrcp.pop %v1795
    %v1797 = vmul.f32 %v1792, %v1796
    %1798 = vrot.lane.b32.xlu0 %v1528, 56
    %v1799 = vpop.permute.xlu0 %1798
    %v1802 = vsel %vm1545, %v1797, 0
    %1804 = vmatprep.subr.mxu0 0.0
    %1805 = vmatpush1.msra.mxu0 %v1799
    %1806 = vmatprep.subr.mxu0 0.0
    %1807 = vmatpush1.msra.mxu0 0.0
    %1808 = vmatprep.subr.mxu0 0.0
    %1809 = vmatpush1.msra.mxu0 0.0
    %1810 = vmatprep.subr.mxu0 0.0
    %1811 = vmatpush1.msra.mxu0 0.0
    %1812 = vmatprep.subr.mxu0 0.0
    %1813 = vmatpush1.msra.mxu0 0.0
    %1814 = vmatprep.subr.mxu0 0.0
    %1815 = vmatpush1.msra.mxu0 0.0
    %1816 = vmatprep.subr.mxu0 0.0
    %1817 = vmatpush1.msra.mxu0 0.0
    %1818 = vmatprep.subr.mxu0 0.0
    %1819 = vmatpush1.msra.mxu0 0.0
    %1820 = vmatprep.subr.mxu0 0.0
    %1821 = vmatpush1.msra.mxu0 0.0
    %1822 = vmatprep.subr.mxu0 0.0
    %1823 = vmatpush1.msra.mxu0 0.0
    %1824 = vmatprep.subr.mxu0 0.0
    %1825 = vmatpush1.msra.mxu0 0.0
    %1826 = vmatprep.subr.mxu0 0.0
    %1827 = vmatpush1.msra.mxu0 0.0
    %1828 = vmatprep.subr.mxu0 0.0
    %1829 = vmatpush1.msra.mxu0 0.0
    %1830 = vmatprep.subr.mxu0 0.0
    %1831 = vmatpush1.msra.mxu0 0.0
    %1832 = vmatprep.subr.mxu0 0.0
    %1833 = vmatpush1.msra.mxu0 0.0
    %1834 = vmatprep.subr.mxu0 0.0
    %1835 = vmatpush1.msra.mxu0 0.0
    %1836 = vmatprep.subr.mxu0 0.0
    %1837 = vmatpush1.msra.mxu0 0.0
    %1838 = vmatprep.subr.mxu0 0.0
    %1839 = vmatpush1.msra.mxu0 0.0
    %1840 = vmatprep.subr.mxu0 0.0
    %1841 = vmatpush1.msra.mxu0 0.0
    %1842 = vmatprep.subr.mxu0 0.0
    %1843 = vmatpush1.msra.mxu0 0.0
    %1844 = vmatprep.subr.mxu0 0.0
    %1845 = vmatpush1.msra.mxu0 0.0
    %1846 = vmatprep.subr.mxu0 0.0
    %1847 = vmatpush1.msra.mxu0 0.0
    %1848 = vmatprep.subr.mxu0 0.0
    %1849 = vmatpush1.msra.mxu0 0.0
    %1850 = vmatprep.subr.mxu0 0.0
    %1851 = vmatpush1.msra.mxu0 0.0
    %1852 = vmatprep.subr.mxu0 0.0
    %1853 = vmatpush1.msra.mxu0 0.0
    %1854 = vmatprep.subr.mxu0 0.0
    %1855 = vmatpush1.msra.mxu0 0.0
    %1856 = vmatprep.subr.mxu0 0.0
    %1857 = vmatpush1.msra.mxu0 0.0
    %1858 = vmatprep.subr.mxu0 0.0
    %1859 = vmatpush1.msra.mxu0 0.0
    %1860 = vmatprep.subr.mxu0 0.0
    %1861 = vmatpush1.msra.mxu0 0.0
    %1862 = vmatprep.subr.mxu0 0.0
    %1863 = vmatpush1.msra.mxu0 0.0
    %1864 = vmatprep.subr.mxu0 0.0
    %1865 = vmatpush1.msra.mxu0 0.0
    %1866 = vmatprep.subr.mxu0 0.0
    %1867 = vmatpush1.msra.mxu0 0.0
    %1868 = vmatprep.mubr.f32.mxu0 0.0
    %1869 = vmatmul.mubr.f32.gmra.mrb[0].mxu0 %v1802
    %v1870 = vpop.f32.mrb[0].mxu0
    %v1871 = vadd.f32 0.0, %v1870
    %v1872 = vpop.f32.mrb[0].mxu0
    %1873 = vdwg.mxu0
    %1875 = vrot.lane.b32.xlu0 %v1871, 8
    %v1876 = vpop.permute.xlu0 %1875
    %vm1878 = vcmask 130112
    %1879 = vst.msk [vmem:[#allocation4] sm:$0xff] %vm1878, %v1876
    %1880 = vrot.lane.b32.xlu0 %v1537, 112
    %v1881 = vpop.permute.xlu0 %1880
    %1882 = vrot.lane.b32.xlu0 %v1528, 80
    %v1883 = vpop.permute.xlu0 %1882
    %v1884 = vsel %vm1545, %v1881, 0
    %v1886 = vsel %vm1545, %v1883, 0
    %1888 = vmatprep.subr.mxu0 0.0
    %1889 = vmatpush1.xpose.msra.mxu0 %v1886
    %1890 = vmatprep.subr.mxu0 0.0
    %1891 = vmatpush1.xpose.msra.mxu0 0.0
    %1892 = vmatprep.subr.mxu0 0.0
    %1893 = vmatpush1.xpose.msra.mxu0 0.0
    %1894 = vmatprep.subr.mxu0 0.0
    %1895 = vmatpush1.xpose.msra.mxu0 0.0
    %1896 = vmatprep.subr.mxu0 0.0
    %1897 = vmatpush1.xpose.msra.mxu0 0.0
    %1898 = vmatprep.subr.mxu0 0.0
    %1899 = vmatpush1.xpose.msra.mxu0 0.0
    %1900 = vmatprep.subr.mxu0 0.0
    %1901 = vmatpush1.xpose.msra.mxu0 0.0
    %1902 = vmatprep.subr.mxu0 0.0
    %1903 = vmatpush1.xpose.msra.mxu0 0.0
    %1904 = vmatprep.subr.mxu0 0.0
    %1905 = vmatpush1.xpose.msra.mxu0 0.0
    %1906 = vmatprep.subr.mxu0 0.0
    %1907 = vmatpush1.xpose.msra.mxu0 0.0
    %1908 = vmatprep.subr.mxu0 0.0
    %1909 = vmatpush1.xpose.msra.mxu0 0.0
    %1910 = vmatprep.subr.mxu0 0.0
    %1911 = vmatpush1.xpose.msra.mxu0 0.0
    %1912 = vmatprep.subr.mxu0 0.0
    %1913 = vmatpush1.xpose.msra.mxu0 0.0
    %1914 = vmatprep.subr.mxu0 0.0
    %1915 = vmatpush1.xpose.msra.mxu0 0.0
    %1916 = vmatprep.subr.mxu0 0.0
    %1917 = vmatpush1.xpose.msra.mxu0 0.0
    %1918 = vmatprep.subr.mxu0 0.0
    %1919 = vmatpush1.xpose.msra.mxu0 0.0
    %1920 = vmatprep.subr.mxu0 0.0
    %1921 = vmatpush1.xpose.msra.mxu0 0.0
    %1922 = vmatprep.subr.mxu0 0.0
    %1923 = vmatpush1.xpose.msra.mxu0 0.0
    %1924 = vmatprep.subr.mxu0 0.0
    %1925 = vmatpush1.xpose.msra.mxu0 0.0
    %1926 = vmatprep.subr.mxu0 0.0
    %1927 = vmatpush1.xpose.msra.mxu0 0.0
    %1928 = vmatprep.subr.mxu0 0.0
    %1929 = vmatpush1.xpose.msra.mxu0 0.0
    %1930 = vmatprep.subr.mxu0 0.0
    %1931 = vmatpush1.xpose.msra.mxu0 0.0
    %1932 = vmatprep.subr.mxu0 0.0
    %1933 = vmatpush1.xpose.msra.mxu0 0.0
    %1934 = vmatprep.subr.mxu0 0.0
    %1935 = vmatpush1.xpose.msra.mxu0 0.0
    %1936 = vmatprep.subr.mxu0 0.0
    %1937 = vmatpush1.xpose.msra.mxu0 0.0
    %1938 = vmatprep.subr.mxu0 0.0
    %1939 = vmatpush1.xpose.msra.mxu0 0.0
    %1940 = vmatprep.subr.mxu0 0.0
    %1941 = vmatpush1.xpose.msra.mxu0 0.0
    %1942 = vmatprep.subr.mxu0 0.0
    %1943 = vmatpush1.xpose.msra.mxu0 0.0
    %1944 = vmatprep.subr.mxu0 0.0
    %1945 = vmatpush1.xpose.msra.mxu0 0.0
    %1946 = vmatprep.subr.mxu0 0.0
    %1947 = vmatpush1.xpose.msra.mxu0 0.0
    %1948 = vmatprep.subr.mxu0 0.0
    %1949 = vmatpush1.xpose.msra.mxu0 0.0
    %1950 = vmatprep.subr.mxu0 0.0
    %1951 = vmatpush1.xpose.msra.mxu0 0.0
    %1952 = vmatprep.mubr.f32.mxu0 0.0
    %1953 = vmatmul.mubr.f32.gmra.mrb[0].mxu0 %v1884
    %v1954 = vpop.f32.mrb[0].mxu0
    %v1955 = vadd.f32 %v1541, %v1954
    %v1956 = vpop.f32.mrb[0].mxu0
    %1957 = vdwg.mxu0
    %v1958 = vsel %vm1545, %v1955, -inf
    %1959 = vmax.xlane.f32.xlu0 %v1958
    %v1960 = vpop.xlane.xlu0 %1959
    %v1961 = vsub.f32 %v1955, %v1960
    %v1962 = vmul.f32 %v1961, 1.442695
    %v1963 = vpow.pop %v1962
    %v1964 = vsel %vm1545, %v1963, 0.0
    %1965 = vadd.xlane.f32.xlu0 %v1964
    %v1966 = vpop.xlane.xlu0 %1965
    %v1967 = vrcp.pop %v1966
    %v1968 = vmul.f32 %v1963, %v1967
    %1969 = vrot.lane.b32.xlu0 %v1528, 48
    %v1970 = vpop.permute.xlu0 %1969
    %v1973 = vsel %vm1545, %v1968, 0
    %1975 = vmatprep.subr.mxu0 0.0
    %1976 = vmatpush1.msra.mxu0 %v1970
    %1977 = vmatprep.subr.mxu0 0.0
    %1978 = vmatpush1.msra.mxu0 0.0
    %1979 = vmatprep.subr.mxu0 0.0
    %1980 = vmatpush1.msra.mxu0 0.0
    %1981 = vmatprep.subr.mxu0 0.0
    %1982 = vmatpush1.msra.mxu0 0.0
    %1983 = vmatprep.subr.mxu0 0.0
    %1984 = vmatpush1.msra.mxu0 0.0
    %1985 = vmatprep.subr.mxu0 0.0
    %1986 = vmatpush1.msra.mxu0 0.0
    %1987 = vmatprep.subr.mxu0 0.0
    %1988 = vmatpush1.msra.mxu0 0.0
    %1989 = vmatprep.subr.mxu0 0.0
    %1990 = vmatpush1.msra.mxu0 0.0
    %1991 = vmatprep.subr.mxu0 0.0
    %1992 = vmatpush1.msra.mxu0 0.0
    %1993 = vmatprep.subr.mxu0 0.0
    %1994 = vmatpush1.msra.mxu0 0.0
    %1995 = vmatprep.subr.mxu0 0.0
    %1996 = vmatpush1.msra.mxu0 0.0
    %1997 = vmatprep.subr.mxu0 0.0
    %1998 = vmatpush1.msra.mxu0 0.0
    %1999 = vmatprep.subr.mxu0 0.0
    %2000 = vmatpush1.msra.mxu0 0.0
    %2001 = vmatprep.subr.mxu0 0.0
    %2002 = vmatpush1.msra.mxu0 0.0
    %2003 = vmatprep.subr.mxu0 0.0
    %2004 = vmatpush1.msra.mxu0 0.0
    %2005 = vmatprep.subr.mxu0 0.0
    %2006 = vmatpush1.msra.mxu0 0.0
    %2007 = vmatprep.subr.mxu0 0.0
    %2008 = vmatpush1.msra.mxu0 0.0
    %2009 = vmatprep.subr.mxu0 0.0
    %2010 = vmatpush1.msra.mxu0 0.0
    %2011 = vmatprep.subr.mxu0 0.0
    %2012 = vmatpush1.msra.mxu0 0.0
    %2013 = vmatprep.subr.mxu0 0.0
    %2014 = vmatpush1.msra.mxu0 0.0
    %2015 = vmatprep.subr.mxu0 0.0
    %2016 = vmatpush1.msra.mxu0 0.0
    %2017 = vmatprep.subr.mxu0 0.0
    %2018 = vmatpush1.msra.mxu0 0.0
    %2019 = vmatprep.subr.mxu0 0.0
    %2020 = vmatpush1.msra.mxu0 0.0
    %2021 = vmatprep.subr.mxu0 0.0
    %2022 = vmatpush1.msra.mxu0 0.0
    %2023 = vmatprep.subr.mxu0 0.0
    %2024 = vmatpush1.msra.mxu0 0.0
    %2025 = vmatprep.subr.mxu0 0.0
    %2026 = vmatpush1.msra.mxu0 0.0
    %2027 = vmatprep.subr.mxu0 0.0
    %2028 = vmatpush1.msra.mxu0 0.0
    %2029 = vmatprep.subr.mxu0 0.0
    %2030 = vmatpush1.msra.mxu0 0.0
    %2031 = vmatprep.subr.mxu0 0.0
    %2032 = vmatpush1.msra.mxu0 0.0
    %2033 = vmatprep.subr.mxu0 0.0
    %2034 = vmatpush1.msra.mxu0 0.0
    %2035 = vmatprep.subr.mxu0 0.0
    %2036 = vmatpush1.msra.mxu0 0.0
    %2037 = vmatprep.subr.mxu0 0.0
    %2038 = vmatpush1.msra.mxu0 0.0
    %2039 = vmatprep.mubr.f32.mxu0 0.0
    %2040 = vmatmul.mubr.f32.gmra.mrb[0].mxu0 %v1973
    %v2041 = vpop.f32.mrb[0].mxu0
    %v2042 = vadd.f32 0.0, %v2041
    %v2043 = vpop.f32.mrb[0].mxu0
    %2044 = vdwg.mxu0
    %2046 = vrot.lane.b32.xlu0 %v2042, 16
    %v2047 = vpop.permute.xlu0 %2046
    %vm2049 = vcmask 195712
    %2050 = vst.msk [vmem:[#allocation4] sm:$0xff] %vm2049, %v2047
    %2051 = vrot.lane.b32.xlu0 %v1537, 104
    %v2052 = vpop.permute.xlu0 %2051
    %2053 = vrot.lane.b32.xlu0 %v1528, 72
    %v2054 = vpop.permute.xlu0 %2053
    %v2055 = vsel %vm1545, %v2052, 0
    %v2057 = vsel %vm1545, %v2054, 0
    %2059 = vmatprep.subr.mxu0 0.0
    %2060 = vmatpush1.xpose.msra.mxu0 %v2057
    %2061 = vmatprep.subr.mxu0 0.0
    %2062 = vmatpush1.xpose.msra.mxu0 0.0
    %2063 = vmatprep.subr.mxu0 0.0
    %2064 = vmatpush1.xpose.msra.mxu0 0.0
    %2065 = vmatprep.subr.mxu0 0.0
    %2066 = vmatpush1.xpose.msra.mxu0 0.0
    %2067 = vmatprep.subr.mxu0 0.0
    %2068 = vmatpush1.xpose.msra.mxu0 0.0
    %2069 = vmatprep.subr.mxu0 0.0
    %2070 = vmatpush1.xpose.msra.mxu0 0.0
    %2071 = vmatprep.subr.mxu0 0.0
    %2072 = vmatpush1.xpose.msra.mxu0 0.0
    %2073 = vmatprep.subr.mxu0 0.0
    %2074 = vmatpush1.xpose.msra.mxu0 0.0
    %2075 = vmatprep.subr.mxu0 0.0
    %2076 = vmatpush1.xpose.msra.mxu0 0.0
    %2077 = vmatprep.subr.mxu0 0.0
    %2078 = vmatpush1.xpose.msra.mxu0 0.0
    %2079 = vmatprep.subr.mxu0 0.0
    %2080 = vmatpush1.xpose.msra.mxu0 0.0
    %2081 = vmatprep.subr.mxu0 0.0
    %2082 = vmatpush1.xpose.msra.mxu0 0.0
    %2083 = vmatprep.subr.mxu0 0.0
    %2084 = vmatpush1.xpose.msra.mxu0 0.0
    %2085 = vmatprep.subr.mxu0 0.0
    %2086 = vmatpush1.xpose.msra.mxu0 0.0
    %2087 = vmatprep.subr.mxu0 0.0
    %2088 = vmatpush1.xpose.msra.mxu0 0.0
    %2089 = vmatprep.subr.mxu0 0.0
    %2090 = vmatpush1.xpose.msra.mxu0 0.0
    %2091 = vmatprep.subr.mxu0 0.0
    %2092 = vmatpush1.xpose.msra.mxu0 0.0
    %2093 = vmatprep.subr.mxu0 0.0
    %2094 = vmatpush1.xpose.msra.mxu0 0.0
    %2095 = vmatprep.subr.mxu0 0.0
    %2096 = vmatpush1.xpose.msra.mxu0 0.0
    %2097 = vmatprep.subr.mxu0 0.0
    %2098 = vmatpush1.xpose.msra.mxu0 0.0
    %2099 = vmatprep.subr.mxu0 0.0
    %2100 = vmatpush1.xpose.msra.mxu0 0.0
    %2101 = vmatprep.subr.mxu0 0.0
    %2102 = vmatpush1.xpose.msra.mxu0 0.0
    %2103 = vmatprep.subr.mxu0 0.0
    %2104 = vmatpush1.xpose.msra.mxu0 0.0
    %2105 = vmatprep.subr.mxu0 0.0
    %2106 = vmatpush1.xpose.msra.mxu0 0.0
    %2107 = vmatprep.subr.mxu0 0.0
    %2108 = vmatpush1.xpose.msra.mxu0 0.0
    %2109 = vmatprep.subr.mxu0 0.0
    %2110 = vmatpush1.xpose.msra.mxu0 0.0
    %2111 = vmatprep.subr.mxu0 0.0
    %2112 = vmatpush1.xpose.msra.mxu0 0.0
    %2113 = vmatprep.subr.mxu0 0.0
    %2114 = vmatpush1.xpose.msra.mxu0 0.0
    %2115 = vmatprep.subr.mxu0 0.0
    %2116 = vmatpush1.xpose.msra.mxu0 0.0
    %2117 = vmatprep.subr.mxu0 0.0
    %2118 = vmatpush1.xpose.msra.mxu0 0.0
    %2119 = vmatprep.subr.mxu0 0.0
    %2120 = vmatpush1.xpose.msra.mxu0 0.0
    %2121 = vmatprep.subr.mxu0 0.0
    %2122 = vmatpush1.xpose.msra.mxu0 0.0
    %2123 = vmatprep.mubr.f32.mxu0 0.0
    %2124 = vmatmul.mubr.f32.gmra.mrb[0].mxu0 %v2055
    %v2125 = vpop.f32.mrb[0].mxu0
    %v2126 = vadd.f32 %v1541, %v2125
    %v2127 = vpop.f32.mrb[0].mxu0
    %2128 = vdwg.mxu0
    %v2129 = vsel %vm1545, %v2126, -inf
    %2130 = vmax.xlane.f32.xlu0 %v2129
    %v2131 = vpop.xlane.xlu0 %2130
    %v2132 = vsub.f32 %v2126, %v2131
    %v2133 = vmul.f32 %v2132, 1.442695
    %v2134 = vpow.pop %v2133
    %v2135 = vsel %vm1545, %v2134, 0.0
    %2136 = vadd.xlane.f32.xlu0 %v2135
    %v2137 = vpop.xlane.xlu0 %2136
    %v2138 = vrcp.pop %v2137
    %v2139 = vmul.f32 %v2134, %v2138
    %2140 = vrot.lane.b32.xlu0 %v1528, 40
    %v2141 = vpop.permute.xlu0 %2140
    %v2144 = vsel %vm1545, %v2139, 0
    %2146 = vmatprep.subr.mxu0 0.0
    %2147 = vmatpush1.msra.mxu0 %v2141
    %2148 = vmatprep.subr.mxu0 0.0
    %2149 = vmatpush1.msra.mxu0 0.0
    %2150 = vmatprep.subr.mxu0 0.0
    %2151 = vmatpush1.msra.mxu0 0.0
    %2152 = vmatprep.subr.mxu0 0.0
    %2153 = vmatpush1.msra.mxu0 0.0
    %2154 = vmatprep.subr.mxu0 0.0
    %2155 = vmatpush1.msra.mxu0 0.0
    %2156 = vmatprep.subr.mxu0 0.0
    %2157 = vmatpush1.msra.mxu0 0.0
    %2158 = vmatprep.subr.mxu0 0.0
    %2159 = vmatpush1.msra.mxu0 0.0
    %2160 = vmatprep.subr.mxu0 0.0
    %2161 = vmatpush1.msra.mxu0 0.0
    %2162 = vmatprep.subr.mxu0 0.0
    %2163 = vmatpush1.msra.mxu0 0.0
    %2164 = vmatprep.subr.mxu0 0.0
    %2165 = vmatpush1.msra.mxu0 0.0
    %2166 = vmatprep.subr.mxu0 0.0
    %2167 = vmatpush1.msra.mxu0 0.0
    %2168 = vmatprep.subr.mxu0 0.0
    %2169 = vmatpush1.msra.mxu0 0.0
    %2170 = vmatprep.subr.mxu0 0.0
    %2171 = vmatpush1.msra.mxu0 0.0
    %2172 = vmatprep.subr.mxu0 0.0
    %2173 = vmatpush1.msra.mxu0 0.0
    %2174 = vmatprep.subr.mxu0 0.0
    %2175 = vmatpush1.msra.mxu0 0.0
    %2176 = vmatprep.subr.mxu0 0.0
    %2177 = vmatpush1.msra.mxu0 0.0
    %2178 = vmatprep.subr.mxu0 0.0
    %2179 = vmatpush1.msra.mxu0 0.0
    %2180 = vmatprep.subr.mxu0 0.0
    %2181 = vmatpush1.msra.mxu0 0.0
    %2182 = vmatprep.subr.mxu0 0.0
    %2183 = vmatpush1.msra.mxu0 0.0
    %2184 = vmatprep.subr.mxu0 0.0
    %2185 = vmatpush1.msra.mxu0 0.0
    %2186 = vmatprep.subr.mxu0 0.0
    %2187 = vmatpush1.msra.mxu0 0.0
    %2188 = vmatprep.subr.mxu0 0.0
    %2189 = vmatpush1.msra.mxu0 0.0
    %2190 = vmatprep.subr.mxu0 0.0
    %2191 = vmatpush1.msra.mxu0 0.0
    %2192 = vmatprep.subr.mxu0 0.0
    %2193 = vmatpush1.msra.mxu0 0.0
    %2194 = vmatprep.subr.mxu0 0.0
    %2195 = vmatpush1.msra.mxu0 0.0
    %2196 = vmatprep.subr.mxu0 0.0
    %2197 = vmatpush1.msra.mxu0 0.0
    %2198 = vmatprep.subr.mxu0 0.0
    %2199 = vmatpush1.msra.mxu0 0.0
    %2200 = vmatprep.subr.mxu0 0.0
    %2201 = vmatpush1.msra.mxu0 0.0
    %2202 = vmatprep.subr.mxu0 0.0
    %2203 = vmatpush1.msra.mxu0 0.0
    %2204 = vmatprep.subr.mxu0 0.0
    %2205 = vmatpush1.msra.mxu0 0.0
    %2206 = vmatprep.subr.mxu0 0.0
    %2207 = vmatpush1.msra.mxu0 0.0
    %2208 = vmatprep.subr.mxu0 0.0
    %2209 = vmatpush1.msra.mxu0 0.0
    %2210 = vmatprep.mubr.f32.mxu0 0.0
    %2211 = vmatmul.mubr.f32.gmra.mrb[0].mxu0 %v2144
    %v2212 = vpop.f32.mrb[0].mxu0
    %v2213 = vadd.f32 0.0, %v2212
    %v2214 = vpop.f32.mrb[0].mxu0
    %2215 = vdwg.mxu0
    %2217 = vrot.lane.b32.xlu0 %v2213, 24
    %v2218 = vpop.permute.xlu0 %2217
    %vm2220 = vcmask 261312
    %2221 = vst.msk [vmem:[#allocation4] sm:$0xff] %vm2220, %v2218
    %v2222 = vld [vmem:[%s15 + $0x1] sm:$0x1]
    %v2223 = vmul.f32 %v1533, 0.35355338
    %v2224 = vlaneseq
    %v2225 = vshrl.u32 %v2224, 7
    %v2226 = vsub.s32 0, %v2225
    %v2227 = vrot.slane %v2222, %v2226
    %2229 = vrot.lane.b32.xlu0 %v1533, 96
    %v2230 = vpop.permute.xlu0 %2229
    %v2232 = vsel %vm1545, %v2223, 0
    %v2234 = vsel %vm1545, %v2230, 0
    %2236 = vmatprep.subr.mxu0 0.0
    %2237 = vmatpush1.xpose.msra.mxu0 %v2234
    %2238 = vmatprep.subr.mxu0 0.0
    %2239 = vmatpush1.xpose.msra.mxu0 0.0
    %2240 = vmatprep.subr.mxu0 0.0
    %2241 = vmatpush1.xpose.msra.mxu0 0.0
    %2242 = vmatprep.subr.mxu0 0.0
    %2243 = vmatpush1.xpose.msra.mxu0 0.0
    %2244 = vmatprep.subr.mxu0 0.0
    %2245 = vmatpush1.xpose.msra.mxu0 0.0
    %2246 = vmatprep.subr.mxu0 0.0
    %2247 = vmatpush1.xpose.msra.mxu0 0.0
    %2248 = vmatprep.subr.mxu0 0.0
    %2249 = vmatpush1.xpose.msra.mxu0 0.0
    %2250 = vmatprep.subr.mxu0 0.0
    %2251 = vmatpush1.xpose.msra.mxu0 0.0
    %2252 = vmatprep.subr.mxu0 0.0
    %2253 = vmatpush1.xpose.msra.mxu0 0.0
    %2254 = vmatprep.subr.mxu0 0.0
    %2255 = vmatpush1.xpose.msra.mxu0 0.0
    %2256 = vmatprep.subr.mxu0 0.0
    %2257 = vmatpush1.xpose.msra.mxu0 0.0
    %2258 = vmatprep.subr.mxu0 0.0
    %2259 = vmatpush1.xpose.msra.mxu0 0.0
    %2260 = vmatprep.subr.mxu0 0.0
    %2261 = vmatpush1.xpose.msra.mxu0 0.0
    %2262 = vmatprep.subr.mxu0 0.0
    %2263 = vmatpush1.xpose.msra.mxu0 0.0
    %2264 = vmatprep.subr.mxu0 0.0
    %2265 = vmatpush1.xpose.msra.mxu0 0.0
    %2266 = vmatprep.subr.mxu0 0.0
    %2267 = vmatpush1.xpose.msra.mxu0 0.0
    %2268 = vmatprep.subr.mxu0 0.0
    %2269 = vmatpush1.xpose.msra.mxu0 0.0
    %2270 = vmatprep.subr.mxu0 0.0
    %2271 = vmatpush1.xpose.msra.mxu0 0.0
    %2272 = vmatprep.subr.mxu0 0.0
    %2273 = vmatpush1.xpose.msra.mxu0 0.0
    %2274 = vmatprep.subr.mxu0 0.0
    %2275 = vmatpush1.xpose.msra.mxu0 0.0
    %2276 = vmatprep.subr.mxu0 0.0
    %2277 = vmatpush1.xpose.msra.mxu0 0.0
    %2278 = vmatprep.subr.mxu0 0.0
    %2279 = vmatpush1.xpose.msra.mxu0 0.0
    %2280 = vmatprep.subr.mxu0 0.0
    %2281 = vmatpush1.xpose.msra.mxu0 0.0
    %2282 = vmatprep.subr.mxu0 0.0
    %2283 = vmatpush1.xpose.msra.mxu0 0.0
    %2284 = vmatprep.subr.mxu0 0.0
    %2285 = vmatpush1.xpose.msra.mxu0 0.0
    %2286 = vmatprep.subr.mxu0 0.0
    %2287 = vmatpush1.xpose.msra.mxu0 0.0
    %2288 = vmatprep.subr.mxu0 0.0
    %2289 = vmatpush1.xpose.msra.mxu0 0.0
    %2290 = vmatprep.subr.mxu0 0.0
    %2291 = vmatpush1.xpose.msra.mxu0 0.0
    %2292 = vmatprep.subr.mxu0 0.0
    %2293 = vmatpush1.xpose.msra.mxu0 0.0
    %2294 = vmatprep.subr.mxu0 0.0
    %2295 = vmatpush1.xpose.msra.mxu0 0.0
    %2296 = vmatprep.subr.mxu0 0.0
    %2297 = vmatpush1.xpose.msra.mxu0 0.0
    %2298 = vmatprep.subr.mxu0 0.0
    %2299 = vmatpush1.xpose.msra.mxu0 0.0
    %2300 = vmatprep.mubr.f32.mxu0 0.0
    %2301 = vmatmul.mubr.f32.gmra.mrb[0].mxu0 %v2232
    %v2302 = vpop.f32.mrb[0].mxu0
    %v2303 = vadd.f32 %v2227, %v2302
    %v2304 = vpop.f32.mrb[0].mxu0
    %2305 = vdwg.mxu0
    %v2306 = vsel %vm1545, %v2303, -inf
    %2307 = vmax.xlane.f32.xlu0 %v2306
    %v2308 = vpop.xlane.xlu0 %2307
    %v2309 = vsub.f32 %v2303, %v2308
    %v2310 = vmul.f32 %v2309, 1.442695
    %v2311 = vpow.pop %v2310
    %v2312 = vsel %vm1545, %v2311, 0.0
    %2313 = vadd.xlane.f32.xlu0 %v2312
    %v2314 = vpop.xlane.xlu0 %2313
    %v2315 = vrcp.pop %v2314
    %v2316 = vmul.f32 %v2311, %v2315
    %2317 = vrot.lane.b32.xlu0 %v1533, 64
    %v2318 = vpop.permute.xlu0 %2317
    %v2321 = vsel %vm1545, %v2316, 0
    %2323 = vmatprep.subr.mxu0 0.0
    %2324 = vmatpush1.msra.mxu0 %v2318
    %2325 = vmatprep.subr.mxu0 0.0
    %2326 = vmatpush1.msra.mxu0 0.0
    %2327 = vmatprep.subr.mxu0 0.0
    %2328 = vmatpush1.msra.mxu0 0.0
    %2329 = vmatprep.subr.mxu0 0.0
    %2330 = vmatpush1.msra.mxu0 0.0
    %2331 = vmatprep.subr.mxu0 0.0
    %2332 = vmatpush1.msra.mxu0 0.0
    %2333 = vmatprep.subr.mxu0 0.0
    %2334 = vmatpush1.msra.mxu0 0.0
    %2335 = vmatprep.subr.mxu0 0.0
    %2336 = vmatpush1.msra.mxu0 0.0
    %2337 = vmatprep.subr.mxu0 0.0
    %2338 = vmatpush1.msra.mxu0 0.0
    %2339 = vmatprep.subr.mxu0 0.0
    %2340 = vmatpush1.msra.mxu0 0.0
    %2341 = vmatprep.subr.mxu0 0.0
    %2342 = vmatpush1.msra.mxu0 0.0
    %2343 = vmatprep.subr.mxu0 0.0
    %2344 = vmatpush1.msra.mxu0 0.0
    %2345 = vmatprep.subr.mxu0 0.0
    %2346 = vmatpush1.msra.mxu0 0.0
    %2347 = vmatprep.subr.mxu0 0.0
    %2348 = vmatpush1.msra.mxu0 0.0
    %2349 = vmatprep.subr.mxu0 0.0
    %2350 = vmatpush1.msra.mxu0 0.0
    %2351 = vmatprep.subr.mxu0 0.0
    %2352 = vmatpush1.msra.mxu0 0.0
    %2353 = vmatprep.subr.mxu0 0.0
    %2354 = vmatpush1.msra.mxu0 0.0
    %2355 = vmatprep.subr.mxu0 0.0
    %2356 = vmatpush1.msra.mxu0 0.0
    %2357 = vmatprep.subr.mxu0 0.0
    %2358 = vmatpush1.msra.mxu0 0.0
    %2359 = vmatprep.subr.mxu0 0.0
    %2360 = vmatpush1.msra.mxu0 0.0
    %2361 = vmatprep.subr.mxu0 0.0
    %2362 = vmatpush1.msra.mxu0 0.0
    %2363 = vmatprep.subr.mxu0 0.0
    %2364 = vmatpush1.msra.mxu0 0.0
    %2365 = vmatprep.subr.mxu0 0.0
    %2366 = vmatpush1.msra.mxu0 0.0
    %2367 = vmatprep.subr.mxu0 0.0
    %2368 = vmatpush1.msra.mxu0 0.0
    %2369 = vmatprep.subr.mxu0 0.0
    %2370 = vmatpush1.msra.mxu0 0.0
    %2371 = vmatprep.subr.mxu0 0.0
    %2372 = vmatpush1.msra.mxu0 0.0
    %2373 = vmatprep.subr.mxu0 0.0
    %2374 = vmatpush1.msra.mxu0 0.0
    %2375 = vmatprep.subr.mxu0 0.0
    %2376 = vmatpush1.msra.mxu0 0.0
    %2377 = vmatprep.subr.mxu0 0.0
    %2378 = vmatpush1.msra.mxu0 0.0
    %2379 = vmatprep.subr.mxu0 0.0
    %2380 = vmatpush1.msra.mxu0 0.0
    %2381 = vmatprep.subr.mxu0 0.0
    %2382 = vmatpush1.msra.mxu0 0.0
    %2383 = vmatprep.subr.mxu0 0.0
    %2384 = vmatpush1.msra.mxu0 0.0
    %2385 = vmatprep.subr.mxu0 0.0
    %2386 = vmatpush1.msra.mxu0 0.0
    %2387 = vmatprep.mubr.f32.mxu0 0.0
    %2388 = vmatmul.mubr.f32.gmra.mrb[0].mxu0 %v2321
    %v2389 = vpop.f32.mrb[0].mxu0
    %v2390 = vadd.f32 0.0, %v2389
    %v2391 = vpop.f32.mrb[0].mxu0
    %2392 = vdwg.mxu0
    %2393 = vst.msk [vmem:[#allocation4 + $0x8] sm:$0xff] %vm1545, %v2390
    %2394 = vrot.lane.b32.xlu0 %v2223, 120
    %v2395 = vpop.permute.xlu0 %2394
    %2396 = vrot.lane.b32.xlu0 %v1533, 88
    %v2397 = vpop.permute.xlu0 %2396
    %v2398 = vsel %vm1545, %v2395, 0
    %v2400 = vsel %vm1545, %v2397, 0
    %2402 = vmatprep.subr.mxu0 0.0
    %2403 = vmatpush1.xpose.msra.mxu0 %v2400
    %2404 = vmatprep.subr.mxu0 0.0
    %2405 = vmatpush1.xpose.msra.mxu0 0.0
    %2406 = vmatprep.subr.mxu0 0.0
    %2407 = vmatpush1.xpose.msra.mxu0 0.0
    %2408 = vmatprep.subr.mxu0 0.0
    %2409 = vmatpush1.xpose.msra.mxu0 0.0
    %2410 = vmatprep.subr.mxu0 0.0
    %2411 = vmatpush1.xpose.msra.mxu0 0.0
    %2412 = vmatprep.subr.mxu0 0.0
    %2413 = vmatpush1.xpose.msra.mxu0 0.0
    %2414 = vmatprep.subr.mxu0 0.0
    %2415 = vmatpush1.xpose.msra.mxu0 0.0
    %2416 = vmatprep.subr.mxu0 0.0
    %2417 = vmatpush1.xpose.msra.mxu0 0.0
    %2418 = vmatprep.subr.mxu0 0.0
    %2419 = vmatpush1.xpose.msra.mxu0 0.0
    %2420 = vmatprep.subr.mxu0 0.0
    %2421 = vmatpush1.xpose.msra.mxu0 0.0
    %2422 = vmatprep.subr.mxu0 0.0
    %2423 = vmatpush1.xpose.msra.mxu0 0.0
    %2424 = vmatprep.subr.mxu0 0.0
    %2425 = vmatpush1.xpose.msra.mxu0 0.0
    %2426 = vmatprep.subr.mxu0 0.0
    %2427 = vmatpush1.xpose.msra.mxu0 0.0
    %2428 = vmatprep.subr.mxu0 0.0
    %2429 = vmatpush1.xpose.msra.mxu0 0.0
    %2430 = vmatprep.subr.mxu0 0.0
    %2431 = vmatpush1.xpose.msra.mxu0 0.0
    %2432 = vmatprep.subr.mxu0 0.0
    %2433 = vmatpush1.xpose.msra.mxu0 0.0
    %2434 = vmatprep.subr.mxu0 0.0
    %2435 = vmatpush1.xpose.msra.mxu0 0.0
    %2436 = vmatprep.subr.mxu0 0.0
    %2437 = vmatpush1.xpose.msra.mxu0 0.0
    %2438 = vmatprep.subr.mxu0 0.0
    %2439 = vmatpush1.xpose.msra.mxu0 0.0
    %2440 = vmatprep.subr.mxu0 0.0
    %2441 = vmatpush1.xpose.msra.mxu0 0.0
    %2442 = vmatprep.subr.mxu0 0.0
    %2443 = vmatpush1.xpose.msra.mxu0 0.0
    %2444 = vmatprep.subr.mxu0 0.0
    %2445 = vmatpush1.xpose.msra.mxu0 0.0
    %2446 = vmatprep.subr.mxu0 0.0
    %2447 = vmatpush1.xpose.msra.mxu0 0.0
    %2448 = vmatprep.subr.mxu0 0.0
    %2449 = vmatpush1.xpose.msra.mxu0 0.0
    %2450 = vmatprep.subr.mxu0 0.0
    %2451 = vmatpush1.xpose.msra.mxu0 0.0
    %2452 = vmatprep.subr.mxu0 0.0
    %2453 = vmatpush1.xpose.msra.mxu0 0.0
    %2454 = vmatprep.subr.mxu0 0.0
    %2455 = vmatpush1.xpose.msra.mxu0 0.0
    %2456 = vmatprep.subr.mxu0 0.0
    %2457 = vmatpush1.xpose.msra.mxu0 0.0
    %2458 = vmatprep.subr.mxu0 0.0
    %2459 = vmatpush1.xpose.msra.mxu0 0.0
    %2460 = vmatprep.subr.mxu0 0.0
    %2461 = vmatpush1.xpose.msra.mxu0 0.0
    %2462 = vmatprep.subr.mxu0 0.0
    %2463 = vmatpush1.xpose.msra.mxu0 0.0
    %2464 = vmatprep.subr.mxu0 0.0
    %2465 = vmatpush1.xpose.msra.mxu0 0.0
    %2466 = vmatprep.mubr.f32.mxu0 0.0
    %2467 = vmatmul.mubr.f32.gmra.mrb[0].mxu0 %v2398
    %v2468 = vpop.f32.mrb[0].mxu0
    %v2469 = vadd.f32 %v2227, %v2468
    %v2470 = vpop.f32.mrb[0].mxu0
    %2471 = vdwg.mxu0
    %v2472 = vsel %vm1545, %v2469, -inf
    %2473 = vmax.xlane.f32.xlu0 %v2472
    %v2474 = vpop.xlane.xlu0 %2473
    %v2475 = vsub.f32 %v2469, %v2474
    %v2476 = vmul.f32 %v2475, 1.442695
    %v2477 = vpow.pop %v2476
    %v2478 = vsel %vm1545, %v2477, 0.0
    %2479 = vadd.xlane.f32.xlu0 %v2478
    %v2480 = vpop.xlane.xlu0 %2479
    %v2481 = vrcp.pop %v2480
    %v2482 = vmul.f32 %v2477, %v2481
    %2483 = vrot.lane.b32.xlu0 %v1533, 56
    %v2484 = vpop.permute.xlu0 %2483
    %v2487 = vsel %vm1545, %v2482, 0
    %2489 = vmatprep.subr.mxu0 0.0
    %2490 = vmatpush1.msra.mxu0 %v2484
    %2491 = vmatprep.subr.mxu0 0.0
    %2492 = vmatpush1.msra.mxu0 0.0
    %2493 = vmatprep.subr.mxu0 0.0
    %2494 = vmatpush1.msra.mxu0 0.0
    %2495 = vmatprep.subr.mxu0 0.0
    %2496 = vmatpush1.msra.mxu0 0.0
    %2497 = vmatprep.subr.mxu0 0.0
    %2498 = vmatpush1.msra.mxu0 0.0
    %2499 = vmatprep.subr.mxu0 0.0
    %2500 = vmatpush1.msra.mxu0 0.0
    %2501 = vmatprep.subr.mxu0 0.0
    %2502 = vmatpush1.msra.mxu0 0.0
    %2503 = vmatprep.subr.mxu0 0.0
    %2504 = vmatpush1.msra.mxu0 0.0
    %2505 = vmatprep.subr.mxu0 0.0
    %2506 = vmatpush1.msra.mxu0 0.0
    %2507 = vmatprep.subr.mxu0 0.0
    %2508 = vmatpush1.msra.mxu0 0.0
    %2509 = vmatprep.subr.mxu0 0.0
    %2510 = vmatpush1.msra.mxu0 0.0
    %2511 = vmatprep.subr.mxu0 0.0
    %2512 = vmatpush1.msra.mxu0 0.0
    %2513 = vmatprep.subr.mxu0 0.0
    %2514 = vmatpush1.msra.mxu0 0.0
    %2515 = vmatprep.subr.mxu0 0.0
    %2516 = vmatpush1.msra.mxu0 0.0
    %2517 = vmatprep.subr.mxu0 0.0
    %2518 = vmatpush1.msra.mxu0 0.0
    %2519 = vmatprep.subr.mxu0 0.0
    %2520 = vmatpush1.msra.mxu0 0.0
    %2521 = vmatprep.subr.mxu0 0.0
    %2522 = vmatpush1.msra.mxu0 0.0
    %2523 = vmatprep.subr.mxu0 0.0
    %2524 = vmatpush1.msra.mxu0 0.0
    %2525 = vmatprep.subr.mxu0 0.0
    %2526 = vmatpush1.msra.mxu0 0.0
    %2527 = vmatprep.subr.mxu0 0.0
    %2528 = vmatpush1.msra.mxu0 0.0
    %2529 = vmatprep.subr.mxu0 0.0
    %2530 = vmatpush1.msra.mxu0 0.0
    %2531 = vmatprep.subr.mxu0 0.0
    %2532 = vmatpush1.msra.mxu0 0.0
    %2533 = vmatprep.subr.mxu0 0.0
    %2534 = vmatpush1.msra.mxu0 0.0
    %2535 = vmatprep.subr.mxu0 0.0
    %2536 = vmatpush1.msra.mxu0 0.0
    %2537 = vmatprep.subr.mxu0 0.0
    %2538 = vmatpush1.msra.mxu0 0.0
    %2539 = vmatprep.subr.mxu0 0.0
    %2540 = vmatpush1.msra.mxu0 0.0
    %2541 = vmatprep.subr.mxu0 0.0
    %2542 = vmatpush1.msra.mxu0 0.0
    %2543 = vmatprep.subr.mxu0 0.0
    %2544 = vmatpush1.msra.mxu0 0.0
    %2545 = vmatprep.subr.mxu0 0.0
    %2546 = vmatpush1.msra.mxu0 0.0
    %2547 = vmatprep.subr.mxu0 0.0
    %2548 = vmatpush1.msra.mxu0 0.0
    %2549 = vmatprep.subr.mxu0 0.0
    %2550 = vmatpush1.msra.mxu0 0.0
    %2551 = vmatprep.subr.mxu0 0.0
    %2552 = vmatpush1.msra.mxu0 0.0
    %2553 = vmatprep.mubr.f32.mxu0 0.0
    %2554 = vmatmul.mubr.f32.gmra.mrb[0].mxu0 %v2487
    %v2555 = vpop.f32.mrb[0].mxu0
    %v2556 = vadd.f32 0.0, %v2555
    %v2557 = vpop.f32.mrb[0].mxu0
    %2558 = vdwg.mxu0
    %2560 = vrot.lane.b32.xlu0 %v2556, 8
    %v2561 = vpop.permute.xlu0 %2560
    %2563 = vst.msk [vmem:[#allocation4 + $0x8] sm:$0xff] %vm1878, %v2561
    %2564 = vrot.lane.b32.xlu0 %v2223, 112
    %v2565 = vpop.permute.xlu0 %2564
    %2566 = vrot.lane.b32.xlu0 %v1533, 80
    %v2567 = vpop.permute.xlu0 %2566
    %v2568 = vsel %vm1545, %v2565, 0
    %v2570 = vsel %vm1545, %v2567, 0
    %2572 = vmatprep.subr.mxu0 0.0
    %2573 = vmatpush1.xpose.msra.mxu0 %v2570
    %2574 = vmatprep.subr.mxu0 0.0
    %2575 = vmatpush1.xpose.msra.mxu0 0.0
    %2576 = vmatprep.subr.mxu0 0.0
    %2577 = vmatpush1.xpose.msra.mxu0 0.0
    %2578 = vmatprep.subr.mxu0 0.0
    %2579 = vmatpush1.xpose.msra.mxu0 0.0
    %2580 = vmatprep.subr.mxu0 0.0
    %2581 = vmatpush1.xpose.msra.mxu0 0.0
    %2582 = vmatprep.subr.mxu0 0.0
    %2583 = vmatpush1.xpose.msra.mxu0 0.0
    %2584 = vmatprep.subr.mxu0 0.0
    %2585 = vmatpush1.xpose.msra.mxu0 0.0
    %2586 = vmatprep.subr.mxu0 0.0
    %2587 = vmatpush1.xpose.msra.mxu0 0.0
    %2588 = vmatprep.subr.mxu0 0.0
    %2589 = vmatpush1.xpose.msra.mxu0 0.0
    %2590 = vmatprep.subr.mxu0 0.0
    %2591 = vmatpush1.xpose.msra.mxu0 0.0
    %2592 = vmatprep.subr.mxu0 0.0
    %2593 = vmatpush1.xpose.msra.mxu0 0.0
    %2594 = vmatprep.subr.mxu0 0.0
    %2595 = vmatpush1.xpose.msra.mxu0 0.0
    %2596 = vmatprep.subr.mxu0 0.0
    %2597 = vmatpush1.xpose.msra.mxu0 0.0
    %2598 = vmatprep.subr.mxu0 0.0
    %2599 = vmatpush1.xpose.msra.mxu0 0.0
    %2600 = vmatprep.subr.mxu0 0.0
    %2601 = vmatpush1.xpose.msra.mxu0 0.0
    %2602 = vmatprep.subr.mxu0 0.0
    %2603 = vmatpush1.xpose.msra.mxu0 0.0
    %2604 = vmatprep.subr.mxu0 0.0
    %2605 = vmatpush1.xpose.msra.mxu0 0.0
    %2606 = vmatprep.subr.mxu0 0.0
    %2607 = vmatpush1.xpose.msra.mxu0 0.0
    %2608 = vmatprep.subr.mxu0 0.0
    %2609 = vmatpush1.xpose.msra.mxu0 0.0
    %2610 = vmatprep.subr.mxu0 0.0
    %2611 = vmatpush1.xpose.msra.mxu0 0.0
    %2612 = vmatprep.subr.mxu0 0.0
    %2613 = vmatpush1.xpose.msra.mxu0 0.0
    %2614 = vmatprep.subr.mxu0 0.0
    %2615 = vmatpush1.xpose.msra.mxu0 0.0
    %2616 = vmatprep.subr.mxu0 0.0
    %2617 = vmatpush1.xpose.msra.mxu0 0.0
    %2618 = vmatprep.subr.mxu0 0.0
    %2619 = vmatpush1.xpose.msra.mxu0 0.0
    %2620 = vmatprep.subr.mxu0 0.0
    %2621 = vmatpush1.xpose.msra.mxu0 0.0
    %2622 = vmatprep.subr.mxu0 0.0
    %2623 = vmatpush1.xpose.msra.mxu0 0.0
    %2624 = vmatprep.subr.mxu0 0.0
    %2625 = vmatpush1.xpose.msra.mxu0 0.0
    %2626 = vmatprep.subr.mxu0 0.0
    %2627 = vmatpush1.xpose.msra.mxu0 0.0
    %2628 = vmatprep.subr.mxu0 0.0
    %2629 = vmatpush1.xpose.msra.mxu0 0.0
    %2630 = vmatprep.subr.mxu0 0.0
    %2631 = vmatpush1.xpose.msra.mxu0 0.0
    %2632 = vmatprep.subr.mxu0 0.0
    %2633 = vmatpush1.xpose.msra.mxu0 0.0
    %2634 = vmatprep.subr.mxu0 0.0
    %2635 = vmatpush1.xpose.msra.mxu0 0.0
    %2636 = vmatprep.mubr.f32.mxu0 0.0
    %2637 = vmatmul.mubr.f32.gmra.mrb[0].mxu0 %v2568
    %v2638 = vpop.f32.mrb[0].mxu0
    %v2639 = vadd.f32 %v2227, %v2638
    %v2640 = vpop.f32.mrb[0].mxu0
    %2641 = vdwg.mxu0
    %v2642 = vsel %vm1545, %v2639, -inf
    %2643 = vmax.xlane.f32.xlu0 %v2642
    %v2644 = vpop.xlane.xlu0 %2643
    %v2645 = vsub.f32 %v2639, %v2644
    %v2646 = vmul.f32 %v2645, 1.442695
    %v2647 = vpow.pop %v2646
    %v2648 = vsel %vm1545, %v2647, 0.0
    %2649 = vadd.xlane.f32.xlu0 %v2648
    %v2650 = vpop.xlane.xlu0 %2649
    %v2651 = vrcp.pop %v2650
    %v2652 = vmul.f32 %v2647, %v2651
    %2653 = vrot.lane.b32.xlu0 %v1533, 48
    %v2654 = vpop.permute.xlu0 %2653
    %v2657 = vsel %vm1545, %v2652, 0
    %2659 = vmatprep.subr.mxu0 0.0
    %2660 = vmatpush1.msra.mxu0 %v2654
    %2661 = vmatprep.subr.mxu0 0.0
    %2662 = vmatpush1.msra.mxu0 0.0
    %2663 = vmatprep.subr.mxu0 0.0
    %2664 = vmatpush1.msra.mxu0 0.0
    %2665 = vmatprep.subr.mxu0 0.0
    %2666 = vmatpush1.msra.mxu0 0.0
    %2667 = vmatprep.subr.mxu0 0.0
    %2668 = vmatpush1.msra.mxu0 0.0
    %2669 = vmatprep.subr.mxu0 0.0
    %2670 = vmatpush1.msra.mxu0 0.0
    %2671 = vmatprep.subr.mxu0 0.0
    %2672 = vmatpush1.msra.mxu0 0.0
    %2673 = vmatprep.subr.mxu0 0.0
    %2674 = vmatpush1.msra.mxu0 0.0
    %2675 = vmatprep.subr.mxu0 0.0
    %2676 = vmatpush1.msra.mxu0 0.0
    %2677 = vmatprep.subr.mxu0 0.0
    %2678 = vmatpush1.msra.mxu0 0.0
    %2679 = vmatprep.subr.mxu0 0.0
    %2680 = vmatpush1.msra.mxu0 0.0
    %2681 = vmatprep.subr.mxu0 0.0
    %2682 = vmatpush1.msra.mxu0 0.0
    %2683 = vmatprep.subr.mxu0 0.0
    %2684 = vmatpush1.msra.mxu0 0.0
    %2685 = vmatprep.subr.mxu0 0.0
    %2686 = vmatpush1.msra.mxu0 0.0
    %2687 = vmatprep.subr.mxu0 0.0
    %2688 = vmatpush1.msra.mxu0 0.0
    %2689 = vmatprep.subr.mxu0 0.0
    %2690 = vmatpush1.msra.mxu0 0.0
    %2691 = vmatprep.subr.mxu0 0.0
    %2692 = vmatpush1.msra.mxu0 0.0
    %2693 = vmatprep.subr.mxu0 0.0
    %2694 = vmatpush1.msra.mxu0 0.0
    %2695 = vmatprep.subr.mxu0 0.0
    %2696 = vmatpush1.msra.mxu0 0.0
    %2697 = vmatprep.subr.mxu0 0.0
    %2698 = vmatpush1.msra.mxu0 0.0
    %2699 = vmatprep.subr.mxu0 0.0
    %2700 = vmatpush1.msra.mxu0 0.0
    %2701 = vmatprep.subr.mxu0 0.0
    %2702 = vmatpush1.msra.mxu0 0.0
    %2703 = vmatprep.subr.mxu0 0.0
    %2704 = vmatpush1.msra.mxu0 0.0
    %2705 = vmatprep.subr.mxu0 0.0
    %2706 = vmatpush1.msra.mxu0 0.0
    %2707 = vmatprep.subr.mxu0 0.0
    %2708 = vmatpush1.msra.mxu0 0.0
    %2709 = vmatprep.subr.mxu0 0.0
    %2710 = vmatpush1.msra.mxu0 0.0
    %2711 = vmatprep.subr.mxu0 0.0
    %2712 = vmatpush1.msra.mxu0 0.0
    %2713 = vmatprep.subr.mxu0 0.0
    %2714 = vmatpush1.msra.mxu0 0.0
    %2715 = vmatprep.subr.mxu0 0.0
    %2716 = vmatpush1.msra.mxu0 0.0
    %2717 = vmatprep.subr.mxu0 0.0
    %2718 = vmatpush1.msra.mxu0 0.0
    %2719 = vmatprep.subr.mxu0 0.0
    %2720 = vmatpush1.msra.mxu0 0.0
    %2721 = vmatprep.subr.mxu0 0.0
    %2722 = vmatpush1.msra.mxu0 0.0
    %2723 = vmatprep.mubr.f32.mxu0 0.0
    %2724 = vmatmul.mubr.f32.gmra.mrb[0].mxu0 %v2657
    %v2725 = vpop.f32.mrb[0].mxu0
    %v2726 = vadd.f32 0.0, %v2725
    %v2727 = vpop.f32.mrb[0].mxu0
    %2728 = vdwg.mxu0
    %2730 = vrot.lane.b32.xlu0 %v2726, 16
    %v2731 = vpop.permute.xlu0 %2730
    %2733 = vst.msk [vmem:[#allocation4 + $0x8] sm:$0xff] %vm2049, %v2731
    %2734 = vrot.lane.b32.xlu0 %v2223, 104
    %v2735 = vpop.permute.xlu0 %2734
    %2736 = vrot.lane.b32.xlu0 %v1533, 72
    %v2737 = vpop.permute.xlu0 %2736
    %v2738 = vsel %vm1545, %v2735, 0
    %v2740 = vsel %vm1545, %v2737, 0
    %2742 = vmatprep.subr.mxu0 0.0
    %2743 = vmatpush1.xpose.msra.mxu0 %v2740
    %2744 = vmatprep.subr.mxu0 0.0
    %2745 = vmatpush1.xpose.msra.mxu0 0.0
    %2746 = vmatprep.subr.mxu0 0.0
    %2747 = vmatpush1.xpose.msra.mxu0 0.0
    %2748 = vmatprep.subr.mxu0 0.0
    %2749 = vmatpush1.xpose.msra.mxu0 0.0
    %2750 = vmatprep.subr.mxu0 0.0
    %2751 = vmatpush1.xpose.msra.mxu0 0.0
    %2752 = vmatprep.subr.mxu0 0.0
    %2753 = vmatpush1.xpose.msra.mxu0 0.0
    %2754 = vmatprep.subr.mxu0 0.0
    %2755 = vmatpush1.xpose.msra.mxu0 0.0
    %2756 = vmatprep.subr.mxu0 0.0
    %2757 = vmatpush1.xpose.msra.mxu0 0.0
    %2758 = vmatprep.subr.mxu0 0.0
    %2759 = vmatpush1.xpose.msra.mxu0 0.0
    %2760 = vmatprep.subr.mxu0 0.0
    %2761 = vmatpush1.xpose.msra.mxu0 0.0
    %2762 = vmatprep.subr.mxu0 0.0
    %2763 = vmatpush1.xpose.msra.mxu0 0.0
    %2764 = vmatprep.subr.mxu0 0.0
    %2765 = vmatpush1.xpose.msra.mxu0 0.0
    %2766 = vmatprep.subr.mxu0 0.0
    %2767 = vmatpush1.xpose.msra.mxu0 0.0
    %2768 = vmatprep.subr.mxu0 0.0
    %2769 = vmatpush1.xpose.msra.mxu0 0.0
    %2770 = vmatprep.subr.mxu0 0.0
    %2771 = vmatpush1.xpose.msra.mxu0 0.0
    %2772 = vmatprep.subr.mxu0 0.0
    %2773 = vmatpush1.xpose.msra.mxu0 0.0
    %2774 = vmatprep.subr.mxu0 0.0
    %2775 = vmatpush1.xpose.msra.mxu0 0.0
    %2776 = vmatprep.subr.mxu0 0.0
    %2777 = vmatpush1.xpose.msra.mxu0 0.0
    %2778 = vmatprep.subr.mxu0 0.0
    %2779 = vmatpush1.xpose.msra.mxu0 0.0
    %2780 = vmatprep.subr.mxu0 0.0
    %2781 = vmatpush1.xpose.msra.mxu0 0.0
    %2782 = vmatprep.subr.mxu0 0.0
    %2783 = vmatpush1.xpose.msra.mxu0 0.0
    %2784 = vmatprep.subr.mxu0 0.0
    %2785 = vmatpush1.xpose.msra.mxu0 0.0
    %2786 = vmatprep.subr.mxu0 0.0
    %2787 = vmatpush1.xpose.msra.mxu0 0.0
    %2788 = vmatprep.subr.mxu0 0.0
    %2789 = vmatpush1.xpose.msra.mxu0 0.0
    %2790 = vmatprep.subr.mxu0 0.0
    %2791 = vmatpush1.xpose.msra.mxu0 0.0
    %2792 = vmatprep.subr.mxu0 0.0
    %2793 = vmatpush1.xpose.msra.mxu0 0.0
    %2794 = vmatprep.subr.mxu0 0.0
    %2795 = vmatpush1.xpose.msra.mxu0 0.0
    %2796 = vmatprep.subr.mxu0 0.0
    %2797 = vmatpush1.xpose.msra.mxu0 0.0
    %2798 = vmatprep.subr.mxu0 0.0
    %2799 = vmatpush1.xpose.msra.mxu0 0.0
    %2800 = vmatprep.subr.mxu0 0.0
    %2801 = vmatpush1.xpose.msra.mxu0 0.0
    %2802 = vmatprep.subr.mxu0 0.0
    %2803 = vmatpush1.xpose.msra.mxu0 0.0
    %2804 = vmatprep.subr.mxu0 0.0
    %2805 = vmatpush1.xpose.msra.mxu0 0.0
    %2806 = vmatprep.mubr.f32.mxu0 0.0
    %2807 = vmatmul.mubr.f32.gmra.mrb[0].mxu0 %v2738
    %v2808 = vpop.f32.mrb[0].mxu0
    %v2809 = vadd.f32 %v2227, %v2808
    %v2810 = vpop.f32.mrb[0].mxu0
    %2811 = vdwg.mxu0
    %v2812 = vsel %vm1545, %v2809, -inf
    %2813 = vmax.xlane.f32.xlu0 %v2812
    %v2814 = vpop.xlane.xlu0 %2813
    %v2815 = vsub.f32 %v2809, %v2814
    %v2816 = vmul.f32 %v2815, 1.442695
    %v2817 = vpow.pop %v2816
    %v2818 = vsel %vm1545, %v2817, 0.0
    %2819 = vadd.xlane.f32.xlu0 %v2818
    %v2820 = vpop.xlane.xlu0 %2819
    %v2821 = vrcp.pop %v2820
    %v2822 = vmul.f32 %v2817, %v2821
    %2823 = vrot.lane.b32.xlu0 %v1533, 40
    %v2824 = vpop.permute.xlu0 %2823
    %v2827 = vsel %vm1545, %v2822, 0
    %2829 = vmatprep.subr.mxu0 0.0
    %2830 = vmatpush1.msra.mxu0 %v2824
    %2831 = vmatprep.subr.mxu0 0.0
    %2832 = vmatpush1.msra.mxu0 0.0
    %2833 = vmatprep.subr.mxu0 0.0
    %2834 = vmatpush1.msra.mxu0 0.0
    %2835 = vmatprep.subr.mxu0 0.0
    %2836 = vmatpush1.msra.mxu0 0.0
    %2837 = vmatprep.subr.mxu0 0.0
    %2838 = vmatpush1.msra.mxu0 0.0
    %2839 = vmatprep.subr.mxu0 0.0
    %2840 = vmatpush1.msra.mxu0 0.0
    %2841 = vmatprep.subr.mxu0 0.0
    %2842 = vmatpush1.msra.mxu0 0.0
    %2843 = vmatprep.subr.mxu0 0.0
    %2844 = vmatpush1.msra.mxu0 0.0
    %2845 = vmatprep.subr.mxu0 0.0
    %2846 = vmatpush1.msra.mxu0 0.0
    %2847 = vmatprep.subr.mxu0 0.0
    %2848 = vmatpush1.msra.mxu0 0.0
    %2849 = vmatprep.subr.mxu0 0.0
    %2850 = vmatpush1.msra.mxu0 0.0
    %2851 = vmatprep.subr.mxu0 0.0
    %2852 = vmatpush1.msra.mxu0 0.0
    %2853 = vmatprep.subr.mxu0 0.0
    %2854 = vmatpush1.msra.mxu0 0.0
    %2855 = vmatprep.subr.mxu0 0.0
    %2856 = vmatpush1.msra.mxu0 0.0
    %2857 = vmatprep.subr.mxu0 0.0
    %2858 = vmatpush1.msra.mxu0 0.0
    %2859 = vmatprep.subr.mxu0 0.0
    %2860 = vmatpush1.msra.mxu0 0.0
    %2861 = vmatprep.subr.mxu0 0.0
    %2862 = vmatpush1.msra.mxu0 0.0
    %2863 = vmatprep.subr.mxu0 0.0
    %2864 = vmatpush1.msra.mxu0 0.0
    %2865 = vmatprep.subr.mxu0 0.0
    %2866 = vmatpush1.msra.mxu0 0.0
    %2867 = vmatprep.subr.mxu0 0.0
    %2868 = vmatpush1.msra.mxu0 0.0
    %2869 = vmatprep.subr.mxu0 0.0
    %2870 = vmatpush1.msra.mxu0 0.0
    %2871 = vmatprep.subr.mxu0 0.0
    %2872 = vmatpush1.msra.mxu0 0.0
    %2873 = vmatprep.subr.mxu0 0.0
    %2874 = vmatpush1.msra.mxu0 0.0
    %2875 = vmatprep.subr.mxu0 0.0
    %2876 = vmatpush1.msra.mxu0 0.0
    %2877 = vmatprep.subr.mxu0 0.0
    %2878 = vmatpush1.msra.mxu0 0.0
    %2879 = vmatprep.subr.mxu0 0.0
    %2880 = vmatpush1.msra.mxu0 0.0
    %2881 = vmatprep.subr.mxu0 0.0
    %2882 = vmatpush1.msra.mxu0 0.0
    %2883 = vmatprep.subr.mxu0 0.0
    %2884 = vmatpush1.msra.mxu0 0.0
    %2885 = vmatprep.subr.mxu0 0.0
    %2886 = vmatpush1.msra.mxu0 0.0
    %2887 = vmatprep.subr.mxu0 0.0
    %2888 = vmatpush1.msra.mxu0 0.0
    %2889 = vmatprep.subr.mxu0 0.0
    %2890 = vmatpush1.msra.mxu0 0.0
    %2891 = vmatprep.subr.mxu0 0.0
    %2892 = vmatpush1.msra.mxu0 0.0
    %2893 = vmatprep.mubr.f32.mxu0 0.0
    %2894 = vmatmul.mubr.f32.gmra.mrb[0].mxu0 %v2827
    %v2895 = vpop.f32.mrb[0].mxu0
    %v2896 = vadd.f32 0.0, %v2895
    %v2897 = vpop.f32.mrb[0].mxu0
    %2898 = vdwg.mxu0
    %2900 = vrot.lane.b32.xlu0 %v2896, 24
    %v2901 = vpop.permute.xlu0 %2900
    %2903 = vst.msk [vmem:[#allocation4 + $0x8] sm:$0xff] %vm2220, %v2901
    %v2904 = vld [vmem:[#allocation4] sm:$0xff]
    %v2905 = vld [vmem:[#allocation4 + $0x8] sm:$0xff]
    %v2906 = vld [vmem:[%s37] sm:$0xff]
    %v2907 = vld [vmem:[%s37 + $0x8] sm:$0xff]
    %v2908 = vld [vmem:[%s37 + $0x10] sm:$0xff]
    %v2909 = vld [vmem:[%s37 + $0x18] sm:$0xff]
    %v2911 = vsel %vm628, %v2904, 0
    %v2914 = vsel %vm628, %v2905, 0
    %2916 = vmatprep.subr.mxu0 0.0
    %2917 = vmatpush1.msra.mxu0 %v2906
    %2918 = vmatprep.subr.mxu0 0.0
    %2919 = vmatpush1.msra.mxu0 %v2907
    %2920 = vmatprep.subr.mxu0 0.0
    %2921 = vmatpush1.msra.mxu0 %v2908
    %2922 = vmatprep.subr.mxu0 0.0
    %2923 = vmatpush1.msra.mxu0 %v2909
    %2924 = vmatprep.subr.mxu0 0.0
    %2925 = vmatpush1.msra.mxu0 0.0
    %2926 = vmatprep.subr.mxu0 0.0
    %2927 = vmatpush1.msra.mxu0 0.0
    %2928 = vmatprep.subr.mxu0 0.0
    %2929 = vmatpush1.msra.mxu0 0.0
    %2930 = vmatprep.subr.mxu0 0.0
    %2931 = vmatpush1.msra.mxu0 0.0
    %2932 = vmatprep.subr.mxu0 0.0
    %2933 = vmatpush1.msra.mxu0 0.0
    %2934 = vmatprep.subr.mxu0 0.0
    %2935 = vmatpush1.msra.mxu0 0.0
    %2936 = vmatprep.subr.mxu0 0.0
    %2937 = vmatpush1.msra.mxu0 0.0
    %2938 = vmatprep.subr.mxu0 0.0
    %2939 = vmatpush1.msra.mxu0 0.0
    %2940 = vmatprep.subr.mxu0 0.0
    %2941 = vmatpush1.msra.mxu0 0.0
    %2942 = vmatprep.subr.mxu0 0.0
    %2943 = vmatpush1.msra.mxu0 0.0
    %2944 = vmatprep.subr.mxu0 0.0
    %2945 = vmatpush1.msra.mxu0 0.0
    %2946 = vmatprep.subr.mxu0 0.0
    %2947 = vmatpush1.msra.mxu0 0.0
    %2948 = vmatprep.subr.mxu0 0.0
    %2949 = vmatpush1.msra.mxu0 0.0
    %2950 = vmatprep.subr.mxu0 0.0
    %2951 = vmatpush1.msra.mxu0 0.0
    %2952 = vmatprep.subr.mxu0 0.0
    %2953 = vmatpush1.msra.mxu0 0.0
    %2954 = vmatprep.subr.mxu0 0.0
    %2955 = vmatpush1.msra.mxu0 0.0
    %2956 = vmatprep.subr.mxu0 0.0
    %2957 = vmatpush1.msra.mxu0 0.0
    %2958 = vmatprep.subr.mxu0 0.0
    %2959 = vmatpush1.msra.mxu0 0.0
    %2960 = vmatprep.subr.mxu0 0.0
    %2961 = vmatpush1.msra.mxu0 0.0
    %2962 = vmatprep.subr.mxu0 0.0
    %2963 = vmatpush1.msra.mxu0 0.0
    %2964 = vmatprep.subr.mxu0 0.0
    %2965 = vmatpush1.msra.mxu0 0.0
    %2966 = vmatprep.subr.mxu0 0.0
    %2967 = vmatpush1.msra.mxu0 0.0
    %2968 = vmatprep.subr.mxu0 0.0
    %2969 = vmatpush1.msra.mxu0 0.0
    %2970 = vmatprep.subr.mxu0 0.0
    %2971 = vmatpush1.msra.mxu0 0.0
    %2972 = vmatprep.subr.mxu0 0.0
    %2973 = vmatpush1.msra.mxu0 0.0
    %2974 = vmatprep.subr.mxu0 0.0
    %2975 = vmatpush1.msra.mxu0 0.0
    %2976 = vmatprep.subr.mxu0 0.0
    %2977 = vmatpush1.msra.mxu0 0.0
    %2978 = vmatprep.subr.mxu0 0.0
    %2979 = vmatpush1.msra.mxu0 0.0
    %2980 = vmatprep.mubr.f32.mxu0 0.0
    %2981 = vmatmul.mubr.f32.gmra.mrb[0].mxu0 %v2911
    %v2982 = vpop.f32.mrb[0].mxu0
    %v2983 = vadd.f32 0.0, %v2982
    %v2984 = vpop.f32.mrb[0].mxu0
    %2985 = vmatprep.mubr.f32.mxu0 0.0
    %2986 = vmatmul.mubr.f32.gmra.mrb[0].mxu0 %v2914
    %v2987 = vpop.f32.mrb[0].mxu0
    %v2988 = vadd.f32 0.0, %v2987
    %v2989 = vpop.f32.mrb[0].mxu0
    %2990 = vdwg.mxu0
    %v2991 = vadd.f32 %v1398, %v2983
    %v2992 = vadd.f32 %v1399, %v2988
    %v2993 = vld [vmem:[%s39] sm:$0x1]
    %v2995 = vlaneseq
    %v2996 = vshrl.u32 %v2995, 7
    %v2997 = vsub.s32 0, %v2996
    %v2998 = vrot.slane %v2993, %v2997
    %v3000 = vadd.f32 %v2991, %v2998
    %v3001 = vadd.f32 %v2992, %v2998
    %v3002 = vld [vmem:[%s41] sm:$0x1]
    %v3003 = vld [vmem:[%s43] sm:$0x1]
    %v3004 = vsel %vm628, %v3000, 0.0
    %3005 = vadd.xlane.f32.xlu0 %v3004
    %v3006 = vpop.xlane.xlu0 %3005
    %v3007 = vsel %vm628, %v3001, 0.0
    %3008 = vadd.xlane.f32.xlu0 %v3007
    %v3009 = vpop.xlane.xlu0 %3008
    %v3010 = vmul.f32 %v3006, %v1156
    %v3011 = vmul.f32 %v3009, %v1156
    %v3012 = vsub.f32 %v3000, %v3010
    %v3013 = vsub.f32 %v3001, %v3011
    %v3014 = vmul.f32 %v3012, %v3012
    %v3015 = vmul.f32 %v3013, %v3013
    %v3016 = vsel %vm628, %v3014, 0.0
    %3017 = vadd.xlane.f32.xlu0 %v3016
    %v3018 = vpop.xlane.xlu0 %3017
    %v3019 = vsel %vm628, %v3015, 0.0
    %3020 = vadd.xlane.f32.xlu0 %v3019
    %v3021 = vpop.xlane.xlu0 %3020
    %v3022 = vmul.f32 %v3018, %v1156
    %v3023 = vmul.f32 %v3021, %v1156
    %v3024 = vadd.f32 %v3022, 1e-05
    %v3025 = vadd.f32 %v3023, 1e-05
    %v3026 = vrsqrt.pop %v3024
    %v3027 = vrsqrt.pop %v3025
    %v3028 = vmul.f32 %v3012, %v3026
    %v3029 = vmul.f32 %v3013, %v3027
    %v3031 = vlaneseq
    %v3032 = vshrl.u32 %v3031, 7
    %v3033 = vsub.s32 0, %v3032
    %v3034 = vrot.slane %v3002, %v3033
    %v3036 = vmul.f32 %v3028, %v3034
    %v3037 = vmul.f32 %v3029, %v3034
    %v3039 = vlaneseq
    %v3040 = vshrl.u32 %v3039, 7
    %v3041 = vsub.s32 0, %v3040
    %v3042 = vrot.slane %v3003, %v3041
    %v3044 = vadd.f32 %v3036, %v3042
    %v3045 = vadd.f32 %v3037, %v3042
    %v3046 = vld [vmem:[%s45] sm:$0xff]
    %v3047 = vld [vmem:[%s45 + $0x8] sm:$0xff]
    %v3048 = vld [vmem:[%s45 + $0x10] sm:$0xff]
    %v3049 = vld [vmem:[%s45 + $0x18] sm:$0xff]
    %v3050 = vld [vmem:[%s47] sm:$0x1]
    %v3052 = vlaneseq
    %v3053 = vshrl.u32 %v3052, 7
    %v3054 = vsub.s32 0, %v3053
    %v3055 = vrot.slane %v3050, %v3054
    %v3058 = vsel %vm628, %v3044, 0
    %v3061 = vsel %vm628, %v3045, 0
    %3063 = vmatprep.subr.mxu0 0.0
    %3064 = vmatpush1.msra.mxu0 %v3046
    %3065 = vmatprep.subr.mxu0 0.0
    %3066 = vmatpush1.msra.mxu0 %v3047
    %3067 = vmatprep.subr.mxu0 0.0
    %3068 = vmatpush1.msra.mxu0 %v3048
    %3069 = vmatprep.subr.mxu0 0.0
    %3070 = vmatpush1.msra.mxu0 %v3049
    %3071 = vmatprep.subr.mxu0 0.0
    %3072 = vmatpush1.msra.mxu0 0.0
    %3073 = vmatprep.subr.mxu0 0.0
    %3074 = vmatpush1.msra.mxu0 0.0
    %3075 = vmatprep.subr.mxu0 0.0
    %3076 = vmatpush1.msra.mxu0 0.0
    %3077 = vmatprep.subr.mxu0 0.0
    %3078 = vmatpush1.msra.mxu0 0.0
    %3079 = vmatprep.subr.mxu0 0.0
    %3080 = vmatpush1.msra.mxu0 0.0
    %3081 = vmatprep.subr.mxu0 0.0
    %3082 = vmatpush1.msra.mxu0 0.0
    %3083 = vmatprep.subr.mxu0 0.0
    %3084 = vmatpush1.msra.mxu0 0.0
    %3085 = vmatprep.subr.mxu0 0.0
    %3086 = vmatpush1.msra.mxu0 0.0
    %3087 = vmatprep.subr.mxu0 0.0
    %3088 = vmatpush1.msra.mxu0 0.0
    %3089 = vmatprep.subr.mxu0 0.0
    %3090 = vmatpush1.msra.mxu0 0.0
    %3091 = vmatprep.subr.mxu0 0.0
    %3092 = vmatpush1.msra.mxu0 0.0
    %3093 = vmatprep.subr.mxu0 0.0
    %3094 = vmatpush1.msra.mxu0 0.0
    %3095 = vmatprep.subr.mxu0 0.0
    %3096 = vmatpush1.msra.mxu0 0.0
    %3097 = vmatprep.subr.mxu0 0.0
    %3098 = vmatpush1.msra.mxu0 0.0
    %3099 = vmatprep.subr.mxu0 0.0
    %3100 = vmatpush1.msra.mxu0 0.0
    %3101 = vmatprep.subr.mxu0 0.0
    %3102 = vmatpush1.msra.mxu0 0.0
    %3103 = vmatprep.subr.mxu0 0.0
    %3104 = vmatpush1.msra.mxu0 0.0
    %3105 = vmatprep.subr.mxu0 0.0
    %3106 = vmatpush1.msra.mxu0 0.0
    %3107 = vmatprep.subr.mxu0 0.0
    %3108 = vmatpush1.msra.mxu0 0.0
    %3109 = vmatprep.subr.mxu0 0.0
    %3110 = vmatpush1.msra.mxu0 0.0
    %3111 = vmatprep.subr.mxu0 0.0
    %3112 = vmatpush1.msra.mxu0 0.0
    %3113 = vmatprep.subr.mxu0 0.0
    %3114 = vmatpush1.msra.mxu0 0.0
    %3115 = vmatprep.subr.mxu0 0.0
    %3116 = vmatpush1.msra.mxu0 0.0
    %3117 = vmatprep.subr.mxu0 0.0
    %3118 = vmatpush1.msra.mxu0 0.0
    %3119 = vmatprep.subr.mxu0 0.0
    %3120 = vmatpush1.msra.mxu0 0.0
    %3121 = vmatprep.subr.mxu0 0.0
    %3122 = vmatpush1.msra.mxu0 0.0
    %3123 = vmatprep.subr.mxu0 0.0
    %3124 = vmatpush1.msra.mxu0 0.0
    %3125 = vmatprep.subr.mxu0 0.0
    %3126 = vmatpush1.msra.mxu0 0.0
    %3127 = vmatprep.mubr.f32.mxu0 0.0
    %3128 = vmatmul.mubr.f32.gmra.mrb[0].mxu0 %v3058
    %v3129 = vpop.f32.mrb[0].mxu0
    %v3130 = vadd.f32 %v3055, %v3129
    %v3131 = vpop.f32.mrb[0].mxu0
    %3132 = vmatprep.mubr.f32.mxu0 0.0
    %3133 = vmatmul.mubr.f32.gmra.mrb[0].mxu0 %v3061
    %v3134 = vpop.f32.mrb[0].mxu0
    %v3135 = vadd.f32 %v3055, %v3134
    %v3136 = vpop.f32.mrb[0].mxu0
    %3137 = vdwg.mxu0
    %v3138 = vxor.u32 %v3130, 2147483648
    %v3139 = vxor.u32 %v3135, 2147483648
    %v3140 = vmul.f32 %v3138, 1.442695
    %v3141 = vpow.pop %v3140
    %v3142 = vmul.f32 %v3139, 1.442695
    %v3143 = vpow.pop %v3142
    %v3144 = vadd.f32 %v3141, 1.0
    %v3145 = vadd.f32 %v3143, 1.0
    %v3146 = vrcp.pop %v3144
    %v3147 = vmul.f32 1.0, %v3146
    %v3148 = vrcp.pop %v3145
    %v3149 = vmul.f32 1.0, %v3148
    %3152 = vrot.lane.b32.xlu0 %v3147, 96
    %v3153 = vpop.permute.xlu0 %3152
    %3154 = vrot.lane.b32.xlu0 %v3149, 96
    %v3155 = vpop.permute.xlu0 %3154
    %v3158 = vmul.f32 %v3130, %v3153
    %v3159 = vmul.f32 %v3135, %v3155
    %v3160 = vld [vmem:[%s49] sm:$0x7f]
    %v3161 = vld [vmem:[%s51] sm:$0x1]
    %3162 = vst.msk [vmem:[#allocation6 + $0x8] sm:$0xff] %vm628, %v3158
    %v3163 = vld [vmem:[#allocation6] sm:$0xff]
    %v3164 = vld [vmem:[#allocation6 + $0x8] sm:$0xff]
    %v3165 = vld [vmem:[#allocation6 + $0x10] sm:$0xff]
    %v3166 = vlaneseq
    %v3167 = vshrl.u32 %v3166, 7
    %v3168 = vsub.s32 0, %v3167
    %v3169 = vrot.slane %v3160, %v3168
    %v3170 = vmul.f32 %v3163, %v3169
    %v3171 = vmul.f32 %v3164, %v3169
    %v3172 = vadd.f32 %v3170, 0.0
    %v3173 = vadd.f32 %v3171, 0.0
    %v3174 = vlaneseq
    %v3175 = vshrl.u32 %v3174, 7
    %v3176 = vsub.s32 1, %v3175
    %v3177 = vrot.slane %v3160, %v3176
    %v3178 = vmul.f32 %v3163, %v3177
    %v3179 = vmul.f32 %v3164, %v3177
    %vm3182 = vcmask 1046528
    %v3183 = vrot.slane %v3178, 1
    %v3184 = vrot.slane %v3179, 1
    %v3185 = vsel %vm3182, %v3183, %v3184
    %v3188 = vadd.f32 %v3172, %v3185
    %v3189 = vadd.f32 %v3173, %v3184
    %v3190 = vlaneseq
    %v3191 = vshrl.u32 %v3190, 7
    %v3192 = vsub.s32 2, %v3191
    %v3193 = vrot.slane %v3160, %v3192
    %v3194 = vmul.f32 %v3163, %v3193
    %v3195 = vmul.f32 %v3164, %v3193
    %vm3198 = vcmask 1045504
    %v3199 = vrot.slane %v3194, 2
    %v3200 = vrot.slane %v3195, 2
    %v3201 = vsel %vm3198, %v3199, %v3200
    %v3204 = vadd.f32 %v3188, %v3201
    %v3205 = vadd.f32 %v3189, %v3200
    %v3206 = vlaneseq
    %v3207 = vshrl.u32 %v3206, 7
    %v3208 = vsub.s32 3, %v3207
    %v3209 = vrot.slane %v3160, %v3208
    %v3210 = vmul.f32 %v3164, %v3209
    %v3212 = vrot.slane %v3210, 3
    %v3214 = vadd.f32 %v3204, %v3212
    %v3215 = vadd.f32 %v3205, %v3212
    %v3216 = vlaneseq
    %v3217 = vshrl.u32 %v3216, 7
    %v3218 = vsub.s32 4, %v3217
    %v3219 = vrot.slane %v3160, %v3218
    %v3220 = vmul.f32 %v3164, %v3219
    %v3221 = vmul.f32 %v3165, %v3219
    %vm3224 = vcmask 1043456
    %v3225 = vrot.slane %v3220, 4
    %v3226 = vrot.slane %v3221, 4
    %v3227 = vsel %vm3224, %v3225, %v3226
    %v3230 = vadd.f32 %v3214, %v3225
    %v3231 = vadd.f32 %v3215, %v3227
    %v3232 = vlaneseq
    %v3233 = vshrl.u32 %v3232, 7
    %v3234 = vsub.s32 5, %v3233
    %v3235 = vrot.slane %v3160, %v3234
    %v3236 = vmul.f32 %v3164, %v3235
    %v3237 = vmul.f32 %v3165, %v3235
    %vm3240 = vcmask 1042432
    %v3241 = vrot.slane %v3236, 5
    %v3242 = vrot.slane %v3237, 5
    %v3243 = vsel %vm3240, %v3241, %v3242
    %v3246 = vadd.f32 %v3230, %v3241
    %v3247 = vadd.f32 %v3231, %v3243
    %v3248 = vlaneseq
    %v3249 = vshrl.u32 %v3248, 7
    %v3250 = vsub.s32 6, %v3249
    %v3251 = vrot.slane %v3160, %v3250
    %v3252 = vmul.f32 %v3164, %v3251
    %v3253 = vmul.f32 %v3165, %v3251
    %vm3256 = vcmask 1041408
    %v3257 = vrot.slane %v3252, 6
    %v3258 = vrot.slane %v3253, 6
    %v3259 = vsel %vm3256, %v3257, %v3258
    %v3262 = vadd.f32 %v3246, %v3257
    %v3263 = vadd.f32 %v3247, %v3259
    %v3265 = vlaneseq
    %v3266 = vshrl.u32 %v3265, 7
    %v3267 = vsub.s32 0, %v3266
    %v3268 = vrot.slane %v3161, %v3267
    %v3270 = vadd.f32 %v3262, %v3268
    %v3271 = vadd.f32 %v3263, %v3268
    %vm3272 = vcmask 261125
    %3273 = vst.msk [vmem:[#allocation5 - $0x5] sm:$0xe0] %vm3272, %v3270
    %vm3274 = vcmask 258048
    %3275 = vst.msk [vmem:[#allocation5 + $0x3] sm:$0x1f] %vm3274, %v3271
    %3276 = vst.msk [vmem:[#allocation6 + $0x8] sm:$0xff] %vm628, %v3159
    %v3277 = vld [vmem:[#allocation6] sm:$0xff]
    %v3278 = vld [vmem:[#allocation6 + $0x8] sm:$0xff]
    %v3279 = vld [vmem:[#allocation6 + $0x10] sm:$0xff]
    %v3280 = vmul.f32 %v3277, %v3169
    %v3281 = vmul.f32 %v3278, %v3169
    %v3282 = vadd.f32 %v3280, 0.0
    %v3283 = vadd.f32 %v3281, 0.0
    %v3284 = vmul.f32 %v3277, %v3177
    %v3285 = vmul.f32 %v3278, %v3177
    %v3288 = vrot.slane %v3284, 1
    %v3289 = vrot.slane %v3285, 1
    %v3290 = vsel %vm3182, %v3288, %v3289
    %v3293 = vadd.f32 %v3282, %v3290
    %v3294 = vadd.f32 %v3283, %v3289
    %v3295 = vmul.f32 %v3277, %v3193
    %v3296 = vmul.f32 %v3278, %v3193
    %v3299 = vrot.slane %v3295, 2
    %v3300 = vrot.slane %v3296, 2
    %v3301 = vsel %vm3198, %v3299, %v3300
    %v3304 = vadd.f32 %v3293, %v3301
    %v3305 = vadd.f32 %v3294, %v3300
    %v3306 = vmul.f32 %v3278, %v3209
    %v3308 = vrot.slane %v3306, 3
    %v3310 = vadd.f32 %v3304, %v3308
    %v3311 = vadd.f32 %v3305, %v3308
    %v3312 = vmul.f32 %v3278, %v3219
    %v3313 = vmul.f32 %v3279, %v3219
    %v3316 = vrot.slane %v3312, 4
    %v3317 = vrot.slane %v3313, 4
    %v3318 = vsel %vm3224, %v3316, %v3317
    %v3321 = vadd.f32 %v3310, %v3316
    %v3322 = vadd.f32 %v3311, %v3318
    %v3323 = vmul.f32 %v3278, %v3235
    %v3324 = vmul.f32 %v3279, %v3235
    %v3327 = vrot.slane %v3323, 5
    %v3328 = vrot.slane %v3324, 5
    %v3329 = vsel %vm3240, %v3327, %v3328
    %v3332 = vadd.f32 %v3321, %v3327
    %v3333 = vadd.f32 %v3322, %v3329
    %v3334 = vmul.f32 %v3278, %v3251
    %v3335 = vmul.f32 %v3279, %v3251
    %v3338 = vrot.slane %v3334, 6
    %v3339 = vrot.slane %v3335, 6
    %v3340 = vsel %vm3256, %v3338, %v3339
    %v3343 = vadd.f32 %v3332, %v3338
    %v3344 = vadd.f32 %v3333, %v3340
    %v3345 = vadd.f32 %v3343, %v3268
    %v3346 = vadd.f32 %v3344, %v3268
    %3347 = vst.msk [vmem:[#allocation5 + $0x3] sm:$0xe0] %vm3272, %v3345
    %3348 = vst.msk [vmem:[#allocation5 + $0xb] sm:$0x1f] %vm3274, %v3346
    %v3349 = vld [vmem:[#allocation5] sm:$0xff]
    %v3350 = vld [vmem:[#allocation5 + $0x8] sm:$0xff]
    %v3351 = vsel %vm628, %v3349, 0.0
    %v3352 = vsel %vm628, %v3350, 0.0
    %v3353 = vadd.f32 %v3351, %v3352
    %v3354 = vrot.slane %v3353, 4
    %v3355 = vadd.f32 %v3353, %v3354
    %v3356 = vrot.slane %v3355, 2
    %v3357 = vadd.f32 %v3355, %v3356
    %v3358 = vrot.slane %v3357, 1
    %v3359 = vadd.f32 %v3357, %v3358
    %v3360 = vrcp.pop 16.0
    %v3361 = vmul.f32 %v3359, %v3360
    %v3362 = vsub.f32 %v3349, %v3361
    %v3363 = vsub.f32 %v3350, %v3361
    %v3364 = vmul.f32 %v3362, %v3362
    %v3365 = vmul.f32 %v3363, %v3363
    %v3366 = vsel %vm628, %v3364, 0.0
    %v3367 = vsel %vm628, %v3365, 0.0
    %v3368 = vadd.f32 %v3366, %v3367
    %v3369 = vrot.slane %v3368, 4
    %v3370 = vadd.f32 %v3368, %v3369
    %v3371 = vrot.slane %v3370, 2
    %v3372 = vadd.f32 %v3370, %v3371
    %v3373 = vrot.slane %v3372, 1
    %v3374 = vadd.f32 %v3372, %v3373
    %v3375 = vmul.f32 %v3374, %v3360
    %v3376 = vadd.f32 %v3375, 1e-05
    %v3377 = vrsqrt.pop %v3376
    %v3378 = vmul.f32 %v3362, %v3377
    %v3379 = vmul.f32 %v3363, %v3377
    %v3380 = vld [vmem:[%s53] sm:$0x1]
    %v3382 = vlaneseq
    %v3383 = vshrl.u32 %v3382, 7
    %v3384 = vsub.s32 0, %v3383
    %v3385 = vrot.slane %v3380, %v3384
    %v3387 = vmul.f32 %v3378, %v3385
    %v3388 = vmul.f32 %v3379, %v3385
    %v3389 = vld [vmem:[%s55] sm:$0x1]
    %v3391 = vlaneseq
    %v3392 = vshrl.u32 %v3391, 7
    %v3393 = vsub.s32 0, %v3392
    %v3394 = vrot.slane %v3389, %v3393
    %v3396 = vadd.f32 %v3387, %v3394
    %v3397 = vadd.f32 %v3388, %v3394
    %v3398 = vxor.u32 %v3396, 2147483648
    %v3399 = vxor.u32 %v3397, 2147483648
    %v3400 = vmul.f32 %v3398, 1.442695
    %v3401 = vpow.pop %v3400
    %v3402 = vmul.f32 %v3399, 1.442695
    %v3403 = vpow.pop %v3402
    %v3404 = vadd.f32 %v3401, 1.0
    %v3405 = vadd.f32 %v3403, 1.0
    %v3406 = vrcp.pop %v3404
    %v3407 = vmul.f32 1.0, %v3406
    %v3408 = vrcp.pop %v3405
    %v3409 = vmul.f32 1.0, %v3408
    %v3410 = vmul.f32 %v3396, %v3407
    %v3411 = vmul.f32 %v3397, %v3409
    %v3412 = vld [vmem:[%s57] sm:$0xff]
    %v3413 = vld [vmem:[%s57 + $0x8] sm:$0xff]
    %v3414 = vld [vmem:[%s57 + $0x10] sm:$0xff]
    %v3415 = vld [vmem:[%s57 + $0x18] sm:$0xff]
    %v3416 = vld [vmem:[#allocation7] sm:$0x1]
    %v3418 = vlaneseq
    %v3419 = vshrl.u32 %v3418, 7
    %v3420 = vsub.s32 0, %v3419
    %v3421 = vrot.slane %v3416, %v3420
    %v3424 = vsel %vm628, %v3410, 0
    %v3427 = vsel %vm628, %v3411, 0
    %3429 = vmatprep.subr.mxu0 0.0
    %3430 = vmatpush1.msra.mxu0 %v3412
    %3431 = vmatprep.subr.mxu0 0.0
    %3432 = vmatpush1.msra.mxu0 %v3413
    %3433 = vmatprep.subr.mxu0 0.0
    %3434 = vmatpush1.msra.mxu0 %v3414
    %3435 = vmatprep.subr.mxu0 0.0
    %3436 = vmatpush1.msra.mxu0 %v3415
    %3437 = vmatprep.subr.mxu0 0.0
    %3438 = vmatpush1.msra.mxu0 0.0
    %3439 = vmatprep.subr.mxu0 0.0
    %3440 = vmatpush1.msra.mxu0 0.0
    %3441 = vmatprep.subr.mxu0 0.0
    %3442 = vmatpush1.msra.mxu0 0.0
    %3443 = vmatprep.subr.mxu0 0.0
    %3444 = vmatpush1.msra.mxu0 0.0
    %3445 = vmatprep.subr.mxu0 0.0
    %3446 = vmatpush1.msra.mxu0 0.0
    %3447 = vmatprep.subr.mxu0 0.0
    %3448 = vmatpush1.msra.mxu0 0.0
    %3449 = vmatprep.subr.mxu0 0.0
    %3450 = vmatpush1.msra.mxu0 0.0
    %3451 = vmatprep.subr.mxu0 0.0
    %3452 = vmatpush1.msra.mxu0 0.0
    %3453 = vmatprep.subr.mxu0 0.0
    %3454 = vmatpush1.msra.mxu0 0.0
    %3455 = vmatprep.subr.mxu0 0.0
    %3456 = vmatpush1.msra.mxu0 0.0
    %3457 = vmatprep.subr.mxu0 0.0
    %3458 = vmatpush1.msra.mxu0 0.0
    %3459 = vmatprep.subr.mxu0 0.0
    %3460 = vmatpush1.msra.mxu0 0.0
    %3461 = vmatprep.subr.mxu0 0.0
    %3462 = vmatpush1.msra.mxu0 0.0
    %3463 = vmatprep.subr.mxu0 0.0
    %3464 = vmatpush1.msra.mxu0 0.0
    %3465 = vmatprep.subr.mxu0 0.0
    %3466 = vmatpush1.msra.mxu0 0.0
    %3467 = vmatprep.subr.mxu0 0.0
    %3468 = vmatpush1.msra.mxu0 0.0
    %3469 = vmatprep.subr.mxu0 0.0
    %3470 = vmatpush1.msra.mxu0 0.0
    %3471 = vmatprep.subr.mxu0 0.0
    %3472 = vmatpush1.msra.mxu0 0.0
    %3473 = vmatprep.subr.mxu0 0.0
    %3474 = vmatpush1.msra.mxu0 0.0
    %3475 = vmatprep.subr.mxu0 0.0
    %3476 = vmatpush1.msra.mxu0 0.0
    %3477 = vmatprep.subr.mxu0 0.0
    %3478 = vmatpush1.msra.mxu0 0.0
    %3479 = vmatprep.subr.mxu0 0.0
    %3480 = vmatpush1.msra.mxu0 0.0
    %3481 = vmatprep.subr.mxu0 0.0
    %3482 = vmatpush1.msra.mxu0 0.0
    %3483 = vmatprep.subr.mxu0 0.0
    %3484 = vmatpush1.msra.mxu0 0.0
    %3485 = vmatprep.subr.mxu0 0.0
    %3486 = vmatpush1.msra.mxu0 0.0
    %3487 = vmatprep.subr.mxu0 0.0
    %3488 = vmatpush1.msra.mxu0 0.0
    %3489 = vmatprep.subr.mxu0 0.0
    %3490 = vmatpush1.msra.mxu0 0.0
    %3491 = vmatprep.subr.mxu0 0.0
    %3492 = vmatpush1.msra.mxu0 0.0
    %3493 = vmatprep.mubr.f32.mxu0 0.0
    %3494 = vmatmul.mubr.f32.gmra.mrb[0].mxu0 %v3424
    %v3495 = vpop.f32.mrb[0].mxu0
    %v3496 = vadd.f32 %v3421, %v3495
    %v3497 = vpop.f32.mrb[0].mxu0
    %3498 = vmatprep.mubr.f32.mxu0 0.0
    %3499 = vmatmul.mubr.f32.gmra.mrb[0].mxu0 %v3427
    %v3500 = vpop.f32.mrb[0].mxu0
    %v3501 = vadd.f32 %v3421, %v3500
    %v3502 = vpop.f32.mrb[0].mxu0
    %3503 = vdwg.mxu0
    %v3504 = vadd.f32 %v3000, %v3496
    %v3505 = vadd.f32 %v3001, %v3501
    %v3506 = vld [vmem:[#allocation10] sm:$0x1]
    %v3507 = vld [vmem:[#allocation12] sm:$0x1]
    %v3508 = vsel %vm628, %v3504, 0.0
    %3509 = vadd.xlane.f32.xlu0 %v3508
    %v3510 = vpop.xlane.xlu0 %3509
    %v3511 = vsel %vm628, %v3505, 0.0
    %3512 = vadd.xlane.f32.xlu0 %v3511
    %v3513 = vpop.xlane.xlu0 %3512
    %v3514 = vmul.f32 %v3510, %v1156
    %v3515 = vmul.f32 %v3513, %v1156
    %v3516 = vsub.f32 %v3504, %v3514
    %v3517 = vsub.f32 %v3505, %v3515
    %v3518 = vmul.f32 %v3516, %v3516
    %v3519 = vmul.f32 %v3517, %v3517
    %v3520 = vsel %vm628, %v3518, 0.0
    %3521 = vadd.xlane.f32.xlu0 %v3520
    %v3522 = vpop.xlane.xlu0 %3521
    %v3523 = vsel %vm628, %v3519, 0.0
    %3524 = vadd.xlane.f32.xlu0 %v3523
    %v3525 = vpop.xlane.xlu0 %3524
    %v3526 = vmul.f32 %v3522, %v1156
    %v3527 = vmul.f32 %v3525, %v1156
    %v3528 = vadd.f32 %v3526, 1e-05
    %v3529 = vadd.f32 %v3527, 1e-05
    %v3530 = vrsqrt.pop %v3528
    %v3531 = vrsqrt.pop %v3529
    %v3532 = vmul.f32 %v3516, %v3530
    %v3533 = vmul.f32 %v3517, %v3531
    %v3535 = vlaneseq
    %v3536 = vshrl.u32 %v3535, 7
    %v3537 = vsub.s32 0, %v3536
    %v3538 = vrot.slane %v3506, %v3537
    %v3540 = vmul.f32 %v3532, %v3538
    %v3541 = vmul.f32 %v3533, %v3538
    %v3543 = vlaneseq
    %v3544 = vshrl.u32 %v3543, 7
    %v3545 = vsub.s32 0, %v3544
    %v3546 = vrot.slane %v3507, %v3545
    %v3548 = vadd.f32 %v3540, %v3546
    %v3549 = vadd.f32 %v3541, %v3546
    %v3550 = vld [vmem:[%s65] sm:$0xff]
    %v3551 = vld [vmem:[%s65 + $0x8] sm:$0xff]
    %v3552 = vld [vmem:[%s65 + $0x10] sm:$0xff]
    %v3553 = vld [vmem:[%s65 + $0x18] sm:$0xff]
    %v3554 = vld [vmem:[#allocation13] sm:$0x1]
    %v3556 = vlaneseq
    %v3557 = vshrl.u32 %v3556, 7
    %v3558 = vsub.s32 0, %v3557
    %v3559 = vrot.slane %v3554, %v3558
    %v3562 = vsel %vm628, %v3548, 0
    %v3565 = vsel %vm628, %v3549, 0
    %3567 = vmatprep.subr.mxu0 0.0
    %3568 = vmatpush1.msra.mxu0 %v3550
    %3569 = vmatprep.subr.mxu0 0.0
    %3570 = vmatpush1.msra.mxu0 %v3551
    %3571 = vmatprep.subr.mxu0 0.0
    %3572 = vmatpush1.msra.mxu0 %v3552
    %3573 = vmatprep.subr.mxu0 0.0
    %3574 = vmatpush1.msra.mxu0 %v3553
    %3575 = vmatprep.subr.mxu0 0.0
    %3576 = vmatpush1.msra.mxu0 0.0
    %3577 = vmatprep.subr.mxu0 0.0
    %3578 = vmatpush1.msra.mxu0 0.0
    %3579 = vmatprep.subr.mxu0 0.0
    %3580 = vmatpush1.msra.mxu0 0.0
    %3581 = vmatprep.subr.mxu0 0.0
    %3582 = vmatpush1.msra.mxu0 0.0
    %3583 = vmatprep.subr.mxu0 0.0
    %3584 = vmatpush1.msra.mxu0 0.0
    %3585 = vmatprep.subr.mxu0 0.0
    %3586 = vmatpush1.msra.mxu0 0.0
    %3587 = vmatprep.subr.mxu0 0.0
    %3588 = vmatpush1.msra.mxu0 0.0
    %3589 = vmatprep.subr.mxu0 0.0
    %3590 = vmatpush1.msra.mxu0 0.0
    %3591 = vmatprep.subr.mxu0 0.0
    %3592 = vmatpush1.msra.mxu0 0.0
    %3593 = vmatprep.subr.mxu0 0.0
    %3594 = vmatpush1.msra.mxu0 0.0
    %3595 = vmatprep.subr.mxu0 0.0
    %3596 = vmatpush1.msra.mxu0 0.0
    %3597 = vmatprep.subr.mxu0 0.0
    %3598 = vmatpush1.msra.mxu0 0.0
    %3599 = vmatprep.subr.mxu0 0.0
    %3600 = vmatpush1.msra.mxu0 0.0
    %3601 = vmatprep.subr.mxu0 0.0
    %3602 = vmatpush1.msra.mxu0 0.0
    %3603 = vmatprep.subr.mxu0 0.0
    %3604 = vmatpush1.msra.mxu0 0.0
    %3605 = vmatprep.subr.mxu0 0.0
    %3606 = vmatpush1.msra.mxu0 0.0
    %3607 = vmatprep.subr.mxu0 0.0
    %3608 = vmatpush1.msra.mxu0 0.0
    %3609 = vmatprep.subr.mxu0 0.0
    %3610 = vmatpush1.msra.mxu0 0.0
    %3611 = vmatprep.subr.mxu0 0.0
    %3612 = vmatpush1.msra.mxu0 0.0
    %3613 = vmatprep.subr.mxu0 0.0
    %3614 = vmatpush1.msra.mxu0 0.0
    %3615 = vmatprep.subr.mxu0 0.0
    %3616 = vmatpush1.msra.mxu0 0.0
    %3617 = vmatprep.subr.mxu0 0.0
    %3618 = vmatpush1.msra.mxu0 0.0
    %3619 = vmatprep.subr.mxu0 0.0
    %3620 = vmatpush1.msra.mxu0 0.0
    %3621 = vmatprep.subr.mxu0 0.0
    %3622 = vmatpush1.msra.mxu0 0.0
    %3623 = vmatprep.subr.mxu0 0.0
    %3624 = vmatpush1.msra.mxu0 0.0
    %3625 = vmatprep.subr.mxu0 0.0
    %3626 = vmatpush1.msra.mxu0 0.0
    %3627 = vmatprep.subr.mxu0 0.0
    %3628 = vmatpush1.msra.mxu0 0.0
    %3629 = vmatprep.subr.mxu0 0.0
    %3630 = vmatpush1.msra.mxu0 0.0
    %3631 = vmatprep.mubr.f32.mxu0 0.0
    %3632 = vmatmul.mubr.f32.gmra.mrb[0].mxu0 %v3562
    %v3633 = vpop.f32.mrb[0].mxu0
    %v3634 = vadd.f32 %v3559, %v3633
    %v3635 = vpop.f32.mrb[0].mxu0
    %3636 = vmatprep.mubr.f32.mxu0 0.0
    %3637 = vmatmul.mubr.f32.gmra.mrb[0].mxu0 %v3565
    %v3638 = vpop.f32.mrb[0].mxu0
    %v3639 = vadd.f32 %v3559, %v3638
    %v3640 = vpop.f32.mrb[0].mxu0
    %3641 = vdwg.mxu0
    %v3642 = vxor.u32 %v3634, 2147483648
    %v3643 = vxor.u32 %v3639, 2147483648
    %v3644 = vmul.f32 %v3642, 1.442695
    %v3645 = vpow.pop %v3644
    %v3646 = vmul.f32 %v3643, 1.442695
    %v3647 = vpow.pop %v3646
    %v3648 = vadd.f32 %v3645, 1.0
    %v3649 = vadd.f32 %v3647, 1.0
    %v3650 = vrcp.pop %v3648
    %v3651 = vmul.f32 1.0, %v3650
    %v3652 = vrcp.pop %v3649
    %v3653 = vmul.f32 1.0, %v3652
    %v3654 = vmul.f32 %v3634, %v3651
    %v3655 = vmul.f32 %v3639, %v3653
    %v3656 = vld [vmem:[%s69] sm:$0xff]
    %v3657 = vld [vmem:[%s69 + $0x8] sm:$0xff]
    %v3658 = vld [vmem:[%s69 + $0x10] sm:$0xff]
    %v3659 = vld [vmem:[%s69 + $0x18] sm:$0xff]
    %v3660 = vld [vmem:[%s69 + $0x20] sm:$0xff]
    %v3661 = vld [vmem:[%s69 + $0x28] sm:$0xff]
    %v3662 = vld [vmem:[%s69 + $0x30] sm:$0xff]
    %v3663 = vld [vmem:[%s69 + $0x38] sm:$0xff]
    %v3664 = vld [vmem:[#allocation15] sm:$0x1]
    %v3666 = vlaneseq
    %v3667 = vshrl.u32 %v3666, 7
    %v3668 = vsub.s32 0, %v3667
    %v3669 = vrot.slane %v3664, %v3668
    %v3672 = vsel %vm1314, %v3654, 0
    %v3675 = vsel %vm1314, %v3655, 0
    %3677 = vmatprep.subr.mxu0 0.0
    %3678 = vmatpush1.msra.mxu0 %v3656
    %3679 = vmatprep.subr.mxu0 0.0
    %3680 = vmatpush1.msra.mxu0 %v3657
    %3681 = vmatprep.subr.mxu0 0.0
    %3682 = vmatpush1.msra.mxu0 %v3658
    %3683 = vmatprep.subr.mxu0 0.0
    %3684 = vmatpush1.msra.mxu0 %v3659
    %3685 = vmatprep.subr.mxu0 0.0
    %3686 = vmatpush1.msra.mxu0 %v3660
    %3687 = vmatprep.subr.mxu0 0.0
    %3688 = vmatpush1.msra.mxu0 %v3661
    %3689 = vmatprep.subr.mxu0 0.0
    %3690 = vmatpush1.msra.mxu0 %v3662
    %3691 = vmatprep.subr.mxu0 0.0
    %3692 = vmatpush1.msra.mxu0 %v3663
    %3693 = vmatprep.subr.mxu0 0.0
    %3694 = vmatpush1.msra.mxu0 0.0
    %3695 = vmatprep.subr.mxu0 0.0
    %3696 = vmatpush1.msra.mxu0 0.0
    %3697 = vmatprep.subr.mxu0 0.0
    %3698 = vmatpush1.msra.mxu0 0.0
    %3699 = vmatprep.subr.mxu0 0.0
    %3700 = vmatpush1.msra.mxu0 0.0
    %3701 = vmatprep.subr.mxu0 0.0
    %3702 = vmatpush1.msra.mxu0 0.0
    %3703 = vmatprep.subr.mxu0 0.0
    %3704 = vmatpush1.msra.mxu0 0.0
    %3705 = vmatprep.subr.mxu0 0.0
    %3706 = vmatpush1.msra.mxu0 0.0
    %3707 = vmatprep.subr.mxu0 0.0
    %3708 = vmatpush1.msra.mxu0 0.0
    %3709 = vmatprep.subr.mxu0 0.0
    %3710 = vmatpush1.msra.mxu0 0.0
    %3711 = vmatprep.subr.mxu0 0.0
    %3712 = vmatpush1.msra.mxu0 0.0
    %3713 = vmatprep.subr.mxu0 0.0
    %3714 = vmatpush1.msra.mxu0 0.0
    %3715 = vmatprep.subr.mxu0 0.0
    %3716 = vmatpush1.msra.mxu0 0.0
    %3717 = vmatprep.subr.mxu0 0.0
    %3718 = vmatpush1.msra.mxu0 0.0
    %3719 = vmatprep.subr.mxu0 0.0
    %3720 = vmatpush1.msra.mxu0 0.0
    %3721 = vmatprep.subr.mxu0 0.0
    %3722 = vmatpush1.msra.mxu0 0.0
    %3723 = vmatprep.subr.mxu0 0.0
    %3724 = vmatpush1.msra.mxu0 0.0
    %3725 = vmatprep.subr.mxu0 0.0
    %3726 = vmatpush1.msra.mxu0 0.0
    %3727 = vmatprep.subr.mxu0 0.0
    %3728 = vmatpush1.msra.mxu0 0.0
    %3729 = vmatprep.subr.mxu0 0.0
    %3730 = vmatpush1.msra.mxu0 0.0
    %3731 = vmatprep.subr.mxu0 0.0
    %3732 = vmatpush1.msra.mxu0 0.0
    %3733 = vmatprep.subr.mxu0 0.0
    %3734 = vmatpush1.msra.mxu0 0.0
    %3735 = vmatprep.subr.mxu0 0.0
    %3736 = vmatpush1.msra.mxu0 0.0
    %3737 = vmatprep.subr.mxu0 0.0
    %3738 = vmatpush1.msra.mxu0 0.0
    %3739 = vmatprep.subr.mxu0 0.0
    %3740 = vmatpush1.msra.mxu0 0.0
    %3741 = vmatprep.mubr.f32.mxu0 0.0
    %3742 = vmatmul.mubr.f32.gmra.mrb[0].mxu0 %v3672
    %v3743 = vpop.f32.mrb[0].mxu0
    %v3744 = vadd.f32 %v3669, %v3743
    %v3745 = vpop.f32.mrb[0].mxu0
    %3746 = vmatprep.mubr.f32.mxu0 0.0
    %3747 = vmatmul.mubr.f32.gmra.mrb[0].mxu0 %v3675
    %v3748 = vpop.f32.mrb[0].mxu0
    %v3749 = vadd.f32 %v3669, %v3748
    %v3750 = vpop.f32.mrb[0].mxu0
    %3751 = vdwg.mxu0
    %v3752 = vmul.f32 %v3744, 0.5
    %v3753 = vmul.f32 %v3749, 0.5
    %v3754 = vadd.f32 %v3504, %v3752
    %v3755 = vadd.f32 %v3505, %v3753
    %v3756 = vld [vmem:[#allocation16] sm:$0x1]
    %v3757 = vld [vmem:[#allocation18] sm:$0x1]
    %v3758 = vsel %vm628, %v3754, 0.0
    %3759 = vadd.xlane.f32.xlu0 %v3758
    %v3760 = vpop.xlane.xlu0 %3759
    %v3761 = vsel %vm628, %v3755, 0.0
    %3762 = vadd.xlane.f32.xlu0 %v3761
    %v3763 = vpop.xlane.xlu0 %3762
    %v3764 = vmul.f32 %v3760, %v1156
    %v3765 = vmul.f32 %v3763, %v1156
    %v3766 = vsub.f32 %v3754, %v3764
    %v3767 = vsub.f32 %v3755, %v3765
    %v3768 = vmul.f32 %v3766, %v3766
    %v3769 = vmul.f32 %v3767, %v3767
    %v3770 = vsel %vm628, %v3768, 0.0
    %3771 = vadd.xlane.f32.xlu0 %v3770
    %v3772 = vpop.xlane.xlu0 %3771
    %v3773 = vsel %vm628, %v3769, 0.0
    %3774 = vadd.xlane.f32.xlu0 %v3773
    %v3775 = vpop.xlane.xlu0 %3774
    %v3776 = vmul.f32 %v3772, %v1156
    %v3777 = vmul.f32 %v3775, %v1156
    %v3778 = vadd.f32 %v3776, 1e-05
    %v3779 = vadd.f32 %v3777, 1e-05
    %v3780 = vrsqrt.pop %v3778
    %v3781 = vrsqrt.pop %v3779
    %v3782 = vmul.f32 %v3766, %v3780
    %v3783 = vmul.f32 %v3767, %v3781
    %v3785 = vlaneseq
    %v3786 = vshrl.u32 %v3785, 7
    %v3787 = vsub.s32 0, %v3786
    %v3788 = vrot.slane %v3756, %v3787
    %v3790 = vmul.f32 %v3782, %v3788
    %v3791 = vmul.f32 %v3783, %v3788
    %v3793 = vlaneseq
    %v3794 = vshrl.u32 %v3793, 7
    %v3795 = vsub.s32 0, %v3794
    %v3796 = vrot.slane %v3757, %v3795
    %v3798 = vadd.f32 %v3790, %v3796
    %v3799 = vadd.f32 %v3791, %v3796
    %v3800 = vld [vmem:[#allocation19] sm:$0x1]
    %v3801 = vld [vmem:[#allocation21] sm:$0x1]
    %v3802 = vsel %vm628, %v3798, 0.0
    %3803 = vadd.xlane.f32.xlu0 %v3802
    %v3804 = vpop.xlane.xlu0 %3803
    %v3805 = vsel %vm628, %v3799, 0.0
    %3806 = vadd.xlane.f32.xlu0 %v3805
    %v3807 = vpop.xlane.xlu0 %3806
    %v3808 = vmul.f32 %v3804, %v1156
    %v3809 = vmul.f32 %v3807, %v1156
    %v3810 = vsub.f32 %v3798, %v3808
    %v3811 = vsub.f32 %v3799, %v3809
    %v3812 = vmul.f32 %v3810, %v3810
    %v3813 = vmul.f32 %v3811, %v3811
    %v3814 = vsel %vm628, %v3812, 0.0
    %3815 = vadd.xlane.f32.xlu0 %v3814
    %v3816 = vpop.xlane.xlu0 %3815
    %v3817 = vsel %vm628, %v3813, 0.0
    %3818 = vadd.xlane.f32.xlu0 %v3817
    %v3819 = vpop.xlane.xlu0 %3818
    %v3820 = vmul.f32 %v3816, %v1156
    %v3821 = vmul.f32 %v3819, %v1156
    %v3822 = vadd.f32 %v3820, 1e-05
    %v3823 = vadd.f32 %v3821, 1e-05
    %v3824 = vrsqrt.pop %v3822
    %v3825 = vrsqrt.pop %v3823
    %v3826 = vmul.f32 %v3810, %v3824
    %v3827 = vmul.f32 %v3811, %v3825
    %v3829 = vlaneseq
    %v3830 = vshrl.u32 %v3829, 7
    %v3831 = vsub.s32 0, %v3830
    %v3832 = vrot.slane %v3800, %v3831
    %v3834 = vmul.f32 %v3826, %v3832
    %v3835 = vmul.f32 %v3827, %v3832
    %v3837 = vlaneseq
    %v3838 = vshrl.u32 %v3837, 7
    %v3839 = vsub.s32 0, %v3838
    %v3840 = vrot.slane %v3801, %v3839
    %v3842 = vadd.f32 %v3834, %v3840
    %v3843 = vadd.f32 %v3835, %v3840
    %v3844 = vld [vmem:[%s81] sm:$0xff]
    %v3845 = vld [vmem:[%s81 + $0x8] sm:$0xff]
    %v3846 = vld [vmem:[%s81 + $0x10] sm:$0xff]
    %v3847 = vld [vmem:[%s81 + $0x18] sm:$0xff]
    %v3848 = vld [vmem:[#allocation22] sm:$0x1]
    %v3850 = vlaneseq
    %v3851 = vshrl.u32 %v3850, 7
    %v3852 = vsub.s32 0, %v3851
    %v3853 = vrot.slane %v3848, %v3852
    %v3856 = vsel %vm628, %v3842, 0
    %v3859 = vsel %vm628, %v3843, 0
    %3861 = vmatprep.subr.mxu0 0.0
    %3862 = vmatpush1.msra.mxu0 %v3844
    %3863 = vmatprep.subr.mxu0 0.0
    %3864 = vmatpush1.msra.mxu0 %v3845
    %3865 = vmatprep.subr.mxu0 0.0
    %3866 = vmatpush1.msra.mxu0 %v3846
    %3867 = vmatprep.subr.mxu0 0.0
    %3868 = vmatpush1.msra.mxu0 %v3847
    %3869 = vmatprep.subr.mxu0 0.0
    %3870 = vmatpush1.msra.mxu0 0.0
    %3871 = vmatprep.subr.mxu0 0.0
    %3872 = vmatpush1.msra.mxu0 0.0
    %3873 = vmatprep.subr.mxu0 0.0
    %3874 = vmatpush1.msra.mxu0 0.0
    %3875 = vmatprep.subr.mxu0 0.0
    %3876 = vmatpush1.msra.mxu0 0.0
    %3877 = vmatprep.subr.mxu0 0.0
    %3878 = vmatpush1.msra.mxu0 0.0
    %3879 = vmatprep.subr.mxu0 0.0
    %3880 = vmatpush1.msra.mxu0 0.0
    %3881 = vmatprep.subr.mxu0 0.0
    %3882 = vmatpush1.msra.mxu0 0.0
    %3883 = vmatprep.subr.mxu0 0.0
    %3884 = vmatpush1.msra.mxu0 0.0
    %3885 = vmatprep.subr.mxu0 0.0
    %3886 = vmatpush1.msra.mxu0 0.0
    %3887 = vmatprep.subr.mxu0 0.0
    %3888 = vmatpush1.msra.mxu0 0.0
    %3889 = vmatprep.subr.mxu0 0.0
    %3890 = vmatpush1.msra.mxu0 0.0
    %3891 = vmatprep.subr.mxu0 0.0
    %3892 = vmatpush1.msra.mxu0 0.0
    %3893 = vmatprep.subr.mxu0 0.0
    %3894 = vmatpush1.msra.mxu0 0.0
    %3895 = vmatprep.subr.mxu0 0.0
    %3896 = vmatpush1.msra.mxu0 0.0
    %3897 = vmatprep.subr.mxu0 0.0
    %3898 = vmatpush1.msra.mxu0 0.0
    %3899 = vmatprep.subr.mxu0 0.0
    %3900 = vmatpush1.msra.mxu0 0.0
    %3901 = vmatprep.subr.mxu0 0.0
    %3902 = vmatpush1.msra.mxu0 0.0
    %3903 = vmatprep.subr.mxu0 0.0
    %3904 = vmatpush1.msra.mxu0 0.0
    %3905 = vmatprep.subr.mxu0 0.0
    %3906 = vmatpush1.msra.mxu0 0.0
    %3907 = vmatprep.subr.mxu0 0.0
    %3908 = vmatpush1.msra.mxu0 0.0
    %3909 = vmatprep.subr.mxu0 0.0
    %3910 = vmatpush1.msra.mxu0 0.0
    %3911 = vmatprep.subr.mxu0 0.0
    %3912 = vmatpush1.msra.mxu0 0.0
    %3913 = vmatprep.subr.mxu0 0.0
    %3914 = vmatpush1.msra.mxu0 0.0
    %3915 = vmatprep.subr.mxu0 0.0
    %3916 = vmatpush1.msra.mxu0 0.0
    %3917 = vmatprep.subr.mxu0 0.0
    %3918 = vmatpush1.msra.mxu0 0.0
    %3919 = vmatprep.subr.mxu0 0.0
    %3920 = vmatpush1.msra.mxu0 0.0
    %3921 = vmatprep.subr.mxu0 0.0
    %3922 = vmatpush1.msra.mxu0 0.0
    %3923 = vmatprep.subr.mxu0 0.0
    %3924 = vmatpush1.msra.mxu0 0.0
    %3925 = vmatprep.mubr.f32.mxu0 0.0
    %3926 = vmatmul.mubr.f32.gmra.mrb[0].mxu0 %v3856
    %v3927 = vpop.f32.mrb[0].mxu0
    %v3928 = vadd.f32 %v3853, %v3927
    %v3929 = vpop.f32.mrb[0].mxu0
    %3930 = vmatprep.mubr.f32.mxu0 0.0
    %3931 = vmatmul.mubr.f32.gmra.mrb[0].mxu0 %v3859
    %v3932 = vpop.f32.mrb[0].mxu0
    %v3933 = vadd.f32 %v3853, %v3932
    %v3934 = vpop.f32.mrb[0].mxu0
    %3935 = vdwg.mxu0
    %v3936 = vxor.u32 %v3928, 2147483648
    %v3937 = vxor.u32 %v3933, 2147483648
    %v3938 = vmul.f32 %v3936, 1.442695
    %v3939 = vpow.pop %v3938
    %v3940 = vmul.f32 %v3937, 1.442695
    %v3941 = vpow.pop %v3940
    %v3942 = vadd.f32 %v3939, 1.0
    %v3943 = vadd.f32 %v3941, 1.0
    %v3944 = vrcp.pop %v3942
    %v3945 = vmul.f32 1.0, %v3944
    %v3946 = vrcp.pop %v3943
    %v3947 = vmul.f32 1.0, %v3946
    %v3948 = vmul.f32 %v3928, %v3945
    %v3949 = vmul.f32 %v3933, %v3947
    %v3950 = vld [vmem:[%s85] sm:$0xff]
    %v3951 = vld [vmem:[%s85 + $0x8] sm:$0xff]
    %v3952 = vld [vmem:[%s85 + $0x10] sm:$0xff]
    %v3953 = vld [vmem:[%s85 + $0x18] sm:$0xff]
    %v3954 = vld [vmem:[%s85 + $0x20] sm:$0xff]
    %v3955 = vld [vmem:[%s85 + $0x28] sm:$0xff]
    %v3956 = vld [vmem:[%s85 + $0x30] sm:$0xff]
    %v3957 = vld [vmem:[%s85 + $0x38] sm:$0xff]
    %v3958 = vld [vmem:[#allocation24] sm:$0x1]
    %v3960 = vlaneseq
    %v3961 = vshrl.u32 %v3960, 7
    %v3962 = vsub.s32 0, %v3961
    %v3963 = vrot.slane %v3958, %v3962
    %v3966 = vsel %vm1314, %v3948, 0
    %v3969 = vsel %vm1314, %v3949, 0
    %3971 = vmatprep.subr.mxu0 0.0
    %3972 = vmatpush1.msra.mxu0 %v3950
    %3973 = vmatprep.subr.mxu0 0.0
    %3974 = vmatpush1.msra.mxu0 %v3951
    %3975 = vmatprep.subr.mxu0 0.0
    %3976 = vmatpush1.msra.mxu0 %v3952
    %3977 = vmatprep.subr.mxu0 0.0
    %3978 = vmatpush1.msra.mxu0 %v3953
    %3979 = vmatprep.subr.mxu0 0.0
    %3980 = vmatpush1.msra.mxu0 %v3954
    %3981 = vmatprep.subr.mxu0 0.0
    %3982 = vmatpush1.msra.mxu0 %v3955
    %3983 = vmatprep.subr.mxu0 0.0
    %3984 = vmatpush1.msra.mxu0 %v3956
    %3985 = vmatprep.subr.mxu0 0.0
    %3986 = vmatpush1.msra.mxu0 %v3957
    %3987 = vmatprep.subr.mxu0 0.0
    %3988 = vmatpush1.msra.mxu0 0.0
    %3989 = vmatprep.subr.mxu0 0.0
    %3990 = vmatpush1.msra.mxu0 0.0
    %3991 = vmatprep.subr.mxu0 0.0
    %3992 = vmatpush1.msra.mxu0 0.0
    %3993 = vmatprep.subr.mxu0 0.0
    %3994 = vmatpush1.msra.mxu0 0.0
    %3995 = vmatprep.subr.mxu0 0.0
    %3996 = vmatpush1.msra.mxu0 0.0
    %3997 = vmatprep.subr.mxu0 0.0
    %3998 = vmatpush1.msra.mxu0 0.0
    %3999 = vmatprep.subr.mxu0 0.0
    %4000 = vmatpush1.msra.mxu0 0.0
    %4001 = vmatprep.subr.mxu0 0.0
    %4002 = vmatpush1.msra.mxu0 0.0
    %4003 = vmatprep.subr.mxu0 0.0
    %4004 = vmatpush1.msra.mxu0 0.0
    %4005 = vmatprep.subr.mxu0 0.0
    %4006 = vmatpush1.msra.mxu0 0.0
    %4007 = vmatprep.subr.mxu0 0.0
    %4008 = vmatpush1.msra.mxu0 0.0
    %4009 = vmatprep.subr.mxu0 0.0
    %4010 = vmatpush1.msra.mxu0 0.0
    %4011 = vmatprep.subr.mxu0 0.0
    %4012 = vmatpush1.msra.mxu0 0.0
    %4013 = vmatprep.subr.mxu0 0.0
    %4014 = vmatpush1.msra.mxu0 0.0
    %4015 = vmatprep.subr.mxu0 0.0
    %4016 = vmatpush1.msra.mxu0 0.0
    %4017 = vmatprep.subr.mxu0 0.0
    %4018 = vmatpush1.msra.mxu0 0.0
    %4019 = vmatprep.subr.mxu0 0.0
    %4020 = vmatpush1.msra.mxu0 0.0
    %4021 = vmatprep.subr.mxu0 0.0
    %4022 = vmatpush1.msra.mxu0 0.0
    %4023 = vmatprep.subr.mxu0 0.0
    %4024 = vmatpush1.msra.mxu0 0.0
    %4025 = vmatprep.subr.mxu0 0.0
    %4026 = vmatpush1.msra.mxu0 0.0
    %4027 = vmatprep.subr.mxu0 0.0
    %4028 = vmatpush1.msra.mxu0 0.0
    %4029 = vmatprep.subr.mxu0 0.0
    %4030 = vmatpush1.msra.mxu0 0.0
    %4031 = vmatprep.subr.mxu0 0.0
    %4032 = vmatpush1.msra.mxu0 0.0
    %4033 = vmatprep.subr.mxu0 0.0
    %4034 = vmatpush1.msra.mxu0 0.0
    %4035 = vmatprep.mubr.f32.mxu0 0.0
    %4036 = vmatmul.mubr.f32.gmra.mrb[0].mxu0 %v3966
    %v4037 = vpop.f32.mrb[0].mxu0
    %v4038 = vadd.f32 %v3963, %v4037
    %v4039 = vpop.f32.mrb[0].mxu0
    %4040 = vmatprep.mubr.f32.mxu0 0.0
    %4041 = vmatmul.mubr.f32.gmra.mrb[0].mxu0 %v3969
    %v4042 = vpop.f32.mrb[0].mxu0
    %v4043 = vadd.f32 %v3963, %v4042
    %v4044 = vpop.f32.mrb[0].mxu0
    %4045 = vdwg.mxu0
    %v4046 = vmul.f32 %v4038, 0.5
    %v4047 = vmul.f32 %v4043, 0.5
    %v4048 = vadd.f32 %v3798, %v4046
    %v4049 = vadd.f32 %v3799, %v4047
    %v4050 = vld [vmem:[#allocation25] sm:$0x1]
    %v4051 = vld [vmem:[#allocation27] sm:$0x1]
    %v4052 = vsel %vm628, %v4048, 0.0
    %4053 = vadd.xlane.f32.xlu0 %v4052
    %v4054 = vpop.xlane.xlu0 %4053
    %v4055 = vsel %vm628, %v4049, 0.0
    %4056 = vadd.xlane.f32.xlu0 %v4055
    %v4057 = vpop.xlane.xlu0 %4056
    %v4058 = vmul.f32 %v4054, %v1156
    %v4059 = vmul.f32 %v4057, %v1156
    %v4060 = vsub.f32 %v4048, %v4058
    %v4061 = vsub.f32 %v4049, %v4059
    %v4062 = vmul.f32 %v4060, %v4060
    %v4063 = vmul.f32 %v4061, %v4061
    %v4064 = vsel %vm628, %v4062, 0.0
    %4065 = vadd.xlane.f32.xlu0 %v4064
    %v4066 = vpop.xlane.xlu0 %4065
    %v4067 = vsel %vm628, %v4063, 0.0
    %4068 = vadd.xlane.f32.xlu0 %v4067
    %v4069 = vpop.xlane.xlu0 %4068
    %v4070 = vmul.f32 %v4066, %v1156
    %v4071 = vmul.f32 %v4069, %v1156
    %v4072 = vadd.f32 %v4070, 1e-05
    %v4073 = vadd.f32 %v4071, 1e-05
    %v4074 = vrsqrt.pop %v4072
    %v4075 = vrsqrt.pop %v4073
    %v4076 = vmul.f32 %v4060, %v4074
    %v4077 = vmul.f32 %v4061, %v4075
    %v4079 = vlaneseq
    %v4080 = vshrl.u32 %v4079, 7
    %v4081 = vsub.s32 0, %v4080
    %v4082 = vrot.slane %v4050, %v4081
    %v4084 = vmul.f32 %v4076, %v4082
    %v4085 = vmul.f32 %v4077, %v4082
    %v4087 = vlaneseq
    %v4088 = vshrl.u32 %v4087, 7
    %v4089 = vsub.s32 0, %v4088
    %v4090 = vrot.slane %v4051, %v4089
    %v4092 = vadd.f32 %v4084, %v4090
    %v4093 = vadd.f32 %v4085, %v4090
    %v4094 = vld [vmem:[%s93] sm:$0xff]
    %v4095 = vld [vmem:[%s93 + $0x8] sm:$0xff]
    %v4096 = vld [vmem:[%s93 + $0x10] sm:$0xff]
    %v4097 = vld [vmem:[%s93 + $0x18] sm:$0xff]
    %v4098 = vld [vmem:[#allocation28] sm:$0x1]
    %v4100 = vlaneseq
    %v4101 = vshrl.u32 %v4100, 7
    %v4102 = vsub.s32 0, %v4101
    %v4103 = vrot.slane %v4098, %v4102
    %v4106 = vsel %vm628, %v4092, 0
    %v4109 = vsel %vm628, %v4093, 0
    %4111 = vmatprep.subr.mxu0 0.0
    %4112 = vmatpush1.msra.mxu0 %v4094
    %4113 = vmatprep.subr.mxu0 0.0
    %4114 = vmatpush1.msra.mxu0 %v4095
    %4115 = vmatprep.subr.mxu0 0.0
    %4116 = vmatpush1.msra.mxu0 %v4096
    %4117 = vmatprep.subr.mxu0 0.0
    %4118 = vmatpush1.msra.mxu0 %v4097
    %4119 = vmatprep.subr.mxu0 0.0
    %4120 = vmatpush1.msra.mxu0 0.0
    %4121 = vmatprep.subr.mxu0 0.0
    %4122 = vmatpush1.msra.mxu0 0.0
    %4123 = vmatprep.subr.mxu0 0.0
    %4124 = vmatpush1.msra.mxu0 0.0
    %4125 = vmatprep.subr.mxu0 0.0
    %4126 = vmatpush1.msra.mxu0 0.0
    %4127 = vmatprep.subr.mxu0 0.0
    %4128 = vmatpush1.msra.mxu0 0.0
    %4129 = vmatprep.subr.mxu0 0.0
    %4130 = vmatpush1.msra.mxu0 0.0
    %4131 = vmatprep.subr.mxu0 0.0
    %4132 = vmatpush1.msra.mxu0 0.0
    %4133 = vmatprep.subr.mxu0 0.0
    %4134 = vmatpush1.msra.mxu0 0.0
    %4135 = vmatprep.subr.mxu0 0.0
    %4136 = vmatpush1.msra.mxu0 0.0
    %4137 = vmatprep.subr.mxu0 0.0
    %4138 = vmatpush1.msra.mxu0 0.0
    %4139 = vmatprep.subr.mxu0 0.0
    %4140 = vmatpush1.msra.mxu0 0.0
    %4141 = vmatprep.subr.mxu0 0.0
    %4142 = vmatpush1.msra.mxu0 0.0
    %4143 = vmatprep.subr.mxu0 0.0
    %4144 = vmatpush1.msra.mxu0 0.0
    %4145 = vmatprep.subr.mxu0 0.0
    %4146 = vmatpush1.msra.mxu0 0.0
    %4147 = vmatprep.subr.mxu0 0.0
    %4148 = vmatpush1.msra.mxu0 0.0
    %4149 = vmatprep.subr.mxu0 0.0
    %4150 = vmatpush1.msra.mxu0 0.0
    %4151 = vmatprep.subr.mxu0 0.0
    %4152 = vmatpush1.msra.mxu0 0.0
    %4153 = vmatprep.subr.mxu0 0.0
    %4154 = vmatpush1.msra.mxu0 0.0
    %4155 = vmatprep.subr.mxu0 0.0
    %4156 = vmatpush1.msra.mxu0 0.0
    %4157 = vmatprep.subr.mxu0 0.0
    %4158 = vmatpush1.msra.mxu0 0.0
    %4159 = vmatprep.subr.mxu0 0.0
    %4160 = vmatpush1.msra.mxu0 0.0
    %4161 = vmatprep.subr.mxu0 0.0
    %4162 = vmatpush1.msra.mxu0 0.0
    %4163 = vmatprep.subr.mxu0 0.0
    %4164 = vmatpush1.msra.mxu0 0.0
    %4165 = vmatprep.subr.mxu0 0.0
    %4166 = vmatpush1.msra.mxu0 0.0
    %4167 = vmatprep.subr.mxu0 0.0
    %4168 = vmatpush1.msra.mxu0 0.0
    %4169 = vmatprep.subr.mxu0 0.0
    %4170 = vmatpush1.msra.mxu0 0.0
    %4171 = vmatprep.subr.mxu0 0.0
    %4172 = vmatpush1.msra.mxu0 0.0
    %4173 = vmatprep.subr.mxu0 0.0
    %4174 = vmatpush1.msra.mxu0 0.0
    %4175 = vmatprep.mubr.f32.mxu0 0.0
    %4176 = vmatmul.mubr.f32.gmra.mrb[0].mxu0 %v4106
    %v4177 = vpop.f32.mrb[0].mxu0
    %v4178 = vadd.f32 %v4103, %v4177
    %v4179 = vpop.f32.mrb[0].mxu0
    %4180 = vmatprep.mubr.f32.mxu0 0.0
    %4181 = vmatmul.mubr.f32.gmra.mrb[0].mxu0 %v4109
    %v4182 = vpop.f32.mrb[0].mxu0
    %v4183 = vadd.f32 %v4103, %v4182
    %v4184 = vpop.f32.mrb[0].mxu0
    %4185 = vdwg.mxu0
    %v4186 = vld [vmem:[%s15] sm:$0x1]
    %v4187 = vmul.f32 %v4178, 0.35355338
    %v4188 = vlaneseq
    %v4189 = vshrl.u32 %v4188, 7
    %v4190 = vsub.s32 0, %v4189
    %v4191 = vrot.slane %v4186, %v4190
    %4193 = vrot.lane.b32.xlu0 %v4178, 96
    %v4194 = vpop.permute.xlu0 %4193
    %v4196 = vsel %vm1545, %v4187, 0
    %v4198 = vsel %vm1545, %v4194, 0
    %4200 = vmatprep.subr.mxu0 0.0
    %4201 = vmatpush1.xpose.msra.mxu0 %v4198
    %4202 = vmatprep.subr.mxu0 0.0
    %4203 = vmatpush1.xpose.msra.mxu0 0.0
    %4204 = vmatprep.subr.mxu0 0.0
    %4205 = vmatpush1.xpose.msra.mxu0 0.0
    %4206 = vmatprep.subr.mxu0 0.0
    %4207 = vmatpush1.xpose.msra.mxu0 0.0
    %4208 = vmatprep.subr.mxu0 0.0
    %4209 = vmatpush1.xpose.msra.mxu0 0.0
    %4210 = vmatprep.subr.mxu0 0.0
    %4211 = vmatpush1.xpose.msra.mxu0 0.0
    %4212 = vmatprep.subr.mxu0 0.0
    %4213 = vmatpush1.xpose.msra.mxu0 0.0
    %4214 = vmatprep.subr.mxu0 0.0
    %4215 = vmatpush1.xpose.msra.mxu0 0.0
    %4216 = vmatprep.subr.mxu0 0.0
    %4217 = vmatpush1.xpose.msra.mxu0 0.0
    %4218 = vmatprep.subr.mxu0 0.0
    %4219 = vmatpush1.xpose.msra.mxu0 0.0
    %4220 = vmatprep.subr.mxu0 0.0
    %4221 = vmatpush1.xpose.msra.mxu0 0.0
    %4222 = vmatprep.subr.mxu0 0.0
    %4223 = vmatpush1.xpose.msra.mxu0 0.0
    %4224 = vmatprep.subr.mxu0 0.0
    %4225 = vmatpush1.xpose.msra.mxu0 0.0
    %4226 = vmatprep.subr.mxu0 0.0
    %4227 = vmatpush1.xpose.msra.mxu0 0.0
    %4228 = vmatprep.subr.mxu0 0.0
    %4229 = vmatpush1.xpose.msra.mxu0 0.0
    %4230 = vmatprep.subr.mxu0 0.0
    %4231 = vmatpush1.xpose.msra.mxu0 0.0
    %4232 = vmatprep.subr.mxu0 0.0
    %4233 = vmatpush1.xpose.msra.mxu0 0.0
    %4234 = vmatprep.subr.mxu0 0.0
    %4235 = vmatpush1.xpose.msra.mxu0 0.0
    %4236 = vmatprep.subr.mxu0 0.0
    %4237 = vmatpush1.xpose.msra.mxu0 0.0
    %4238 = vmatprep.subr.mxu0 0.0
    %4239 = vmatpush1.xpose.msra.mxu0 0.0
    %4240 = vmatprep.subr.mxu0 0.0
    %4241 = vmatpush1.xpose.msra.mxu0 0.0
    %4242 = vmatprep.subr.mxu0 0.0
    %4243 = vmatpush1.xpose.msra.mxu0 0.0
    %4244 = vmatprep.subr.mxu0 0.0
    %4245 = vmatpush1.xpose.msra.mxu0 0.0
    %4246 = vmatprep.subr.mxu0 0.0
    %4247 = vmatpush1.xpose.msra.mxu0 0.0
    %4248 = vmatprep.subr.mxu0 0.0
    %4249 = vmatpush1.xpose.msra.mxu0 0.0
    %4250 = vmatprep.subr.mxu0 0.0
    %4251 = vmatpush1.xpose.msra.mxu0 0.0
    %4252 = vmatprep.subr.mxu0 0.0
    %4253 = vmatpush1.xpose.msra.mxu0 0.0
    %4254 = vmatprep.subr.mxu0 0.0
    %4255 = vmatpush1.xpose.msra.mxu0 0.0
    %4256 = vmatprep.subr.mxu0 0.0
    %4257 = vmatpush1.xpose.msra.mxu0 0.0
    %4258 = vmatprep.subr.mxu0 0.0
    %4259 = vmatpush1.xpose.msra.mxu0 0.0
    %4260 = vmatprep.subr.mxu0 0.0
    %4261 = vmatpush1.xpose.msra.mxu0 0.0
    %4262 = vmatprep.subr.mxu0 0.0
    %4263 = vmatpush1.xpose.msra.mxu0 0.0
    %4264 = vmatprep.mubr.f32.mxu0 0.0
    %4265 = vmatmul.mubr.f32.gmra.mrb[0].mxu0 %v4196
    %v4266 = vpop.f32.mrb[0].mxu0
    %v4267 = vadd.f32 %v4191, %v4266
    %v4268 = vpop.f32.mrb[0].mxu0
    %4269 = vdwg.mxu0
    %v4270 = vsel %vm1545, %v4267, -inf
    %4271 = vmax.xlane.f32.xlu0 %v4270
    %v4272 = vpop.xlane.xlu0 %4271
    %v4273 = vsub.f32 %v4267, %v4272
    %v4274 = vmul.f32 %v4273, 1.442695
    %v4275 = vpow.pop %v4274
    %v4276 = vsel %vm1545, %v4275, 0.0
    %4277 = vadd.xlane.f32.xlu0 %v4276
    %v4278 = vpop.xlane.xlu0 %4277
    %v4279 = vrcp.pop %v4278
    %v4280 = vmul.f32 %v4275, %v4279
    %4281 = vrot.lane.b32.xlu0 %v4178, 64
    %v4282 = vpop.permute.xlu0 %4281
    %v4285 = vsel %vm1545, %v4280, 0
    %4287 = vmatprep.subr.mxu0 0.0
    %4288 = vmatpush1.msra.mxu0 %v4282
    %4289 = vmatprep.subr.mxu0 0.0
    %4290 = vmatpush1.msra.mxu0 0.0
    %4291 = vmatprep.subr.mxu0 0.0
    %4292 = vmatpush1.msra.mxu0 0.0
    %4293 = vmatprep.subr.mxu0 0.0
    %4294 = vmatpush1.msra.mxu0 0.0
    %4295 = vmatprep.subr.mxu0 0.0
    %4296 = vmatpush1.msra.mxu0 0.0
    %4297 = vmatprep.subr.mxu0 0.0
    %4298 = vmatpush1.msra.mxu0 0.0
    %4299 = vmatprep.subr.mxu0 0.0
    %4300 = vmatpush1.msra.mxu0 0.0
    %4301 = vmatprep.subr.mxu0 0.0
    %4302 = vmatpush1.msra.mxu0 0.0
    %4303 = vmatprep.subr.mxu0 0.0
    %4304 = vmatpush1.msra.mxu0 0.0
    %4305 = vmatprep.subr.mxu0 0.0
    %4306 = vmatpush1.msra.mxu0 0.0
    %4307 = vmatprep.subr.mxu0 0.0
    %4308 = vmatpush1.msra.mxu0 0.0
    %4309 = vmatprep.subr.mxu0 0.0
    %4310 = vmatpush1.msra.mxu0 0.0
    %4311 = vmatprep.subr.mxu0 0.0
    %4312 = vmatpush1.msra.mxu0 0.0
    %4313 = vmatprep.subr.mxu0 0.0
    %4314 = vmatpush1.msra.mxu0 0.0
    %4315 = vmatprep.subr.mxu0 0.0
    %4316 = vmatpush1.msra.mxu0 0.0
    %4317 = vmatprep.subr.mxu0 0.0
    %4318 = vmatpush1.msra.mxu0 0.0
    %4319 = vmatprep.subr.mxu0 0.0
    %4320 = vmatpush1.msra.mxu0 0.0
    %4321 = vmatprep.subr.mxu0 0.0
    %4322 = vmatpush1.msra.mxu0 0.0
    %4323 = vmatprep.subr.mxu0 0.0
    %4324 = vmatpush1.msra.mxu0 0.0
    %4325 = vmatprep.subr.mxu0 0.0
    %4326 = vmatpush1.msra.mxu0 0.0
    %4327 = vmatprep.subr.mxu0 0.0
    %4328 = vmatpush1.msra.mxu0 0.0
    %4329 = vmatprep.subr.mxu0 0.0
    %4330 = vmatpush1.msra.mxu0 0.0
    %4331 = vmatprep.subr.mxu0 0.0
    %4332 = vmatpush1.msra.mxu0 0.0
    %4333 = vmatprep.subr.mxu0 0.0
    %4334 = vmatpush1.msra.mxu0 0.0
    %4335 = vmatprep.subr.mxu0 0.0
    %4336 = vmatpush1.msra.mxu0 0.0
    %4337 = vmatprep.subr.mxu0 0.0
    %4338 = vmatpush1.msra.mxu0 0.0
    %4339 = vmatprep.subr.mxu0 0.0
    %4340 = vmatpush1.msra.mxu0 0.0
    %4341 = vmatprep.subr.mxu0 0.0
    %4342 = vmatpush1.msra.mxu0 0.0
    %4343 = vmatprep.subr.mxu0 0.0
    %4344 = vmatpush1.msra.mxu0 0.0
    %4345 = vmatprep.subr.mxu0 0.0
    %4346 = vmatpush1.msra.mxu0 0.0
    %4347 = vmatprep.subr.mxu0 0.0
    %4348 = vmatpush1.msra.mxu0 0.0
    %4349 = vmatprep.subr.mxu0 0.0
    %4350 = vmatpush1.msra.mxu0 0.0
    %4351 = vmatprep.mubr.f32.mxu0 0.0
    %4352 = vmatmul.mubr.f32.gmra.mrb[0].mxu0 %v4285
    %v4353 = vpop.f32.mrb[0].mxu0
    %v4354 = vadd.f32 0.0, %v4353
    %v4355 = vpop.f32.mrb[0].mxu0
    %4356 = vdwg.mxu0
    %4357 = vst.msk [vmem:[#allocation4] sm:$0xff] %vm1545, %v4354
    %4358 = vrot.lane.b32.xlu0 %v4187, 120
    %v4359 = vpop.permute.xlu0 %4358
    %4360 = vrot.lane.b32.xlu0 %v4178, 88
    %v4361 = vpop.permute.xlu0 %4360
    %v4362 = vsel %vm1545, %v4359, 0
    %v4364 = vsel %vm1545, %v4361, 0
    %4366 = vmatprep.subr.mxu0 0.0
    %4367 = vmatpush1.xpose.msra.mxu0 %v4364
    %4368 = vmatprep.subr.mxu0 0.0
    %4369 = vmatpush1.xpose.msra.mxu0 0.0
    %4370 = vmatprep.subr.mxu0 0.0
    %4371 = vmatpush1.xpose.msra.mxu0 0.0
    %4372 = vmatprep.subr.mxu0 0.0
    %4373 = vmatpush1.xpose.msra.mxu0 0.0
    %4374 = vmatprep.subr.mxu0 0.0
    %4375 = vmatpush1.xpose.msra.mxu0 0.0
    %4376 = vmatprep.subr.mxu0 0.0
    %4377 = vmatpush1.xpose.msra.mxu0 0.0
    %4378 = vmatprep.subr.mxu0 0.0
    %4379 = vmatpush1.xpose.msra.mxu0 0.0
    %4380 = vmatprep.subr.mxu0 0.0
    %4381 = vmatpush1.xpose.msra.mxu0 0.0
    %4382 = vmatprep.subr.mxu0 0.0
    %4383 = vmatpush1.xpose.msra.mxu0 0.0
    %4384 = vmatprep.subr.mxu0 0.0
    %4385 = vmatpush1.xpose.msra.mxu0 0.0
    %4386 = vmatprep.subr.mxu0 0.0
    %4387 = vmatpush1.xpose.msra.mxu0 0.0
    %4388 = vmatprep.subr.mxu0 0.0
    %4389 = vmatpush1.xpose.msra.mxu0 0.0
    %4390 = vmatprep.subr.mxu0 0.0
    %4391 = vmatpush1.xpose.msra.mxu0 0.0
    %4392 = vmatprep.subr.mxu0 0.0
    %4393 = vmatpush1.xpose.msra.mxu0 0.0
    %4394 = vmatprep.subr.mxu0 0.0
    %4395 = vmatpush1.xpose.msra.mxu0 0.0
    %4396 = vmatprep.subr.mxu0 0.0
    %4397 = vmatpush1.xpose.msra.mxu0 0.0
    %4398 = vmatprep.subr.mxu0 0.0
    %4399 = vmatpush1.xpose.msra.mxu0 0.0
    %4400 = vmatprep.subr.mxu0 0.0
    %4401 = vmatpush1.xpose.msra.mxu0 0.0
    %4402 = vmatprep.subr.mxu0 0.0
    %4403 = vmatpush1.xpose.msra.mxu0 0.0
    %4404 = vmatprep.subr.mxu0 0.0
    %4405 = vmatpush1.xpose.msra.mxu0 0.0
    %4406 = vmatprep.subr.mxu0 0.0
    %4407 = vmatpush1.xpose.msra.mxu0 0.0
    %4408 = vmatprep.subr.mxu0 0.0
    %4409 = vmatpush1.xpose.msra.mxu0 0.0
    %4410 = vmatprep.subr.mxu0 0.0
    %4411 = vmatpush1.xpose.msra.mxu0 0.0
    %4412 = vmatprep.subr.mxu0 0.0
    %4413 = vmatpush1.xpose.msra.mxu0 0.0
    %4414 = vmatprep.subr.mxu0 0.0
    %4415 = vmatpush1.xpose.msra.mxu0 0.0
    %4416 = vmatprep.subr.mxu0 0.0
    %4417 = vmatpush1.xpose.msra.mxu0 0.0
    %4418 = vmatprep.subr.mxu0 0.0
    %4419 = vmatpush1.xpose.msra.mxu0 0.0
    %4420 = vmatprep.subr.mxu0 0.0
    %4421 = vmatpush1.xpose.msra.mxu0 0.0
    %4422 = vmatprep.subr.mxu0 0.0
    %4423 = vmatpush1.xpose.msra.mxu0 0.0
    %4424 = vmatprep.subr.mxu0 0.0
    %4425 = vmatpush1.xpose.msra.mxu0 0.0
    %4426 = vmatprep.subr.mxu0 0.0
    %4427 = vmatpush1.xpose.msra.mxu0 0.0
    %4428 = vmatprep.subr.mxu0 0.0
    %4429 = vmatpush1.xpose.msra.mxu0 0.0
    %4430 = vmatprep.mubr.f32.mxu0 0.0
    %4431 = vmatmul.mubr.f32.gmra.mrb[0].mxu0 %v4362
    %v4432 = vpop.f32.mrb[0].mxu0
    %v4433 = vadd.f32 %v4191, %v4432
    %v4434 = vpop.f32.mrb[0].mxu0
    %4435 = vdwg.mxu0
    %v4436 = vsel %vm1545, %v4433, -inf
    %4437 = vmax.xlane.f32.xlu0 %v4436
    %v4438 = vpop.xlane.xlu0 %4437
    %v4439 = vsub.f32 %v4433, %v4438
    %v4440 = vmul.f32 %v4439, 1.442695
    %v4441 = vpow.pop %v4440
    %v4442 = vsel %vm1545, %v4441, 0.0
    %4443 = vadd.xlane.f32.xlu0 %v4442
    %v4444 = vpop.xlane.xlu0 %4443
    %v4445 = vrcp.pop %v4444
    %v4446 = vmul.f32 %v4441, %v4445
    %4447 = vrot.lane.b32.xlu0 %v4178, 56
    %v4448 = vpop.permute.xlu0 %4447
    %v4451 = vsel %vm1545, %v4446, 0
    %4453 = vmatprep.subr.mxu0 0.0
    %4454 = vmatpush1.msra.mxu0 %v4448
    %4455 = vmatprep.subr.mxu0 0.0
    %4456 = vmatpush1.msra.mxu0 0.0
    %4457 = vmatprep.subr.mxu0 0.0
    %4458 = vmatpush1.msra.mxu0 0.0
    %4459 = vmatprep.subr.mxu0 0.0
    %4460 = vmatpush1.msra.mxu0 0.0
    %4461 = vmatprep.subr.mxu0 0.0
    %4462 = vmatpush1.msra.mxu0 0.0
    %4463 = vmatprep.subr.mxu0 0.0
    %4464 = vmatpush1.msra.mxu0 0.0
    %4465 = vmatprep.subr.mxu0 0.0
    %4466 = vmatpush1.msra.mxu0 0.0
    %4467 = vmatprep.subr.mxu0 0.0
    %4468 = vmatpush1.msra.mxu0 0.0
    %4469 = vmatprep.subr.mxu0 0.0
    %4470 = vmatpush1.msra.mxu0 0.0
    %4471 = vmatprep.subr.mxu0 0.0
    %4472 = vmatpush1.msra.mxu0 0.0
    %4473 = vmatprep.subr.mxu0 0.0
    %4474 = vmatpush1.msra.mxu0 0.0
    %4475 = vmatprep.subr.mxu0 0.0
    %4476 = vmatpush1.msra.mxu0 0.0
    %4477 = vmatprep.subr.mxu0 0.0
    %4478 = vmatpush1.msra.mxu0 0.0
    %4479 = vmatprep.subr.mxu0 0.0
    %4480 = vmatpush1.msra.mxu0 0.0
    %4481 = vmatprep.subr.mxu0 0.0
    %4482 = vmatpush1.msra.mxu0 0.0
    %4483 = vmatprep.subr.mxu0 0.0
    %4484 = vmatpush1.msra.mxu0 0.0
    %4485 = vmatprep.subr.mxu0 0.0
    %4486 = vmatpush1.msra.mxu0 0.0
    %4487 = vmatprep.subr.mxu0 0.0
    %4488 = vmatpush1.msra.mxu0 0.0
    %4489 = vmatprep.subr.mxu0 0.0
    %4490 = vmatpush1.msra.mxu0 0.0
    %4491 = vmatprep.subr.mxu0 0.0
    %4492 = vmatpush1.msra.mxu0 0.0
    %4493 = vmatprep.subr.mxu0 0.0
    %4494 = vmatpush1.msra.mxu0 0.0
    %4495 = vmatprep.subr.mxu0 0.0
    %4496 = vmatpush1.msra.mxu0 0.0
    %4497 = vmatprep.subr.mxu0 0.0
    %4498 = vmatpush1.msra.mxu0 0.0
    %4499 = vmatprep.subr.mxu0 0.0
    %4500 = vmatpush1.msra.mxu0 0.0
    %4501 = vmatprep.subr.mxu0 0.0
    %4502 = vmatpush1.msra.mxu0 0.0
    %4503 = vmatprep.subr.mxu0 0.0
    %4504 = vmatpush1.msra.mxu0 0.0
    %4505 = vmatprep.subr.mxu0 0.0
    %4506 = vmatpush1.msra.mxu0 0.0
    %4507 = vmatprep.subr.mxu0 0.0
    %4508 = vmatpush1.msra.mxu0 0.0
    %4509 = vmatprep.subr.mxu0 0.0
    %4510 = vmatpush1.msra.mxu0 0.0
    %4511 = vmatprep.subr.mxu0 0.0
    %4512 = vmatpush1.msra.mxu0 0.0
    %4513 = vmatprep.subr.mxu0 0.0
    %4514 = vmatpush1.msra.mxu0 0.0
    %4515 = vmatprep.subr.mxu0 0.0
    %4516 = vmatpush1.msra.mxu0 0.0
    %4517 = vmatprep.mubr.f32.mxu0 0.0
    %4518 = vmatmul.mubr.f32.gmra.mrb[0].mxu0 %v4451
    %v4519 = vpop.f32.mrb[0].mxu0
    %v4520 = vadd.f32 0.0, %v4519
    %v4521 = vpop.f32.mrb[0].mxu0
    %4522 = vdwg.mxu0
    %4524 = vrot.lane.b32.xlu0 %v4520, 8
    %v4525 = vpop.permute.xlu0 %4524
    %4527 = vst.msk [vmem:[#allocation4] sm:$0xff] %vm1878, %v4525
    %4528 = vrot.lane.b32.xlu0 %v4187, 112
    %v4529 = vpop.permute.xlu0 %4528
    %4530 = vrot.lane.b32.xlu0 %v4178, 80
    %v4531 = vpop.permute.xlu0 %4530
    %v4532 = vsel %vm1545, %v4529, 0
    %v4534 = vsel %vm1545, %v4531, 0
    %4536 = vmatprep.subr.mxu0 0.0
    %4537 = vmatpush1.xpose.msra.mxu0 %v4534
    %4538 = vmatprep.subr.mxu0 0.0
    %4539 = vmatpush1.xpose.msra.mxu0 0.0
    %4540 = vmatprep.subr.mxu0 0.0
    %4541 = vmatpush1.xpose.msra.mxu0 0.0
    %4542 = vmatprep.subr.mxu0 0.0
    %4543 = vmatpush1.xpose.msra.mxu0 0.0
    %4544 = vmatprep.subr.mxu0 0.0
    %4545 = vmatpush1.xpose.msra.mxu0 0.0
    %4546 = vmatprep.subr.mxu0 0.0
    %4547 = vmatpush1.xpose.msra.mxu0 0.0
    %4548 = vmatprep.subr.mxu0 0.0
    %4549 = vmatpush1.xpose.msra.mxu0 0.0
    %4550 = vmatprep.subr.mxu0 0.0
    %4551 = vmatpush1.xpose.msra.mxu0 0.0
    %4552 = vmatprep.subr.mxu0 0.0
    %4553 = vmatpush1.xpose.msra.mxu0 0.0
    %4554 = vmatprep.subr.mxu0 0.0
    %4555 = vmatpush1.xpose.msra.mxu0 0.0
    %4556 = vmatprep.subr.mxu0 0.0
    %4557 = vmatpush1.xpose.msra.mxu0 0.0
    %4558 = vmatprep.subr.mxu0 0.0
    %4559 = vmatpush1.xpose.msra.mxu0 0.0
    %4560 = vmatprep.subr.mxu0 0.0
    %4561 = vmatpush1.xpose.msra.mxu0 0.0
    %4562 = vmatprep.subr.mxu0 0.0
    %4563 = vmatpush1.xpose.msra.mxu0 0.0
    %4564 = vmatprep.subr.mxu0 0.0
    %4565 = vmatpush1.xpose.msra.mxu0 0.0
    %4566 = vmatprep.subr.mxu0 0.0
    %4567 = vmatpush1.xpose.msra.mxu0 0.0
    %4568 = vmatprep.subr.mxu0 0.0
    %4569 = vmatpush1.xpose.msra.mxu0 0.0
    %4570 = vmatprep.subr.mxu0 0.0
    %4571 = vmatpush1.xpose.msra.mxu0 0.0
    %4572 = vmatprep.subr.mxu0 0.0
    %4573 = vmatpush1.xpose.msra.mxu0 0.0
    %4574 = vmatprep.subr.mxu0 0.0
    %4575 = vmatpush1.xpose.msra.mxu0 0.0
    %4576 = vmatprep.subr.mxu0 0.0
    %4577 = vmatpush1.xpose.msra.mxu0 0.0
    %4578 = vmatprep.subr.mxu0 0.0
    %4579 = vmatpush1.xpose.msra.mxu0 0.0
    %4580 = vmatprep.subr.mxu0 0.0
    %4581 = vmatpush1.xpose.msra.mxu0 0.0
    %4582 = vmatprep.subr.mxu0 0.0
    %4583 = vmatpush1.xpose.msra.mxu0 0.0
    %4584 = vmatprep.subr.mxu0 0.0
    %4585 = vmatpush1.xpose.msra.mxu0 0.0
    %4586 = vmatprep.subr.mxu0 0.0
    %4587 = vmatpush1.xpose.msra.mxu0 0.0
    %4588 = vmatprep.subr.mxu0 0.0
    %4589 = vmatpush1.xpose.msra.mxu0 0.0
    %4590 = vmatprep.subr.mxu0 0.0
    %4591 = vmatpush1.xpose.msra.mxu0 0.0
    %4592 = vmatprep.subr.mxu0 0.0
    %4593 = vmatpush1.xpose.msra.mxu0 0.0
    %4594 = vmatprep.subr.mxu0 0.0
    %4595 = vmatpush1.xpose.msra.mxu0 0.0
    %4596 = vmatprep.subr.mxu0 0.0
    %4597 = vmatpush1.xpose.msra.mxu0 0.0
    %4598 = vmatprep.subr.mxu0 0.0
    %4599 = vmatpush1.xpose.msra.mxu0 0.0
    %4600 = vmatprep.mubr.f32.mxu0 0.0
    %4601 = vmatmul.mubr.f32.gmra.mrb[0].mxu0 %v4532
    %v4602 = vpop.f32.mrb[0].mxu0
    %v4603 = vadd.f32 %v4191, %v4602
    %v4604 = vpop.f32.mrb[0].mxu0
    %4605 = vdwg.mxu0
    %v4606 = vsel %vm1545, %v4603, -inf
    %4607 = vmax.xlane.f32.xlu0 %v4606
    %v4608 = vpop.xlane.xlu0 %4607
    %v4609 = vsub.f32 %v4603, %v4608
    %v4610 = vmul.f32 %v4609, 1.442695
    %v4611 = vpow.pop %v4610
    %v4612 = vsel %vm1545, %v4611, 0.0
    %4613 = vadd.xlane.f32.xlu0 %v4612
    %v4614 = vpop.xlane.xlu0 %4613
    %v4615 = vrcp.pop %v4614
    %v4616 = vmul.f32 %v4611, %v4615
    %4617 = vrot.lane.b32.xlu0 %v4178, 48
    %v4618 = vpop.permute.xlu0 %4617
    %v4621 = vsel %vm1545, %v4616, 0
    %4623 = vmatprep.subr.mxu0 0.0
    %4624 = vmatpush1.msra.mxu0 %v4618
    %4625 = vmatprep.subr.mxu0 0.0
    %4626 = vmatpush1.msra.mxu0 0.0
    %4627 = vmatprep.subr.mxu0 0.0
    %4628 = vmatpush1.msra.mxu0 0.0
    %4629 = vmatprep.subr.mxu0 0.0
    %4630 = vmatpush1.msra.mxu0 0.0
    %4631 = vmatprep.subr.mxu0 0.0
    %4632 = vmatpush1.msra.mxu0 0.0
    %4633 = vmatprep.subr.mxu0 0.0
    %4634 = vmatpush1.msra.mxu0 0.0
    %4635 = vmatprep.subr.mxu0 0.0
    %4636 = vmatpush1.msra.mxu0 0.0
    %4637 = vmatprep.subr.mxu0 0.0
    %4638 = vmatpush1.msra.mxu0 0.0
    %4639 = vmatprep.subr.mxu0 0.0
    %4640 = vmatpush1.msra.mxu0 0.0
    %4641 = vmatprep.subr.mxu0 0.0
    %4642 = vmatpush1.msra.mxu0 0.0
    %4643 = vmatprep.subr.mxu0 0.0
    %4644 = vmatpush1.msra.mxu0 0.0
    %4645 = vmatprep.subr.mxu0 0.0
    %4646 = vmatpush1.msra.mxu0 0.0
    %4647 = vmatprep.subr.mxu0 0.0
    %4648 = vmatpush1.msra.mxu0 0.0
    %4649 = vmatprep.subr.mxu0 0.0
    %4650 = vmatpush1.msra.mxu0 0.0
    %4651 = vmatprep.subr.mxu0 0.0
    %4652 = vmatpush1.msra.mxu0 0.0
    %4653 = vmatprep.subr.mxu0 0.0
    %4654 = vmatpush1.msra.mxu0 0.0
    %4655 = vmatprep.subr.mxu0 0.0
    %4656 = vmatpush1.msra.mxu0 0.0
    %4657 = vmatprep.subr.mxu0 0.0
    %4658 = vmatpush1.msra.mxu0 0.0
    %4659 = vmatprep.subr.mxu0 0.0
    %4660 = vmatpush1.msra.mxu0 0.0
    %4661 = vmatprep.subr.mxu0 0.0
    %4662 = vmatpush1.msra.mxu0 0.0
    %4663 = vmatprep.subr.mxu0 0.0
    %4664 = vmatpush1.msra.mxu0 0.0
    %4665 = vmatprep.subr.mxu0 0.0
    %4666 = vmatpush1.msra.mxu0 0.0
    %4667 = vmatprep.subr.mxu0 0.0
    %4668 = vmatpush1.msra.mxu0 0.0
    %4669 = vmatprep.subr.mxu0 0.0
    %4670 = vmatpush1.msra.mxu0 0.0
    %4671 = vmatprep.subr.mxu0 0.0
    %4672 = vmatpush1.msra.mxu0 0.0
    %4673 = vmatprep.subr.mxu0 0.0
    %4674 = vmatpush1.msra.mxu0 0.0
    %4675 = vmatprep.subr.mxu0 0.0
    %4676 = vmatpush1.msra.mxu0 0.0
    %4677 = vmatprep.subr.mxu0 0.0
    %4678 = vmatpush1.msra.mxu0 0.0
    %4679 = vmatprep.subr.mxu0 0.0
    %4680 = vmatpush1.msra.mxu0 0.0
    %4681 = vmatprep.subr.mxu0 0.0
    %4682 = vmatpush1.msra.mxu0 0.0
    %4683 = vmatprep.subr.mxu0 0.0
    %4684 = vmatpush1.msra.mxu0 0.0
    %4685 = vmatprep.subr.mxu0 0.0
    %4686 = vmatpush1.msra.mxu0 0.0
    %4687 = vmatprep.mubr.f32.mxu0 0.0
    %4688 = vmatmul.mubr.f32.gmra.mrb[0].mxu0 %v4621
    %v4689 = vpop.f32.mrb[0].mxu0
    %v4690 = vadd.f32 0.0, %v4689
    %v4691 = vpop.f32.mrb[0].mxu0
    %4692 = vdwg.mxu0
    %4694 = vrot.lane.b32.xlu0 %v4690, 16
    %v4695 = vpop.permute.xlu0 %4694
    %4697 = vst.msk [vmem:[#allocation4] sm:$0xff] %vm2049, %v4695
    %4698 = vrot.lane.b32.xlu0 %v4187, 104
    %v4699 = vpop.permute.xlu0 %4698
    %4700 = vrot.lane.b32.xlu0 %v4178, 72
    %v4701 = vpop.permute.xlu0 %4700
    %v4702 = vsel %vm1545, %v4699, 0
    %v4704 = vsel %vm1545, %v4701, 0
    %4706 = vmatprep.subr.mxu0 0.0
    %4707 = vmatpush1.xpose.msra.mxu0 %v4704
    %4708 = vmatprep.subr.mxu0 0.0
    %4709 = vmatpush1.xpose.msra.mxu0 0.0
    %4710 = vmatprep.subr.mxu0 0.0
    %4711 = vmatpush1.xpose.msra.mxu0 0.0
    %4712 = vmatprep.subr.mxu0 0.0
    %4713 = vmatpush1.xpose.msra.mxu0 0.0
    %4714 = vmatprep.subr.mxu0 0.0
    %4715 = vmatpush1.xpose.msra.mxu0 0.0
    %4716 = vmatprep.subr.mxu0 0.0
    %4717 = vmatpush1.xpose.msra.mxu0 0.0
    %4718 = vmatprep.subr.mxu0 0.0
    %4719 = vmatpush1.xpose.msra.mxu0 0.0
    %4720 = vmatprep.subr.mxu0 0.0
    %4721 = vmatpush1.xpose.msra.mxu0 0.0
    %4722 = vmatprep.subr.mxu0 0.0
    %4723 = vmatpush1.xpose.msra.mxu0 0.0
    %4724 = vmatprep.subr.mxu0 0.0
    %4725 = vmatpush1.xpose.msra.mxu0 0.0
    %4726 = vmatprep.subr.mxu0 0.0
    %4727 = vmatpush1.xpose.msra.mxu0 0.0
    %4728 = vmatprep.subr.mxu0 0.0
    %4729 = vmatpush1.xpose.msra.mxu0 0.0
    %4730 = vmatprep.subr.mxu0 0.0
    %4731 = vmatpush1.xpose.msra.mxu0 0.0
    %4732 = vmatprep.subr.mxu0 0.0
    %4733 = vmatpush1.xpose.msra.mxu0 0.0
    %4734 = vmatprep.subr.mxu0 0.0
    %4735 = vmatpush1.xpose.msra.mxu0 0.0
    %4736 = vmatprep.subr.mxu0 0.0
    %4737 = vmatpush1.xpose.msra.mxu0 0.0
    %4738 = vmatprep.subr.mxu0 0.0
    %4739 = vmatpush1.xpose.msra.mxu0 0.0
    %4740 = vmatprep.subr.mxu0 0.0
    %4741 = vmatpush1.xpose.msra.mxu0 0.0
    %4742 = vmatprep.subr.mxu0 0.0
    %4743 = vmatpush1.xpose.msra.mxu0 0.0
    %4744 = vmatprep.subr.mxu0 0.0
    %4745 = vmatpush1.xpose.msra.mxu0 0.0
    %4746 = vmatprep.subr.mxu0 0.0
    %4747 = vmatpush1.xpose.msra.mxu0 0.0
    %4748 = vmatprep.subr.mxu0 0.0
    %4749 = vmatpush1.xpose.msra.mxu0 0.0
    %4750 = vmatprep.subr.mxu0 0.0
    %4751 = vmatpush1.xpose.msra.mxu0 0.0
    %4752 = vmatprep.subr.mxu0 0.0
    %4753 = vmatpush1.xpose.msra.mxu0 0.0
    %4754 = vmatprep.subr.mxu0 0.0
    %4755 = vmatpush1.xpose.msra.mxu0 0.0
    %4756 = vmatprep.subr.mxu0 0.0
    %4757 = vmatpush1.xpose.msra.mxu0 0.0
    %4758 = vmatprep.subr.mxu0 0.0
    %4759 = vmatpush1.xpose.msra.mxu0 0.0
    %4760 = vmatprep.subr.mxu0 0.0
    %4761 = vmatpush1.xpose.msra.mxu0 0.0
    %4762 = vmatprep.subr.mxu0 0.0
    %4763 = vmatpush1.xpose.msra.mxu0 0.0
    %4764 = vmatprep.subr.mxu0 0.0
    %4765 = vmatpush1.xpose.msra.mxu0 0.0
    %4766 = vmatprep.subr.mxu0 0.0
    %4767 = vmatpush1.xpose.msra.mxu0 0.0
    %4768 = vmatprep.subr.mxu0 0.0
    %4769 = vmatpush1.xpose.msra.mxu0 0.0
    %4770 = vmatprep.mubr.f32.mxu0 0.0
    %4771 = vmatmul.mubr.f32.gmra.mrb[0].mxu0 %v4702
    %v4772 = vpop.f32.mrb[0].mxu0
    %v4773 = vadd.f32 %v4191, %v4772
    %v4774 = vpop.f32.mrb[0].mxu0
    %4775 = vdwg.mxu0
    %v4776 = vsel %vm1545, %v4773, -inf
    %4777 = vmax.xlane.f32.xlu0 %v4776
    %v4778 = vpop.xlane.xlu0 %4777
    %v4779 = vsub.f32 %v4773, %v4778
    %v4780 = vmul.f32 %v4779, 1.442695
    %v4781 = vpow.pop %v4780
    %v4782 = vsel %vm1545, %v4781, 0.0
    %4783 = vadd.xlane.f32.xlu0 %v4782
    %v4784 = vpop.xlane.xlu0 %4783
    %v4785 = vrcp.pop %v4784
    %v4786 = vmul.f32 %v4781, %v4785
    %4787 = vrot.lane.b32.xlu0 %v4178, 40
    %v4788 = vpop.permute.xlu0 %4787
    %v4791 = vsel %vm1545, %v4786, 0
    %4793 = vmatprep.subr.mxu0 0.0
    %4794 = vmatpush1.msra.mxu0 %v4788
    %4795 = vmatprep.subr.mxu0 0.0
    %4796 = vmatpush1.msra.mxu0 0.0
    %4797 = vmatprep.subr.mxu0 0.0
    %4798 = vmatpush1.msra.mxu0 0.0
    %4799 = vmatprep.subr.mxu0 0.0
    %4800 = vmatpush1.msra.mxu0 0.0
    %4801 = vmatprep.subr.mxu0 0.0
    %4802 = vmatpush1.msra.mxu0 0.0
    %4803 = vmatprep.subr.mxu0 0.0
    %4804 = vmatpush1.msra.mxu0 0.0
    %4805 = vmatprep.subr.mxu0 0.0
    %4806 = vmatpush1.msra.mxu0 0.0
    %4807 = vmatprep.subr.mxu0 0.0
    %4808 = vmatpush1.msra.mxu0 0.0
    %4809 = vmatprep.subr.mxu0 0.0
    %4810 = vmatpush1.msra.mxu0 0.0
    %4811 = vmatprep.subr.mxu0 0.0
    %4812 = vmatpush1.msra.mxu0 0.0
    %4813 = vmatprep.subr.mxu0 0.0
    %4814 = vmatpush1.msra.mxu0 0.0
    %4815 = vmatprep.subr.mxu0 0.0
    %4816 = vmatpush1.msra.mxu0 0.0
    %4817 = vmatprep.subr.mxu0 0.0
    %4818 = vmatpush1.msra.mxu0 0.0
    %4819 = vmatprep.subr.mxu0 0.0
    %4820 = vmatpush1.msra.mxu0 0.0
    %4821 = vmatprep.subr.mxu0 0.0
    %4822 = vmatpush1.msra.mxu0 0.0
    %4823 = vmatprep.subr.mxu0 0.0
    %4824 = vmatpush1.msra.mxu0 0.0
    %4825 = vmatprep.subr.mxu0 0.0
    %4826 = vmatpush1.msra.mxu0 0.0
    %4827 = vmatprep.subr.mxu0 0.0
    %4828 = vmatpush1.msra.mxu0 0.0
    %4829 = vmatprep.subr.mxu0 0.0
    %4830 = vmatpush1.msra.mxu0 0.0
    %4831 = vmatprep.subr.mxu0 0.0
    %4832 = vmatpush1.msra.mxu0 0.0
    %4833 = vmatprep.subr.mxu0 0.0
    %4834 = vmatpush1.msra.mxu0 0.0
    %4835 = vmatprep.subr.mxu0 0.0
    %4836 = vmatpush1.msra.mxu0 0.0
    %4837 = vmatprep.subr.mxu0 0.0
    %4838 = vmatpush1.msra.mxu0 0.0
    %4839 = vmatprep.subr.mxu0 0.0
    %4840 = vmatpush1.msra.mxu0 0.0
    %4841 = vmatprep.subr.mxu0 0.0
    %4842 = vmatpush1.msra.mxu0 0.0
    %4843 = vmatprep.subr.mxu0 0.0
    %4844 = vmatpush1.msra.mxu0 0.0
    %4845 = vmatprep.subr.mxu0 0.0
    %4846 = vmatpush1.msra.mxu0 0.0
    %4847 = vmatprep.subr.mxu0 0.0
    %4848 = vmatpush1.msra.mxu0 0.0
    %4849 = vmatprep.subr.mxu0 0.0
    %4850 = vmatpush1.msra.mxu0 0.0
    %4851 = vmatprep.subr.mxu0 0.0
    %4852 = vmatpush1.msra.mxu0 0.0
    %4853 = vmatprep.subr.mxu0 0.0
    %4854 = vmatpush1.msra.mxu0 0.0
    %4855 = vmatprep.subr.mxu0 0.0
    %4856 = vmatpush1.msra.mxu0 0.0
    %4857 = vmatprep.mubr.f32.mxu0 0.0
    %4858 = vmatmul.mubr.f32.gmra.mrb[0].mxu0 %v4791
    %v4859 = vpop.f32.mrb[0].mxu0
    %v4860 = vadd.f32 0.0, %v4859
    %v4861 = vpop.f32.mrb[0].mxu0
    %4862 = vdwg.mxu0
    %4864 = vrot.lane.b32.xlu0 %v4860, 24
    %v4865 = vpop.permute.xlu0 %4864
    %4867 = vst.msk [vmem:[#allocation4] sm:$0xff] %vm2220, %v4865
    %v4868 = vld [vmem:[%s15 + $0x1] sm:$0x1]
    %v4869 = vmul.f32 %v4183, 0.35355338
    %v4870 = vlaneseq
    %v4871 = vshrl.u32 %v4870, 7
    %v4872 = vsub.s32 0, %v4871
    %v4873 = vrot.slane %v4868, %v4872
    %4875 = vrot.lane.b32.xlu0 %v4183, 96
    %v4876 = vpop.permute.xlu0 %4875
    %v4878 = vsel %vm1545, %v4869, 0
    %v4880 = vsel %vm1545, %v4876, 0
    %4882 = vmatprep.subr.mxu0 0.0
    %4883 = vmatpush1.xpose.msra.mxu0 %v4880
    %4884 = vmatprep.subr.mxu0 0.0
    %4885 = vmatpush1.xpose.msra.mxu0 0.0
    %4886 = vmatprep.subr.mxu0 0.0
    %4887 = vmatpush1.xpose.msra.mxu0 0.0
    %4888 = vmatprep.subr.mxu0 0.0
    %4889 = vmatpush1.xpose.msra.mxu0 0.0
    %4890 = vmatprep.subr.mxu0 0.0
    %4891 = vmatpush1.xpose.msra.mxu0 0.0
    %4892 = vmatprep.subr.mxu0 0.0
    %4893 = vmatpush1.xpose.msra.mxu0 0.0
    %4894 = vmatprep.subr.mxu0 0.0
    %4895 = vmatpush1.xpose.msra.mxu0 0.0
    %4896 = vmatprep.subr.mxu0 0.0
    %4897 = vmatpush1.xpose.msra.mxu0 0.0
    %4898 = vmatprep.subr.mxu0 0.0
    %4899 = vmatpush1.xpose.msra.mxu0 0.0
    %4900 = vmatprep.subr.mxu0 0.0
    %4901 = vmatpush1.xpose.msra.mxu0 0.0
    %4902 = vmatprep.subr.mxu0 0.0
    %4903 = vmatpush1.xpose.msra.mxu0 0.0
    %4904 = vmatprep.subr.mxu0 0.0
    %4905 = vmatpush1.xpose.msra.mxu0 0.0
    %4906 = vmatprep.subr.mxu0 0.0
    %4907 = vmatpush1.xpose.msra.mxu0 0.0
    %4908 = vmatprep.subr.mxu0 0.0
    %4909 = vmatpush1.xpose.msra.mxu0 0.0
    %4910 = vmatprep.subr.mxu0 0.0
    %4911 = vmatpush1.xpose.msra.mxu0 0.0
    %4912 = vmatprep.subr.mxu0 0.0
    %4913 = vmatpush1.xpose.msra.mxu0 0.0
    %4914 = vmatprep.subr.mxu0 0.0
    %4915 = vmatpush1.xpose.msra.mxu0 0.0
    %4916 = vmatprep.subr.mxu0 0.0
    %4917 = vmatpush1.xpose.msra.mxu0 0.0
    %4918 = vmatprep.subr.mxu0 0.0
    %4919 = vmatpush1.xpose.msra.mxu0 0.0
    %4920 = vmatprep.subr.mxu0 0.0
    %4921 = vmatpush1.xpose.msra.mxu0 0.0
    %4922 = vmatprep.subr.mxu0 0.0
    %4923 = vmatpush1.xpose.msra.mxu0 0.0
    %4924 = vmatprep.subr.mxu0 0.0
    %4925 = vmatpush1.xpose.msra.mxu0 0.0
    %4926 = vmatprep.subr.mxu0 0.0
    %4927 = vmatpush1.xpose.msra.mxu0 0.0
    %4928 = vmatprep.subr.mxu0 0.0
    %4929 = vmatpush1.xpose.msra.mxu0 0.0
    %4930 = vmatprep.subr.mxu0 0.0
    %4931 = vmatpush1.xpose.msra.mxu0 0.0
    %4932 = vmatprep.subr.mxu0 0.0
    %4933 = vmatpush1.xpose.msra.mxu0 0.0
    %4934 = vmatprep.subr.mxu0 0.0
    %4935 = vmatpush1.xpose.msra.mxu0 0.0
    %4936 = vmatprep.subr.mxu0 0.0
    %4937 = vmatpush1.xpose.msra.mxu0 0.0
    %4938 = vmatprep.subr.mxu0 0.0
    %4939 = vmatpush1.xpose.msra.mxu0 0.0
    %4940 = vmatprep.subr.mxu0 0.0
    %4941 = vmatpush1.xpose.msra.mxu0 0.0
    %4942 = vmatprep.subr.mxu0 0.0
    %4943 = vmatpush1.xpose.msra.mxu0 0.0
    %4944 = vmatprep.subr.mxu0 0.0
    %4945 = vmatpush1.xpose.msra.mxu0 0.0
    %4946 = vmatprep.mubr.f32.mxu0 0.0
    %4947 = vmatmul.mubr.f32.gmra.mrb[0].mxu0 %v4878
    %v4948 = vpop.f32.mrb[0].mxu0
    %v4949 = vadd.f32 %v4873, %v4948
    %v4950 = vpop.f32.mrb[0].mxu0
    %4951 = vdwg.mxu0
    %v4952 = vsel %vm1545, %v4949, -inf
    %4953 = vmax.xlane.f32.xlu0 %v4952
    %v4954 = vpop.xlane.xlu0 %4953
    %v4955 = vsub.f32 %v4949, %v4954
    %v4956 = vmul.f32 %v4955, 1.442695
    %v4957 = vpow.pop %v4956
    %v4958 = vsel %vm1545, %v4957, 0.0
    %4959 = vadd.xlane.f32.xlu0 %v4958
    %v4960 = vpop.xlane.xlu0 %4959
    %v4961 = vrcp.pop %v4960
    %v4962 = vmul.f32 %v4957, %v4961
    %4963 = vrot.lane.b32.xlu0 %v4183, 64
    %v4964 = vpop.permute.xlu0 %4963
    %v4967 = vsel %vm1545, %v4962, 0
    %4969 = vmatprep.subr.mxu0 0.0
    %4970 = vmatpush1.msra.mxu0 %v4964
    %4971 = vmatprep.subr.mxu0 0.0
    %4972 = vmatpush1.msra.mxu0 0.0
    %4973 = vmatprep.subr.mxu0 0.0
    %4974 = vmatpush1.msra.mxu0 0.0
    %4975 = vmatprep.subr.mxu0 0.0
    %4976 = vmatpush1.msra.mxu0 0.0
    %4977 = vmatprep.subr.mxu0 0.0
    %4978 = vmatpush1.msra.mxu0 0.0
    %4979 = vmatprep.subr.mxu0 0.0
    %4980 = vmatpush1.msra.mxu0 0.0
    %4981 = vmatprep.subr.mxu0 0.0
    %4982 = vmatpush1.msra.mxu0 0.0
    %4983 = vmatprep.subr.mxu0 0.0
    %4984 = vmatpush1.msra.mxu0 0.0
    %4985 = vmatprep.subr.mxu0 0.0
    %4986 = vmatpush1.msra.mxu0 0.0
    %4987 = vmatprep.subr.mxu0 0.0
    %4988 = vmatpush1.msra.mxu0 0.0
    %4989 = vmatprep.subr.mxu0 0.0
    %4990 = vmatpush1.msra.mxu0 0.0
    %4991 = vmatprep.subr.mxu0 0.0
    %4992 = vmatpush1.msra.mxu0 0.0
    %4993 = vmatprep.subr.mxu0 0.0
    %4994 = vmatpush1.msra.mxu0 0.0
    %4995 = vmatprep.subr.mxu0 0.0
    %4996 = vmatpush1.msra.mxu0 0.0
    %4997 = vmatprep.subr.mxu0 0.0
    %4998 = vmatpush1.msra.mxu0 0.0
    %4999 = vmatprep.subr.mxu0 0.0
    %5000 = vmatpush1.msra.mxu0 0.0
    %5001 = vmatprep.subr.mxu0 0.0
    %5002 = vmatpush1.msra.mxu0 0.0
    %5003 = vmatprep.subr.mxu0 0.0
    %5004 = vmatpush1.msra.mxu0 0.0
    %5005 = vmatprep.subr.mxu0 0.0
    %5006 = vmatpush1.msra.mxu0 0.0
    %5007 = vmatprep.subr.mxu0 0.0
    %5008 = vmatpush1.msra.mxu0 0.0
    %5009 = vmatprep.subr.mxu0 0.0
    %5010 = vmatpush1.msra.mxu0 0.0
    %5011 = vmatprep.subr.mxu0 0.0
    %5012 = vmatpush1.msra.mxu0 0.0
    %5013 = vmatprep.subr.mxu0 0.0
    %5014 = vmatpush1.msra.mxu0 0.0
    %5015 = vmatprep.subr.mxu0 0.0
    %5016 = vmatpush1.msra.mxu0 0.0
    %5017 = vmatprep.subr.mxu0 0.0
    %5018 = vmatpush1.msra.mxu0 0.0
    %5019 = vmatprep.subr.mxu0 0.0
    %5020 = vmatpush1.msra.mxu0 0.0
    %5021 = vmatprep.subr.mxu0 0.0
    %5022 = vmatpush1.msra.mxu0 0.0
    %5023 = vmatprep.subr.mxu0 0.0
    %5024 = vmatpush1.msra.mxu0 0.0
    %5025 = vmatprep.subr.mxu0 0.0
    %5026 = vmatpush1.msra.mxu0 0.0
    %5027 = vmatprep.subr.mxu0 0.0
    %5028 = vmatpush1.msra.mxu0 0.0
    %5029 = vmatprep.subr.mxu0 0.0
    %5030 = vmatpush1.msra.mxu0 0.0
    %5031 = vmatprep.subr.mxu0 0.0
    %5032 = vmatpush1.msra.mxu0 0.0
    %5033 = vmatprep.mubr.f32.mxu0 0.0
    %5034 = vmatmul.mubr.f32.gmra.mrb[0].mxu0 %v4967
    %v5035 = vpop.f32.mrb[0].mxu0
    %v5036 = vadd.f32 0.0, %v5035
    %v5037 = vpop.f32.mrb[0].mxu0
    %5038 = vdwg.mxu0
    %5039 = vst.msk [vmem:[#allocation4 + $0x8] sm:$0xff] %vm1545, %v5036
    %5040 = vrot.lane.b32.xlu0 %v4869, 120
    %v5041 = vpop.permute.xlu0 %5040
    %5042 = vrot.lane.b32.xlu0 %v4183, 88
    %v5043 = vpop.permute.xlu0 %5042
    %v5044 = vsel %vm1545, %v5041, 0
    %v5046 = vsel %vm1545, %v5043, 0
    %5048 = vmatprep.subr.mxu0 0.0
    %5049 = vmatpush1.xpose.msra.mxu0 %v5046
    %5050 = vmatprep.subr.mxu0 0.0
    %5051 = vmatpush1.xpose.msra.mxu0 0.0
    %5052 = vmatprep.subr.mxu0 0.0
    %5053 = vmatpush1.xpose.msra.mxu0 0.0
    %5054 = vmatprep.subr.mxu0 0.0
    %5055 = vmatpush1.xpose.msra.mxu0 0.0
    %5056 = vmatprep.subr.mxu0 0.0
    %5057 = vmatpush1.xpose.msra.mxu0 0.0
    %5058 = vmatprep.subr.mxu0 0.0
    %5059 = vmatpush1.xpose.msra.mxu0 0.0
    %5060 = vmatprep.subr.mxu0 0.0
    %5061 = vmatpush1.xpose.msra.mxu0 0.0
    %5062 = vmatprep.subr.mxu0 0.0
    %5063 = vmatpush1.xpose.msra.mxu0 0.0
    %5064 = vmatprep.subr.mxu0 0.0
    %5065 = vmatpush1.xpose.msra.mxu0 0.0
    %5066 = vmatprep.subr.mxu0 0.0
    %5067 = vmatpush1.xpose.msra.mxu0 0.0
    %5068 = vmatprep.subr.mxu0 0.0
    %5069 = vmatpush1.xpose.msra.mxu0 0.0
    %5070 = vmatprep.subr.mxu0 0.0
    %5071 = vmatpush1.xpose.msra.mxu0 0.0
    %5072 = vmatprep.subr.mxu0 0.0
    %5073 = vmatpush1.xpose.msra.mxu0 0.0
    %5074 = vmatprep.subr.mxu0 0.0
    %5075 = vmatpush1.xpose.msra.mxu0 0.0
    %5076 = vmatprep.subr.mxu0 0.0
    %5077 = vmatpush1.xpose.msra.mxu0 0.0
    %5078 = vmatprep.subr.mxu0 0.0
    %5079 = vmatpush1.xpose.msra.mxu0 0.0
    %5080 = vmatprep.subr.mxu0 0.0
    %5081 = vmatpush1.xpose.msra.mxu0 0.0
    %5082 = vmatprep.subr.mxu0 0.0
    %5083 = vmatpush1.xpose.msra.mxu0 0.0
    %5084 = vmatprep.subr.mxu0 0.0
    %5085 = vmatpush1.xpose.msra.mxu0 0.0
    %5086 = vmatprep.subr.mxu0 0.0
    %5087 = vmatpush1.xpose.msra.mxu0 0.0
    %5088 = vmatprep.subr.mxu0 0.0
    %5089 = vmatpush1.xpose.msra.mxu0 0.0
    %5090 = vmatprep.subr.mxu0 0.0
    %5091 = vmatpush1.xpose.msra.mxu0 0.0
    %5092 = vmatprep.subr.mxu0 0.0
    %5093 = vmatpush1.xpose.msra.mxu0 0.0
    %5094 = vmatprep.subr.mxu0 0.0
    %5095 = vmatpush1.xpose.msra.mxu0 0.0
    %5096 = vmatprep.subr.mxu0 0.0
    %5097 = vmatpush1.xpose.msra.mxu0 0.0
    %5098 = vmatprep.subr.mxu0 0.0
    %5099 = vmatpush1.xpose.msra.mxu0 0.0
    %5100 = vmatprep.subr.mxu0 0.0
    %5101 = vmatpush1.xpose.msra.mxu0 0.0
    %5102 = vmatprep.subr.mxu0 0.0
    %5103 = vmatpush1.xpose.msra.mxu0 0.0
    %5104 = vmatprep.subr.mxu0 0.0
    %5105 = vmatpush1.xpose.msra.mxu0 0.0
    %5106 = vmatprep.subr.mxu0 0.0
    %5107 = vmatpush1.xpose.msra.mxu0 0.0
    %5108 = vmatprep.subr.mxu0 0.0
    %5109 = vmatpush1.xpose.msra.mxu0 0.0
    %5110 = vmatprep.subr.mxu0 0.0
    %5111 = vmatpush1.xpose.msra.mxu0 0.0
    %5112 = vmatprep.mubr.f32.mxu0 0.0
    %5113 = vmatmul.mubr.f32.gmra.mrb[0].mxu0 %v5044
    %v5114 = vpop.f32.mrb[0].mxu0
    %v5115 = vadd.f32 %v4873, %v5114
    %v5116 = vpop.f32.mrb[0].mxu0
    %5117 = vdwg.mxu0
    %v5118 = vsel %vm1545, %v5115, -inf
    %5119 = vmax.xlane.f32.xlu0 %v5118
    %v5120 = vpop.xlane.xlu0 %5119
    %v5121 = vsub.f32 %v5115, %v5120
    %v5122 = vmul.f32 %v5121, 1.442695
    %v5123 = vpow.pop %v5122
    %v5124 = vsel %vm1545, %v5123, 0.0
    %5125 = vadd.xlane.f32.xlu0 %v5124
    %v5126 = vpop.xlane.xlu0 %5125
    %v5127 = vrcp.pop %v5126
    %v5128 = vmul.f32 %v5123, %v5127
    %5129 = vrot.lane.b32.xlu0 %v4183, 56
    %v5130 = vpop.permute.xlu0 %5129
    %v5133 = vsel %vm1545, %v5128, 0
    %5135 = vmatprep.subr.mxu0 0.0
    %5136 = vmatpush1.msra.mxu0 %v5130
    %5137 = vmatprep.subr.mxu0 0.0
    %5138 = vmatpush1.msra.mxu0 0.0
    %5139 = vmatprep.subr.mxu0 0.0
    %5140 = vmatpush1.msra.mxu0 0.0
    %5141 = vmatprep.subr.mxu0 0.0
    %5142 = vmatpush1.msra.mxu0 0.0
    %5143 = vmatprep.subr.mxu0 0.0
    %5144 = vmatpush1.msra.mxu0 0.0
    %5145 = vmatprep.subr.mxu0 0.0
    %5146 = vmatpush1.msra.mxu0 0.0
    %5147 = vmatprep.subr.mxu0 0.0
    %5148 = vmatpush1.msra.mxu0 0.0
    %5149 = vmatprep.subr.mxu0 0.0
    %5150 = vmatpush1.msra.mxu0 0.0
    %5151 = vmatprep.subr.mxu0 0.0
    %5152 = vmatpush1.msra.mxu0 0.0
    %5153 = vmatprep.subr.mxu0 0.0
    %5154 = vmatpush1.msra.mxu0 0.0
    %5155 = vmatprep.subr.mxu0 0.0
    %5156 = vmatpush1.msra.mxu0 0.0
    %5157 = vmatprep.subr.mxu0 0.0
    %5158 = vmatpush1.msra.mxu0 0.0
    %5159 = vmatprep.subr.mxu0 0.0
    %5160 = vmatpush1.msra.mxu0 0.0
    %5161 = vmatprep.subr.mxu0 0.0
    %5162 = vmatpush1.msra.mxu0 0.0
    %5163 = vmatprep.subr.mxu0 0.0
    %5164 = vmatpush1.msra.mxu0 0.0
    %5165 = vmatprep.subr.mxu0 0.0
    %5166 = vmatpush1.msra.mxu0 0.0
    %5167 = vmatprep.subr.mxu0 0.0
    %5168 = vmatpush1.msra.mxu0 0.0
    %5169 = vmatprep.subr.mxu0 0.0
    %5170 = vmatpush1.msra.mxu0 0.0
    %5171 = vmatprep.subr.mxu0 0.0
    %5172 = vmatpush1.msra.mxu0 0.0
    %5173 = vmatprep.subr.mxu0 0.0
    %5174 = vmatpush1.msra.mxu0 0.0
    %5175 = vmatprep.subr.mxu0 0.0
    %5176 = vmatpush1.msra.mxu0 0.0
    %5177 = vmatprep.subr.mxu0 0.0
    %5178 = vmatpush1.msra.mxu0 0.0
    %5179 = vmatprep.subr.mxu0 0.0
    %5180 = vmatpush1.msra.mxu0 0.0
    %5181 = vmatprep.subr.mxu0 0.0
    %5182 = vmatpush1.msra.mxu0 0.0
    %5183 = vmatprep.subr.mxu0 0.0
    %5184 = vmatpush1.msra.mxu0 0.0
    %5185 = vmatprep.subr.mxu0 0.0
    %5186 = vmatpush1.msra.mxu0 0.0
    %5187 = vmatprep.subr.mxu0 0.0
    %5188 = vmatpush1.msra.mxu0 0.0
    %5189 = vmatprep.subr.mxu0 0.0
    %5190 = vmatpush1.msra.mxu0 0.0
    %5191 = vmatprep.subr.mxu0 0.0
    %5192 = vmatpush1.msra.mxu0 0.0
    %5193 = vmatprep.subr.mxu0 0.0
    %5194 = vmatpush1.msra.mxu0 0.0
    %5195 = vmatprep.subr.mxu0 0.0
    %5196 = vmatpush1.msra.mxu0 0.0
    %5197 = vmatprep.subr.mxu0 0.0
    %5198 = vmatpush1.msra.mxu0 0.0
    %5199 = vmatprep.mubr.f32.mxu0 0.0
    %5200 = vmatmul.mubr.f32.gmra.mrb[0].mxu0 %v5133
    %v5201 = vpop.f32.mrb[0].mxu0
    %v5202 = vadd.f32 0.0, %v5201
    %v5203 = vpop.f32.mrb[0].mxu0
    %5204 = vdwg.mxu0
    %5206 = vrot.lane.b32.xlu0 %v5202, 8
    %v5207 = vpop.permute.xlu0 %5206
    %5209 = vst.msk [vmem:[#allocation4 + $0x8] sm:$0xff] %vm1878, %v5207
    %5210 = vrot.lane.b32.xlu0 %v4869, 112
    %v5211 = vpop.permute.xlu0 %5210
    %5212 = vrot.lane.b32.xlu0 %v4183, 80
    %v5213 = vpop.permute.xlu0 %5212
    %v5214 = vsel %vm1545, %v5211, 0
    %v5216 = vsel %vm1545, %v5213, 0
    %5218 = vmatprep.subr.mxu0 0.0
    %5219 = vmatpush1.xpose.msra.mxu0 %v5216
    %5220 = vmatprep.subr.mxu0 0.0
    %5221 = vmatpush1.xpose.msra.mxu0 0.0
    %5222 = vmatprep.subr.mxu0 0.0
    %5223 = vmatpush1.xpose.msra.mxu0 0.0
    %5224 = vmatprep.subr.mxu0 0.0
    %5225 = vmatpush1.xpose.msra.mxu0 0.0
    %5226 = vmatprep.subr.mxu0 0.0
    %5227 = vmatpush1.xpose.msra.mxu0 0.0
    %5228 = vmatprep.subr.mxu0 0.0
    %5229 = vmatpush1.xpose.msra.mxu0 0.0
    %5230 = vmatprep.subr.mxu0 0.0
    %5231 = vmatpush1.xpose.msra.mxu0 0.0
    %5232 = vmatprep.subr.mxu0 0.0
    %5233 = vmatpush1.xpose.msra.mxu0 0.0
    %5234 = vmatprep.subr.mxu0 0.0
    %5235 = vmatpush1.xpose.msra.mxu0 0.0
    %5236 = vmatprep.subr.mxu0 0.0
    %5237 = vmatpush1.xpose.msra.mxu0 0.0
    %5238 = vmatprep.subr.mxu0 0.0
    %5239 = vmatpush1.xpose.msra.mxu0 0.0
    %5240 = vmatprep.subr.mxu0 0.0
    %5241 = vmatpush1.xpose.msra.mxu0 0.0
    %5242 = vmatprep.subr.mxu0 0.0
    %5243 = vmatpush1.xpose.msra.mxu0 0.0
    %5244 = vmatprep.subr.mxu0 0.0
    %5245 = vmatpush1.xpose.msra.mxu0 0.0
    %5246 = vmatprep.subr.mxu0 0.0
    %5247 = vmatpush1.xpose.msra.mxu0 0.0
    %5248 = vmatprep.subr.mxu0 0.0
    %5249 = vmatpush1.xpose.msra.mxu0 0.0
    %5250 = vmatprep.subr.mxu0 0.0
    %5251 = vmatpush1.xpose.msra.mxu0 0.0
    %5252 = vmatprep.subr.mxu0 0.0
    %5253 = vmatpush1.xpose.msra.mxu0 0.0
    %5254 = vmatprep.subr.mxu0 0.0
    %5255 = vmatpush1.xpose.msra.mxu0 0.0
    %5256 = vmatprep.subr.mxu0 0.0
    %5257 = vmatpush1.xpose.msra.mxu0 0.0
    %5258 = vmatprep.subr.mxu0 0.0
    %5259 = vmatpush1.xpose.msra.mxu0 0.0
    %5260 = vmatprep.subr.mxu0 0.0
    %5261 = vmatpush1.xpose.msra.mxu0 0.0
    %5262 = vmatprep.subr.mxu0 0.0
    %5263 = vmatpush1.xpose.msra.mxu0 0.0
    %5264 = vmatprep.subr.mxu0 0.0
    %5265 = vmatpush1.xpose.msra.mxu0 0.0
    %5266 = vmatprep.subr.mxu0 0.0
    %5267 = vmatpush1.xpose.msra.mxu0 0.0
    %5268 = vmatprep.subr.mxu0 0.0
    %5269 = vmatpush1.xpose.msra.mxu0 0.0
    %5270 = vmatprep.subr.mxu0 0.0
    %5271 = vmatpush1.xpose.msra.mxu0 0.0
    %5272 = vmatprep.subr.mxu0 0.0
    %5273 = vmatpush1.xpose.msra.mxu0 0.0
    %5274 = vmatprep.subr.mxu0 0.0
    %5275 = vmatpush1.xpose.msra.mxu0 0.0
    %5276 = vmatprep.subr.mxu0 0.0
    %5277 = vmatpush1.xpose.msra.mxu0 0.0
    %5278 = vmatprep.subr.mxu0 0.0
    %5279 = vmatpush1.xpose.msra.mxu0 0.0
    %5280 = vmatprep.subr.mxu0 0.0
    %5281 = vmatpush1.xpose.msra.mxu0 0.0
    %5282 = vmatprep.mubr.f32.mxu0 0.0
    %5283 = vmatmul.mubr.f32.gmra.mrb[0].mxu0 %v5214
    %v5284 = vpop.f32.mrb[0].mxu0
    %v5285 = vadd.f32 %v4873, %v5284
    %v5286 = vpop.f32.mrb[0].mxu0
    %5287 = vdwg.mxu0
    %v5288 = vsel %vm1545, %v5285, -inf
    %5289 = vmax.xlane.f32.xlu0 %v5288
    %v5290 = vpop.xlane.xlu0 %5289
    %v5291 = vsub.f32 %v5285, %v5290
    %v5292 = vmul.f32 %v5291, 1.442695
    %v5293 = vpow.pop %v5292
    %v5294 = vsel %vm1545, %v5293, 0.0
    %5295 = vadd.xlane.f32.xlu0 %v5294
    %v5296 = vpop.xlane.xlu0 %5295
    %v5297 = vrcp.pop %v5296
    %v5298 = vmul.f32 %v5293, %v5297
    %5299 = vrot.lane.b32.xlu0 %v4183, 48
    %v5300 = vpop.permute.xlu0 %5299
    %v5303 = vsel %vm1545, %v5298, 0
    %5305 = vmatprep.subr.mxu0 0.0
    %5306 = vmatpush1.msra.mxu0 %v5300
    %5307 = vmatprep.subr.mxu0 0.0
    %5308 = vmatpush1.msra.mxu0 0.0
    %5309 = vmatprep.subr.mxu0 0.0
    %5310 = vmatpush1.msra.mxu0 0.0
    %5311 = vmatprep.subr.mxu0 0.0
    %5312 = vmatpush1.msra.mxu0 0.0
    %5313 = vmatprep.subr.mxu0 0.0
    %5314 = vmatpush1.msra.mxu0 0.0
    %5315 = vmatprep.subr.mxu0 0.0
    %5316 = vmatpush1.msra.mxu0 0.0
    %5317 = vmatprep.subr.mxu0 0.0
    %5318 = vmatpush1.msra.mxu0 0.0
    %5319 = vmatprep.subr.mxu0 0.0
    %5320 = vmatpush1.msra.mxu0 0.0
    %5321 = vmatprep.subr.mxu0 0.0
    %5322 = vmatpush1.msra.mxu0 0.0
    %5323 = vmatprep.subr.mxu0 0.0
    %5324 = vmatpush1.msra.mxu0 0.0
    %5325 = vmatprep.subr.mxu0 0.0
    %5326 = vmatpush1.msra.mxu0 0.0
    %5327 = vmatprep.subr.mxu0 0.0
    %5328 = vmatpush1.msra.mxu0 0.0
    %5329 = vmatprep.subr.mxu0 0.0
    %5330 = vmatpush1.msra.mxu0 0.0
    %5331 = vmatprep.subr.mxu0 0.0
    %5332 = vmatpush1.msra.mxu0 0.0
    %5333 = vmatprep.subr.mxu0 0.0
    %5334 = vmatpush1.msra.mxu0 0.0
    %5335 = vmatprep.subr.mxu0 0.0
    %5336 = vmatpush1.msra.mxu0 0.0
    %5337 = vmatprep.subr.mxu0 0.0
    %5338 = vmatpush1.msra.mxu0 0.0
    %5339 = vmatprep.subr.mxu0 0.0
    %5340 = vmatpush1.msra.mxu0 0.0
    %5341 = vmatprep.subr.mxu0 0.0
    %5342 = vmatpush1.msra.mxu0 0.0
    %5343 = vmatprep.subr.mxu0 0.0
    %5344 = vmatpush1.msra.mxu0 0.0
    %5345 = vmatprep.subr.mxu0 0.0
    %5346 = vmatpush1.msra.mxu0 0.0
    %5347 = vmatprep.subr.mxu0 0.0
    %5348 = vmatpush1.msra.mxu0 0.0
    %5349 = vmatprep.subr.mxu0 0.0
    %5350 = vmatpush1.msra.mxu0 0.0
    %5351 = vmatprep.subr.mxu0 0.0
    %5352 = vmatpush1.msra.mxu0 0.0
    %5353 = vmatprep.subr.mxu0 0.0
    %5354 = vmatpush1.msra.mxu0 0.0
    %5355 = vmatprep.subr.mxu0 0.0
    %5356 = vmatpush1.msra.mxu0 0.0
    %5357 = vmatprep.subr.mxu0 0.0
    %5358 = vmatpush1.msra.mxu0 0.0
    %5359 = vmatprep.subr.mxu0 0.0
    %5360 = vmatpush1.msra.mxu0 0.0
    %5361 = vmatprep.subr.mxu0 0.0
    %5362 = vmatpush1.msra.mxu0 0.0
    %5363 = vmatprep.subr.mxu0 0.0
    %5364 = vmatpush1.msra.mxu0 0.0
    %5365 = vmatprep.subr.mxu0 0.0
    %5366 = vmatpush1.msra.mxu0 0.0
    %5367 = vmatprep.subr.mxu0 0.0
    %5368 = vmatpush1.msra.mxu0 0.0
    %5369 = vmatprep.mubr.f32.mxu0 0.0
    %5370 = vmatmul.mubr.f32.gmra.mrb[0].mxu0 %v5303
    %v5371 = vpop.f32.mrb[0].mxu0
    %v5372 = vadd.f32 0.0, %v5371
    %v5373 = vpop.f32.mrb[0].mxu0
    %5374 = vdwg.mxu0
    %5376 = vrot.lane.b32.xlu0 %v5372, 16
    %v5377 = vpop.permute.xlu0 %5376
    %5379 = vst.msk [vmem:[#allocation4 + $0x8] sm:$0xff] %vm2049, %v5377
    %5380 = vrot.lane.b32.xlu0 %v4869, 104
    %v5381 = vpop.permute.xlu0 %5380
    %5382 = vrot.lane.b32.xlu0 %v4183, 72
    %v5383 = vpop.permute.xlu0 %5382
    %v5384 = vsel %vm1545, %v5381, 0
    %v5386 = vsel %vm1545, %v5383, 0
    %5388 = vmatprep.subr.mxu0 0.0
    %5389 = vmatpush1.xpose.msra.mxu0 %v5386
    %5390 = vmatprep.subr.mxu0 0.0
    %5391 = vmatpush1.xpose.msra.mxu0 0.0
    %5392 = vmatprep.subr.mxu0 0.0
    %5393 = vmatpush1.xpose.msra.mxu0 0.0
    %5394 = vmatprep.subr.mxu0 0.0
    %5395 = vmatpush1.xpose.msra.mxu0 0.0
    %5396 = vmatprep.subr.mxu0 0.0
    %5397 = vmatpush1.xpose.msra.mxu0 0.0
    %5398 = vmatprep.subr.mxu0 0.0
    %5399 = vmatpush1.xpose.msra.mxu0 0.0
    %5400 = vmatprep.subr.mxu0 0.0
    %5401 = vmatpush1.xpose.msra.mxu0 0.0
    %5402 = vmatprep.subr.mxu0 0.0
    %5403 = vmatpush1.xpose.msra.mxu0 0.0
    %5404 = vmatprep.subr.mxu0 0.0
    %5405 = vmatpush1.xpose.msra.mxu0 0.0
    %5406 = vmatprep.subr.mxu0 0.0
    %5407 = vmatpush1.xpose.msra.mxu0 0.0
    %5408 = vmatprep.subr.mxu0 0.0
    %5409 = vmatpush1.xpose.msra.mxu0 0.0
    %5410 = vmatprep.subr.mxu0 0.0
    %5411 = vmatpush1.xpose.msra.mxu0 0.0
    %5412 = vmatprep.subr.mxu0 0.0
    %5413 = vmatpush1.xpose.msra.mxu0 0.0
    %5414 = vmatprep.subr.mxu0 0.0
    %5415 = vmatpush1.xpose.msra.mxu0 0.0
    %5416 = vmatprep.subr.mxu0 0.0
    %5417 = vmatpush1.xpose.msra.mxu0 0.0
    %5418 = vmatprep.subr.mxu0 0.0
    %5419 = vmatpush1.xpose.msra.mxu0 0.0
    %5420 = vmatprep.subr.mxu0 0.0
    %5421 = vmatpush1.xpose.msra.mxu0 0.0
    %5422 = vmatprep.subr.mxu0 0.0
    %5423 = vmatpush1.xpose.msra.mxu0 0.0
    %5424 = vmatprep.subr.mxu0 0.0
    %5425 = vmatpush1.xpose.msra.mxu0 0.0
    %5426 = vmatprep.subr.mxu0 0.0
    %5427 = vmatpush1.xpose.msra.mxu0 0.0
    %5428 = vmatprep.subr.mxu0 0.0
    %5429 = vmatpush1.xpose.msra.mxu0 0.0
    %5430 = vmatprep.subr.mxu0 0.0
    %5431 = vmatpush1.xpose.msra.mxu0 0.0
    %5432 = vmatprep.subr.mxu0 0.0
    %5433 = vmatpush1.xpose.msra.mxu0 0.0
    %5434 = vmatprep.subr.mxu0 0.0
    %5435 = vmatpush1.xpose.msra.mxu0 0.0
    %5436 = vmatprep.subr.mxu0 0.0
    %5437 = vmatpush1.xpose.msra.mxu0 0.0
    %5438 = vmatprep.subr.mxu0 0.0
    %5439 = vmatpush1.xpose.msra.mxu0 0.0
    %5440 = vmatprep.subr.mxu0 0.0
    %5441 = vmatpush1.xpose.msra.mxu0 0.0
    %5442 = vmatprep.subr.mxu0 0.0
    %5443 = vmatpush1.xpose.msra.mxu0 0.0
    %5444 = vmatprep.subr.mxu0 0.0
    %5445 = vmatpush1.xpose.msra.mxu0 0.0
    %5446 = vmatprep.subr.mxu0 0.0
    %5447 = vmatpush1.xpose.msra.mxu0 0.0
    %5448 = vmatprep.subr.mxu0 0.0
    %5449 = vmatpush1.xpose.msra.mxu0 0.0
    %5450 = vmatprep.subr.mxu0 0.0
    %5451 = vmatpush1.xpose.msra.mxu0 0.0
    %5452 = vmatprep.mubr.f32.mxu0 0.0
    %5453 = vmatmul.mubr.f32.gmra.mrb[0].mxu0 %v5384
    %v5454 = vpop.f32.mrb[0].mxu0
    %v5455 = vadd.f32 %v4873, %v5454
    %v5456 = vpop.f32.mrb[0].mxu0
    %5457 = vdwg.mxu0
    %v5458 = vsel %vm1545, %v5455, -inf
    %5459 = vmax.xlane.f32.xlu0 %v5458
    %v5460 = vpop.xlane.xlu0 %5459
    %v5461 = vsub.f32 %v5455, %v5460
    %v5462 = vmul.f32 %v5461, 1.442695
    %v5463 = vpow.pop %v5462
    %v5464 = vsel %vm1545, %v5463, 0.0
    %5465 = vadd.xlane.f32.xlu0 %v5464
    %v5466 = vpop.xlane.xlu0 %5465
    %v5467 = vrcp.pop %v5466
    %v5468 = vmul.f32 %v5463, %v5467
    %5469 = vrot.lane.b32.xlu0 %v4183, 40
    %v5470 = vpop.permute.xlu0 %5469
    %v5473 = vsel %vm1545, %v5468, 0
    %5475 = vmatprep.subr.mxu0 0.0
    %5476 = vmatpush1.msra.mxu0 %v5470
    %5477 = vmatprep.subr.mxu0 0.0
    %5478 = vmatpush1.msra.mxu0 0.0
    %5479 = vmatprep.subr.mxu0 0.0
    %5480 = vmatpush1.msra.mxu0 0.0
    %5481 = vmatprep.subr.mxu0 0.0
    %5482 = vmatpush1.msra.mxu0 0.0
    %5483 = vmatprep.subr.mxu0 0.0
    %5484 = vmatpush1.msra.mxu0 0.0
    %5485 = vmatprep.subr.mxu0 0.0
    %5486 = vmatpush1.msra.mxu0 0.0
    %5487 = vmatprep.subr.mxu0 0.0
    %5488 = vmatpush1.msra.mxu0 0.0
    %5489 = vmatprep.subr.mxu0 0.0
    %5490 = vmatpush1.msra.mxu0 0.0
    %5491 = vmatprep.subr.mxu0 0.0
    %5492 = vmatpush1.msra.mxu0 0.0
    %5493 = vmatprep.subr.mxu0 0.0
    %5494 = vmatpush1.msra.mxu0 0.0
    %5495 = vmatprep.subr.mxu0 0.0
    %5496 = vmatpush1.msra.mxu0 0.0
    %5497 = vmatprep.subr.mxu0 0.0
    %5498 = vmatpush1.msra.mxu0 0.0
    %5499 = vmatprep.subr.mxu0 0.0
    %5500 = vmatpush1.msra.mxu0 0.0
    %5501 = vmatprep.subr.mxu0 0.0
    %5502 = vmatpush1.msra.mxu0 0.0
    %5503 = vmatprep.subr.mxu0 0.0
    %5504 = vmatpush1.msra.mxu0 0.0
    %5505 = vmatprep.subr.mxu0 0.0
    %5506 = vmatpush1.msra.mxu0 0.0
    %5507 = vmatprep.subr.mxu0 0.0
    %5508 = vmatpush1.msra.mxu0 0.0
    %5509 = vmatprep.subr.mxu0 0.0
    %5510 = vmatpush1.msra.mxu0 0.0
    %5511 = vmatprep.subr.mxu0 0.0
    %5512 = vmatpush1.msra.mxu0 0.0
    %5513 = vmatprep.subr.mxu0 0.0
    %5514 = vmatpush1.msra.mxu0 0.0
    %5515 = vmatprep.subr.mxu0 0.0
    %5516 = vmatpush1.msra.mxu0 0.0
    %5517 = vmatprep.subr.mxu0 0.0
    %5518 = vmatpush1.msra.mxu0 0.0
    %5519 = vmatprep.subr.mxu0 0.0
    %5520 = vmatpush1.msra.mxu0 0.0
    %5521 = vmatprep.subr.mxu0 0.0
    %5522 = vmatpush1.msra.mxu0 0.0
    %5523 = vmatprep.subr.mxu0 0.0
    %5524 = vmatpush1.msra.mxu0 0.0
    %5525 = vmatprep.subr.mxu0 0.0
    %5526 = vmatpush1.msra.mxu0 0.0
    %5527 = vmatprep.subr.mxu0 0.0
    %5528 = vmatpush1.msra.mxu0 0.0
    %5529 = vmatprep.subr.mxu0 0.0
    %5530 = vmatpush1.msra.mxu0 0.0
    %5531 = vmatprep.subr.mxu0 0.0
    %5532 = vmatpush1.msra.mxu0 0.0
    %5533 = vmatprep.subr.mxu0 0.0
    %5534 = vmatpush1.msra.mxu0 0.0
    %5535 = vmatprep.subr.mxu0 0.0
    %5536 = vmatpush1.msra.mxu0 0.0
    %5537 = vmatprep.subr.mxu0 0.0
    %5538 = vmatpush1.msra.mxu0 0.0
    %5539 = vmatprep.mubr.f32.mxu0 0.0
    %5540 = vmatmul.mubr.f32.gmra.mrb[0].mxu0 %v5473
    %v5541 = vpop.f32.mrb[0].mxu0
    %v5542 = vadd.f32 0.0, %v5541
    %v5543 = vpop.f32.mrb[0].mxu0
    %5544 = vdwg.mxu0
    %5546 = vrot.lane.b32.xlu0 %v5542, 24
    %v5547 = vpop.permute.xlu0 %5546
    %5549 = vst.msk [vmem:[#allocation4 + $0x8] sm:$0xff] %vm2220, %v5547
    %v5550 = vld [vmem:[#allocation4] sm:$0xff]
    %v5551 = vld [vmem:[#allocation4 + $0x8] sm:$0xff]
    %v5552 = vld [vmem:[%s97] sm:$0xff]
    %v5553 = vld [vmem:[%s97 + $0x8] sm:$0xff]
    %v5554 = vld [vmem:[%s97 + $0x10] sm:$0xff]
    %v5555 = vld [vmem:[%s97 + $0x18] sm:$0xff]
    %v5557 = vsel %vm628, %v5550, 0
    %v5560 = vsel %vm628, %v5551, 0
    %5562 = vmatprep.subr.mxu0 0.0
    %5563 = vmatpush1.msra.mxu0 %v5552
    %5564 = vmatprep.subr.mxu0 0.0
    %5565 = vmatpush1.msra.mxu0 %v5553
    %5566 = vmatprep.subr.mxu0 0.0
    %5567 = vmatpush1.msra.mxu0 %v5554
    %5568 = vmatprep.subr.mxu0 0.0
    %5569 = vmatpush1.msra.mxu0 %v5555
    %5570 = vmatprep.subr.mxu0 0.0
    %5571 = vmatpush1.msra.mxu0 0.0
    %5572 = vmatprep.subr.mxu0 0.0
    %5573 = vmatpush1.msra.mxu0 0.0
    %5574 = vmatprep.subr.mxu0 0.0
    %5575 = vmatpush1.msra.mxu0 0.0
    %5576 = vmatprep.subr.mxu0 0.0
    %5577 = vmatpush1.msra.mxu0 0.0
    %5578 = vmatprep.subr.mxu0 0.0
    %5579 = vmatpush1.msra.mxu0 0.0
    %5580 = vmatprep.subr.mxu0 0.0
    %5581 = vmatpush1.msra.mxu0 0.0
    %5582 = vmatprep.subr.mxu0 0.0
    %5583 = vmatpush1.msra.mxu0 0.0
    %5584 = vmatprep.subr.mxu0 0.0
    %5585 = vmatpush1.msra.mxu0 0.0
    %5586 = vmatprep.subr.mxu0 0.0
    %5587 = vmatpush1.msra.mxu0 0.0
    %5588 = vmatprep.subr.mxu0 0.0
    %5589 = vmatpush1.msra.mxu0 0.0
    %5590 = vmatprep.subr.mxu0 0.0
    %5591 = vmatpush1.msra.mxu0 0.0
    %5592 = vmatprep.subr.mxu0 0.0
    %5593 = vmatpush1.msra.mxu0 0.0
    %5594 = vmatprep.subr.mxu0 0.0
    %5595 = vmatpush1.msra.mxu0 0.0
    %5596 = vmatprep.subr.mxu0 0.0
    %5597 = vmatpush1.msra.mxu0 0.0
    %5598 = vmatprep.subr.mxu0 0.0
    %5599 = vmatpush1.msra.mxu0 0.0
    %5600 = vmatprep.subr.mxu0 0.0
    %5601 = vmatpush1.msra.mxu0 0.0
    %5602 = vmatprep.subr.mxu0 0.0
    %5603 = vmatpush1.msra.mxu0 0.0
    %5604 = vmatprep.subr.mxu0 0.0
    %5605 = vmatpush1.msra.mxu0 0.0
    %5606 = vmatprep.subr.mxu0 0.0
    %5607 = vmatpush1.msra.mxu0 0.0
    %5608 = vmatprep.subr.mxu0 0.0
    %5609 = vmatpush1.msra.mxu0 0.0
    %5610 = vmatprep.subr.mxu0 0.0
    %5611 = vmatpush1.msra.mxu0 0.0
    %5612 = vmatprep.subr.mxu0 0.0
    %5613 = vmatpush1.msra.mxu0 0.0
    %5614 = vmatprep.subr.mxu0 0.0
    %5615 = vmatpush1.msra.mxu0 0.0
    %5616 = vmatprep.subr.mxu0 0.0
    %5617 = vmatpush1.msra.mxu0 0.0
    %5618 = vmatprep.subr.mxu0 0.0
    %5619 = vmatpush1.msra.mxu0 0.0
    %5620 = vmatprep.subr.mxu0 0.0
    %5621 = vmatpush1.msra.mxu0 0.0
    %5622 = vmatprep.subr.mxu0 0.0
    %5623 = vmatpush1.msra.mxu0 0.0
    %5624 = vmatprep.subr.mxu0 0.0
    %5625 = vmatpush1.msra.mxu0 0.0
    %5626 = vmatprep.mubr.f32.mxu0 0.0
    %5627 = vmatmul.mubr.f32.gmra.mrb[0].mxu0 %v5557
    %v5628 = vpop.f32.mrb[0].mxu0
    %v5629 = vadd.f32 0.0, %v5628
    %v5630 = vpop.f32.mrb[0].mxu0
    %5631 = vmatprep.mubr.f32.mxu0 0.0
    %5632 = vmatmul.mubr.f32.gmra.mrb[0].mxu0 %v5560
    %v5633 = vpop.f32.mrb[0].mxu0
    %v5634 = vadd.f32 0.0, %v5633
    %v5635 = vpop.f32.mrb[0].mxu0
    %5636 = vdwg.mxu0
    %v5637 = vadd.f32 %v4048, %v5629
    %v5638 = vadd.f32 %v4049, %v5634
    %v5639 = vld [vmem:[#allocation30] sm:$0x1]
    %v5641 = vlaneseq
    %v5642 = vshrl.u32 %v5641, 7
    %v5643 = vsub.s32 0, %v5642
    %v5644 = vrot.slane %v5639, %v5643
    %v5646 = vadd.f32 %v5637, %v5644
    %v5647 = vadd.f32 %v5638, %v5644
    %v5648 = vld [vmem:[#allocation31] sm:$0x1]
    %v5649 = vld [vmem:[#allocation33] sm:$0x1]
    %v5650 = vsel %vm628, %v5646, 0.0
    %5651 = vadd.xlane.f32.xlu0 %v5650
    %v5652 = vpop.xlane.xlu0 %5651
    %v5653 = vsel %vm628, %v5647, 0.0
    %5654 = vadd.xlane.f32.xlu0 %v5653
    %v5655 = vpop.xlane.xlu0 %5654
    %v5656 = vmul.f32 %v5652, %v1156
    %v5657 = vmul.f32 %v5655, %v1156
    %v5658 = vsub.f32 %v5646, %v5656
    %v5659 = vsub.f32 %v5647, %v5657
    %v5660 = vmul.f32 %v5658, %v5658
    %v5661 = vmul.f32 %v5659, %v5659
    %v5662 = vsel %vm628, %v5660, 0.0
    %5663 = vadd.xlane.f32.xlu0 %v5662
    %v5664 = vpop.xlane.xlu0 %5663
    %v5665 = vsel %vm628, %v5661, 0.0
    %5666 = vadd.xlane.f32.xlu0 %v5665
    %v5667 = vpop.xlane.xlu0 %5666
    %v5668 = vmul.f32 %v5664, %v1156
    %v5669 = vmul.f32 %v5667, %v1156
    %v5670 = vadd.f32 %v5668, 1e-05
    %v5671 = vadd.f32 %v5669, 1e-05
    %v5672 = vrsqrt.pop %v5670
    %v5673 = vrsqrt.pop %v5671
    %v5674 = vmul.f32 %v5658, %v5672
    %v5675 = vmul.f32 %v5659, %v5673
    %v5677 = vlaneseq
    %v5678 = vshrl.u32 %v5677, 7
    %v5679 = vsub.s32 0, %v5678
    %v5680 = vrot.slane %v5648, %v5679
    %v5682 = vmul.f32 %v5674, %v5680
    %v5683 = vmul.f32 %v5675, %v5680
    %v5685 = vlaneseq
    %v5686 = vshrl.u32 %v5685, 7
    %v5687 = vsub.s32 0, %v5686
    %v5688 = vrot.slane %v5649, %v5687
    %v5690 = vadd.f32 %v5682, %v5688
    %v5691 = vadd.f32 %v5683, %v5688
    %v5692 = vld [vmem:[%s105] sm:$0xff]
    %v5693 = vld [vmem:[%s105 + $0x8] sm:$0xff]
    %v5694 = vld [vmem:[%s105 + $0x10] sm:$0xff]
    %v5695 = vld [vmem:[%s105 + $0x18] sm:$0xff]
    %v5696 = vld [vmem:[#allocation34] sm:$0x1]
    %v5698 = vlaneseq
    %v5699 = vshrl.u32 %v5698, 7
    %v5700 = vsub.s32 0, %v5699
    %v5701 = vrot.slane %v5696, %v5700
    %v5704 = vsel %vm628, %v5690, 0
    %v5707 = vsel %vm628, %v5691, 0
    %5709 = vmatprep.subr.mxu0 0.0
    %5710 = vmatpush1.msra.mxu0 %v5692
    %5711 = vmatprep.subr.mxu0 0.0
    %5712 = vmatpush1.msra.mxu0 %v5693
    %5713 = vmatprep.subr.mxu0 0.0
    %5714 = vmatpush1.msra.mxu0 %v5694
    %5715 = vmatprep.subr.mxu0 0.0
    %5716 = vmatpush1.msra.mxu0 %v5695
    %5717 = vmatprep.subr.mxu0 0.0
    %5718 = vmatpush1.msra.mxu0 0.0
    %5719 = vmatprep.subr.mxu0 0.0
    %5720 = vmatpush1.msra.mxu0 0.0
    %5721 = vmatprep.subr.mxu0 0.0
    %5722 = vmatpush1.msra.mxu0 0.0
    %5723 = vmatprep.subr.mxu0 0.0
    %5724 = vmatpush1.msra.mxu0 0.0
    %5725 = vmatprep.subr.mxu0 0.0
    %5726 = vmatpush1.msra.mxu0 0.0
    %5727 = vmatprep.subr.mxu0 0.0
    %5728 = vmatpush1.msra.mxu0 0.0
    %5729 = vmatprep.subr.mxu0 0.0
    %5730 = vmatpush1.msra.mxu0 0.0
    %5731 = vmatprep.subr.mxu0 0.0
    %5732 = vmatpush1.msra.mxu0 0.0
    %5733 = vmatprep.subr.mxu0 0.0
    %5734 = vmatpush1.msra.mxu0 0.0
    %5735 = vmatprep.subr.mxu0 0.0
    %5736 = vmatpush1.msra.mxu0 0.0
    %5737 = vmatprep.subr.mxu0 0.0
    %5738 = vmatpush1.msra.mxu0 0.0
    %5739 = vmatprep.subr.mxu0 0.0
    %5740 = vmatpush1.msra.mxu0 0.0
    %5741 = vmatprep.subr.mxu0 0.0
    %5742 = vmatpush1.msra.mxu0 0.0
    %5743 = vmatprep.subr.mxu0 0.0
    %5744 = vmatpush1.msra.mxu0 0.0
    %5745 = vmatprep.subr.mxu0 0.0
    %5746 = vmatpush1.msra.mxu0 0.0
    %5747 = vmatprep.subr.mxu0 0.0
    %5748 = vmatpush1.msra.mxu0 0.0
    %5749 = vmatprep.subr.mxu0 0.0
    %5750 = vmatpush1.msra.mxu0 0.0
    %5751 = vmatprep.subr.mxu0 0.0
    %5752 = vmatpush1.msra.mxu0 0.0
    %5753 = vmatprep.subr.mxu0 0.0
    %5754 = vmatpush1.msra.mxu0 0.0
    %5755 = vmatprep.subr.mxu0 0.0
    %5756 = vmatpush1.msra.mxu0 0.0
    %5757 = vmatprep.subr.mxu0 0.0
    %5758 = vmatpush1.msra.mxu0 0.0
    %5759 = vmatprep.subr.mxu0 0.0
    %5760 = vmatpush1.msra.mxu0 0.0
    %5761 = vmatprep.subr.mxu0 0.0
    %5762 = vmatpush1.msra.mxu0 0.0
    %5763 = vmatprep.subr.mxu0 0.0
    %5764 = vmatpush1.msra.mxu0 0.0
    %5765 = vmatprep.subr.mxu0 0.0
    %5766 = vmatpush1.msra.mxu0 0.0
    %5767 = vmatprep.subr.mxu0 0.0
    %5768 = vmatpush1.msra.mxu0 0.0
    %5769 = vmatprep.subr.mxu0 0.0
    %5770 = vmatpush1.msra.mxu0 0.0
    %5771 = vmatprep.subr.mxu0 0.0
    %5772 = vmatpush1.msra.mxu0 0.0
    %5773 = vmatprep.mubr.f32.mxu0 0.0
    %5774 = vmatmul.mubr.f32.gmra.mrb[0].mxu0 %v5704
    %v5775 = vpop.f32.mrb[0].mxu0
    %v5776 = vadd.f32 %v5701, %v5775
    %v5777 = vpop.f32.mrb[0].mxu0
    %5778 = vmatprep.mubr.f32.mxu0 0.0
    %5779 = vmatmul.mubr.f32.gmra.mrb[0].mxu0 %v5707
    %v5780 = vpop.f32.mrb[0].mxu0
    %v5781 = vadd.f32 %v5701, %v5780
    %v5782 = vpop.f32.mrb[0].mxu0
    %5783 = vdwg.mxu0
    %v5784 = vxor.u32 %v5776, 2147483648
    %v5785 = vxor.u32 %v5781, 2147483648
    %v5786 = vmul.f32 %v5784, 1.442695
    %v5787 = vpow.pop %v5786
    %v5788 = vmul.f32 %v5785, 1.442695
    %v5789 = vpow.pop %v5788
    %v5790 = vadd.f32 %v5787, 1.0
    %v5791 = vadd.f32 %v5789, 1.0
    %v5792 = vrcp.pop %v5790
    %v5793 = vmul.f32 1.0, %v5792
    %v5794 = vrcp.pop %v5791
    %v5795 = vmul.f32 1.0, %v5794
    %5798 = vrot.lane.b32.xlu0 %v5793, 96
    %v5799 = vpop.permute.xlu0 %5798
    %5800 = vrot.lane.b32.xlu0 %v5795, 96
    %v5801 = vpop.permute.xlu0 %5800
    %v5804 = vmul.f32 %v5776, %v5799
    %v5805 = vmul.f32 %v5781, %v5801
    %v5806 = vld [vmem:[%s109] sm:$0x7f]
    %v5807 = vld [vmem:[#allocation36] sm:$0x1]
    %5808 = vst.msk [vmem:[#allocation6 + $0x8] sm:$0xff] %vm628, %v5804
    %v5809 = vld [vmem:[#allocation6] sm:$0xff]
    %v5810 = vld [vmem:[#allocation6 + $0x8] sm:$0xff]
    %v5811 = vld [vmem:[#allocation6 + $0x10] sm:$0xff]
    %v5812 = vlaneseq
    %v5813 = vshrl.u32 %v5812, 7
    %v5814 = vsub.s32 0, %v5813
    %v5815 = vrot.slane %v5806, %v5814
    %v5816 = vmul.f32 %v5809, %v5815
    %v5817 = vmul.f32 %v5810, %v5815
    %v5818 = vadd.f32 %v5816, 0.0
    %v5819 = vadd.f32 %v5817, 0.0
    %v5820 = vlaneseq
    %v5821 = vshrl.u32 %v5820, 7
    %v5822 = vsub.s32 1, %v5821
    %v5823 = vrot.slane %v5806, %v5822
    %v5824 = vmul.f32 %v5809, %v5823
    %v5825 = vmul.f32 %v5810, %v5823
    %v5828 = vrot.slane %v5824, 1
    %v5829 = vrot.slane %v5825, 1
    %v5830 = vsel %vm3182, %v5828, %v5829
    %v5833 = vadd.f32 %v5818, %v5830
    %v5834 = vadd.f32 %v5819, %v5829
    %v5835 = vlaneseq
    %v5836 = vshrl.u32 %v5835, 7
    %v5837 = vsub.s32 2, %v5836
    %v5838 = vrot.slane %v5806, %v5837
    %v5839 = vmul.f32 %v5809, %v5838
    %v5840 = vmul.f32 %v5810, %v5838
    %v5843 = vrot.slane %v5839, 2
    %v5844 = vrot.slane %v5840, 2
    %v5845 = vsel %vm3198, %v5843, %v5844
    %v5848 = vadd.f32 %v5833, %v5845
    %v5849 = vadd.f32 %v5834, %v5844
    %v5850 = vlaneseq
    %v5851 = vshrl.u32 %v5850, 7
    %v5852 = vsub.s32 3, %v5851
    %v5853 = vrot.slane %v5806, %v5852
    %v5854 = vmul.f32 %v5810, %v5853
    %v5856 = vrot.slane %v5854, 3
    %v5858 = vadd.f32 %v5848, %v5856
    %v5859 = vadd.f32 %v5849, %v5856
    %v5860 = vlaneseq
    %v5861 = vshrl.u32 %v5860, 7
    %v5862 = vsub.s32 4, %v5861
    %v5863 = vrot.slane %v5806, %v5862
    %v5864 = vmul.f32 %v5810, %v5863
    %v5865 = vmul.f32 %v5811, %v5863
    %v5868 = vrot.slane %v5864, 4
    %v5869 = vrot.slane %v5865, 4
    %v5870 = vsel %vm3224, %v5868, %v5869
    %v5873 = vadd.f32 %v5858, %v5868
    %v5874 = vadd.f32 %v5859, %v5870
    %v5875 = vlaneseq
    %v5876 = vshrl.u32 %v5875, 7
    %v5877 = vsub.s32 5, %v5876
    %v5878 = vrot.slane %v5806, %v5877
    %v5879 = vmul.f32 %v5810, %v5878
    %v5880 = vmul.f32 %v5811, %v5878
    %v5883 = vrot.slane %v5879, 5
    %v5884 = vrot.slane %v5880, 5
    %v5885 = vsel %vm3240, %v5883, %v5884
    %v5888 = vadd.f32 %v5873, %v5883
    %v5889 = vadd.f32 %v5874, %v5885
    %v5890 = vlaneseq
    %v5891 = vshrl.u32 %v5890, 7
    %v5892 = vsub.s32 6, %v5891
    %v5893 = vrot.slane %v5806, %v5892
    %v5894 = vmul.f32 %v5810, %v5893
    %v5895 = vmul.f32 %v5811, %v5893
    %v5898 = vrot.slane %v5894, 6
    %v5899 = vrot.slane %v5895, 6
    %v5900 = vsel %vm3256, %v5898, %v5899
    %v5903 = vadd.f32 %v5888, %v5898
    %v5904 = vadd.f32 %v5889, %v5900
    %v5906 = vlaneseq
    %v5907 = vshrl.u32 %v5906, 7
    %v5908 = vsub.s32 0, %v5907
    %v5909 = vrot.slane %v5807, %v5908
    %v5911 = vadd.f32 %v5903, %v5909
    %v5912 = vadd.f32 %v5904, %v5909
    %5913 = vst.msk [vmem:[#allocation5 - $0x5] sm:$0xe0] %vm3272, %v5911
    %5914 = vst.msk [vmem:[#allocation5 + $0x3] sm:$0x1f] %vm3274, %v5912
    %5915 = vst.msk [vmem:[#allocation6 + $0x8] sm:$0xff] %vm628, %v5805
    %v5916 = vld [vmem:[#allocation6] sm:$0xff]
    %v5917 = vld [vmem:[#allocation6 + $0x8] sm:$0xff]
    %v5918 = vld [vmem:[#allocation6 + $0x10] sm:$0xff]
    %v5919 = vmul.f32 %v5916, %v5815
    %v5920 = vmul.f32 %v5917, %v5815
    %v5921 = vadd.f32 %v5919, 0.0
    %v5922 = vadd.f32 %v5920, 0.0
    %v5923 = vmul.f32 %v5916, %v5823
    %v5924 = vmul.f32 %v5917, %v5823
    %v5927 = vrot.slane %v5923, 1
    %v5928 = vrot.slane %v5924, 1
    %v5929 = vsel %vm3182, %v5927, %v5928
    %v5932 = vadd.f32 %v5921, %v5929
    %v5933 = vadd.f32 %v5922, %v5928
    %v5934 = vmul.f32 %v5916, %v5838
    %v5935 = vmul.f32 %v5917, %v5838
    %v5938 = vrot.slane %v5934, 2
    %v5939 = vrot.slane %v5935, 2
    %v5940 = vsel %vm3198, %v5938, %v5939
    %v5943 = vadd.f32 %v5932, %v5940
    %v5944 = vadd.f32 %v5933, %v5939
    %v5945 = vmul.f32 %v5917, %v5853
    %v5947 = vrot.slane %v5945, 3
    %v5949 = vadd.f32 %v5943, %v5947
    %v5950 = vadd.f32 %v5944, %v5947
    %v5951 = vmul.f32 %v5917, %v5863
    %v5952 = vmul.f32 %v5918, %v5863
    %v5955 = vrot.slane %v5951, 4
    %v5956 = vrot.slane %v5952, 4
    %v5957 = vsel %vm3224, %v5955, %v5956
    %v5960 = vadd.f32 %v5949, %v5955
    %v5961 = vadd.f32 %v5950, %v5957
    %v5962 = vmul.f32 %v5917, %v5878
    %v5963 = vmul.f32 %v5918, %v5878
    %v5966 = vrot.slane %v5962, 5
    %v5967 = vrot.slane %v5963, 5
    %v5968 = vsel %vm3240, %v5966, %v5967
    %v5971 = vadd.f32 %v5960, %v5966
    %v5972 = vadd.f32 %v5961, %v5968
    %v5973 = vmul.f32 %v5917, %v5893
    %v5974 = vmul.f32 %v5918, %v5893
    %v5977 = vrot.slane %v5973, 6
    %v5978 = vrot.slane %v5974, 6
    %v5979 = vsel %vm3256, %v5977, %v5978
    %v5982 = vadd.f32 %v5971, %v5977
    %v5983 = vadd.f32 %v5972, %v5979
    %v5984 = vadd.f32 %v5982, %v5909
    %v5985 = vadd.f32 %v5983, %v5909
    %5986 = vst.msk [vmem:[#allocation5 + $0x3] sm:$0xe0] %vm3272, %v5984
    %5987 = vst.msk [vmem:[#allocation5 + $0xb] sm:$0x1f] %vm3274, %v5985
    %v5988 = vld [vmem:[#allocation5] sm:$0xff]
    %v5989 = vld [vmem:[#allocation5 + $0x8] sm:$0xff]
    %v5990 = vsel %vm628, %v5988, 0.0
    %v5991 = vsel %vm628, %v5989, 0.0
    %v5992 = vadd.f32 %v5990, %v5991
    %v5993 = vrot.slane %v5992, 4
    %v5994 = vadd.f32 %v5992, %v5993
    %v5995 = vrot.slane %v5994, 2
    %v5996 = vadd.f32 %v5994, %v5995
    %v5997 = vrot.slane %v5996, 1
    %v5998 = vadd.f32 %v5996, %v5997
    %v5999 = vmul.f32 %v5998, %v3360
    %v6000 = vsub.f32 %v5988, %v5999
    %v6001 = vsub.f32 %v5989, %v5999
    %v6002 = vmul.f32 %v6000, %v6000
    %v6003 = vmul.f32 %v6001, %v6001
    %v6004 = vsel %vm628, %v6002, 0.0
    %v6005 = vsel %vm628, %v6003, 0.0
    %v6006 = vadd.f32 %v6004, %v6005
    %v6007 = vrot.slane %v6006, 4
    %v6008 = vadd.f32 %v6006, %v6007
    %v6009 = vrot.slane %v6008, 2
    %v6010 = vadd.f32 %v6008, %v6009
    %v6011 = vrot.slane %v6010, 1
    %v6012 = vadd.f32 %v6010, %v6011
    %v6013 = vmul.f32 %v6012, %v3360
    %v6014 = vadd.f32 %v6013, 1e-05
    %v6015 = vrsqrt.pop %v6014
    %v6016 = vmul.f32 %v6000, %v6015
    %v6017 = vmul.f32 %v6001, %v6015
    %v6018 = vld [vmem:[#allocation37] sm:$0x1]
    %v6020 = vlaneseq
    %v6021 = vshrl.u32 %v6020, 7
    %v6022 = vsub.s32 0, %v6021
    %v6023 = vrot.slane %v6018, %v6022
    %v6025 = vmul.f32 %v6016, %v6023
    %v6026 = vmul.f32 %v6017, %v6023
    %v6027 = vld [vmem:[#allocation39] sm:$0x1]
    %v6029 = vlaneseq
    %v6030 = vshrl.u32 %v6029, 7
    %v6031 = vsub.s32 0, %v6030
    %v6032 = vrot.slane %v6027, %v6031
    %v6034 = vadd.f32 %v6025, %v6032
    %v6035 = vadd.f32 %v6026, %v6032
    %v6036 = vxor.u32 %v6034, 2147483648
    %v6037 = vxor.u32 %v6035, 2147483648
    %v6038 = vmul.f32 %v6036, 1.442695
    %v6039 = vpow.pop %v6038
    %v6040 = vmul.f32 %v6037, 1.442695
    %v6041 = vpow.pop %v6040
    %v6042 = vadd.f32 %v6039, 1.0
    %v6043 = vadd.f32 %v6041, 1.0
    %v6044 = vrcp.pop %v6042
    %v6045 = vmul.f32 1.0, %v6044
    %v6046 = vrcp.pop %v6043
    %v6047 = vmul.f32 1.0, %v6046
    %v6048 = vmul.f32 %v6034, %v6045
    %v6049 = vmul.f32 %v6035, %v6047
    %v6050 = vld [vmem:[%s117] sm:$0xff]
    %v6051 = vld [vmem:[%s117 + $0x8] sm:$0xff]
    %v6052 = vld [vmem:[%s117 + $0x10] sm:$0xff]
    %v6053 = vld [vmem:[%s117 + $0x18] sm:$0xff]
    %v6054 = vld [vmem:[#allocation40] sm:$0x1]
    %v6056 = vlaneseq
    %v6057 = vshrl.u32 %v6056, 7
    %v6058 = vsub.s32 0, %v6057
    %v6059 = vrot.slane %v6054, %v6058
    %v6062 = vsel %vm628, %v6048, 0
    %v6065 = vsel %vm628, %v6049, 0
    %6067 = vmatprep.subr.mxu0 0.0
    %6068 = vmatpush1.msra.mxu0 %v6050
    %6069 = vmatprep.subr.mxu0 0.0
    %6070 = vmatpush1.msra.mxu0 %v6051
    %6071 = vmatprep.subr.mxu0 0.0
    %6072 = vmatpush1.msra.mxu0 %v6052
    %6073 = vmatprep.subr.mxu0 0.0
    %6074 = vmatpush1.msra.mxu0 %v6053
    %6075 = vmatprep.subr.mxu0 0.0
    %6076 = vmatpush1.msra.mxu0 0.0
    %6077 = vmatprep.subr.mxu0 0.0
    %6078 = vmatpush1.msra.mxu0 0.0
    %6079 = vmatprep.subr.mxu0 0.0
    %6080 = vmatpush1.msra.mxu0 0.0
    %6081 = vmatprep.subr.mxu0 0.0
    %6082 = vmatpush1.msra.mxu0 0.0
    %6083 = vmatprep.subr.mxu0 0.0
    %6084 = vmatpush1.msra.mxu0 0.0
    %6085 = vmatprep.subr.mxu0 0.0
    %6086 = vmatpush1.msra.mxu0 0.0
    %6087 = vmatprep.subr.mxu0 0.0
    %6088 = vmatpush1.msra.mxu0 0.0
    %6089 = vmatprep.subr.mxu0 0.0
    %6090 = vmatpush1.msra.mxu0 0.0
    %6091 = vmatprep.subr.mxu0 0.0
    %6092 = vmatpush1.msra.mxu0 0.0
    %6093 = vmatprep.subr.mxu0 0.0
    %6094 = vmatpush1.msra.mxu0 0.0
    %6095 = vmatprep.subr.mxu0 0.0
    %6096 = vmatpush1.msra.mxu0 0.0
    %6097 = vmatprep.subr.mxu0 0.0
    %6098 = vmatpush1.msra.mxu0 0.0
    %6099 = vmatprep.subr.mxu0 0.0
    %6100 = vmatpush1.msra.mxu0 0.0
    %6101 = vmatprep.subr.mxu0 0.0
    %6102 = vmatpush1.msra.mxu0 0.0
    %6103 = vmatprep.subr.mxu0 0.0
    %6104 = vmatpush1.msra.mxu0 0.0
    %6105 = vmatprep.subr.mxu0 0.0
    %6106 = vmatpush1.msra.mxu0 0.0
    %6107 = vmatprep.subr.mxu0 0.0
    %6108 = vmatpush1.msra.mxu0 0.0
    %6109 = vmatprep.subr.mxu0 0.0
    %6110 = vmatpush1.msra.mxu0 0.0
    %6111 = vmatprep.subr.mxu0 0.0
    %6112 = vmatpush1.msra.mxu0 0.0
    %6113 = vmatprep.subr.mxu0 0.0
    %6114 = vmatpush1.msra.mxu0 0.0
    %6115 = vmatprep.subr.mxu0 0.0
    %6116 = vmatpush1.msra.mxu0 0.0
    %6117 = vmatprep.subr.mxu0 0.0
    %6118 = vmatpush1.msra.mxu0 0.0
    %6119 = vmatprep.subr.mxu0 0.0
    %6120 = vmatpush1.msra.mxu0 0.0
    %6121 = vmatprep.subr.mxu0 0.0
    %6122 = vmatpush1.msra.mxu0 0.0
    %6123 = vmatprep.subr.mxu0 0.0
    %6124 = vmatpush1.msra.mxu0 0.0
    %6125 = vmatprep.subr.mxu0 0.0
    %6126 = vmatpush1.msra.mxu0 0.0
    %6127 = vmatprep.subr.mxu0 0.0
    %6128 = vmatpush1.msra.mxu0 0.0
    %6129 = vmatprep.subr.mxu0 0.0
    %6130 = vmatpush1.msra.mxu0 0.0
    %6131 = vmatprep.mubr.f32.mxu0 0.0
    %6132 = vmatmul.mubr.f32.gmra.mrb[0].mxu0 %v6062
    %v6133 = vpop.f32.mrb[0].mxu0
    %v6134 = vadd.f32 %v6059, %v6133
    %v6135 = vpop.f32.mrb[0].mxu0
    %6136 = vmatprep.mubr.f32.mxu0 0.0
    %6137 = vmatmul.mubr.f32.gmra.mrb[0].mxu0 %v6065
    %v6138 = vpop.f32.mrb[0].mxu0
    %v6139 = vadd.f32 %v6059, %v6138
    %v6140 = vpop.f32.mrb[0].mxu0
    %6141 = vdwg.mxu0
    %v6142 = vadd.f32 %v5646, %v6134
    %v6143 = vadd.f32 %v5647, %v6139
    %v6144 = vld [vmem:[#allocation42] sm:$0x1]
    %v6145 = vld [vmem:[#allocation43] sm:$0x1]
    %v6146 = vsel %vm628, %v6142, 0.0
    %6147 = vadd.xlane.f32.xlu0 %v6146
    %v6148 = vpop.xlane.xlu0 %6147
    %v6149 = vsel %vm628, %v6143, 0.0
    %6150 = vadd.xlane.f32.xlu0 %v6149
    %v6151 = vpop.xlane.xlu0 %6150
    %v6152 = vmul.f32 %v6148, %v1156
    %v6153 = vmul.f32 %v6151, %v1156
    %v6154 = vsub.f32 %v6142, %v6152
    %v6155 = vsub.f32 %v6143, %v6153
    %v6156 = vmul.f32 %v6154, %v6154
    %v6157 = vmul.f32 %v6155, %v6155
    %v6158 = vsel %vm628, %v6156, 0.0
    %6159 = vadd.xlane.f32.xlu0 %v6158
    %v6160 = vpop.xlane.xlu0 %6159
    %v6161 = vsel %vm628, %v6157, 0.0
    %6162 = vadd.xlane.f32.xlu0 %v6161
    %v6163 = vpop.xlane.xlu0 %6162
    %v6164 = vmul.f32 %v6160, %v1156
    %v6165 = vmul.f32 %v6163, %v1156
    %v6166 = vadd.f32 %v6164, 1e-05
    %v6167 = vadd.f32 %v6165, 1e-05
    %v6168 = vrsqrt.pop %v6166
    %v6169 = vrsqrt.pop %v6167
    %v6170 = vmul.f32 %v6154, %v6168
    %v6171 = vmul.f32 %v6155, %v6169
    %v6173 = vlaneseq
    %v6174 = vshrl.u32 %v6173, 7
    %v6175 = vsub.s32 0, %v6174
    %v6176 = vrot.slane %v6144, %v6175
    %v6178 = vmul.f32 %v6170, %v6176
    %v6179 = vmul.f32 %v6171, %v6176
    %v6181 = vlaneseq
    %v6182 = vshrl.u32 %v6181, 7
    %v6183 = vsub.s32 0, %v6182
    %v6184 = vrot.slane %v6145, %v6183
    %v6186 = vadd.f32 %v6178, %v6184
    %v6187 = vadd.f32 %v6179, %v6184
    %v6188 = vld [vmem:[%s125] sm:$0xff]
    %v6189 = vld [vmem:[%s125 + $0x8] sm:$0xff]
    %v6190 = vld [vmem:[%s125 + $0x10] sm:$0xff]
    %v6191 = vld [vmem:[%s125 + $0x18] sm:$0xff]
    %v6192 = vld [vmem:[#allocation45] sm:$0x1]
    %v6194 = vlaneseq
    %v6195 = vshrl.u32 %v6194, 7
    %v6196 = vsub.s32 0, %v6195
    %v6197 = vrot.slane %v6192, %v6196
    %v6200 = vsel %vm628, %v6186, 0
    %v6203 = vsel %vm628, %v6187, 0
    %6205 = vmatprep.subr.mxu0 0.0
    %6206 = vmatpush1.msra.mxu0 %v6188
    %6207 = vmatprep.subr.mxu0 0.0
    %6208 = vmatpush1.msra.mxu0 %v6189
    %6209 = vmatprep.subr.mxu0 0.0
    %6210 = vmatpush1.msra.mxu0 %v6190
    %6211 = vmatprep.subr.mxu0 0.0
    %6212 = vmatpush1.msra.mxu0 %v6191
    %6213 = vmatprep.subr.mxu0 0.0
    %6214 = vmatpush1.msra.mxu0 0.0
    %6215 = vmatprep.subr.mxu0 0.0
    %6216 = vmatpush1.msra.mxu0 0.0
    %6217 = vmatprep.subr.mxu0 0.0
    %6218 = vmatpush1.msra.mxu0 0.0
    %6219 = vmatprep.subr.mxu0 0.0
    %6220 = vmatpush1.msra.mxu0 0.0
    %6221 = vmatprep.subr.mxu0 0.0
    %6222 = vmatpush1.msra.mxu0 0.0
    %6223 = vmatprep.subr.mxu0 0.0
    %6224 = vmatpush1.msra.mxu0 0.0
    %6225 = vmatprep.subr.mxu0 0.0
    %6226 = vmatpush1.msra.mxu0 0.0
    %6227 = vmatprep.subr.mxu0 0.0
    %6228 = vmatpush1.msra.mxu0 0.0
    %6229 = vmatprep.subr.mxu0 0.0
    %6230 = vmatpush1.msra.mxu0 0.0
    %6231 = vmatprep.subr.mxu0 0.0
    %6232 = vmatpush1.msra.mxu0 0.0
    %6233 = vmatprep.subr.mxu0 0.0
    %6234 = vmatpush1.msra.mxu0 0.0
    %6235 = vmatprep.subr.mxu0 0.0
    %6236 = vmatpush1.msra.mxu0 0.0
    %6237 = vmatprep.subr.mxu0 0.0
    %6238 = vmatpush1.msra.mxu0 0.0
    %6239 = vmatprep.subr.mxu0 0.0
    %6240 = vmatpush1.msra.mxu0 0.0
    %6241 = vmatprep.subr.mxu0 0.0
    %6242 = vmatpush1.msra.mxu0 0.0
    %6243 = vmatprep.subr.mxu0 0.0
    %6244 = vmatpush1.msra.mxu0 0.0
    %6245 = vmatprep.subr.mxu0 0.0
    %6246 = vmatpush1.msra.mxu0 0.0
    %6247 = vmatprep.subr.mxu0 0.0
    %6248 = vmatpush1.msra.mxu0 0.0
    %6249 = vmatprep.subr.mxu0 0.0
    %6250 = vmatpush1.msra.mxu0 0.0
    %6251 = vmatprep.subr.mxu0 0.0
    %6252 = vmatpush1.msra.mxu0 0.0
    %6253 = vmatprep.subr.mxu0 0.0
    %6254 = vmatpush1.msra.mxu0 0.0
    %6255 = vmatprep.subr.mxu0 0.0
    %6256 = vmatpush1.msra.mxu0 0.0
    %6257 = vmatprep.subr.mxu0 0.0
    %6258 = vmatpush1.msra.mxu0 0.0
    %6259 = vmatprep.subr.mxu0 0.0
    %6260 = vmatpush1.msra.mxu0 0.0
    %6261 = vmatprep.subr.mxu0 0.0
    %6262 = vmatpush1.msra.mxu0 0.0
    %6263 = vmatprep.subr.mxu0 0.0
    %6264 = vmatpush1.msra.mxu0 0.0
    %6265 = vmatprep.subr.mxu0 0.0
    %6266 = vmatpush1.msra.mxu0 0.0
    %6267 = vmatprep.subr.mxu0 0.0
    %6268 = vmatpush1.msra.mxu0 0.0
    %6269 = vmatprep.mubr.f32.mxu0 0.0
    %6270 = vmatmul.mubr.f32.gmra.mrb[0].mxu0 %v6200
    %v6271 = vpop.f32.mrb[0].mxu0
    %v6272 = vadd.f32 %v6197, %v6271
    %v6273 = vpop.f32.mrb[0].mxu0
    %6274 = vmatprep.mubr.f32.mxu0 0.0
    %6275 = vmatmul.mubr.f32.gmra.mrb[0].mxu0 %v6203
    %v6276 = vpop.f32.mrb[0].mxu0
    %v6277 = vadd.f32 %v6197, %v6276
    %v6278 = vpop.f32.mrb[0].mxu0
    %6279 = vdwg.mxu0
    %v6280 = vxor.u32 %v6272, 2147483648
    %v6281 = vxor.u32 %v6277, 2147483648
    %v6282 = vmul.f32 %v6280, 1.442695
    %v6283 = vpow.pop %v6282
    %v6284 = vmul.f32 %v6281, 1.442695
    %v6285 = vpow.pop %v6284
    %v6286 = vadd.f32 %v6283, 1.0
    %v6287 = vadd.f32 %v6285, 1.0
    %v6288 = vrcp.pop %v6286
    %v6289 = vmul.f32 1.0, %v6288
    %v6290 = vrcp.pop %v6287
    %v6291 = vmul.f32 1.0, %v6290
    %v6292 = vmul.f32 %v6272, %v6289
    %v6293 = vmul.f32 %v6277, %v6291
    %v6294 = vld [vmem:[%s129] sm:$0xff]
    %v6295 = vld [vmem:[%s129 + $0x8] sm:$0xff]
    %v6296 = vld [vmem:[%s129 + $0x10] sm:$0xff]
    %v6297 = vld [vmem:[%s129 + $0x18] sm:$0xff]
    %v6298 = vld [vmem:[%s129 + $0x20] sm:$0xff]
    %v6299 = vld [vmem:[%s129 + $0x28] sm:$0xff]
    %v6300 = vld [vmem:[%s129 + $0x30] sm:$0xff]
    %v6301 = vld [vmem:[%s129 + $0x38] sm:$0xff]
    %v6302 = vld [vmem:[#allocation46] sm:$0x1]
    %v6304 = vlaneseq
    %v6305 = vshrl.u32 %v6304, 7
    %v6306 = vsub.s32 0, %v6305
    %v6307 = vrot.slane %v6302, %v6306
    %v6310 = vsel %vm1314, %v6292, 0
    %v6313 = vsel %vm1314, %v6293, 0
    %6315 = vmatprep.subr.mxu0 0.0
    %6316 = vmatpush1.msra.mxu0 %v6294
    %6317 = vmatprep.subr.mxu0 0.0
    %6318 = vmatpush1.msra.mxu0 %v6295
    %6319 = vmatprep.subr.mxu0 0.0
    %6320 = vmatpush1.msra.mxu0 %v6296
    %6321 = vmatprep.subr.mxu0 0.0
    %6322 = vmatpush1.msra.mxu0 %v6297
    %6323 = vmatprep.subr.mxu0 0.0
    %6324 = vmatpush1.msra.mxu0 %v6298
    %6325 = vmatprep.subr.mxu0 0.0
    %6326 = vmatpush1.msra.mxu0 %v6299
    %6327 = vmatprep.subr.mxu0 0.0
    %6328 = vmatpush1.msra.mxu0 %v6300
    %6329 = vmatprep.subr.mxu0 0.0
    %6330 = vmatpush1.msra.mxu0 %v6301
    %6331 = vmatprep.subr.mxu0 0.0
    %6332 = vmatpush1.msra.mxu0 0.0
    %6333 = vmatprep.subr.mxu0 0.0
    %6334 = vmatpush1.msra.mxu0 0.0
    %6335 = vmatprep.subr.mxu0 0.0
    %6336 = vmatpush1.msra.mxu0 0.0
    %6337 = vmatprep.subr.mxu0 0.0
    %6338 = vmatpush1.msra.mxu0 0.0
    %6339 = vmatprep.subr.mxu0 0.0
    %6340 = vmatpush1.msra.mxu0 0.0
    %6341 = vmatprep.subr.mxu0 0.0
    %6342 = vmatpush1.msra.mxu0 0.0
    %6343 = vmatprep.subr.mxu0 0.0
    %6344 = vmatpush1.msra.mxu0 0.0
    %6345 = vmatprep.subr.mxu0 0.0
    %6346 = vmatpush1.msra.mxu0 0.0
    %6347 = vmatprep.subr.mxu0 0.0
    %6348 = vmatpush1.msra.mxu0 0.0
    %6349 = vmatprep.subr.mxu0 0.0
    %6350 = vmatpush1.msra.mxu0 0.0
    %6351 = vmatprep.subr.mxu0 0.0
    %6352 = vmatpush1.msra.mxu0 0.0
    %6353 = vmatprep.subr.mxu0 0.0
    %6354 = vmatpush1.msra.mxu0 0.0
    %6355 = vmatprep.subr.mxu0 0.0
    %6356 = vmatpush1.msra.mxu0 0.0
    %6357 = vmatprep.subr.mxu0 0.0
    %6358 = vmatpush1.msra.mxu0 0.0
    %6359 = vmatprep.subr.mxu0 0.0
    %6360 = vmatpush1.msra.mxu0 0.0
    %6361 = vmatprep.subr.mxu0 0.0
    %6362 = vmatpush1.msra.mxu0 0.0
    %6363 = vmatprep.subr.mxu0 0.0
    %6364 = vmatpush1.msra.mxu0 0.0
    %6365 = vmatprep.subr.mxu0 0.0
    %6366 = vmatpush1.msra.mxu0 0.0
    %6367 = vmatprep.subr.mxu0 0.0
    %6368 = vmatpush1.msra.mxu0 0.0
    %6369 = vmatprep.subr.mxu0 0.0
    %6370 = vmatpush1.msra.mxu0 0.0
    %6371 = vmatprep.subr.mxu0 0.0
    %6372 = vmatpush1.msra.mxu0 0.0
    %6373 = vmatprep.subr.mxu0 0.0
    %6374 = vmatpush1.msra.mxu0 0.0
    %6375 = vmatprep.subr.mxu0 0.0
    %6376 = vmatpush1.msra.mxu0 0.0
    %6377 = vmatprep.subr.mxu0 0.0
    %6378 = vmatpush1.msra.mxu0 0.0
    %6379 = vmatprep.mubr.f32.mxu0 0.0
    %6380 = vmatmul.mubr.f32.gmra.mrb[0].mxu0 %v6310
    %v6381 = vpop.f32.mrb[0].mxu0
    %v6382 = vadd.f32 %v6307, %v6381
    %v6383 = vpop.f32.mrb[0].mxu0
    %6384 = vmatprep.mubr.f32.mxu0 0.0
    %6385 = vmatmul.mubr.f32.gmra.mrb[0].mxu0 %v6313
    %v6386 = vpop.f32.mrb[0].mxu0
    %v6387 = vadd.f32 %v6307, %v6386
    %v6388 = vpop.f32.mrb[0].mxu0
    %6389 = vdwg.mxu0
    %v6390 = vmul.f32 %v6382, 0.5
    %v6391 = vmul.f32 %v6387, 0.5
    %v6392 = vadd.f32 %v6142, %v6390
    %v6393 = vadd.f32 %v6143, %v6391
    %v6394 = vld [vmem:[#allocation48] sm:$0x1]
    %v6395 = vld [vmem:[#allocation49] sm:$0x1]
    %v6396 = vsel %vm628, %v6392, 0.0
    %6397 = vadd.xlane.f32.xlu0 %v6396
    %v6398 = vpop.xlane.xlu0 %6397
    %v6399 = vsel %vm628, %v6393, 0.0
    %6400 = vadd.xlane.f32.xlu0 %v6399
    %v6401 = vpop.xlane.xlu0 %6400
    %v6402 = vmul.f32 %v6398, %v1156
    %v6403 = vmul.f32 %v6401, %v1156
    %v6404 = vsub.f32 %v6392, %v6402
    %v6405 = vsub.f32 %v6393, %v6403
    %v6406 = vmul.f32 %v6404, %v6404
    %v6407 = vmul.f32 %v6405, %v6405
    %v6408 = vsel %vm628, %v6406, 0.0
    %6409 = vadd.xlane.f32.xlu0 %v6408
    %v6410 = vpop.xlane.xlu0 %6409
    %v6411 = vsel %vm628, %v6407, 0.0
    %6412 = vadd.xlane.f32.xlu0 %v6411
    %v6413 = vpop.xlane.xlu0 %6412
    %v6414 = vmul.f32 %v6410, %v1156
    %v6415 = vmul.f32 %v6413, %v1156
    %v6416 = vadd.f32 %v6414, 1e-05
    %v6417 = vadd.f32 %v6415, 1e-05
    %v6418 = vrsqrt.pop %v6416
    %v6419 = vrsqrt.pop %v6417
    %v6420 = vmul.f32 %v6404, %v6418
    %v6421 = vmul.f32 %v6405, %v6419
    %v6423 = vlaneseq
    %v6424 = vshrl.u32 %v6423, 7
    %v6425 = vsub.s32 0, %v6424
    %v6426 = vrot.slane %v6394, %v6425
    %v6428 = vmul.f32 %v6420, %v6426
    %v6429 = vmul.f32 %v6421, %v6426
    %v6431 = vlaneseq
    %v6432 = vshrl.u32 %v6431, 7
    %v6433 = vsub.s32 0, %v6432
    %v6434 = vrot.slane %v6395, %v6433
    %v6436 = vadd.f32 %v6428, %v6434
    %v6437 = vadd.f32 %v6429, %v6434
    %v6438 = vld [vmem:[%s137] sm:$0xff]
    %v6439 = vld [vmem:[%s137 + $0x8] sm:$0xff]
    %v6440 = vld [vmem:[%s137 + $0x10] sm:$0xff]
    %v6441 = vld [vmem:[%s137 + $0x18] sm:$0xff]
    %v6442 = vld [vmem:[#allocation51] sm:$0x1]
    %v6444 = vlaneseq
    %v6445 = vshrl.u32 %v6444, 7
    %v6446 = vsub.s32 0, %v6445
    %v6447 = vrot.slane %v6442, %v6446
    %v6450 = vsel %vm628, %v6436, 0
    %v6453 = vsel %vm628, %v6437, 0
    %6455 = vmatprep.subr.mxu0 0.0
    %6456 = vmatpush1.msra.mxu0 %v6438
    %6457 = vmatprep.subr.mxu0 0.0
    %6458 = vmatpush1.msra.mxu0 %v6439
    %6459 = vmatprep.subr.mxu0 0.0
    %6460 = vmatpush1.msra.mxu0 %v6440
    %6461 = vmatprep.subr.mxu0 0.0
    %6462 = vmatpush1.msra.mxu0 %v6441
    %6463 = vmatprep.subr.mxu0 0.0
    %6464 = vmatpush1.msra.mxu0 0.0
    %6465 = vmatprep.subr.mxu0 0.0
    %6466 = vmatpush1.msra.mxu0 0.0
    %6467 = vmatprep.subr.mxu0 0.0
    %6468 = vmatpush1.msra.mxu0 0.0
    %6469 = vmatprep.subr.mxu0 0.0
    %6470 = vmatpush1.msra.mxu0 0.0
    %6471 = vmatprep.subr.mxu0 0.0
    %6472 = vmatpush1.msra.mxu0 0.0
    %6473 = vmatprep.subr.mxu0 0.0
    %6474 = vmatpush1.msra.mxu0 0.0
    %6475 = vmatprep.subr.mxu0 0.0
    %6476 = vmatpush1.msra.mxu0 0.0
    %6477 = vmatprep.subr.mxu0 0.0
    %6478 = vmatpush1.msra.mxu0 0.0
    %6479 = vmatprep.subr.mxu0 0.0
    %6480 = vmatpush1.msra.mxu0 0.0
    %6481 = vmatprep.subr.mxu0 0.0
    %6482 = vmatpush1.msra.mxu0 0.0
    %6483 = vmatprep.subr.mxu0 0.0
    %6484 = vmatpush1.msra.mxu0 0.0
    %6485 = vmatprep.subr.mxu0 0.0
    %6486 = vmatpush1.msra.mxu0 0.0
    %6487 = vmatprep.subr.mxu0 0.0
    %6488 = vmatpush1.msra.mxu0 0.0
    %6489 = vmatprep.subr.mxu0 0.0
    %6490 = vmatpush1.msra.mxu0 0.0
    %6491 = vmatprep.subr.mxu0 0.0
    %6492 = vmatpush1.msra.mxu0 0.0
    %6493 = vmatprep.subr.mxu0 0.0
    %6494 = vmatpush1.msra.mxu0 0.0
    %6495 = vmatprep.subr.mxu0 0.0
    %6496 = vmatpush1.msra.mxu0 0.0
    %6497 = vmatprep.subr.mxu0 0.0
    %6498 = vmatpush1.msra.mxu0 0.0
    %6499 = vmatprep.subr.mxu0 0.0
    %6500 = vmatpush1.msra.mxu0 0.0
    %6501 = vmatprep.subr.mxu0 0.0
    %6502 = vmatpush1.msra.mxu0 0.0
    %6503 = vmatprep.subr.mxu0 0.0
    %6504 = vmatpush1.msra.mxu0 0.0
    %6505 = vmatprep.subr.mxu0 0.0
    %6506 = vmatpush1.msra.mxu0 0.0
    %6507 = vmatprep.subr.mxu0 0.0
    %6508 = vmatpush1.msra.mxu0 0.0
    %6509 = vmatprep.subr.mxu0 0.0
    %6510 = vmatpush1.msra.mxu0 0.0
    %6511 = vmatprep.subr.mxu0 0.0
    %6512 = vmatpush1.msra.mxu0 0.0
    %6513 = vmatprep.subr.mxu0 0.0
    %6514 = vmatpush1.msra.mxu0 0.0
    %6515 = vmatprep.subr.mxu0 0.0
    %6516 = vmatpush1.msra.mxu0 0.0
    %6517 = vmatprep.subr.mxu0 0.0
    %6518 = vmatpush1.msra.mxu0 0.0
    %6519 = vmatprep.mubr.f32.mxu0 0.0
    %6520 = vmatmul.mubr.f32.gmra.mrb[0].mxu0 %v6450
    %v6521 = vpop.f32.mrb[0].mxu0
    %v6522 = vadd.f32 %v6447, %v6521
    %v6523 = vpop.f32.mrb[0].mxu0
    %6524 = vmatprep.mubr.f32.mxu0 0.0
    %6525 = vmatmul.mubr.f32.gmra.mrb[0].mxu0 %v6453
    %v6526 = vpop.f32.mrb[0].mxu0
    %v6527 = vadd.f32 %v6447, %v6526
    %v6528 = vpop.f32.mrb[0].mxu0
    %6529 = vdwg.mxu0
    %v6530 = vld [vmem:[%s139] sm:$0xff]
    %v6531 = vld [vmem:[%s139 + $0x8] sm:$0xff]
    %v6532 = vld [vmem:[%s139 + $0x10] sm:$0xff]
    %v6533 = vld [vmem:[%s139 + $0x18] sm:$0xff]
    %v6535 = vsel %vm628, 0.0, 0
    %6537 = vmatprep.subr.mxu0 0.0
    %6538 = vmatpush1.msra.mxu0 %v6530
    %6539 = vmatprep.subr.mxu0 0.0
    %6540 = vmatpush1.msra.mxu0 %v6531
    %6541 = vmatprep.subr.mxu0 0.0
    %6542 = vmatpush1.msra.mxu0 %v6532
    %6543 = vmatprep.subr.mxu0 0.0
    %6544 = vmatpush1.msra.mxu0 %v6533
    %6545 = vmatprep.subr.mxu0 0.0
    %6546 = vmatpush1.msra.mxu0 0.0
    %6547 = vmatprep.subr.mxu0 0.0
    %6548 = vmatpush1.msra.mxu0 0.0
    %6549 = vmatprep.subr.mxu0 0.0
    %6550 = vmatpush1.msra.mxu0 0.0
    %6551 = vmatprep.subr.mxu0 0.0
    %6552 = vmatpush1.msra.mxu0 0.0
    %6553 = vmatprep.subr.mxu0 0.0
    %6554 = vmatpush1.msra.mxu0 0.0
    %6555 = vmatprep.subr.mxu0 0.0
    %6556 = vmatpush1.msra.mxu0 0.0
    %6557 = vmatprep.subr.mxu0 0.0
    %6558 = vmatpush1.msra.mxu0 0.0
    %6559 = vmatprep.subr.mxu0 0.0
    %6560 = vmatpush1.msra.mxu0 0.0
    %6561 = vmatprep.subr.mxu0 0.0
    %6562 = vmatpush1.msra.mxu0 0.0
    %6563 = vmatprep.subr.mxu0 0.0
    %6564 = vmatpush1.msra.mxu0 0.0
    %6565 = vmatprep.subr.mxu0 0.0
    %6566 = vmatpush1.msra.mxu0 0.0
    %6567 = vmatprep.subr.mxu0 0.0
    %6568 = vmatpush1.msra.mxu0 0.0
    %6569 = vmatprep.subr.mxu0 0.0
    %6570 = vmatpush1.msra.mxu0 0.0
    %6571 = vmatprep.subr.mxu0 0.0
    %6572 = vmatpush1.msra.mxu0 0.0
    %6573 = vmatprep.subr.mxu0 0.0
    %6574 = vmatpush1.msra.mxu0 0.0
    %6575 = vmatprep.subr.mxu0 0.0
    %6576 = vmatpush1.msra.mxu0 0.0
    %6577 = vmatprep.subr.mxu0 0.0
    %6578 = vmatpush1.msra.mxu0 0.0
    %6579 = vmatprep.subr.mxu0 0.0
    %6580 = vmatpush1.msra.mxu0 0.0
    %6581 = vmatprep.subr.mxu0 0.0
    %6582 = vmatpush1.msra.mxu0 0.0
    %6583 = vmatprep.subr.mxu0 0.0
    %6584 = vmatpush1.msra.mxu0 0.0
    %6585 = vmatprep.subr.mxu0 0.0
    %6586 = vmatpush1.msra.mxu0 0.0
    %6587 = vmatprep.subr.mxu0 0.0
    %6588 = vmatpush1.msra.mxu0 0.0
    %6589 = vmatprep.subr.mxu0 0.0
    %6590 = vmatpush1.msra.mxu0 0.0
    %6591 = vmatprep.subr.mxu0 0.0
    %6592 = vmatpush1.msra.mxu0 0.0
    %6593 = vmatprep.subr.mxu0 0.0
    %6594 = vmatpush1.msra.mxu0 0.0
    %6595 = vmatprep.subr.mxu0 0.0
    %6596 = vmatpush1.msra.mxu0 0.0
    %6597 = vmatprep.subr.mxu0 0.0
    %6598 = vmatpush1.msra.mxu0 0.0
    %6599 = vmatprep.subr.mxu0 0.0
    %6600 = vmatpush1.msra.mxu0 0.0
    %6601 = vmatprep.mubr.f32.mxu0 0.0
    %6602 = vmatmul.mubr.f32.gmra.mrb[0].mxu0 %v6535
    %v6603 = vpop.f32.mrb[0].mxu0
    %v6604 = vadd.f32 0.0, %v6603
    %v6605 = vpop.f32.mrb[0].mxu0
    %6606 = vdwg.mxu0
    %v6607 = vadd.f32 %v6522, %v6604
    %v6608 = vxor.u32 %v6607, 2147483648
    %v6609 = vmul.f32 %v6608, 1.442695
    %v6610 = vpow.pop %v6609
    %v6611 = vadd.f32 %v6610, 1.0
    %v6612 = vrcp.pop %v6611
    %v6613 = vmul.f32 1.0, %v6612
    %v6614 = vtanh.pop %v6607
    %v6615 = vmul.f32 %v6613, 0.0
    %6617 = vrot.lane.b32.xlu0 %v6614, 64
    %v6618 = vpop.permute.xlu0 %6617
    %v6620 = vmul.f32 %v6613, %v6618
    %6622 = vrot.lane.b32.xlu0 %v6620, 32
    %v6623 = vpop.permute.xlu0 %6622
    %v6625 = vadd.f32 %v6615, %v6623
    %v6626 = vtanh.pop %v6625
    %6628 = vrot.lane.b32.xlu0 %v6626, 64
    %v6629 = vpop.permute.xlu0 %6628
    %v6631 = vmul.f32 %v6613, %v6629
    %6633 = vrot.lane.b32.xlu0 %v6631, 32
    %v6634 = vpop.permute.xlu0 %6633
    %6636 = vst.msk [vmem:[#allocation52] sm:$0xff] %vm628, %v6634
    %v6637 = vld [vmem:[%s139] sm:$0xff]
    %v6638 = vld [vmem:[%s139 + $0x8] sm:$0xff]
    %v6639 = vld [vmem:[%s139 + $0x10] sm:$0xff]
    %v6640 = vld [vmem:[%s139 + $0x18] sm:$0xff]
    %v6641 = vsel %vm628, %v6634, 0
    %6643 = vmatprep.subr.mxu0 0.0
    %6644 = vmatpush1.msra.mxu0 %v6637
    %6645 = vmatprep.subr.mxu0 0.0
    %6646 = vmatpush1.msra.mxu0 %v6638
    %6647 = vmatprep.subr.mxu0 0.0
    %6648 = vmatpush1.msra.mxu0 %v6639
    %6649 = vmatprep.subr.mxu0 0.0
    %6650 = vmatpush1.msra.mxu0 %v6640
    %6651 = vmatprep.subr.mxu0 0.0
    %6652 = vmatpush1.msra.mxu0 0.0
    %6653 = vmatprep.subr.mxu0 0.0
    %6654 = vmatpush1.msra.mxu0 0.0
    %6655 = vmatprep.subr.mxu0 0.0
    %6656 = vmatpush1.msra.mxu0 0.0
    %6657 = vmatprep.subr.mxu0 0.0
    %6658 = vmatpush1.msra.mxu0 0.0
    %6659 = vmatprep.subr.mxu0 0.0
    %6660 = vmatpush1.msra.mxu0 0.0
    %6661 = vmatprep.subr.mxu0 0.0
    %6662 = vmatpush1.msra.mxu0 0.0
    %6663 = vmatprep.subr.mxu0 0.0
    %6664 = vmatpush1.msra.mxu0 0.0
    %6665 = vmatprep.subr.mxu0 0.0
    %6666 = vmatpush1.msra.mxu0 0.0
    %6667 = vmatprep.subr.mxu0 0.0
    %6668 = vmatpush1.msra.mxu0 0.0
    %6669 = vmatprep.subr.mxu0 0.0
    %6670 = vmatpush1.msra.mxu0 0.0
    %6671 = vmatprep.subr.mxu0 0.0
    %6672 = vmatpush1.msra.mxu0 0.0
    %6673 = vmatprep.subr.mxu0 0.0
    %6674 = vmatpush1.msra.mxu0 0.0
    %6675 = vmatprep.subr.mxu0 0.0
    %6676 = vmatpush1.msra.mxu0 0.0
    %6677 = vmatprep.subr.mxu0 0.0
    %6678 = vmatpush1.msra.mxu0 0.0
    %6679 = vmatprep.subr.mxu0 0.0
    %6680 = vmatpush1.msra.mxu0 0.0
    %6681 = vmatprep.subr.mxu0 0.0
    %6682 = vmatpush1.msra.mxu0 0.0
    %6683 = vmatprep.subr.mxu0 0.0
    %6684 = vmatpush1.msra.mxu0 0.0
    %6685 = vmatprep.subr.mxu0 0.0
    %6686 = vmatpush1.msra.mxu0 0.0
    %6687 = vmatprep.subr.mxu0 0.0
    %6688 = vmatpush1.msra.mxu0 0.0
    %6689 = vmatprep.subr.mxu0 0.0
    %6690 = vmatpush1.msra.mxu0 0.0
    %6691 = vmatprep.subr.mxu0 0.0
    %6692 = vmatpush1.msra.mxu0 0.0
    %6693 = vmatprep.subr.mxu0 0.0
    %6694 = vmatpush1.msra.mxu0 0.0
    %6695 = vmatprep.subr.mxu0 0.0
    %6696 = vmatpush1.msra.mxu0 0.0
    %6697 = vmatprep.subr.mxu0 0.0
    %6698 = vmatpush1.msra.mxu0 0.0
    %6699 = vmatprep.subr.mxu0 0.0
    %6700 = vmatpush1.msra.mxu0 0.0
    %6701 = vmatprep.subr.mxu0 0.0
    %6702 = vmatpush1.msra.mxu0 0.0
    %6703 = vmatprep.subr.mxu0 0.0
    %6704 = vmatpush1.msra.mxu0 0.0
    %6705 = vmatprep.subr.mxu0 0.0
    %6706 = vmatpush1.msra.mxu0 0.0
    %6707 = vmatprep.mubr.f32.mxu0 0.0
    %6708 = vmatmul.mubr.f32.gmra.mrb[0].mxu0 %v6641
    %v6709 = vpop.f32.mrb[0].mxu0
    %v6710 = vadd.f32 0.0, %v6709
    %v6711 = vpop.f32.mrb[0].mxu0
    %6712 = vdwg.mxu0
    %v6713 = vadd.f32 %v6527, %v6710
    %v6714 = vxor.u32 %v6713, 2147483648
    %v6715 = vmul.f32 %v6714, 1.442695
    %v6716 = vpow.pop %v6715
    %v6717 = vadd.f32 %v6716, 1.0
    %v6718 = vrcp.pop %v6717
    %v6719 = vmul.f32 1.0, %v6718
    %v6720 = vtanh.pop %v6713
    %v6721 = vmul.f32 %v6719, %v6625
    %6723 = vrot.lane.b32.xlu0 %v6720, 64
    %v6724 = vpop.permute.xlu0 %6723
    %v6726 = vmul.f32 %v6719, %v6724
    %6728 = vrot.lane.b32.xlu0 %v6726, 32
    %v6729 = vpop.permute.xlu0 %6728
    %v6731 = vadd.f32 %v6721, %v6729
    %v6732 = vtanh.pop %v6731
    %6734 = vrot.lane.b32.xlu0 %v6732, 64
    %v6735 = vpop.permute.xlu0 %6734
    %v6737 = vmul.f32 %v6719, %v6735
    %6739 = vrot.lane.b32.xlu0 %v6737, 32
    %v6740 = vpop.permute.xlu0 %6739
    %s6742 = scalar_lea.vmem [#allocation52], 8
    %6743 = vst.msk [vmem:[%s6742] sm:$0xff] %vm628, %v6740
    // Predicated region
    $region402: #{pretraining_forward.3} parent=1 // pred_check
      _
    $region403: #{pretraining_forward.3} parent=1 // pred_check_branch
      %6745 = sbr.rel (0) target = $region405
    $region404: #{pretraining_forward.3} parent=1 // pred_region
      %s6747 = ssub.s32 256, 256
      %6748 = vsyncadd [#allocation9], %s6747
      %s6749 = sshll.u32 [#allocation52], 4
      %s6750 = int_to_ptr.vmem [resolvable:$true] %s6749
      %6755 = dma.vmem_to_hbm [thread:$0]  %s6750, 256, %s143, [#allocation9], 128, 128, 8
    $region405: #{pretraining_forward.3} parent=1 // pred_fallthru
      _
    // Predicated region
    $region406: #{pretraining_forward.3} parent=1 // pred_check
      _
    $region407: #{pretraining_forward.3} parent=1 // pred_check_branch
      %6757 = sbr.rel (0) target = $region409
    $region408: #{pretraining_forward.3} parent=1 // pred_region
      _
    $region409: #{pretraining_forward.3} parent=1 // pred_fallthru
      _
    // Predicated region
    $region410: #{pretraining_forward.3} parent=1 // pred_check
      _
    $region411: #{pretraining_forward.3} parent=1 // pred_check_branch
      %6759 = sbr.rel (0) target = $region413
    $region412: #{pretraining_forward.3} parent=1 // pred_region
      %6760 = dma.done [#allocation9], 256
    $region413: #{pretraining_forward.3} parent=1 // pred_fallthru
      _
    // Predicated region
    $region414: #{pretraining_forward.3} parent=1 // pred_check
      _
    $region415: #{pretraining_forward.3} parent=1 // pred_check_branch
      %6762 = sbr.rel (0) target = $region417
    $region416: #{pretraining_forward.3} parent=1 // pred_region
      _
    $region417: #{pretraining_forward.3} parent=1 // pred_fallthru
      _
    %6763 = vsyncpa [#allocation8], 1
    %6764 = vsyncpa [#allocation11], 1
    %6765 = vsyncpa [#allocation14], 1
    %6766 = vsyncpa [#allocation17], 1
    %6767 = vsyncpa [#allocation20], 1
    %6768 = vsyncpa [#allocation23], 1
    %6769 = vsyncpa [#allocation26], 1
    %6770 = vsyncpa [#allocation29], 1
    %6771 = vsyncpa [#allocation32], 1
    %6772 = vsyncpa [#allocation35], 1
    %6773 = vsyncpa [#allocation38], 1
    %6774 = vsyncpa [#allocation41], 1
    %6775 = vsyncpa [#allocation44], 1
    %6776 = vsyncpa [#allocation47], 1
    %6777 = vsyncpa [#allocation50], 1
    %6778 = vsyncpa [#allocation9], 1

</llo_original>
